<compile_context>
chip_gen: v7x
topology: tpu7x:2x2x1
jax: 0.10.0
libtpu: 0.0.40
codegen_flags: <defaults>
</compile_context>

<pallas_src>
import numpy as np
import jax
import jax.numpy as jnp
from jax import lax
from jax.experimental import pallas as pl
from jax.experimental.pallas import tpu as pltpu

BN_EPS = 1e-5
NUM_CLASSES = 10      # nn.Linear(256, num_classes)
PAD_CLASSES = 128     # lane-dense padded classifier width (sliced back in the wrapper)


# ----------------------------- in-kernel helpers --------------------------------------

def _shift_rows(x, s):
    """y[r, :] = x[r + s, :] when 0 <= r + s < rows, else 0.  `s` is a static int.

    Implemented with a static sublane slice + zero concat (XLU shift, no MXU work)."""
    if s == 0:
        return x
    rows, c = x.shape
    z = jnp.zeros((abs(s), c), x.dtype)
    if s > 0:
        return jnp.concatenate([x[s:, :], z], axis=0)
    return jnp.concatenate([z, x[:rows + s, :]], axis=0)


def _bn_relu(y, gamma, beta):
    """nn.BatchNorm2d forward in default (training) mode + ReLU.

    y: (rows, C) f32 with rows = N*H*W stacked over images; gamma/beta: (1, C) f32.
    Single stacked reduction per block; centered (two-pass) biased variance."""
    inv_cnt = 1.0 / y.shape[0]
    mean = jnp.sum(y, axis=0, keepdims=True) * inv_cnt
    cent = y - mean
    var = jnp.sum(cent * cent, axis=0, keepdims=True) * inv_cnt
    scale = gamma * lax.rsqrt(var + BN_EPS)
    return jnp.maximum(cent * scale + beta, 0.0)


# ----------------------------- Pallas kernel ------------------------------------------

def make_mobilenet_kernel(n_img, blocks_cfg):
    """blocks_cfg: list of dicts {h, w, stride, cin, cout} (depthwise INPUT spatial)."""
    for cfg in blocks_cfg:
        h, w = cfg["h"], cfg["w"]
        assert (h & (h - 1)) == 0 and (w & (w - 1)) == 0, "power-of-two spatial assumed"

    def kernel(*refs):
        it = iter(refs)
        patches_ref = next(it)      # (N*H*W, 27) bf16   stem im2col (tap-major, ch-minor)
        stem_w_ref = next(it)       # (27, 16)    bf16
        stem_g_ref = next(it)       # (1, 16)     f32
        stem_b_ref = next(it)       # (1, 16)     f32
        blk_refs = []
        for cfg in blocks_cfg:
            dw = next(it)                                    # (9, Cin)        f32
            pw = next(it)                                    # (Cin, Cout)     bf16
            g = next(it)                                     # (1, Cout)       f32
            b = next(it)                                     # (1, Cout)       f32
            d = next(it) if cfg["stride"] == 2 else None     # (N*Mo, N*Mi)    bf16
            blk_refs.append((dw, pw, g, b, d))
        fc_w_ref = next(it)         # (256, PAD_CLASSES) bf16
        fc_b_ref = next(it)         # (1, PAD_CLASSES)   f32
        out_ref = next(it)          # (N, PAD_CLASSES)   f32

        # ---- stem: Conv2d(3,16,3,p=1,bias=False) as ONE batched matmul, BN, ReLU ----
        act = jnp.dot(patches_ref[...], stem_w_ref[...],
                      preferred_element_type=jnp.float32)          # (N*M, 16) f32
        act = _bn_relu(act, stem_g_ref[...], stem_b_ref[...])

        # ---- DepthwiseSeparableConv blocks, all images stacked along rows ------------
        for cfg, (dw_ref, pw_ref, g_ref, b_ref, d_ref) in zip(blocks_cfg, blk_refs):
            h, w = cfg["h"], cfg["w"]
            rows = n_img * h * w
            log2w = w.bit_length() - 1

            # per-row spatial coordinates (hoisted once per block; shifts/ands only)
            r = lax.broadcasted_iota(jnp.int32, (rows, 1), 0)
            i_idx = (r >> log2w) & (h - 1)
            j_idx = r & (w - 1)

            dwt = dw_ref[...]                                    # (9, Cin) f32, one load
            acc = None
            for ky in range(3):
                for kx in range(3):
                    dy, dx = ky - 1, kx - 1
                    shifted = _shift_rows(act, dy * w + dx)      # sublane shift (XLU)
                    conds = []
                    if dy < 0:
                        conds.append(i_idx >= -dy)
                    if dy > 0:
                        conds.append(i_idx < h - dy)
                    if dx < 0:
                        conds.append(j_idx >= -dx)
                    if dx > 0:
                        conds.append(j_idx < w - dx)
                    if conds:
                        m = conds[0]
                        for cnd in conds[1:]:
                            m = jnp.logical_and(m, cnd)
                        shifted = jnp.where(m, shifted, 0.0)     # zero the conv padding
                    k = ky * 3 + kx
                    tap = shifted * dwt[k:k + 1, :]              # per-channel scale (VPU)
                    acc = tap if acc is None else acc + tap      # first tap inits acc

            if d_ref is not None:
                # stride-2: small block-diagonal 0/1 row-selection matmul (exact in bf16)
                acc = jnp.dot(d_ref[...], acc.astype(jnp.bfloat16),
                              preferred_element_type=jnp.float32)

            # pointwise 1x1 conv: one batched matmul over all images
            y = jnp.dot(acc.astype(jnp.bfloat16), pw_ref[...],
                        preferred_element_type=jnp.float32)
            act = _bn_relu(y, g_ref[...], b_ref[...])

        # ---- AdaptiveAvgPool2d(1) + Flatten + Linear(256, K), one lane-dense store ----
        m_last = act.shape[0] // n_img
        pooled = jnp.concatenate(
            [jnp.mean(act[n * m_last:(n + 1) * m_last, :], axis=0, keepdims=True)
             for n in range(n_img)], axis=0)                        # (N, 256) f32
        logits = jnp.dot(pooled.astype(jnp.bfloat16), fc_w_ref[...],
                         preferred_element_type=jnp.float32) + fc_b_ref[...]
        out_ref[...] = logits                                       # single (N,128) store

    return kernel


# ----------------------------- wrapper / glue ------------------------------------------

def _full_spec(shape):
    ndim = len(shape)
    return pl.BlockSpec(shape, lambda i: (0,) * ndim)


def _stem_patches(x_nhwc):
    # One-time im2col of the raw network input: (N,H,W,3) -> (N*H*W, 27),
    # tap-major / channel-minor (3x3, pad=1, stride=1).  ~27 KB at this size.
    n, h, w, c = x_nhwc.shape
    xp = jnp.pad(x_nhwc, ((0, 0), (1, 1), (1, 1), (0, 0)))
    taps = [xp[:, dy:dy + h, dx:dx + w, :].reshape(n, h * w, c)
            for dy in range(3) for dx in range(3)]
    return jnp.concatenate(taps, axis=-1).reshape(n * h * w, 9 * c)


def _downsample_mat(n_img, h_in, w_in):
    # Block-diagonal 0/1 row-selection matrix implementing the stride-2 downsample on the
    # flat (N*H*W, C) depthwise output.  Exact in bf16.
    ho, wo = h_in // 2, w_in // 2
    d = np.zeros((n_img * ho * wo, n_img * h_in * w_in), np.float32)
    for n in range(n_img):
        for oi in range(ho):
            for oj in range(wo):
                d[n * ho * wo + oi * wo + oj,
                  n * h_in * w_in + (2 * oi) * w_in + (2 * oj)] = 1.0
    return jnp.asarray(d, jnp.bfloat16)


def mobilenet_forward(params, consts, blocks_cfg, x_nchw):
    n = x_nchw.shape[0]
    x = jnp.transpose(x_nchw, (0, 2, 3, 1))                    # NCHW -> NHWC
    patches = _stem_patches(x).astype(jnp.bfloat16)            # (N*H*W, 27)

    inputs = [patches, params["stem_w"], params["stem_g"], params["stem_b"]]
    for i, cfg in enumerate(blocks_cfg):
        inputs += [params[f"ds{i}_dw"], params[f"ds{i}_pw"],
                   params[f"ds{i}_g"], params[f"ds{i}_b"]]
        if cfg["stride"] == 2:
            inputs.append(consts[f"down{i}"])
    inputs += [params["fc_w"], params["fc_b"]]

    kernel = make_mobilenet_kernel(n, blocks_cfg)
    # TODO(synk): parallel row-tiling + cross-tile BN reduction for v7x's 2nd TensorCore.
    out = pl.pallas_call(
        kernel,
        grid=(1,),
        out_shape=jax.ShapeDtypeStruct((n, PAD_CLASSES), jnp.float32),
        in_specs=[_full_spec(a.shape) for a in inputs],
        out_specs=_full_spec((n, PAD_CLASSES)),
        compiler_params=pltpu.CompilerParams(dimension_semantics=("arbitrary",)),
    )(*inputs)
    return out[:, :NUM_CLASSES]


# ----------------------------- parameter construction ----------------------------------

def _stem_weight(key, cout=16, cin=3):
    # PyTorch Conv2d weight (Cout, Cin, 3, 3) -> (9*Cin, Cout), tap-major / channel-minor
    w = jax.random.normal(key, (cout, cin, 3, 3), jnp.float32) * (1.0 / (cin * 9)) ** 0.5
    return jnp.transpose(w, (2, 3, 1, 0)).reshape(9 * cin, cout)


def _dw_weight(key, c):
    # depthwise weight (C, 1, 3, 3) -> (9, C), tap-major
    w = jax.random.normal(key, (c, 1, 3, 3), jnp.float32) * (1.0 / 9.0) ** 0.5
    return jnp.transpose(w, (2, 3, 0, 1)).reshape(9, c)


def _pw_weight(key, cout, cin):
    # pointwise weight (Cout, Cin, 1, 1) -> (Cin, Cout)
    w = jax.random.normal(key, (cout, cin), jnp.float32) * (1.0 / cin) ** 0.5
    return jnp.transpose(w, (1, 0))


def _bn_params(c):
    # PyTorch BatchNorm2d init: weight=1, bias=0
    return jnp.ones((1, c), jnp.float32), jnp.zeros((1, c), jnp.float32)


def init_params(key):
    ks = jax.random.split(key, 16)
    p = {}
    p["stem_w"] = _stem_weight(ks[0]).astype(jnp.bfloat16)          # (27, 16)
    p["stem_g"], p["stem_b"] = _bn_params(16)
    chan_cfg = [(16, 32, 1), (32, 64, 2), (64, 128, 2), (128, 256, 2)]
    for i, (cin, cout, _s) in enumerate(chan_cfg):
        p[f"ds{i}_dw"] = _dw_weight(ks[1 + 3 * i], cin)              # (9, Cin) f32
        p[f"ds{i}_pw"] = _pw_weight(ks[2 + 3 * i], cout, cin).astype(jnp.bfloat16)
        p[f"ds{i}_g"], p[f"ds{i}_b"] = _bn_params(cout)
    fc_w = jax.random.normal(ks[14], (NUM_CLASSES, 256), jnp.float32) * (1.0 / 256) ** 0.5
    fc_b = jax.random.normal(ks[15], (NUM_CLASSES,), jnp.float32) * (1.0 / 256) ** 0.5
    # pad the classifier to 128 output lanes (zeros); wrapper slices back to NUM_CLASSES
    p["fc_w"] = (jnp.zeros((256, PAD_CLASSES), jnp.float32)
                 .at[:, :NUM_CLASSES].set(fc_w.T)).astype(jnp.bfloat16)
    p["fc_b"] = jnp.zeros((1, PAD_CLASSES), jnp.float32).at[0, :NUM_CLASSES].set(fc_b)
    return p, chan_cfg


def build_blocks_cfg(chan_cfg, h, w):
    cfgs = []
    for cin, cout, s in chan_cfg:
        cfgs.append(dict(h=h, w=w, stride=s, cin=cin, cout=cout))
        if s == 2:
            h, w = h // 2, w // 2
    return cfgs


def build_consts(blocks_cfg, n_img):
    consts = {}
    for i, cfg in enumerate(blocks_cfg):
        if cfg["stride"] == 2:
            consts[f"down{i}"] = _downsample_mat(n_img, cfg["h"], cfg["w"])
    return consts


# ----------------------------- main -----------------------------------------------------

if __name__ == "__main__":
    key = jax.random.PRNGKey(0)
    kp, kx = jax.random.split(key)
    params, chan_cfg = init_params(kp)

    N, H, W = 2, 16, 16
    blocks_cfg = build_blocks_cfg(chan_cfg, H, W)   # stem (stride 1) keeps 16x16 into ds0
    consts = build_consts(blocks_cfg, N)

    # module expects 3 input channels (Conv2d(3, 16, ...)); small spatial size 16
    x = jax.random.normal(kx, (N, 3, H, W), jnp.float32)

    fwd = jax.jit(lambda xx: mobilenet_forward(params, consts, blocks_cfg, xx))
    logits = fwd(x)
    jax.block_until_ready(logits)
    assert logits.shape == (N, NUM_CLASSES) and logits.dtype == jnp.float32
    print("KERNEL_OK")
</pallas_src>

<mosaic_0001>
module attributes {stable_mosaic.version = 11 : i64} {
  func.func @kernel(%arg0: i32, %arg1: memref<512x27xbf16, #tpu.memory_space<vmem>>, %arg2: memref<27x16xbf16, #tpu.memory_space<vmem>>, %arg3: memref<1x16xf32, #tpu.memory_space<vmem>>, %arg4: memref<1x16xf32, #tpu.memory_space<vmem>>, %arg5: memref<9x16xf32, #tpu.memory_space<vmem>>, %arg6: memref<16x32xbf16, #tpu.memory_space<vmem>>, %arg7: memref<1x32xf32, #tpu.memory_space<vmem>>, %arg8: memref<1x32xf32, #tpu.memory_space<vmem>>, %arg9: memref<9x32xf32, #tpu.memory_space<vmem>>, %arg10: memref<32x64xbf16, #tpu.memory_space<vmem>>, %arg11: memref<1x64xf32, #tpu.memory_space<vmem>>, %arg12: memref<1x64xf32, #tpu.memory_space<vmem>>, %arg13: memref<128x512xbf16, #tpu.memory_space<vmem>>, %arg14: memref<9x64xf32, #tpu.memory_space<vmem>>, %arg15: memref<64x128xbf16, #tpu.memory_space<vmem>>, %arg16: memref<1x128xf32, #tpu.memory_space<vmem>>, %arg17: memref<1x128xf32, #tpu.memory_space<vmem>>, %arg18: memref<32x128xbf16, #tpu.memory_space<vmem>>, %arg19: memref<9x128xf32, #tpu.memory_space<vmem>>, %arg20: memref<128x256xbf16, #tpu.memory_space<vmem>>, %arg21: memref<1x256xf32, #tpu.memory_space<vmem>>, %arg22: memref<1x256xf32, #tpu.memory_space<vmem>>, %arg23: memref<8x32xbf16, #tpu.memory_space<vmem>>, %arg24: memref<256x128xbf16, #tpu.memory_space<vmem>>, %arg25: memref<1x128xf32, #tpu.memory_space<vmem>>, %arg26: memref<2x128xf32, #tpu.memory_space<vmem>>) attributes {dimension_semantics = [#tpu.dimension_semantics<arbitrary>], iteration_bounds = array<i64: 1>, scalar_prefetch = 0 : i64, scratch_operands = 0 : i64, tpu.core_type = #tpu.core_type<tc>, window_params = [{pipeline_mode = #tpu.pipeline_mode<synchronous>, transform_indices = @transform_0, window_bounds = array<i64: 512, 27>}, {pipeline_mode = #tpu.pipeline_mode<synchronous>, transform_indices = @transform_1, window_bounds = array<i64: 27, 16>}, {pipeline_mode = #tpu.pipeline_mode<synchronous>, transform_indices = @transform_2, window_bounds = array<i64: 1, 16>}, {pipeline_mode = #tpu.pipeline_mode<synchronous>, transform_indices = @transform_3, window_bounds = array<i64: 1, 16>}, {pipeline_mode = #tpu.pipeline_mode<synchronous>, transform_indices = @transform_4, window_bounds = array<i64: 9, 16>}, {pipeline_mode = #tpu.pipeline_mode<synchronous>, transform_indices = @transform_5, window_bounds = array<i64: 16, 32>}, {pipeline_mode = #tpu.pipeline_mode<synchronous>, transform_indices = @transform_6, window_bounds = array<i64: 1, 32>}, {pipeline_mode = #tpu.pipeline_mode<synchronous>, transform_indices = @transform_7, window_bounds = array<i64: 1, 32>}, {pipeline_mode = #tpu.pipeline_mode<synchronous>, transform_indices = @transform_8, window_bounds = array<i64: 9, 32>}, {pipeline_mode = #tpu.pipeline_mode<synchronous>, transform_indices = @transform_9, window_bounds = array<i64: 32, 64>}, {pipeline_mode = #tpu.pipeline_mode<synchronous>, transform_indices = @transform_10, window_bounds = array<i64: 1, 64>}, {pipeline_mode = #tpu.pipeline_mode<synchronous>, transform_indices = @transform_11, window_bounds = array<i64: 1, 64>}, {pipeline_mode = #tpu.pipeline_mode<synchronous>, transform_indices = @transform_12, window_bounds = array<i64: 128, 512>}, {pipeline_mode = #tpu.pipeline_mode<synchronous>, transform_indices = @transform_13, window_bounds = array<i64: 9, 64>}, {pipeline_mode = #tpu.pipeline_mode<synchronous>, transform_indices = @transform_14, window_bounds = array<i64: 64, 128>}, {pipeline_mode = #tpu.pipeline_mode<synchronous>, transform_indices = @transform_15, window_bounds = array<i64: 1, 128>}, {pipeline_mode = #tpu.pipeline_mode<synchronous>, transform_indices = @transform_16, window_bounds = array<i64: 1, 128>}, {pipeline_mode = #tpu.pipeline_mode<synchronous>, transform_indices = @transform_17, window_bounds = array<i64: 32, 128>}, {pipeline_mode = #tpu.pipeline_mode<synchronous>, transform_indices = @transform_18, window_bounds = array<i64: 9, 128>}, {pipeline_mode = #tpu.pipeline_mode<synchronous>, transform_indices = @transform_19, window_bounds = array<i64: 128, 256>}, {pipeline_mode = #tpu.pipeline_mode<synchronous>, transform_indices = @transform_20, window_bounds = array<i64: 1, 256>}, {pipeline_mode = #tpu.pipeline_mode<synchronous>, transform_indices = @transform_21, window_bounds = array<i64: 1, 256>}, {pipeline_mode = #tpu.pipeline_mode<synchronous>, transform_indices = @transform_22, window_bounds = array<i64: 8, 32>}, {pipeline_mode = #tpu.pipeline_mode<synchronous>, transform_indices = @transform_23, window_bounds = array<i64: 256, 128>}, {pipeline_mode = #tpu.pipeline_mode<synchronous>, transform_indices = @transform_24, window_bounds = array<i64: 1, 128>}, {pipeline_mode = #tpu.pipeline_mode<synchronous>, transform_indices = @transform_25, window_bounds = array<i64: 2, 128>}]} {
    %c0 = arith.constant 0 : index
    %c0_0 = arith.constant 0 : index
    %0 = vector.load %arg1[%c0, %c0_0] : memref<512x27xbf16, #tpu.memory_space<vmem>>, vector<512x27xbf16>
    %c0_1 = arith.constant 0 : index
    %c0_2 = arith.constant 0 : index
    %1 = vector.load %arg2[%c0_1, %c0_2] : memref<27x16xbf16, #tpu.memory_space<vmem>>, vector<27x16xbf16>
    %cst = arith.constant dense<0.000000e+00> : vector<512x16xf32>
    %2 = tpu.matmul %0, %1, %cst {dimension_numbers = #tpu.dot_dimension_numbers<[1], [0], [0], [1], [0, 0, 1, 1], [], []>} : vector<512x27xbf16>, vector<27x16xbf16>, vector<512x16xf32> -> vector<512x16xf32>
    %c0_3 = arith.constant 0 : index
    %c0_4 = arith.constant 0 : index
    %3 = vector.load %arg3[%c0_3, %c0_4] : memref<1x16xf32, #tpu.memory_space<vmem>>, vector<1x16xf32>
    %c0_5 = arith.constant 0 : index
    %c0_6 = arith.constant 0 : index
    %4 = vector.load %arg4[%c0_5, %c0_6] : memref<1x16xf32, #tpu.memory_space<vmem>>, vector<1x16xf32>
    %cst_7 = arith.constant dense<0.000000e+00> : vector<16xf32>
    %5 = vector.multi_reduction <add>, %2, %cst_7 [0] : vector<512x16xf32> to vector<16xf32>
    %6 = vector.shape_cast %5 : vector<16xf32> to vector<1x16xf32>
    %cst_8 = arith.constant 0.001953125 : f32
    %7 = vector.broadcast %cst_8 : f32 to vector<1x16xf32>
    %8 = arith.mulf %6, %7 : vector<1x16xf32>
    %9 = vector.broadcast %8 : vector<1x16xf32> to vector<512x16xf32>
    %10 = arith.subf %2, %9 : vector<512x16xf32>
    %11 = arith.mulf %10, %10 : vector<512x16xf32>
    %cst_9 = arith.constant dense<0.000000e+00> : vector<16xf32>
    %12 = vector.multi_reduction <add>, %11, %cst_9 [0] : vector<512x16xf32> to vector<16xf32>
    %13 = vector.shape_cast %12 : vector<16xf32> to vector<1x16xf32>
    %cst_10 = arith.constant 0.001953125 : f32
    %14 = vector.broadcast %cst_10 : f32 to vector<1x16xf32>
    %15 = arith.mulf %13, %14 : vector<1x16xf32>
    %cst_11 = arith.constant 9.99999974E-6 : f32
    %16 = vector.broadcast %cst_11 : f32 to vector<1x16xf32>
    %17 = arith.addf %15, %16 : vector<1x16xf32>
    %18 = math.rsqrt %17 : vector<1x16xf32>
    %19 = arith.mulf %3, %18 : vector<1x16xf32>
    %20 = vector.broadcast %19 : vector<1x16xf32> to vector<512x16xf32>
    %21 = arith.mulf %10, %20 : vector<512x16xf32>
    %22 = vector.broadcast %4 : vector<1x16xf32> to vector<512x16xf32>
    %23 = arith.addf %21, %22 : vector<512x16xf32>
    %cst_12 = arith.constant 0.000000e+00 : f32
    %24 = vector.broadcast %cst_12 : f32 to vector<512x16xf32>
    %25 = arith.maximumf %23, %24 : vector<512x16xf32>
    %26 = tpu.iota {dimensions = array<i32: 0>} : vector<512x1xi32>
    %c4_i32 = arith.constant 4 : i32
    %27 = vector.broadcast %c4_i32 : i32 to vector<512x1xi32>
    %28 = arith.shrsi %26, %27 : vector<512x1xi32>
    %c15_i32 = arith.constant 15 : i32
    %29 = vector.broadcast %c15_i32 : i32 to vector<512x1xi32>
    %30 = arith.andi %28, %29 : vector<512x1xi32>
    %c15_i32_13 = arith.constant 15 : i32
    %31 = vector.broadcast %c15_i32_13 : i32 to vector<512x1xi32>
    %32 = arith.andi %26, %31 : vector<512x1xi32>
    %c0_14 = arith.constant 0 : index
    %c0_15 = arith.constant 0 : index
    %33 = vector.load %arg5[%c0_14, %c0_15] : memref<9x16xf32, #tpu.memory_space<vmem>>, vector<9x16xf32>
    %cst_16 = arith.constant 0.000000e+00 : f32
    %34 = vector.broadcast %cst_16 : f32 to vector<17x16xf32>
    %35 = vector.extract_strided_slice %25 {offsets = [0, 0], sizes = [495, 16], strides = [1, 1]} : vector<512x16xf32> to vector<495x16xf32>
    %36 = tpu.concatenate %34, %35 in 0 : vector<17x16xf32>, vector<495x16xf32> -> vector<512x16xf32>
    %c1_i32 = arith.constant 1 : i32
    %37 = vector.broadcast %c1_i32 : i32 to vector<512x1xi32>
    %38 = arith.cmpi sge, %30, %37 : vector<512x1xi32>
    %c1_i32_17 = arith.constant 1 : i32
    %39 = vector.broadcast %c1_i32_17 : i32 to vector<512x1xi32>
    %40 = arith.cmpi sge, %32, %39 : vector<512x1xi32>
    %41 = arith.andi %38, %40 : vector<512x1xi1>
    %cst_18 = arith.constant 0.000000e+00 : f32
    %42 = vector.shape_cast %41 : vector<512x1xi1> to vector<512x1xi1>
    %43 = vector.broadcast %42 : vector<512x1xi1> to vector<512x16xi1>
    %44 = vector.broadcast %cst_18 : f32 to vector<512x16xf32>
    %45 = arith.select %43, %36, %44 : vector<512x16xi1>, vector<512x16xf32>
    %46 = vector.extract_strided_slice %33 {offsets = [0, 0], sizes = [1, 16], strides = [1, 1]} : vector<9x16xf32> to vector<1x16xf32>
    %47 = vector.broadcast %46 : vector<1x16xf32> to vector<512x16xf32>
    %48 = arith.mulf %45, %47 : vector<512x16xf32>
    %cst_19 = arith.constant 0.000000e+00 : f32
    %49 = vector.broadcast %cst_19 : f32 to vector<16x16xf32>
    %50 = vector.extract_strided_slice %25 {offsets = [0, 0], sizes = [496, 16], strides = [1, 1]} : vector<512x16xf32> to vector<496x16xf32>
    %51 = tpu.concatenate %49, %50 in 0 : vector<16x16xf32>, vector<496x16xf32> -> vector<512x16xf32>
    %c1_i32_20 = arith.constant 1 : i32
    %52 = vector.broadcast %c1_i32_20 : i32 to vector<512x1xi32>
    %53 = arith.cmpi sge, %30, %52 : vector<512x1xi32>
    %cst_21 = arith.constant 0.000000e+00 : f32
    %54 = vector.shape_cast %53 : vector<512x1xi1> to vector<512x1xi1>
    %55 = vector.broadcast %54 : vector<512x1xi1> to vector<512x16xi1>
    %56 = vector.broadcast %cst_21 : f32 to vector<512x16xf32>
    %57 = arith.select %55, %51, %56 : vector<512x16xi1>, vector<512x16xf32>
    %58 = vector.extract_strided_slice %33 {offsets = [1, 0], sizes = [1, 16], strides = [1, 1]} : vector<9x16xf32> to vector<1x16xf32>
    %59 = vector.broadcast %58 : vector<1x16xf32> to vector<512x16xf32>
    %60 = arith.mulf %57, %59 : vector<512x16xf32>
    %61 = arith.addf %48, %60 : vector<512x16xf32>
    %cst_22 = arith.constant 0.000000e+00 : f32
    %62 = vector.broadcast %cst_22 : f32 to vector<15x16xf32>
    %63 = vector.extract_strided_slice %25 {offsets = [0, 0], sizes = [497, 16], strides = [1, 1]} : vector<512x16xf32> to vector<497x16xf32>
    %64 = tpu.concatenate %62, %63 in 0 : vector<15x16xf32>, vector<497x16xf32> -> vector<512x16xf32>
    %c1_i32_23 = arith.constant 1 : i32
    %65 = vector.broadcast %c1_i32_23 : i32 to vector<512x1xi32>
    %66 = arith.cmpi sge, %30, %65 : vector<512x1xi32>
    %c15_i32_24 = arith.constant 15 : i32
    %67 = vector.broadcast %c15_i32_24 : i32 to vector<512x1xi32>
    %68 = arith.cmpi slt, %32, %67 : vector<512x1xi32>
    %69 = arith.andi %66, %68 : vector<512x1xi1>
    %cst_25 = arith.constant 0.000000e+00 : f32
    %70 = vector.shape_cast %69 : vector<512x1xi1> to vector<512x1xi1>
    %71 = vector.broadcast %70 : vector<512x1xi1> to vector<512x16xi1>
    %72 = vector.broadcast %cst_25 : f32 to vector<512x16xf32>
    %73 = arith.select %71, %64, %72 : vector<512x16xi1>, vector<512x16xf32>
    %74 = vector.extract_strided_slice %33 {offsets = [2, 0], sizes = [1, 16], strides = [1, 1]} : vector<9x16xf32> to vector<1x16xf32>
    %75 = vector.broadcast %74 : vector<1x16xf32> to vector<512x16xf32>
    %76 = arith.mulf %73, %75 : vector<512x16xf32>
    %77 = arith.addf %61, %76 : vector<512x16xf32>
    %cst_26 = arith.constant 0.000000e+00 : f32
    %78 = vector.broadcast %cst_26 : f32 to vector<1x16xf32>
    %79 = vector.extract_strided_slice %25 {offsets = [0, 0], sizes = [511, 16], strides = [1, 1]} : vector<512x16xf32> to vector<511x16xf32>
    %80 = tpu.concatenate %78, %79 in 0 : vector<1x16xf32>, vector<511x16xf32> -> vector<512x16xf32>
    %c1_i32_27 = arith.constant 1 : i32
    %81 = vector.broadcast %c1_i32_27 : i32 to vector<512x1xi32>
    %82 = arith.cmpi sge, %32, %81 : vector<512x1xi32>
    %cst_28 = arith.constant 0.000000e+00 : f32
    %83 = vector.shape_cast %82 : vector<512x1xi1> to vector<512x1xi1>
    %84 = vector.broadcast %83 : vector<512x1xi1> to vector<512x16xi1>
    %85 = vector.broadcast %cst_28 : f32 to vector<512x16xf32>
    %86 = arith.select %84, %80, %85 : vector<512x16xi1>, vector<512x16xf32>
    %87 = vector.extract_strided_slice %33 {offsets = [3, 0], sizes = [1, 16], strides = [1, 1]} : vector<9x16xf32> to vector<1x16xf32>
    %88 = vector.broadcast %87 : vector<1x16xf32> to vector<512x16xf32>
    %89 = arith.mulf %86, %88 : vector<512x16xf32>
    %90 = arith.addf %77, %89 : vector<512x16xf32>
    %91 = vector.extract_strided_slice %33 {offsets = [4, 0], sizes = [1, 16], strides = [1, 1]} : vector<9x16xf32> to vector<1x16xf32>
    %92 = vector.broadcast %91 : vector<1x16xf32> to vector<512x16xf32>
    %93 = arith.mulf %25, %92 : vector<512x16xf32>
    %94 = arith.addf %90, %93 : vector<512x16xf32>
    %cst_29 = arith.constant 0.000000e+00 : f32
    %95 = vector.broadcast %cst_29 : f32 to vector<1x16xf32>
    %96 = vector.extract_strided_slice %25 {offsets = [1, 0], sizes = [511, 16], strides = [1, 1]} : vector<512x16xf32> to vector<511x16xf32>
    %97 = tpu.concatenate %96, %95 in 0 : vector<511x16xf32>, vector<1x16xf32> -> vector<512x16xf32>
    %c15_i32_30 = arith.constant 15 : i32
    %98 = vector.broadcast %c15_i32_30 : i32 to vector<512x1xi32>
    %99 = arith.cmpi slt, %32, %98 : vector<512x1xi32>
    %cst_31 = arith.constant 0.000000e+00 : f32
    %100 = vector.shape_cast %99 : vector<512x1xi1> to vector<512x1xi1>
    %101 = vector.broadcast %100 : vector<512x1xi1> to vector<512x16xi1>
    %102 = vector.broadcast %cst_31 : f32 to vector<512x16xf32>
    %103 = arith.select %101, %97, %102 : vector<512x16xi1>, vector<512x16xf32>
    %104 = vector.extract_strided_slice %33 {offsets = [5, 0], sizes = [1, 16], strides = [1, 1]} : vector<9x16xf32> to vector<1x16xf32>
    %105 = vector.broadcast %104 : vector<1x16xf32> to vector<512x16xf32>
    %106 = arith.mulf %103, %105 : vector<512x16xf32>
    %107 = arith.addf %94, %106 : vector<512x16xf32>
    %cst_32 = arith.constant 0.000000e+00 : f32
    %108 = vector.broadcast %cst_32 : f32 to vector<15x16xf32>
    %109 = vector.extract_strided_slice %25 {offsets = [15, 0], sizes = [497, 16], strides = [1, 1]} : vector<512x16xf32> to vector<497x16xf32>
    %110 = tpu.concatenate %109, %108 in 0 : vector<497x16xf32>, vector<15x16xf32> -> vector<512x16xf32>
    %c15_i32_33 = arith.constant 15 : i32
    %111 = vector.broadcast %c15_i32_33 : i32 to vector<512x1xi32>
    %112 = arith.cmpi slt, %30, %111 : vector<512x1xi32>
    %c1_i32_34 = arith.constant 1 : i32
    %113 = vector.broadcast %c1_i32_34 : i32 to vector<512x1xi32>
    %114 = arith.cmpi sge, %32, %113 : vector<512x1xi32>
    %115 = arith.andi %112, %114 : vector<512x1xi1>
    %cst_35 = arith.constant 0.000000e+00 : f32
    %116 = vector.shape_cast %115 : vector<512x1xi1> to vector<512x1xi1>
    %117 = vector.broadcast %116 : vector<512x1xi1> to vector<512x16xi1>
    %118 = vector.broadcast %cst_35 : f32 to vector<512x16xf32>
    %119 = arith.select %117, %110, %118 : vector<512x16xi1>, vector<512x16xf32>
    %120 = vector.extract_strided_slice %33 {offsets = [6, 0], sizes = [1, 16], strides = [1, 1]} : vector<9x16xf32> to vector<1x16xf32>
    %121 = vector.broadcast %120 : vector<1x16xf32> to vector<512x16xf32>
    %122 = arith.mulf %119, %121 : vector<512x16xf32>
    %123 = arith.addf %107, %122 : vector<512x16xf32>
    %cst_36 = arith.constant 0.000000e+00 : f32
    %124 = vector.broadcast %cst_36 : f32 to vector<16x16xf32>
    %125 = vector.extract_strided_slice %25 {offsets = [16, 0], sizes = [496, 16], strides = [1, 1]} : vector<512x16xf32> to vector<496x16xf32>
    %126 = tpu.concatenate %125, %124 in 0 : vector<496x16xf32>, vector<16x16xf32> -> vector<512x16xf32>
    %c15_i32_37 = arith.constant 15 : i32
    %127 = vector.broadcast %c15_i32_37 : i32 to vector<512x1xi32>
    %128 = arith.cmpi slt, %30, %127 : vector<512x1xi32>
    %cst_38 = arith.constant 0.000000e+00 : f32
    %129 = vector.shape_cast %128 : vector<512x1xi1> to vector<512x1xi1>
    %130 = vector.broadcast %129 : vector<512x1xi1> to vector<512x16xi1>
    %131 = vector.broadcast %cst_38 : f32 to vector<512x16xf32>
    %132 = arith.select %130, %126, %131 : vector<512x16xi1>, vector<512x16xf32>
    %133 = vector.extract_strided_slice %33 {offsets = [7, 0], sizes = [1, 16], strides = [1, 1]} : vector<9x16xf32> to vector<1x16xf32>
    %134 = vector.broadcast %133 : vector<1x16xf32> to vector<512x16xf32>
    %135 = arith.mulf %132, %134 : vector<512x16xf32>
    %136 = arith.addf %123, %135 : vector<512x16xf32>
    %cst_39 = arith.constant 0.000000e+00 : f32
    %137 = vector.broadcast %cst_39 : f32 to vector<17x16xf32>
    %138 = vector.extract_strided_slice %25 {offsets = [17, 0], sizes = [495, 16], strides = [1, 1]} : vector<512x16xf32> to vector<495x16xf32>
    %139 = tpu.concatenate %138, %137 in 0 : vector<495x16xf32>, vector<17x16xf32> -> vector<512x16xf32>
    %c15_i32_40 = arith.constant 15 : i32
    %140 = vector.broadcast %c15_i32_40 : i32 to vector<512x1xi32>
    %141 = arith.cmpi slt, %30, %140 : vector<512x1xi32>
    %c15_i32_41 = arith.constant 15 : i32
    %142 = vector.broadcast %c15_i32_41 : i32 to vector<512x1xi32>
    %143 = arith.cmpi slt, %32, %142 : vector<512x1xi32>
    %144 = arith.andi %141, %143 : vector<512x1xi1>
    %cst_42 = arith.constant 0.000000e+00 : f32
    %145 = vector.shape_cast %144 : vector<512x1xi1> to vector<512x1xi1>
    %146 = vector.broadcast %145 : vector<512x1xi1> to vector<512x16xi1>
    %147 = vector.broadcast %cst_42 : f32 to vector<512x16xf32>
    %148 = arith.select %146, %139, %147 : vector<512x16xi1>, vector<512x16xf32>
    %149 = vector.extract_strided_slice %33 {offsets = [8, 0], sizes = [1, 16], strides = [1, 1]} : vector<9x16xf32> to vector<1x16xf32>
    %150 = vector.broadcast %149 : vector<1x16xf32> to vector<512x16xf32>
    %151 = arith.mulf %148, %150 : vector<512x16xf32>
    %152 = arith.addf %136, %151 : vector<512x16xf32>
    %153 = arith.truncf %152 : vector<512x16xf32> to vector<512x16xbf16>
    %c0_43 = arith.constant 0 : index
    %c0_44 = arith.constant 0 : index
    %154 = vector.load %arg6[%c0_43, %c0_44] : memref<16x32xbf16, #tpu.memory_space<vmem>>, vector<16x32xbf16>
    %cst_45 = arith.constant dense<0.000000e+00> : vector<512x32xf32>
    %155 = tpu.matmul %153, %154, %cst_45 {dimension_numbers = #tpu.dot_dimension_numbers<[1], [0], [0], [1], [0, 0, 1, 1], [], []>} : vector<512x16xbf16>, vector<16x32xbf16>, vector<512x32xf32> -> vector<512x32xf32>
    %c0_46 = arith.constant 0 : index
    %c0_47 = arith.constant 0 : index
    %156 = vector.load %arg7[%c0_46, %c0_47] : memref<1x32xf32, #tpu.memory_space<vmem>>, vector<1x32xf32>
    %c0_48 = arith.constant 0 : index
    %c0_49 = arith.constant 0 : index
    %157 = vector.load %arg8[%c0_48, %c0_49] : memref<1x32xf32, #tpu.memory_space<vmem>>, vector<1x32xf32>
    %cst_50 = arith.constant dense<0.000000e+00> : vector<32xf32>
    %158 = vector.multi_reduction <add>, %155, %cst_50 [0] : vector<512x32xf32> to vector<32xf32>
    %159 = vector.shape_cast %158 : vector<32xf32> to vector<1x32xf32>
    %cst_51 = arith.constant 0.001953125 : f32
    %160 = vector.broadcast %cst_51 : f32 to vector<1x32xf32>
    %161 = arith.mulf %159, %160 : vector<1x32xf32>
    %162 = vector.broadcast %161 : vector<1x32xf32> to vector<512x32xf32>
    %163 = arith.subf %155, %162 : vector<512x32xf32>
    %164 = arith.mulf %163, %163 : vector<512x32xf32>
    %cst_52 = arith.constant dense<0.000000e+00> : vector<32xf32>
    %165 = vector.multi_reduction <add>, %164, %cst_52 [0] : vector<512x32xf32> to vector<32xf32>
    %166 = vector.shape_cast %165 : vector<32xf32> to vector<1x32xf32>
    %cst_53 = arith.constant 0.001953125 : f32
    %167 = vector.broadcast %cst_53 : f32 to vector<1x32xf32>
    %168 = arith.mulf %166, %167 : vector<1x32xf32>
    %cst_54 = arith.constant 9.99999974E-6 : f32
    %169 = vector.broadcast %cst_54 : f32 to vector<1x32xf32>
    %170 = arith.addf %168, %169 : vector<1x32xf32>
    %171 = math.rsqrt %170 : vector<1x32xf32>
    %172 = arith.mulf %156, %171 : vector<1x32xf32>
    %173 = vector.broadcast %172 : vector<1x32xf32> to vector<512x32xf32>
    %174 = arith.mulf %163, %173 : vector<512x32xf32>
    %175 = vector.broadcast %157 : vector<1x32xf32> to vector<512x32xf32>
    %176 = arith.addf %174, %175 : vector<512x32xf32>
    %cst_55 = arith.constant 0.000000e+00 : f32
    %177 = vector.broadcast %cst_55 : f32 to vector<512x32xf32>
    %178 = arith.maximumf %176, %177 : vector<512x32xf32>
    %179 = tpu.iota {dimensions = array<i32: 0>} : vector<512x1xi32>
    %c4_i32_56 = arith.constant 4 : i32
    %180 = vector.broadcast %c4_i32_56 : i32 to vector<512x1xi32>
    %181 = arith.shrsi %179, %180 : vector<512x1xi32>
    %c15_i32_57 = arith.constant 15 : i32
    %182 = vector.broadcast %c15_i32_57 : i32 to vector<512x1xi32>
    %183 = arith.andi %181, %182 : vector<512x1xi32>
    %c15_i32_58 = arith.constant 15 : i32
    %184 = vector.broadcast %c15_i32_58 : i32 to vector<512x1xi32>
    %185 = arith.andi %179, %184 : vector<512x1xi32>
    %c0_59 = arith.constant 0 : index
    %c0_60 = arith.constant 0 : index
    %186 = vector.load %arg9[%c0_59, %c0_60] : memref<9x32xf32, #tpu.memory_space<vmem>>, vector<9x32xf32>
    %cst_61 = arith.constant 0.000000e+00 : f32
    %187 = vector.broadcast %cst_61 : f32 to vector<17x32xf32>
    %188 = vector.extract_strided_slice %178 {offsets = [0, 0], sizes = [495, 32], strides = [1, 1]} : vector<512x32xf32> to vector<495x32xf32>
    %189 = tpu.concatenate %187, %188 in 0 : vector<17x32xf32>, vector<495x32xf32> -> vector<512x32xf32>
    %c1_i32_62 = arith.constant 1 : i32
    %190 = vector.broadcast %c1_i32_62 : i32 to vector<512x1xi32>
    %191 = arith.cmpi sge, %183, %190 : vector<512x1xi32>
    %c1_i32_63 = arith.constant 1 : i32
    %192 = vector.broadcast %c1_i32_63 : i32 to vector<512x1xi32>
    %193 = arith.cmpi sge, %185, %192 : vector<512x1xi32>
    %194 = arith.andi %191, %193 : vector<512x1xi1>
    %cst_64 = arith.constant 0.000000e+00 : f32
    %195 = vector.shape_cast %194 : vector<512x1xi1> to vector<512x1xi1>
    %196 = vector.broadcast %195 : vector<512x1xi1> to vector<512x32xi1>
    %197 = vector.broadcast %cst_64 : f32 to vector<512x32xf32>
    %198 = arith.select %196, %189, %197 : vector<512x32xi1>, vector<512x32xf32>
    %199 = vector.extract_strided_slice %186 {offsets = [0, 0], sizes = [1, 32], strides = [1, 1]} : vector<9x32xf32> to vector<1x32xf32>
    %200 = vector.broadcast %199 : vector<1x32xf32> to vector<512x32xf32>
    %201 = arith.mulf %198, %200 : vector<512x32xf32>
    %cst_65 = arith.constant 0.000000e+00 : f32
    %202 = vector.broadcast %cst_65 : f32 to vector<16x32xf32>
    %203 = vector.extract_strided_slice %178 {offsets = [0, 0], sizes = [496, 32], strides = [1, 1]} : vector<512x32xf32> to vector<496x32xf32>
    %204 = tpu.concatenate %202, %203 in 0 : vector<16x32xf32>, vector<496x32xf32> -> vector<512x32xf32>
    %c1_i32_66 = arith.constant 1 : i32
    %205 = vector.broadcast %c1_i32_66 : i32 to vector<512x1xi32>
    %206 = arith.cmpi sge, %183, %205 : vector<512x1xi32>
    %cst_67 = arith.constant 0.000000e+00 : f32
    %207 = vector.shape_cast %206 : vector<512x1xi1> to vector<512x1xi1>
    %208 = vector.broadcast %207 : vector<512x1xi1> to vector<512x32xi1>
    %209 = vector.broadcast %cst_67 : f32 to vector<512x32xf32>
    %210 = arith.select %208, %204, %209 : vector<512x32xi1>, vector<512x32xf32>
    %211 = vector.extract_strided_slice %186 {offsets = [1, 0], sizes = [1, 32], strides = [1, 1]} : vector<9x32xf32> to vector<1x32xf32>
    %212 = vector.broadcast %211 : vector<1x32xf32> to vector<512x32xf32>
    %213 = arith.mulf %210, %212 : vector<512x32xf32>
    %214 = arith.addf %201, %213 : vector<512x32xf32>
    %cst_68 = arith.constant 0.000000e+00 : f32
    %215 = vector.broadcast %cst_68 : f32 to vector<15x32xf32>
    %216 = vector.extract_strided_slice %178 {offsets = [0, 0], sizes = [497, 32], strides = [1, 1]} : vector<512x32xf32> to vector<497x32xf32>
    %217 = tpu.concatenate %215, %216 in 0 : vector<15x32xf32>, vector<497x32xf32> -> vector<512x32xf32>
    %c1_i32_69 = arith.constant 1 : i32
    %218 = vector.broadcast %c1_i32_69 : i32 to vector<512x1xi32>
    %219 = arith.cmpi sge, %183, %218 : vector<512x1xi32>
    %c15_i32_70 = arith.constant 15 : i32
    %220 = vector.broadcast %c15_i32_70 : i32 to vector<512x1xi32>
    %221 = arith.cmpi slt, %185, %220 : vector<512x1xi32>
    %222 = arith.andi %219, %221 : vector<512x1xi1>
    %cst_71 = arith.constant 0.000000e+00 : f32
    %223 = vector.shape_cast %222 : vector<512x1xi1> to vector<512x1xi1>
    %224 = vector.broadcast %223 : vector<512x1xi1> to vector<512x32xi1>
    %225 = vector.broadcast %cst_71 : f32 to vector<512x32xf32>
    %226 = arith.select %224, %217, %225 : vector<512x32xi1>, vector<512x32xf32>
    %227 = vector.extract_strided_slice %186 {offsets = [2, 0], sizes = [1, 32], strides = [1, 1]} : vector<9x32xf32> to vector<1x32xf32>
    %228 = vector.broadcast %227 : vector<1x32xf32> to vector<512x32xf32>
    %229 = arith.mulf %226, %228 : vector<512x32xf32>
    %230 = arith.addf %214, %229 : vector<512x32xf32>
    %cst_72 = arith.constant 0.000000e+00 : f32
    %231 = vector.broadcast %cst_72 : f32 to vector<1x32xf32>
    %232 = vector.extract_strided_slice %178 {offsets = [0, 0], sizes = [511, 32], strides = [1, 1]} : vector<512x32xf32> to vector<511x32xf32>
    %233 = tpu.concatenate %231, %232 in 0 : vector<1x32xf32>, vector<511x32xf32> -> vector<512x32xf32>
    %c1_i32_73 = arith.constant 1 : i32
    %234 = vector.broadcast %c1_i32_73 : i32 to vector<512x1xi32>
    %235 = arith.cmpi sge, %185, %234 : vector<512x1xi32>
    %cst_74 = arith.constant 0.000000e+00 : f32
    %236 = vector.shape_cast %235 : vector<512x1xi1> to vector<512x1xi1>
    %237 = vector.broadcast %236 : vector<512x1xi1> to vector<512x32xi1>
    %238 = vector.broadcast %cst_74 : f32 to vector<512x32xf32>
    %239 = arith.select %237, %233, %238 : vector<512x32xi1>, vector<512x32xf32>
    %240 = vector.extract_strided_slice %186 {offsets = [3, 0], sizes = [1, 32], strides = [1, 1]} : vector<9x32xf32> to vector<1x32xf32>
    %241 = vector.broadcast %240 : vector<1x32xf32> to vector<512x32xf32>
    %242 = arith.mulf %239, %241 : vector<512x32xf32>
    %243 = arith.addf %230, %242 : vector<512x32xf32>
    %244 = vector.extract_strided_slice %186 {offsets = [4, 0], sizes = [1, 32], strides = [1, 1]} : vector<9x32xf32> to vector<1x32xf32>
    %245 = vector.broadcast %244 : vector<1x32xf32> to vector<512x32xf32>
    %246 = arith.mulf %178, %245 : vector<512x32xf32>
    %247 = arith.addf %243, %246 : vector<512x32xf32>
    %cst_75 = arith.constant 0.000000e+00 : f32
    %248 = vector.broadcast %cst_75 : f32 to vector<1x32xf32>
    %249 = vector.extract_strided_slice %178 {offsets = [1, 0], sizes = [511, 32], strides = [1, 1]} : vector<512x32xf32> to vector<511x32xf32>
    %250 = tpu.concatenate %249, %248 in 0 : vector<511x32xf32>, vector<1x32xf32> -> vector<512x32xf32>
    %c15_i32_76 = arith.constant 15 : i32
    %251 = vector.broadcast %c15_i32_76 : i32 to vector<512x1xi32>
    %252 = arith.cmpi slt, %185, %251 : vector<512x1xi32>
    %cst_77 = arith.constant 0.000000e+00 : f32
    %253 = vector.shape_cast %252 : vector<512x1xi1> to vector<512x1xi1>
    %254 = vector.broadcast %253 : vector<512x1xi1> to vector<512x32xi1>
    %255 = vector.broadcast %cst_77 : f32 to vector<512x32xf32>
    %256 = arith.select %254, %250, %255 : vector<512x32xi1>, vector<512x32xf32>
    %257 = vector.extract_strided_slice %186 {offsets = [5, 0], sizes = [1, 32], strides = [1, 1]} : vector<9x32xf32> to vector<1x32xf32>
    %258 = vector.broadcast %257 : vector<1x32xf32> to vector<512x32xf32>
    %259 = arith.mulf %256, %258 : vector<512x32xf32>
    %260 = arith.addf %247, %259 : vector<512x32xf32>
    %cst_78 = arith.constant 0.000000e+00 : f32
    %261 = vector.broadcast %cst_78 : f32 to vector<15x32xf32>
    %262 = vector.extract_strided_slice %178 {offsets = [15, 0], sizes = [497, 32], strides = [1, 1]} : vector<512x32xf32> to vector<497x32xf32>
    %263 = tpu.concatenate %262, %261 in 0 : vector<497x32xf32>, vector<15x32xf32> -> vector<512x32xf32>
    %c15_i32_79 = arith.constant 15 : i32
    %264 = vector.broadcast %c15_i32_79 : i32 to vector<512x1xi32>
    %265 = arith.cmpi slt, %183, %264 : vector<512x1xi32>
    %c1_i32_80 = arith.constant 1 : i32
    %266 = vector.broadcast %c1_i32_80 : i32 to vector<512x1xi32>
    %267 = arith.cmpi sge, %185, %266 : vector<512x1xi32>
    %268 = arith.andi %265, %267 : vector<512x1xi1>
    %cst_81 = arith.constant 0.000000e+00 : f32
    %269 = vector.shape_cast %268 : vector<512x1xi1> to vector<512x1xi1>
    %270 = vector.broadcast %269 : vector<512x1xi1> to vector<512x32xi1>
    %271 = vector.broadcast %cst_81 : f32 to vector<512x32xf32>
    %272 = arith.select %270, %263, %271 : vector<512x32xi1>, vector<512x32xf32>
    %273 = vector.extract_strided_slice %186 {offsets = [6, 0], sizes = [1, 32], strides = [1, 1]} : vector<9x32xf32> to vector<1x32xf32>
    %274 = vector.broadcast %273 : vector<1x32xf32> to vector<512x32xf32>
    %275 = arith.mulf %272, %274 : vector<512x32xf32>
    %276 = arith.addf %260, %275 : vector<512x32xf32>
    %cst_82 = arith.constant 0.000000e+00 : f32
    %277 = vector.broadcast %cst_82 : f32 to vector<16x32xf32>
    %278 = vector.extract_strided_slice %178 {offsets = [16, 0], sizes = [496, 32], strides = [1, 1]} : vector<512x32xf32> to vector<496x32xf32>
    %279 = tpu.concatenate %278, %277 in 0 : vector<496x32xf32>, vector<16x32xf32> -> vector<512x32xf32>
    %c15_i32_83 = arith.constant 15 : i32
    %280 = vector.broadcast %c15_i32_83 : i32 to vector<512x1xi32>
    %281 = arith.cmpi slt, %183, %280 : vector<512x1xi32>
    %cst_84 = arith.constant 0.000000e+00 : f32
    %282 = vector.shape_cast %281 : vector<512x1xi1> to vector<512x1xi1>
    %283 = vector.broadcast %282 : vector<512x1xi1> to vector<512x32xi1>
    %284 = vector.broadcast %cst_84 : f32 to vector<512x32xf32>
    %285 = arith.select %283, %279, %284 : vector<512x32xi1>, vector<512x32xf32>
    %286 = vector.extract_strided_slice %186 {offsets = [7, 0], sizes = [1, 32], strides = [1, 1]} : vector<9x32xf32> to vector<1x32xf32>
    %287 = vector.broadcast %286 : vector<1x32xf32> to vector<512x32xf32>
    %288 = arith.mulf %285, %287 : vector<512x32xf32>
    %289 = arith.addf %276, %288 : vector<512x32xf32>
    %cst_85 = arith.constant 0.000000e+00 : f32
    %290 = vector.broadcast %cst_85 : f32 to vector<17x32xf32>
    %291 = vector.extract_strided_slice %178 {offsets = [17, 0], sizes = [495, 32], strides = [1, 1]} : vector<512x32xf32> to vector<495x32xf32>
    %292 = tpu.concatenate %291, %290 in 0 : vector<495x32xf32>, vector<17x32xf32> -> vector<512x32xf32>
    %c15_i32_86 = arith.constant 15 : i32
    %293 = vector.broadcast %c15_i32_86 : i32 to vector<512x1xi32>
    %294 = arith.cmpi slt, %183, %293 : vector<512x1xi32>
    %c15_i32_87 = arith.constant 15 : i32
    %295 = vector.broadcast %c15_i32_87 : i32 to vector<512x1xi32>
    %296 = arith.cmpi slt, %185, %295 : vector<512x1xi32>
    %297 = arith.andi %294, %296 : vector<512x1xi1>
    %cst_88 = arith.constant 0.000000e+00 : f32
    %298 = vector.shape_cast %297 : vector<512x1xi1> to vector<512x1xi1>
    %299 = vector.broadcast %298 : vector<512x1xi1> to vector<512x32xi1>
    %300 = vector.broadcast %cst_88 : f32 to vector<512x32xf32>
    %301 = arith.select %299, %292, %300 : vector<512x32xi1>, vector<512x32xf32>
    %302 = vector.extract_strided_slice %186 {offsets = [8, 0], sizes = [1, 32], strides = [1, 1]} : vector<9x32xf32> to vector<1x32xf32>
    %303 = vector.broadcast %302 : vector<1x32xf32> to vector<512x32xf32>
    %304 = arith.mulf %301, %303 : vector<512x32xf32>
    %305 = arith.addf %289, %304 : vector<512x32xf32>
    %c0_89 = arith.constant 0 : index
    %c0_90 = arith.constant 0 : index
    %306 = vector.load %arg13[%c0_89, %c0_90] : memref<128x512xbf16, #tpu.memory_space<vmem>>, vector<128x512xbf16>
    %307 = arith.truncf %305 : vector<512x32xf32> to vector<512x32xbf16>
    %cst_91 = arith.constant dense<0.000000e+00> : vector<128x32xf32>
    %308 = tpu.matmul %306, %307, %cst_91 {dimension_numbers = #tpu.dot_dimension_numbers<[1], [0], [0], [1], [0, 0, 1, 1], [], []>} : vector<128x512xbf16>, vector<512x32xbf16>, vector<128x32xf32> -> vector<128x32xf32>
    %309 = arith.truncf %308 : vector<128x32xf32> to vector<128x32xbf16>
    %c0_92 = arith.constant 0 : index
    %c0_93 = arith.constant 0 : index
    %310 = vector.load %arg10[%c0_92, %c0_93] : memref<32x64xbf16, #tpu.memory_space<vmem>>, vector<32x64xbf16>
    %cst_94 = arith.constant dense<0.000000e+00> : vector<128x64xf32>
    %311 = tpu.matmul %309, %310, %cst_94 {dimension_numbers = #tpu.dot_dimension_numbers<[1], [0], [0], [1], [0, 0, 1, 1], [], []>} : vector<128x32xbf16>, vector<32x64xbf16>, vector<128x64xf32> -> vector<128x64xf32>
    %c0_95 = arith.constant 0 : index
    %c0_96 = arith.constant 0 : index
    %312 = vector.load %arg11[%c0_95, %c0_96] : memref<1x64xf32, #tpu.memory_space<vmem>>, vector<1x64xf32>
    %c0_97 = arith.constant 0 : index
    %c0_98 = arith.constant 0 : index
    %313 = vector.load %arg12[%c0_97, %c0_98] : memref<1x64xf32, #tpu.memory_space<vmem>>, vector<1x64xf32>
    %cst_99 = arith.constant dense<0.000000e+00> : vector<64xf32>
    %314 = vector.multi_reduction <add>, %311, %cst_99 [0] : vector<128x64xf32> to vector<64xf32>
    %315 = vector.shape_cast %314 : vector<64xf32> to vector<1x64xf32>
    %cst_100 = arith.constant 7.812500e-03 : f32
    %316 = vector.broadcast %cst_100 : f32 to vector<1x64xf32>
    %317 = arith.mulf %315, %316 : vector<1x64xf32>
    %318 = vector.broadcast %317 : vector<1x64xf32> to vector<128x64xf32>
    %319 = arith.subf %311, %318 : vector<128x64xf32>
    %320 = arith.mulf %319, %319 : vector<128x64xf32>
    %cst_101 = arith.constant dense<0.000000e+00> : vector<64xf32>
    %321 = vector.multi_reduction <add>, %320, %cst_101 [0] : vector<128x64xf32> to vector<64xf32>
    %322 = vector.shape_cast %321 : vector<64xf32> to vector<1x64xf32>
    %cst_102 = arith.constant 7.812500e-03 : f32
    %323 = vector.broadcast %cst_102 : f32 to vector<1x64xf32>
    %324 = arith.mulf %322, %323 : vector<1x64xf32>
    %cst_103 = arith.constant 9.99999974E-6 : f32
    %325 = vector.broadcast %cst_103 : f32 to vector<1x64xf32>
    %326 = arith.addf %324, %325 : vector<1x64xf32>
    %327 = math.rsqrt %326 : vector<1x64xf32>
    %328 = arith.mulf %312, %327 : vector<1x64xf32>
    %329 = vector.broadcast %328 : vector<1x64xf32> to vector<128x64xf32>
    %330 = arith.mulf %319, %329 : vector<128x64xf32>
    %331 = vector.broadcast %313 : vector<1x64xf32> to vector<128x64xf32>
    %332 = arith.addf %330, %331 : vector<128x64xf32>
    %cst_104 = arith.constant 0.000000e+00 : f32
    %333 = vector.broadcast %cst_104 : f32 to vector<128x64xf32>
    %334 = arith.maximumf %332, %333 : vector<128x64xf32>
    %335 = tpu.iota {dimensions = array<i32: 0>} : vector<128x1xi32>
    %c3_i32 = arith.constant 3 : i32
    %336 = vector.broadcast %c3_i32 : i32 to vector<128x1xi32>
    %337 = arith.shrsi %335, %336 : vector<128x1xi32>
    %c7_i32 = arith.constant 7 : i32
    %338 = vector.broadcast %c7_i32 : i32 to vector<128x1xi32>
    %339 = arith.andi %337, %338 : vector<128x1xi32>
    %c7_i32_105 = arith.constant 7 : i32
    %340 = vector.broadcast %c7_i32_105 : i32 to vector<128x1xi32>
    %341 = arith.andi %335, %340 : vector<128x1xi32>
    %c0_106 = arith.constant 0 : index
    %c0_107 = arith.constant 0 : index
    %342 = vector.load %arg14[%c0_106, %c0_107] : memref<9x64xf32, #tpu.memory_space<vmem>>, vector<9x64xf32>
    %cst_108 = arith.constant 0.000000e+00 : f32
    %343 = vector.broadcast %cst_108 : f32 to vector<9x64xf32>
    %344 = vector.extract_strided_slice %334 {offsets = [0, 0], sizes = [119, 64], strides = [1, 1]} : vector<128x64xf32> to vector<119x64xf32>
    %345 = tpu.concatenate %343, %344 in 0 : vector<9x64xf32>, vector<119x64xf32> -> vector<128x64xf32>
    %c1_i32_109 = arith.constant 1 : i32
    %346 = vector.broadcast %c1_i32_109 : i32 to vector<128x1xi32>
    %347 = arith.cmpi sge, %339, %346 : vector<128x1xi32>
    %c1_i32_110 = arith.constant 1 : i32
    %348 = vector.broadcast %c1_i32_110 : i32 to vector<128x1xi32>
    %349 = arith.cmpi sge, %341, %348 : vector<128x1xi32>
    %350 = arith.andi %347, %349 : vector<128x1xi1>
    %cst_111 = arith.constant 0.000000e+00 : f32
    %351 = vector.shape_cast %350 : vector<128x1xi1> to vector<128x1xi1>
    %352 = vector.broadcast %351 : vector<128x1xi1> to vector<128x64xi1>
    %353 = vector.broadcast %cst_111 : f32 to vector<128x64xf32>
    %354 = arith.select %352, %345, %353 : vector<128x64xi1>, vector<128x64xf32>
    %355 = vector.extract_strided_slice %342 {offsets = [0, 0], sizes = [1, 64], strides = [1, 1]} : vector<9x64xf32> to vector<1x64xf32>
    %356 = vector.broadcast %355 : vector<1x64xf32> to vector<128x64xf32>
    %357 = arith.mulf %354, %356 : vector<128x64xf32>
    %cst_112 = arith.constant 0.000000e+00 : f32
    %358 = vector.broadcast %cst_112 : f32 to vector<8x64xf32>
    %359 = vector.extract_strided_slice %334 {offsets = [0, 0], sizes = [120, 64], strides = [1, 1]} : vector<128x64xf32> to vector<120x64xf32>
    %360 = tpu.concatenate %358, %359 in 0 : vector<8x64xf32>, vector<120x64xf32> -> vector<128x64xf32>
    %c1_i32_113 = arith.constant 1 : i32
    %361 = vector.broadcast %c1_i32_113 : i32 to vector<128x1xi32>
    %362 = arith.cmpi sge, %339, %361 : vector<128x1xi32>
    %cst_114 = arith.constant 0.000000e+00 : f32
    %363 = vector.shape_cast %362 : vector<128x1xi1> to vector<128x1xi1>
    %364 = vector.broadcast %363 : vector<128x1xi1> to vector<128x64xi1>
    %365 = vector.broadcast %cst_114 : f32 to vector<128x64xf32>
    %366 = arith.select %364, %360, %365 : vector<128x64xi1>, vector<128x64xf32>
    %367 = vector.extract_strided_slice %342 {offsets = [1, 0], sizes = [1, 64], strides = [1, 1]} : vector<9x64xf32> to vector<1x64xf32>
    %368 = vector.broadcast %367 : vector<1x64xf32> to vector<128x64xf32>
    %369 = arith.mulf %366, %368 : vector<128x64xf32>
    %370 = arith.addf %357, %369 : vector<128x64xf32>
    %cst_115 = arith.constant 0.000000e+00 : f32
    %371 = vector.broadcast %cst_115 : f32 to vector<7x64xf32>
    %372 = vector.extract_strided_slice %334 {offsets = [0, 0], sizes = [121, 64], strides = [1, 1]} : vector<128x64xf32> to vector<121x64xf32>
    %373 = tpu.concatenate %371, %372 in 0 : vector<7x64xf32>, vector<121x64xf32> -> vector<128x64xf32>
    %c1_i32_116 = arith.constant 1 : i32
    %374 = vector.broadcast %c1_i32_116 : i32 to vector<128x1xi32>
    %375 = arith.cmpi sge, %339, %374 : vector<128x1xi32>
    %c7_i32_117 = arith.constant 7 : i32
    %376 = vector.broadcast %c7_i32_117 : i32 to vector<128x1xi32>
    %377 = arith.cmpi slt, %341, %376 : vector<128x1xi32>
    %378 = arith.andi %375, %377 : vector<128x1xi1>
    %cst_118 = arith.constant 0.000000e+00 : f32
    %379 = vector.shape_cast %378 : vector<128x1xi1> to vector<128x1xi1>
    %380 = vector.broadcast %379 : vector<128x1xi1> to vector<128x64xi1>
    %381 = vector.broadcast %cst_118 : f32 to vector<128x64xf32>
    %382 = arith.select %380, %373, %381 : vector<128x64xi1>, vector<128x64xf32>
    %383 = vector.extract_strided_slice %342 {offsets = [2, 0], sizes = [1, 64], strides = [1, 1]} : vector<9x64xf32> to vector<1x64xf32>
    %384 = vector.broadcast %383 : vector<1x64xf32> to vector<128x64xf32>
    %385 = arith.mulf %382, %384 : vector<128x64xf32>
    %386 = arith.addf %370, %385 : vector<128x64xf32>
    %cst_119 = arith.constant 0.000000e+00 : f32
    %387 = vector.broadcast %cst_119 : f32 to vector<1x64xf32>
    %388 = vector.extract_strided_slice %334 {offsets = [0, 0], sizes = [127, 64], strides = [1, 1]} : vector<128x64xf32> to vector<127x64xf32>
    %389 = tpu.concatenate %387, %388 in 0 : vector<1x64xf32>, vector<127x64xf32> -> vector<128x64xf32>
    %c1_i32_120 = arith.constant 1 : i32
    %390 = vector.broadcast %c1_i32_120 : i32 to vector<128x1xi32>
    %391 = arith.cmpi sge, %341, %390 : vector<128x1xi32>
    %cst_121 = arith.constant 0.000000e+00 : f32
    %392 = vector.shape_cast %391 : vector<128x1xi1> to vector<128x1xi1>
    %393 = vector.broadcast %392 : vector<128x1xi1> to vector<128x64xi1>
    %394 = vector.broadcast %cst_121 : f32 to vector<128x64xf32>
    %395 = arith.select %393, %389, %394 : vector<128x64xi1>, vector<128x64xf32>
    %396 = vector.extract_strided_slice %342 {offsets = [3, 0], sizes = [1, 64], strides = [1, 1]} : vector<9x64xf32> to vector<1x64xf32>
    %397 = vector.broadcast %396 : vector<1x64xf32> to vector<128x64xf32>
    %398 = arith.mulf %395, %397 : vector<128x64xf32>
    %399 = arith.addf %386, %398 : vector<128x64xf32>
    %400 = vector.extract_strided_slice %342 {offsets = [4, 0], sizes = [1, 64], strides = [1, 1]} : vector<9x64xf32> to vector<1x64xf32>
    %401 = vector.broadcast %400 : vector<1x64xf32> to vector<128x64xf32>
    %402 = arith.mulf %334, %401 : vector<128x64xf32>
    %403 = arith.addf %399, %402 : vector<128x64xf32>
    %cst_122 = arith.constant 0.000000e+00 : f32
    %404 = vector.broadcast %cst_122 : f32 to vector<1x64xf32>
    %405 = vector.extract_strided_slice %334 {offsets = [1, 0], sizes = [127, 64], strides = [1, 1]} : vector<128x64xf32> to vector<127x64xf32>
    %406 = tpu.concatenate %405, %404 in 0 : vector<127x64xf32>, vector<1x64xf32> -> vector<128x64xf32>
    %c7_i32_123 = arith.constant 7 : i32
    %407 = vector.broadcast %c7_i32_123 : i32 to vector<128x1xi32>
    %408 = arith.cmpi slt, %341, %407 : vector<128x1xi32>
    %cst_124 = arith.constant 0.000000e+00 : f32
    %409 = vector.shape_cast %408 : vector<128x1xi1> to vector<128x1xi1>
    %410 = vector.broadcast %409 : vector<128x1xi1> to vector<128x64xi1>
    %411 = vector.broadcast %cst_124 : f32 to vector<128x64xf32>
    %412 = arith.select %410, %406, %411 : vector<128x64xi1>, vector<128x64xf32>
    %413 = vector.extract_strided_slice %342 {offsets = [5, 0], sizes = [1, 64], strides = [1, 1]} : vector<9x64xf32> to vector<1x64xf32>
    %414 = vector.broadcast %413 : vector<1x64xf32> to vector<128x64xf32>
    %415 = arith.mulf %412, %414 : vector<128x64xf32>
    %416 = arith.addf %403, %415 : vector<128x64xf32>
    %cst_125 = arith.constant 0.000000e+00 : f32
    %417 = vector.broadcast %cst_125 : f32 to vector<7x64xf32>
    %418 = vector.extract_strided_slice %334 {offsets = [7, 0], sizes = [121, 64], strides = [1, 1]} : vector<128x64xf32> to vector<121x64xf32>
    %419 = tpu.concatenate %418, %417 in 0 : vector<121x64xf32>, vector<7x64xf32> -> vector<128x64xf32>
    %c7_i32_126 = arith.constant 7 : i32
    %420 = vector.broadcast %c7_i32_126 : i32 to vector<128x1xi32>
    %421 = arith.cmpi slt, %339, %420 : vector<128x1xi32>
    %c1_i32_127 = arith.constant 1 : i32
    %422 = vector.broadcast %c1_i32_127 : i32 to vector<128x1xi32>
    %423 = arith.cmpi sge, %341, %422 : vector<128x1xi32>
    %424 = arith.andi %421, %423 : vector<128x1xi1>
    %cst_128 = arith.constant 0.000000e+00 : f32
    %425 = vector.shape_cast %424 : vector<128x1xi1> to vector<128x1xi1>
    %426 = vector.broadcast %425 : vector<128x1xi1> to vector<128x64xi1>
    %427 = vector.broadcast %cst_128 : f32 to vector<128x64xf32>
    %428 = arith.select %426, %419, %427 : vector<128x64xi1>, vector<128x64xf32>
    %429 = vector.extract_strided_slice %342 {offsets = [6, 0], sizes = [1, 64], strides = [1, 1]} : vector<9x64xf32> to vector<1x64xf32>
    %430 = vector.broadcast %429 : vector<1x64xf32> to vector<128x64xf32>
    %431 = arith.mulf %428, %430 : vector<128x64xf32>
    %432 = arith.addf %416, %431 : vector<128x64xf32>
    %cst_129 = arith.constant 0.000000e+00 : f32
    %433 = vector.broadcast %cst_129 : f32 to vector<8x64xf32>
    %434 = vector.extract_strided_slice %334 {offsets = [8, 0], sizes = [120, 64], strides = [1, 1]} : vector<128x64xf32> to vector<120x64xf32>
    %435 = tpu.concatenate %434, %433 in 0 : vector<120x64xf32>, vector<8x64xf32> -> vector<128x64xf32>
    %c7_i32_130 = arith.constant 7 : i32
    %436 = vector.broadcast %c7_i32_130 : i32 to vector<128x1xi32>
    %437 = arith.cmpi slt, %339, %436 : vector<128x1xi32>
    %cst_131 = arith.constant 0.000000e+00 : f32
    %438 = vector.shape_cast %437 : vector<128x1xi1> to vector<128x1xi1>
    %439 = vector.broadcast %438 : vector<128x1xi1> to vector<128x64xi1>
    %440 = vector.broadcast %cst_131 : f32 to vector<128x64xf32>
    %441 = arith.select %439, %435, %440 : vector<128x64xi1>, vector<128x64xf32>
    %442 = vector.extract_strided_slice %342 {offsets = [7, 0], sizes = [1, 64], strides = [1, 1]} : vector<9x64xf32> to vector<1x64xf32>
    %443 = vector.broadcast %442 : vector<1x64xf32> to vector<128x64xf32>
    %444 = arith.mulf %441, %443 : vector<128x64xf32>
    %445 = arith.addf %432, %444 : vector<128x64xf32>
    %cst_132 = arith.constant 0.000000e+00 : f32
    %446 = vector.broadcast %cst_132 : f32 to vector<9x64xf32>
    %447 = vector.extract_strided_slice %334 {offsets = [9, 0], sizes = [119, 64], strides = [1, 1]} : vector<128x64xf32> to vector<119x64xf32>
    %448 = tpu.concatenate %447, %446 in 0 : vector<119x64xf32>, vector<9x64xf32> -> vector<128x64xf32>
    %c7_i32_133 = arith.constant 7 : i32
    %449 = vector.broadcast %c7_i32_133 : i32 to vector<128x1xi32>
    %450 = arith.cmpi slt, %339, %449 : vector<128x1xi32>
    %c7_i32_134 = arith.constant 7 : i32
    %451 = vector.broadcast %c7_i32_134 : i32 to vector<128x1xi32>
    %452 = arith.cmpi slt, %341, %451 : vector<128x1xi32>
    %453 = arith.andi %450, %452 : vector<128x1xi1>
    %cst_135 = arith.constant 0.000000e+00 : f32
    %454 = vector.shape_cast %453 : vector<128x1xi1> to vector<128x1xi1>
    %455 = vector.broadcast %454 : vector<128x1xi1> to vector<128x64xi1>
    %456 = vector.broadcast %cst_135 : f32 to vector<128x64xf32>
    %457 = arith.select %455, %448, %456 : vector<128x64xi1>, vector<128x64xf32>
    %458 = vector.extract_strided_slice %342 {offsets = [8, 0], sizes = [1, 64], strides = [1, 1]} : vector<9x64xf32> to vector<1x64xf32>
    %459 = vector.broadcast %458 : vector<1x64xf32> to vector<128x64xf32>
    %460 = arith.mulf %457, %459 : vector<128x64xf32>
    %461 = arith.addf %445, %460 : vector<128x64xf32>
    %c0_136 = arith.constant 0 : index
    %c0_137 = arith.constant 0 : index
    %462 = vector.load %arg18[%c0_136, %c0_137] : memref<32x128xbf16, #tpu.memory_space<vmem>>, vector<32x128xbf16>
    %463 = arith.truncf %461 : vector<128x64xf32> to vector<128x64xbf16>
    %cst_138 = arith.constant dense<0.000000e+00> : vector<32x64xf32>
    %464 = tpu.matmul %462, %463, %cst_138 {dimension_numbers = #tpu.dot_dimension_numbers<[1], [0], [0], [1], [0, 0, 1, 1], [], []>} : vector<32x128xbf16>, vector<128x64xbf16>, vector<32x64xf32> -> vector<32x64xf32>
    %465 = arith.truncf %464 : vector<32x64xf32> to vector<32x64xbf16>
    %c0_139 = arith.constant 0 : index
    %c0_140 = arith.constant 0 : index
    %466 = vector.load %arg15[%c0_139, %c0_140] : memref<64x128xbf16, #tpu.memory_space<vmem>>, vector<64x128xbf16>
    %cst_141 = arith.constant dense<0.000000e+00> : vector<32x128xf32>
    %467 = tpu.matmul %465, %466, %cst_141 {dimension_numbers = #tpu.dot_dimension_numbers<[1], [0], [0], [1], [0, 0, 1, 1], [], []>} : vector<32x64xbf16>, vector<64x128xbf16>, vector<32x128xf32> -> vector<32x128xf32>
    %c0_142 = arith.constant 0 : index
    %c0_143 = arith.constant 0 : index
    %468 = vector.load %arg16[%c0_142, %c0_143] : memref<1x128xf32, #tpu.memory_space<vmem>>, vector<1x128xf32>
    %c0_144 = arith.constant 0 : index
    %c0_145 = arith.constant 0 : index
    %469 = vector.load %arg17[%c0_144, %c0_145] : memref<1x128xf32, #tpu.memory_space<vmem>>, vector<1x128xf32>
    %cst_146 = arith.constant dense<0.000000e+00> : vector<128xf32>
    %470 = vector.multi_reduction <add>, %467, %cst_146 [0] : vector<32x128xf32> to vector<128xf32>
    %471 = vector.shape_cast %470 : vector<128xf32> to vector<1x128xf32>
    %cst_147 = arith.constant 3.125000e-02 : f32
    %472 = vector.broadcast %cst_147 : f32 to vector<1x128xf32>
    %473 = arith.mulf %471, %472 : vector<1x128xf32>
    %474 = vector.broadcast %473 : vector<1x128xf32> to vector<32x128xf32>
    %475 = arith.subf %467, %474 : vector<32x128xf32>
    %476 = arith.mulf %475, %475 : vector<32x128xf32>
    %cst_148 = arith.constant dense<0.000000e+00> : vector<128xf32>
    %477 = vector.multi_reduction <add>, %476, %cst_148 [0] : vector<32x128xf32> to vector<128xf32>
    %478 = vector.shape_cast %477 : vector<128xf32> to vector<1x128xf32>
    %cst_149 = arith.constant 3.125000e-02 : f32
    %479 = vector.broadcast %cst_149 : f32 to vector<1x128xf32>
    %480 = arith.mulf %478, %479 : vector<1x128xf32>
    %cst_150 = arith.constant 9.99999974E-6 : f32
    %481 = vector.broadcast %cst_150 : f32 to vector<1x128xf32>
    %482 = arith.addf %480, %481 : vector<1x128xf32>
    %483 = math.rsqrt %482 : vector<1x128xf32>
    %484 = arith.mulf %468, %483 : vector<1x128xf32>
    %485 = vector.broadcast %484 : vector<1x128xf32> to vector<32x128xf32>
    %486 = arith.mulf %475, %485 : vector<32x128xf32>
    %487 = vector.broadcast %469 : vector<1x128xf32> to vector<32x128xf32>
    %488 = arith.addf %486, %487 : vector<32x128xf32>
    %cst_151 = arith.constant 0.000000e+00 : f32
    %489 = vector.broadcast %cst_151 : f32 to vector<32x128xf32>
    %490 = arith.maximumf %488, %489 : vector<32x128xf32>
    %491 = tpu.iota {dimensions = array<i32: 0>} : vector<32x1xi32>
    %c2_i32 = arith.constant 2 : i32
    %492 = vector.broadcast %c2_i32 : i32 to vector<32x1xi32>
    %493 = arith.shrsi %491, %492 : vector<32x1xi32>
    %c3_i32_152 = arith.constant 3 : i32
    %494 = vector.broadcast %c3_i32_152 : i32 to vector<32x1xi32>
    %495 = arith.andi %493, %494 : vector<32x1xi32>
    %c3_i32_153 = arith.constant 3 : i32
    %496 = vector.broadcast %c3_i32_153 : i32 to vector<32x1xi32>
    %497 = arith.andi %491, %496 : vector<32x1xi32>
    %c0_154 = arith.constant 0 : index
    %c0_155 = arith.constant 0 : index
    %498 = vector.load %arg19[%c0_154, %c0_155] : memref<9x128xf32, #tpu.memory_space<vmem>>, vector<9x128xf32>
    %cst_156 = arith.constant 0.000000e+00 : f32
    %499 = vector.broadcast %cst_156 : f32 to vector<5x128xf32>
    %500 = vector.extract_strided_slice %490 {offsets = [0, 0], sizes = [27, 128], strides = [1, 1]} : vector<32x128xf32> to vector<27x128xf32>
    %501 = tpu.concatenate %499, %500 in 0 : vector<5x128xf32>, vector<27x128xf32> -> vector<32x128xf32>
    %c1_i32_157 = arith.constant 1 : i32
    %502 = vector.broadcast %c1_i32_157 : i32 to vector<32x1xi32>
    %503 = arith.cmpi sge, %495, %502 : vector<32x1xi32>
    %c1_i32_158 = arith.constant 1 : i32
    %504 = vector.broadcast %c1_i32_158 : i32 to vector<32x1xi32>
    %505 = arith.cmpi sge, %497, %504 : vector<32x1xi32>
    %506 = arith.andi %503, %505 : vector<32x1xi1>
    %cst_159 = arith.constant 0.000000e+00 : f32
    %507 = vector.shape_cast %506 : vector<32x1xi1> to vector<32x1xi1>
    %508 = vector.broadcast %507 : vector<32x1xi1> to vector<32x128xi1>
    %509 = vector.broadcast %cst_159 : f32 to vector<32x128xf32>
    %510 = arith.select %508, %501, %509 : vector<32x128xi1>, vector<32x128xf32>
    %511 = vector.extract_strided_slice %498 {offsets = [0, 0], sizes = [1, 128], strides = [1, 1]} : vector<9x128xf32> to vector<1x128xf32>
    %512 = vector.broadcast %511 : vector<1x128xf32> to vector<32x128xf32>
    %513 = arith.mulf %510, %512 : vector<32x128xf32>
    %cst_160 = arith.constant 0.000000e+00 : f32
    %514 = vector.broadcast %cst_160 : f32 to vector<4x128xf32>
    %515 = vector.extract_strided_slice %490 {offsets = [0, 0], sizes = [28, 128], strides = [1, 1]} : vector<32x128xf32> to vector<28x128xf32>
    %516 = tpu.concatenate %514, %515 in 0 : vector<4x128xf32>, vector<28x128xf32> -> vector<32x128xf32>
    %c1_i32_161 = arith.constant 1 : i32
    %517 = vector.broadcast %c1_i32_161 : i32 to vector<32x1xi32>
    %518 = arith.cmpi sge, %495, %517 : vector<32x1xi32>
    %cst_162 = arith.constant 0.000000e+00 : f32
    %519 = vector.shape_cast %518 : vector<32x1xi1> to vector<32x1xi1>
    %520 = vector.broadcast %519 : vector<32x1xi1> to vector<32x128xi1>
    %521 = vector.broadcast %cst_162 : f32 to vector<32x128xf32>
    %522 = arith.select %520, %516, %521 : vector<32x128xi1>, vector<32x128xf32>
    %523 = vector.extract_strided_slice %498 {offsets = [1, 0], sizes = [1, 128], strides = [1, 1]} : vector<9x128xf32> to vector<1x128xf32>
    %524 = vector.broadcast %523 : vector<1x128xf32> to vector<32x128xf32>
    %525 = arith.mulf %522, %524 : vector<32x128xf32>
    %526 = arith.addf %513, %525 : vector<32x128xf32>
    %cst_163 = arith.constant 0.000000e+00 : f32
    %527 = vector.broadcast %cst_163 : f32 to vector<3x128xf32>
    %528 = vector.extract_strided_slice %490 {offsets = [0, 0], sizes = [29, 128], strides = [1, 1]} : vector<32x128xf32> to vector<29x128xf32>
    %529 = tpu.concatenate %527, %528 in 0 : vector<3x128xf32>, vector<29x128xf32> -> vector<32x128xf32>
    %c1_i32_164 = arith.constant 1 : i32
    %530 = vector.broadcast %c1_i32_164 : i32 to vector<32x1xi32>
    %531 = arith.cmpi sge, %495, %530 : vector<32x1xi32>
    %c3_i32_165 = arith.constant 3 : i32
    %532 = vector.broadcast %c3_i32_165 : i32 to vector<32x1xi32>
    %533 = arith.cmpi slt, %497, %532 : vector<32x1xi32>
    %534 = arith.andi %531, %533 : vector<32x1xi1>
    %cst_166 = arith.constant 0.000000e+00 : f32
    %535 = vector.shape_cast %534 : vector<32x1xi1> to vector<32x1xi1>
    %536 = vector.broadcast %535 : vector<32x1xi1> to vector<32x128xi1>
    %537 = vector.broadcast %cst_166 : f32 to vector<32x128xf32>
    %538 = arith.select %536, %529, %537 : vector<32x128xi1>, vector<32x128xf32>
    %539 = vector.extract_strided_slice %498 {offsets = [2, 0], sizes = [1, 128], strides = [1, 1]} : vector<9x128xf32> to vector<1x128xf32>
    %540 = vector.broadcast %539 : vector<1x128xf32> to vector<32x128xf32>
    %541 = arith.mulf %538, %540 : vector<32x128xf32>
    %542 = arith.addf %526, %541 : vector<32x128xf32>
    %cst_167 = arith.constant 0.000000e+00 : f32
    %543 = vector.broadcast %cst_167 : f32 to vector<1x128xf32>
    %544 = vector.extract_strided_slice %490 {offsets = [0, 0], sizes = [31, 128], strides = [1, 1]} : vector<32x128xf32> to vector<31x128xf32>
    %545 = tpu.concatenate %543, %544 in 0 : vector<1x128xf32>, vector<31x128xf32> -> vector<32x128xf32>
    %c1_i32_168 = arith.constant 1 : i32
    %546 = vector.broadcast %c1_i32_168 : i32 to vector<32x1xi32>
    %547 = arith.cmpi sge, %497, %546 : vector<32x1xi32>
    %cst_169 = arith.constant 0.000000e+00 : f32
    %548 = vector.shape_cast %547 : vector<32x1xi1> to vector<32x1xi1>
    %549 = vector.broadcast %548 : vector<32x1xi1> to vector<32x128xi1>
    %550 = vector.broadcast %cst_169 : f32 to vector<32x128xf32>
    %551 = arith.select %549, %545, %550 : vector<32x128xi1>, vector<32x128xf32>
    %552 = vector.extract_strided_slice %498 {offsets = [3, 0], sizes = [1, 128], strides = [1, 1]} : vector<9x128xf32> to vector<1x128xf32>
    %553 = vector.broadcast %552 : vector<1x128xf32> to vector<32x128xf32>
    %554 = arith.mulf %551, %553 : vector<32x128xf32>
    %555 = arith.addf %542, %554 : vector<32x128xf32>
    %556 = vector.extract_strided_slice %498 {offsets = [4, 0], sizes = [1, 128], strides = [1, 1]} : vector<9x128xf32> to vector<1x128xf32>
    %557 = vector.broadcast %556 : vector<1x128xf32> to vector<32x128xf32>
    %558 = arith.mulf %490, %557 : vector<32x128xf32>
    %559 = arith.addf %555, %558 : vector<32x128xf32>
    %cst_170 = arith.constant 0.000000e+00 : f32
    %560 = vector.broadcast %cst_170 : f32 to vector<1x128xf32>
    %561 = vector.extract_strided_slice %490 {offsets = [1, 0], sizes = [31, 128], strides = [1, 1]} : vector<32x128xf32> to vector<31x128xf32>
    %562 = tpu.concatenate %561, %560 in 0 : vector<31x128xf32>, vector<1x128xf32> -> vector<32x128xf32>
    %c3_i32_171 = arith.constant 3 : i32
    %563 = vector.broadcast %c3_i32_171 : i32 to vector<32x1xi32>
    %564 = arith.cmpi slt, %497, %563 : vector<32x1xi32>
    %cst_172 = arith.constant 0.000000e+00 : f32
    %565 = vector.shape_cast %564 : vector<32x1xi1> to vector<32x1xi1>
    %566 = vector.broadcast %565 : vector<32x1xi1> to vector<32x128xi1>
    %567 = vector.broadcast %cst_172 : f32 to vector<32x128xf32>
    %568 = arith.select %566, %562, %567 : vector<32x128xi1>, vector<32x128xf32>
    %569 = vector.extract_strided_slice %498 {offsets = [5, 0], sizes = [1, 128], strides = [1, 1]} : vector<9x128xf32> to vector<1x128xf32>
    %570 = vector.broadcast %569 : vector<1x128xf32> to vector<32x128xf32>
    %571 = arith.mulf %568, %570 : vector<32x128xf32>
    %572 = arith.addf %559, %571 : vector<32x128xf32>
    %cst_173 = arith.constant 0.000000e+00 : f32
    %573 = vector.broadcast %cst_173 : f32 to vector<3x128xf32>
    %574 = vector.extract_strided_slice %490 {offsets = [3, 0], sizes = [29, 128], strides = [1, 1]} : vector<32x128xf32> to vector<29x128xf32>
    %575 = tpu.concatenate %574, %573 in 0 : vector<29x128xf32>, vector<3x128xf32> -> vector<32x128xf32>
    %c3_i32_174 = arith.constant 3 : i32
    %576 = vector.broadcast %c3_i32_174 : i32 to vector<32x1xi32>
    %577 = arith.cmpi slt, %495, %576 : vector<32x1xi32>
    %c1_i32_175 = arith.constant 1 : i32
    %578 = vector.broadcast %c1_i32_175 : i32 to vector<32x1xi32>
    %579 = arith.cmpi sge, %497, %578 : vector<32x1xi32>
    %580 = arith.andi %577, %579 : vector<32x1xi1>
    %cst_176 = arith.constant 0.000000e+00 : f32
    %581 = vector.shape_cast %580 : vector<32x1xi1> to vector<32x1xi1>
    %582 = vector.broadcast %581 : vector<32x1xi1> to vector<32x128xi1>
    %583 = vector.broadcast %cst_176 : f32 to vector<32x128xf32>
    %584 = arith.select %582, %575, %583 : vector<32x128xi1>, vector<32x128xf32>
    %585 = vector.extract_strided_slice %498 {offsets = [6, 0], sizes = [1, 128], strides = [1, 1]} : vector<9x128xf32> to vector<1x128xf32>
    %586 = vector.broadcast %585 : vector<1x128xf32> to vector<32x128xf32>
    %587 = arith.mulf %584, %586 : vector<32x128xf32>
    %588 = arith.addf %572, %587 : vector<32x128xf32>
    %cst_177 = arith.constant 0.000000e+00 : f32
    %589 = vector.broadcast %cst_177 : f32 to vector<4x128xf32>
    %590 = vector.extract_strided_slice %490 {offsets = [4, 0], sizes = [28, 128], strides = [1, 1]} : vector<32x128xf32> to vector<28x128xf32>
    %591 = tpu.concatenate %590, %589 in 0 : vector<28x128xf32>, vector<4x128xf32> -> vector<32x128xf32>
    %c3_i32_178 = arith.constant 3 : i32
    %592 = vector.broadcast %c3_i32_178 : i32 to vector<32x1xi32>
    %593 = arith.cmpi slt, %495, %592 : vector<32x1xi32>
    %cst_179 = arith.constant 0.000000e+00 : f32
    %594 = vector.shape_cast %593 : vector<32x1xi1> to vector<32x1xi1>
    %595 = vector.broadcast %594 : vector<32x1xi1> to vector<32x128xi1>
    %596 = vector.broadcast %cst_179 : f32 to vector<32x128xf32>
    %597 = arith.select %595, %591, %596 : vector<32x128xi1>, vector<32x128xf32>
    %598 = vector.extract_strided_slice %498 {offsets = [7, 0], sizes = [1, 128], strides = [1, 1]} : vector<9x128xf32> to vector<1x128xf32>
    %599 = vector.broadcast %598 : vector<1x128xf32> to vector<32x128xf32>
    %600 = arith.mulf %597, %599 : vector<32x128xf32>
    %601 = arith.addf %588, %600 : vector<32x128xf32>
    %cst_180 = arith.constant 0.000000e+00 : f32
    %602 = vector.broadcast %cst_180 : f32 to vector<5x128xf32>
    %603 = vector.extract_strided_slice %490 {offsets = [5, 0], sizes = [27, 128], strides = [1, 1]} : vector<32x128xf32> to vector<27x128xf32>
    %604 = tpu.concatenate %603, %602 in 0 : vector<27x128xf32>, vector<5x128xf32> -> vector<32x128xf32>
    %c3_i32_181 = arith.constant 3 : i32
    %605 = vector.broadcast %c3_i32_181 : i32 to vector<32x1xi32>
    %606 = arith.cmpi slt, %495, %605 : vector<32x1xi32>
    %c3_i32_182 = arith.constant 3 : i32
    %607 = vector.broadcast %c3_i32_182 : i32 to vector<32x1xi32>
    %608 = arith.cmpi slt, %497, %607 : vector<32x1xi32>
    %609 = arith.andi %606, %608 : vector<32x1xi1>
    %cst_183 = arith.constant 0.000000e+00 : f32
    %610 = vector.shape_cast %609 : vector<32x1xi1> to vector<32x1xi1>
    %611 = vector.broadcast %610 : vector<32x1xi1> to vector<32x128xi1>
    %612 = vector.broadcast %cst_183 : f32 to vector<32x128xf32>
    %613 = arith.select %611, %604, %612 : vector<32x128xi1>, vector<32x128xf32>
    %614 = vector.extract_strided_slice %498 {offsets = [8, 0], sizes = [1, 128], strides = [1, 1]} : vector<9x128xf32> to vector<1x128xf32>
    %615 = vector.broadcast %614 : vector<1x128xf32> to vector<32x128xf32>
    %616 = arith.mulf %613, %615 : vector<32x128xf32>
    %617 = arith.addf %601, %616 : vector<32x128xf32>
    %c0_184 = arith.constant 0 : index
    %c0_185 = arith.constant 0 : index
    %618 = vector.load %arg23[%c0_184, %c0_185] : memref<8x32xbf16, #tpu.memory_space<vmem>>, vector<8x32xbf16>
    %619 = arith.truncf %617 : vector<32x128xf32> to vector<32x128xbf16>
    %cst_186 = arith.constant dense<0.000000e+00> : vector<8x128xf32>
    %620 = tpu.matmul %618, %619, %cst_186 {dimension_numbers = #tpu.dot_dimension_numbers<[1], [0], [0], [1], [0, 0, 1, 1], [], []>} : vector<8x32xbf16>, vector<32x128xbf16>, vector<8x128xf32> -> vector<8x128xf32>
    %621 = arith.truncf %620 : vector<8x128xf32> to vector<8x128xbf16>
    %c0_187 = arith.constant 0 : index
    %c0_188 = arith.constant 0 : index
    %622 = vector.load %arg20[%c0_187, %c0_188] : memref<128x256xbf16, #tpu.memory_space<vmem>>, vector<128x256xbf16>
    %cst_189 = arith.constant dense<0.000000e+00> : vector<8x256xf32>
    %623 = tpu.matmul %621, %622, %cst_189 {dimension_numbers = #tpu.dot_dimension_numbers<[1], [0], [0], [1], [0, 0, 1, 1], [], []>} : vector<8x128xbf16>, vector<128x256xbf16>, vector<8x256xf32> -> vector<8x256xf32>
    %c0_190 = arith.constant 0 : index
    %c0_191 = arith.constant 0 : index
    %624 = vector.load %arg21[%c0_190, %c0_191] : memref<1x256xf32, #tpu.memory_space<vmem>>, vector<1x256xf32>
    %c0_192 = arith.constant 0 : index
    %c0_193 = arith.constant 0 : index
    %625 = vector.load %arg22[%c0_192, %c0_193] : memref<1x256xf32, #tpu.memory_space<vmem>>, vector<1x256xf32>
    %cst_194 = arith.constant dense<0.000000e+00> : vector<256xf32>
    %626 = vector.multi_reduction <add>, %623, %cst_194 [0] : vector<8x256xf32> to vector<256xf32>
    %627 = vector.shape_cast %626 : vector<256xf32> to vector<1x256xf32>
    %cst_195 = arith.constant 1.250000e-01 : f32
    %628 = vector.broadcast %cst_195 : f32 to vector<1x256xf32>
    %629 = arith.mulf %627, %628 : vector<1x256xf32>
    %630 = vector.broadcast %629 : vector<1x256xf32> to vector<8x256xf32>
    %631 = arith.subf %623, %630 : vector<8x256xf32>
    %632 = arith.mulf %631, %631 : vector<8x256xf32>
    %cst_196 = arith.constant dense<0.000000e+00> : vector<256xf32>
    %633 = vector.multi_reduction <add>, %632, %cst_196 [0] : vector<8x256xf32> to vector<256xf32>
    %634 = vector.shape_cast %633 : vector<256xf32> to vector<1x256xf32>
    %cst_197 = arith.constant 1.250000e-01 : f32
    %635 = vector.broadcast %cst_197 : f32 to vector<1x256xf32>
    %636 = arith.mulf %634, %635 : vector<1x256xf32>
    %cst_198 = arith.constant 9.99999974E-6 : f32
    %637 = vector.broadcast %cst_198 : f32 to vector<1x256xf32>
    %638 = arith.addf %636, %637 : vector<1x256xf32>
    %639 = math.rsqrt %638 : vector<1x256xf32>
    %640 = arith.mulf %624, %639 : vector<1x256xf32>
    %641 = vector.broadcast %640 : vector<1x256xf32> to vector<8x256xf32>
    %642 = arith.mulf %631, %641 : vector<8x256xf32>
    %643 = vector.broadcast %625 : vector<1x256xf32> to vector<8x256xf32>
    %644 = arith.addf %642, %643 : vector<8x256xf32>
    %cst_199 = arith.constant 0.000000e+00 : f32
    %645 = vector.broadcast %cst_199 : f32 to vector<8x256xf32>
    %646 = arith.maximumf %644, %645 : vector<8x256xf32>
    %647 = vector.extract_strided_slice %646 {offsets = [0, 0], sizes = [4, 256], strides = [1, 1]} : vector<8x256xf32> to vector<4x256xf32>
    %cst_200 = arith.constant dense<0.000000e+00> : vector<256xf32>
    %648 = vector.multi_reduction <add>, %647, %cst_200 [0] : vector<4x256xf32> to vector<256xf32>
    %649 = vector.shape_cast %648 : vector<256xf32> to vector<1x256xf32>
    %cst_201 = arith.constant 4.000000e+00 : f32
    %650 = vector.broadcast %cst_201 : f32 to vector<1x256xf32>
    %651 = arith.divf %649, %650 : vector<1x256xf32>
    %652 = vector.extract_strided_slice %646 {offsets = [4, 0], sizes = [4, 256], strides = [1, 1]} : vector<8x256xf32> to vector<4x256xf32>
    %cst_202 = arith.constant dense<0.000000e+00> : vector<256xf32>
    %653 = vector.multi_reduction <add>, %652, %cst_202 [0] : vector<4x256xf32> to vector<256xf32>
    %654 = vector.shape_cast %653 : vector<256xf32> to vector<1x256xf32>
    %cst_203 = arith.constant 4.000000e+00 : f32
    %655 = vector.broadcast %cst_203 : f32 to vector<1x256xf32>
    %656 = arith.divf %654, %655 : vector<1x256xf32>
    %657 = tpu.concatenate %651, %656 in 0 : vector<1x256xf32>, vector<1x256xf32> -> vector<2x256xf32>
    %658 = arith.truncf %657 : vector<2x256xf32> to vector<2x256xbf16>
    %c0_204 = arith.constant 0 : index
    %c0_205 = arith.constant 0 : index
    %659 = vector.load %arg24[%c0_204, %c0_205] : memref<256x128xbf16, #tpu.memory_space<vmem>>, vector<256x128xbf16>
    %cst_206 = arith.constant dense<0.000000e+00> : vector<2x128xf32>
    %660 = tpu.matmul %658, %659, %cst_206 {dimension_numbers = #tpu.dot_dimension_numbers<[1], [0], [0], [1], [0, 0, 1, 1], [], []>} : vector<2x256xbf16>, vector<256x128xbf16>, vector<2x128xf32> -> vector<2x128xf32>
    %c0_207 = arith.constant 0 : index
    %c0_208 = arith.constant 0 : index
    %661 = vector.load %arg25[%c0_207, %c0_208] : memref<1x128xf32, #tpu.memory_space<vmem>>, vector<1x128xf32>
    %662 = vector.broadcast %661 : vector<1x128xf32> to vector<2x128xf32>
    %663 = arith.addf %660, %662 : vector<2x128xf32>
    %c0_209 = arith.constant 0 : index
    %c0_210 = arith.constant 0 : index
    %664 = vector.load %arg26[%c0_209, %c0_210] : memref<2x128xf32, #tpu.memory_space<vmem>>, vector<2x128xf32>
    tpu.vector_store %arg26[%c0_209, %c0_210], %663 {strides = array<i32>} : memref<2x128xf32, #tpu.memory_space<vmem>>, vector<2x128xf32>,
    return
  }
  func.func @transform_0(%arg0: i32) -> (i32, i32) {
    %c0_i32 = arith.constant 0 : i32
    %c0_i32_0 = arith.constant 0 : i32
    %c0_i32_1 = arith.constant 0 : i32
    return %c0_i32, %c0_i32_0 : i32, i32
  }
  func.func @transform_1(%arg0: i32) -> (i32, i32) {
    %c0_i32 = arith.constant 0 : i32
    %c0_i32_0 = arith.constant 0 : i32
    %c0_i32_1 = arith.constant 0 : i32
    return %c0_i32, %c0_i32_0 : i32, i32
  }
  func.func @transform_2(%arg0: i32) -> (i32, i32) {
    %c0_i32 = arith.constant 0 : i32
    %c0_i32_0 = arith.constant 0 : i32
    %c0_i32_1 = arith.constant 0 : i32
    return %c0_i32, %c0_i32_0 : i32, i32
  }
  func.func @transform_3(%arg0: i32) -> (i32, i32) {
    %c0_i32 = arith.constant 0 : i32
    %c0_i32_0 = arith.constant 0 : i32
    %c0_i32_1 = arith.constant 0 : i32
    return %c0_i32, %c0_i32_0 : i32, i32
  }
  func.func @transform_4(%arg0: i32) -> (i32, i32) {
    %c0_i32 = arith.constant 0 : i32
    %c0_i32_0 = arith.constant 0 : i32
    %c0_i32_1 = arith.constant 0 : i32
    return %c0_i32, %c0_i32_0 : i32, i32
  }
  func.func @transform_5(%arg0: i32) -> (i32, i32) {
    %c0_i32 = arith.constant 0 : i32
    %c0_i32_0 = arith.constant 0 : i32
    %c0_i32_1 = arith.constant 0 : i32
    return %c0_i32, %c0_i32_0 : i32, i32
  }
  func.func @transform_6(%arg0: i32) -> (i32, i32) {
    %c0_i32 = arith.constant 0 : i32
    %c0_i32_0 = arith.constant 0 : i32
    %c0_i32_1 = arith.constant 0 : i32
    return %c0_i32, %c0_i32_0 : i32, i32
  }
  func.func @transform_7(%arg0: i32) -> (i32, i32) {
    %c0_i32 = arith.constant 0 : i32
    %c0_i32_0 = arith.constant 0 : i32
    %c0_i32_1 = arith.constant 0 : i32
    return %c0_i32, %c0_i32_0 : i32, i32
  }
  func.func @transform_8(%arg0: i32) -> (i32, i32) {
    %c0_i32 = arith.constant 0 : i32
    %c0_i32_0 = arith.constant 0 : i32
    %c0_i32_1 = arith.constant 0 : i32
    return %c0_i32, %c0_i32_0 : i32, i32
  }
  func.func @transform_9(%arg0: i32) -> (i32, i32) {
    %c0_i32 = arith.constant 0 : i32
    %c0_i32_0 = arith.constant 0 : i32
    %c0_i32_1 = arith.constant 0 : i32
    return %c0_i32, %c0_i32_0 : i32, i32
  }
  func.func @transform_10(%arg0: i32) -> (i32, i32) {
    %c0_i32 = arith.constant 0 : i32
    %c0_i32_0 = arith.constant 0 : i32
    %c0_i32_1 = arith.constant 0 : i32
    return %c0_i32, %c0_i32_0 : i32, i32
  }
  func.func @transform_11(%arg0: i32) -> (i32, i32) {
    %c0_i32 = arith.constant 0 : i32
    %c0_i32_0 = arith.constant 0 : i32
    %c0_i32_1 = arith.constant 0 : i32
    return %c0_i32, %c0_i32_0 : i32, i32
  }
  func.func @transform_12(%arg0: i32) -> (i32, i32) {
    %c0_i32 = arith.constant 0 : i32
    %c0_i32_0 = arith.constant 0 : i32
    %c0_i32_1 = arith.constant 0 : i32
    return %c0_i32, %c0_i32_0 : i32, i32
  }
  func.func @transform_13(%arg0: i32) -> (i32, i32) {
    %c0_i32 = arith.constant 0 : i32
    %c0_i32_0 = arith.constant 0 : i32
    %c0_i32_1 = arith.constant 0 : i32
    return %c0_i32, %c0_i32_0 : i32, i32
  }
  func.func @transform_14(%arg0: i32) -> (i32, i32) {
    %c0_i32 = arith.constant 0 : i32
    %c0_i32_0 = arith.constant 0 : i32
    %c0_i32_1 = arith.constant 0 : i32
    return %c0_i32, %c0_i32_0 : i32, i32
  }
  func.func @transform_15(%arg0: i32) -> (i32, i32) {
    %c0_i32 = arith.constant 0 : i32
    %c0_i32_0 = arith.constant 0 : i32
    %c0_i32_1 = arith.constant 0 : i32
    return %c0_i32, %c0_i32_0 : i32, i32
  }
  func.func @transform_16(%arg0: i32) -> (i32, i32) {
    %c0_i32 = arith.constant 0 : i32
    %c0_i32_0 = arith.constant 0 : i32
    %c0_i32_1 = arith.constant 0 : i32
    return %c0_i32, %c0_i32_0 : i32, i32
  }
  func.func @transform_17(%arg0: i32) -> (i32, i32) {
    %c0_i32 = arith.constant 0 : i32
    %c0_i32_0 = arith.constant 0 : i32
    %c0_i32_1 = arith.constant 0 : i32
    return %c0_i32, %c0_i32_0 : i32, i32
  }
  func.func @transform_18(%arg0: i32) -> (i32, i32) {
    %c0_i32 = arith.constant 0 : i32
    %c0_i32_0 = arith.constant 0 : i32
    %c0_i32_1 = arith.constant 0 : i32
    return %c0_i32, %c0_i32_0 : i32, i32
  }
  func.func @transform_19(%arg0: i32) -> (i32, i32) {
    %c0_i32 = arith.constant 0 : i32
    %c0_i32_0 = arith.constant 0 : i32
    %c0_i32_1 = arith.constant 0 : i32
    return %c0_i32, %c0_i32_0 : i32, i32
  }
  func.func @transform_20(%arg0: i32) -> (i32, i32) {
    %c0_i32 = arith.constant 0 : i32
    %c0_i32_0 = arith.constant 0 : i32
    %c0_i32_1 = arith.constant 0 : i32
    return %c0_i32, %c0_i32_0 : i32, i32
  }
  func.func @transform_21(%arg0: i32) -> (i32, i32) {
    %c0_i32 = arith.constant 0 : i32
    %c0_i32_0 = arith.constant 0 : i32
    %c0_i32_1 = arith.constant 0 : i32
    return %c0_i32, %c0_i32_0 : i32, i32
  }
  func.func @transform_22(%arg0: i32) -> (i32, i32) {
    %c0_i32 = arith.constant 0 : i32
    %c0_i32_0 = arith.constant 0 : i32
    %c0_i32_1 = arith.constant 0 : i32
    return %c0_i32, %c0_i32_0 : i32, i32
  }
  func.func @transform_23(%arg0: i32) -> (i32, i32) {
    %c0_i32 = arith.constant 0 : i32
    %c0_i32_0 = arith.constant 0 : i32
    %c0_i32_1 = arith.constant 0 : i32
    return %c0_i32, %c0_i32_0 : i32, i32
  }
  func.func @transform_24(%arg0: i32) -> (i32, i32) {
    %c0_i32 = arith.constant 0 : i32
    %c0_i32_0 = arith.constant 0 : i32
    %c0_i32_1 = arith.constant 0 : i32
    return %c0_i32, %c0_i32_0 : i32, i32
  }
  func.func @transform_25(%arg0: i32) -> (i32, i32) {
    %c0_i32 = arith.constant 0 : i32
    %c0_i32_0 = arith.constant 0 : i32
    %c0_i32_1 = arith.constant 0 : i32
    return %c0_i32, %c0_i32_0 : i32, i32
  }
}

</mosaic_0001>

<llo_original>
// kernel: _lambda_.1
$region0: #{_lambda_.1}
  #allocation0 [shape = 'u32[]', space=smem, size = 0x4, offset = 0x4, fixed_abs, tag = 'smem constant byte address 0x4 - core index']
  #allocation1 [shape = 'u32[144,128]{1,0:T(1,128)}', space=vmem, size = 0x12000, scoped, tag = 'internal scratch']
  %s0 = inlined_call_operand.vmem [shape: bf16[512,27], index: 0, kind: input, shape index: {}]
  %s1 = inlined_call_operand.vmem [shape: bf16[27,16], index: 1, kind: input, shape index: {}]
  %s2 = inlined_call_operand.vmem [shape: f32[1,16], index: 2, kind: input, shape index: {}]
  %s3 = inlined_call_operand.vmem [shape: f32[1,16], index: 3, kind: input, shape index: {}]
  %s4 = inlined_call_operand.vmem [shape: f32[9,16], index: 4, kind: input, shape index: {}]
  %s5 = inlined_call_operand.vmem [shape: bf16[16,32], index: 5, kind: input, shape index: {}]
  %s6 = inlined_call_operand.vmem [shape: f32[1,32], index: 6, kind: input, shape index: {}]
  %s7 = inlined_call_operand.vmem [shape: f32[1,32], index: 7, kind: input, shape index: {}]
  %s8 = inlined_call_operand.vmem [shape: f32[9,32], index: 8, kind: input, shape index: {}]
  %s9 = inlined_call_operand.vmem [shape: bf16[32,64], index: 9, kind: input, shape index: {}]
  %s10 = inlined_call_operand.vmem [shape: f32[1,64], index: 10, kind: input, shape index: {}]
  %s11 = inlined_call_operand.vmem [shape: f32[1,64], index: 11, kind: input, shape index: {}]
  %s12 = inlined_call_operand.vmem [shape: bf16[128,512], index: 12, kind: input, shape index: {}]
  %s13 = inlined_call_operand.vmem [shape: f32[9,64], index: 13, kind: input, shape index: {}]
  %s14 = inlined_call_operand.vmem [shape: bf16[64,128], index: 14, kind: input, shape index: {}]
  %s15 = inlined_call_operand.vmem [shape: f32[1,128], index: 15, kind: input, shape index: {}]
  %s16 = inlined_call_operand.vmem [shape: f32[1,128], index: 16, kind: input, shape index: {}]
  %s17 = inlined_call_operand.vmem [shape: bf16[32,128], index: 17, kind: input, shape index: {}]
  %s18 = inlined_call_operand.vmem [shape: f32[9,128], index: 18, kind: input, shape index: {}]
  %s19 = inlined_call_operand.vmem [shape: bf16[128,256], index: 19, kind: input, shape index: {}]
  %s20 = inlined_call_operand.vmem [shape: f32[1,256], index: 20, kind: input, shape index: {}]
  %s21 = inlined_call_operand.vmem [shape: f32[1,256], index: 21, kind: input, shape index: {}]
  %s22 = inlined_call_operand.vmem [shape: bf16[8,32], index: 22, kind: input, shape index: {}]
  %s23 = inlined_call_operand.vmem [shape: bf16[256,128], index: 23, kind: input, shape index: {}]
  %s24 = inlined_call_operand.vmem [shape: f32[1,128], index: 24, kind: input, shape index: {}]
  %s25 = inlined_call_operand.hbm [shape: f32[2,128], index: 25, kind: output, shape index: {}]
  %s26 = sld [smem:[#allocation0]]
  $region110: #{_lambda_.1} parent=0
    _
  %s28 = ssub.s32 1, %s26
  %s29 = scalar_select 0, %s28, %s26
  $region1: #{_lambda_.1} parent=0
    #allocation2 [shape = 'u8[1024]{0}', space=vmem, size = 0x400, scoped, tag = 'output window, operand 0, single buffered']
    #allocation3 [shape = 's32[1]{0}', space=sflag, size = 0x4, scoped, tag = 'scoped memory for _lambda_.1']
    %30 = vsyncpa [#allocation3], 0
    // Predicated region
    $region2: #{_lambda_.1} parent=1 // pred_check
      _
    $region3: #{_lambda_.1} parent=1 // pred_check_branch
      %32 = sbr.rel (0) target = $region5
    $region4: #{_lambda_.1} parent=1 // pred_region
      _
    $region5: #{_lambda_.1} parent=1 // pred_fallthru
      _
    // Predicated region
    $region6: #{_lambda_.1} parent=1 // pred_check
      _
    $region7: #{_lambda_.1} parent=1 // pred_check_branch
      %34 = sbr.rel (0) target = $region9
    $region8: #{_lambda_.1} parent=1 // pred_region
      _
    $region9: #{_lambda_.1} parent=1 // pred_fallthru
      _
    // Predicated region
    $region10: #{_lambda_.1} parent=1 // pred_check
      _
    $region11: #{_lambda_.1} parent=1 // pred_check_branch
      %36 = sbr.rel (0) target = $region13
    $region12: #{_lambda_.1} parent=1 // pred_region
      _
    $region13: #{_lambda_.1} parent=1 // pred_fallthru
      _
    // Predicated region
    $region14: #{_lambda_.1} parent=1 // pred_check
      _
    $region15: #{_lambda_.1} parent=1 // pred_check_branch
      %38 = sbr.rel (0) target = $region17
    $region16: #{_lambda_.1} parent=1 // pred_region
      _
    $region17: #{_lambda_.1} parent=1 // pred_fallthru
      _
    // Predicated region
    $region18: #{_lambda_.1} parent=1 // pred_check
      _
    $region19: #{_lambda_.1} parent=1 // pred_check_branch
      %40 = sbr.rel (0) target = $region21
    $region20: #{_lambda_.1} parent=1 // pred_region
      _
    $region21: #{_lambda_.1} parent=1 // pred_fallthru
      _
    // Predicated region
    $region22: #{_lambda_.1} parent=1 // pred_check
      _
    $region23: #{_lambda_.1} parent=1 // pred_check_branch
      %42 = sbr.rel (0) target = $region25
    $region24: #{_lambda_.1} parent=1 // pred_region
      _
    $region25: #{_lambda_.1} parent=1 // pred_fallthru
      _
    // Predicated region
    $region26: #{_lambda_.1} parent=1 // pred_check
      _
    $region27: #{_lambda_.1} parent=1 // pred_check_branch
      %44 = sbr.rel (0) target = $region29
    $region28: #{_lambda_.1} parent=1 // pred_region
      _
    $region29: #{_lambda_.1} parent=1 // pred_fallthru
      _
    // Predicated region
    $region30: #{_lambda_.1} parent=1 // pred_check
      _
    $region31: #{_lambda_.1} parent=1 // pred_check_branch
      %46 = sbr.rel (0) target = $region33
    $region32: #{_lambda_.1} parent=1 // pred_region
      _
    $region33: #{_lambda_.1} parent=1 // pred_fallthru
      _
    // Predicated region
    $region34: #{_lambda_.1} parent=1 // pred_check
      _
    $region35: #{_lambda_.1} parent=1 // pred_check_branch
      %48 = sbr.rel (0) target = $region37
    $region36: #{_lambda_.1} parent=1 // pred_region
      _
    $region37: #{_lambda_.1} parent=1 // pred_fallthru
      _
    // Predicated region
    $region38: #{_lambda_.1} parent=1 // pred_check
      _
    $region39: #{_lambda_.1} parent=1 // pred_check_branch
      %50 = sbr.rel (0) target = $region41
    $region40: #{_lambda_.1} parent=1 // pred_region
      _
    $region41: #{_lambda_.1} parent=1 // pred_fallthru
      _
    // Predicated region
    $region42: #{_lambda_.1} parent=1 // pred_check
      _
    $region43: #{_lambda_.1} parent=1 // pred_check_branch
      %52 = sbr.rel (0) target = $region45
    $region44: #{_lambda_.1} parent=1 // pred_region
      _
    $region45: #{_lambda_.1} parent=1 // pred_fallthru
      _
    // Predicated region
    $region46: #{_lambda_.1} parent=1 // pred_check
      _
    $region47: #{_lambda_.1} parent=1 // pred_check_branch
      %54 = sbr.rel (0) target = $region49
    $region48: #{_lambda_.1} parent=1 // pred_region
      _
    $region49: #{_lambda_.1} parent=1 // pred_fallthru
      _
    // Predicated region
    $region50: #{_lambda_.1} parent=1 // pred_check
      _
    $region51: #{_lambda_.1} parent=1 // pred_check_branch
      %56 = sbr.rel (0) target = $region53
    $region52: #{_lambda_.1} parent=1 // pred_region
      _
    $region53: #{_lambda_.1} parent=1 // pred_fallthru
      _
    // Predicated region
    $region54: #{_lambda_.1} parent=1 // pred_check
      _
    $region55: #{_lambda_.1} parent=1 // pred_check_branch
      %58 = sbr.rel (0) target = $region57
    $region56: #{_lambda_.1} parent=1 // pred_region
      _
    $region57: #{_lambda_.1} parent=1 // pred_fallthru
      _
    // Predicated region
    $region58: #{_lambda_.1} parent=1 // pred_check
      _
    $region59: #{_lambda_.1} parent=1 // pred_check_branch
      %60 = sbr.rel (0) target = $region61
    $region60: #{_lambda_.1} parent=1 // pred_region
      _
    $region61: #{_lambda_.1} parent=1 // pred_fallthru
      _
    // Predicated region
    $region62: #{_lambda_.1} parent=1 // pred_check
      _
    $region63: #{_lambda_.1} parent=1 // pred_check_branch
      %62 = sbr.rel (0) target = $region65
    $region64: #{_lambda_.1} parent=1 // pred_region
      _
    $region65: #{_lambda_.1} parent=1 // pred_fallthru
      _
    // Predicated region
    $region66: #{_lambda_.1} parent=1 // pred_check
      _
    $region67: #{_lambda_.1} parent=1 // pred_check_branch
      %64 = sbr.rel (0) target = $region69
    $region68: #{_lambda_.1} parent=1 // pred_region
      _
    $region69: #{_lambda_.1} parent=1 // pred_fallthru
      _
    // Predicated region
    $region70: #{_lambda_.1} parent=1 // pred_check
      _
    $region71: #{_lambda_.1} parent=1 // pred_check_branch
      %66 = sbr.rel (0) target = $region73
    $region72: #{_lambda_.1} parent=1 // pred_region
      _
    $region73: #{_lambda_.1} parent=1 // pred_fallthru
      _
    // Predicated region
    $region74: #{_lambda_.1} parent=1 // pred_check
      _
    $region75: #{_lambda_.1} parent=1 // pred_check_branch
      %68 = sbr.rel (0) target = $region77
    $region76: #{_lambda_.1} parent=1 // pred_region
      _
    $region77: #{_lambda_.1} parent=1 // pred_fallthru
      _
    // Predicated region
    $region78: #{_lambda_.1} parent=1 // pred_check
      _
    $region79: #{_lambda_.1} parent=1 // pred_check_branch
      %70 = sbr.rel (0) target = $region81
    $region80: #{_lambda_.1} parent=1 // pred_region
      _
    $region81: #{_lambda_.1} parent=1 // pred_fallthru
      _
    // Predicated region
    $region82: #{_lambda_.1} parent=1 // pred_check
      _
    $region83: #{_lambda_.1} parent=1 // pred_check_branch
      %72 = sbr.rel (0) target = $region85
    $region84: #{_lambda_.1} parent=1 // pred_region
      _
    $region85: #{_lambda_.1} parent=1 // pred_fallthru
      _
    // Predicated region
    $region86: #{_lambda_.1} parent=1 // pred_check
      _
    $region87: #{_lambda_.1} parent=1 // pred_check_branch
      %74 = sbr.rel (0) target = $region89
    $region88: #{_lambda_.1} parent=1 // pred_region
      _
    $region89: #{_lambda_.1} parent=1 // pred_fallthru
      _
    // Predicated region
    $region90: #{_lambda_.1} parent=1 // pred_check
      _
    $region91: #{_lambda_.1} parent=1 // pred_check_branch
      %76 = sbr.rel (0) target = $region93
    $region92: #{_lambda_.1} parent=1 // pred_region
      _
    $region93: #{_lambda_.1} parent=1 // pred_fallthru
      _
    // Predicated region
    $region94: #{_lambda_.1} parent=1 // pred_check
      _
    $region95: #{_lambda_.1} parent=1 // pred_check_branch
      %78 = sbr.rel (0) target = $region97
    $region96: #{_lambda_.1} parent=1 // pred_region
      _
    $region97: #{_lambda_.1} parent=1 // pred_fallthru
      _
    // Predicated region
    $region98: #{_lambda_.1} parent=1 // pred_check
      _
    $region99: #{_lambda_.1} parent=1 // pred_check_branch
      %80 = sbr.rel (0) target = $region101
    $region100: #{_lambda_.1} parent=1 // pred_region
      _
    $region101: #{_lambda_.1} parent=1 // pred_fallthru
      _
    %v82 = vld [vmem:[%s0] sm:$0xf]
    %v83 = vld [vmem:[%s0 + $0x4] sm:$0xf]
    %v84 = vld [vmem:[%s0 + $0x8] sm:$0xf]
    %v85 = vld [vmem:[%s0 + $0xc] sm:$0xf]
    %v86 = vld [vmem:[%s0 + $0x10] sm:$0xf]
    %v87 = vld [vmem:[%s0 + $0x14] sm:$0xf]
    %v88 = vld [vmem:[%s0 + $0x18] sm:$0xf]
    %v89 = vld [vmem:[%s0 + $0x1c] sm:$0xf]
    %v90 = vld [vmem:[%s0 + $0x20] sm:$0xf]
    %v91 = vld [vmem:[%s0 + $0x24] sm:$0xf]
    %v92 = vld [vmem:[%s0 + $0x28] sm:$0xf]
    %v93 = vld [vmem:[%s0 + $0x2c] sm:$0xf]
    %v94 = vld [vmem:[%s0 + $0x30] sm:$0xf]
    %v95 = vld [vmem:[%s0 + $0x34] sm:$0xf]
    %v96 = vld [vmem:[%s0 + $0x38] sm:$0xf]
    %v97 = vld [vmem:[%s0 + $0x3c] sm:$0xf]
    %v98 = vld [vmem:[%s0 + $0x40] sm:$0xf]
    %v99 = vld [vmem:[%s0 + $0x44] sm:$0xf]
    %v100 = vld [vmem:[%s0 + $0x48] sm:$0xf]
    %v101 = vld [vmem:[%s0 + $0x4c] sm:$0xf]
    %v102 = vld [vmem:[%s0 + $0x50] sm:$0xf]
    %v103 = vld [vmem:[%s0 + $0x54] sm:$0xf]
    %v104 = vld [vmem:[%s0 + $0x58] sm:$0xf]
    %v105 = vld [vmem:[%s0 + $0x5c] sm:$0xf]
    %v106 = vld [vmem:[%s0 + $0x60] sm:$0xf]
    %v107 = vld [vmem:[%s0 + $0x64] sm:$0xf]
    %v108 = vld [vmem:[%s0 + $0x68] sm:$0xf]
    %v109 = vld [vmem:[%s0 + $0x6c] sm:$0xf]
    %v110 = vld [vmem:[%s0 + $0x70] sm:$0xf]
    %v111 = vld [vmem:[%s0 + $0x74] sm:$0xf]
    %v112 = vld [vmem:[%s0 + $0x78] sm:$0xf]
    %v113 = vld [vmem:[%s0 + $0x7c] sm:$0xf]
    %v114 = vld [vmem:[%s0 + $0x80] sm:$0xf]
    %v115 = vld [vmem:[%s0 + $0x84] sm:$0xf]
    %v116 = vld [vmem:[%s0 + $0x88] sm:$0xf]
    %v117 = vld [vmem:[%s0 + $0x8c] sm:$0xf]
    %v118 = vld [vmem:[%s0 + $0x90] sm:$0xf]
    %v119 = vld [vmem:[%s0 + $0x94] sm:$0xf]
    %v120 = vld [vmem:[%s0 + $0x98] sm:$0xf]
    %v121 = vld [vmem:[%s0 + $0x9c] sm:$0xf]
    %v122 = vld [vmem:[%s0 + $0xa0] sm:$0xf]
    %v123 = vld [vmem:[%s0 + $0xa4] sm:$0xf]
    %v124 = vld [vmem:[%s0 + $0xa8] sm:$0xf]
    %v125 = vld [vmem:[%s0 + $0xac] sm:$0xf]
    %v126 = vld [vmem:[%s0 + $0xb0] sm:$0xf]
    %v127 = vld [vmem:[%s0 + $0xb4] sm:$0xf]
    %v128 = vld [vmem:[%s0 + $0xb8] sm:$0xf]
    %v129 = vld [vmem:[%s0 + $0xbc] sm:$0xf]
    %v130 = vld [vmem:[%s0 + $0xc0] sm:$0xf]
    %v131 = vld [vmem:[%s0 + $0xc4] sm:$0xf]
    %v132 = vld [vmem:[%s0 + $0xc8] sm:$0xf]
    %v133 = vld [vmem:[%s0 + $0xcc] sm:$0xf]
    %v134 = vld [vmem:[%s0 + $0xd0] sm:$0xf]
    %v135 = vld [vmem:[%s0 + $0xd4] sm:$0xf]
    %v136 = vld [vmem:[%s0 + $0xd8] sm:$0xf]
    %v137 = vld [vmem:[%s0 + $0xdc] sm:$0xf]
    %v138 = vld [vmem:[%s0 + $0xe0] sm:$0xf]
    %v139 = vld [vmem:[%s0 + $0xe4] sm:$0xf]
    %v140 = vld [vmem:[%s0 + $0xe8] sm:$0xf]
    %v141 = vld [vmem:[%s0 + $0xec] sm:$0xf]
    %v142 = vld [vmem:[%s0 + $0xf0] sm:$0xf]
    %v143 = vld [vmem:[%s0 + $0xf4] sm:$0xf]
    %v144 = vld [vmem:[%s0 + $0xf8] sm:$0xf]
    %v145 = vld [vmem:[%s0 + $0xfc] sm:$0xf]
    %v146 = vld [vmem:[%s1] sm:$0xf]
    %v147 = vld [vmem:[%s1 + $0x4] sm:$0xf]
    %v148 = vld [vmem:[%s1 + $0x8] sm:$0xf]
    %v149 = vld [vmem:[%s1 + $0xc] sm:$0x3]
    %v214 = vunpack.c.l.b16 %v82
    %v215 = vunpack.c.l.b16 %v83
    %v216 = vunpack.c.l.b16 %v84
    %v217 = vunpack.c.l.b16 %v85
    %v218 = vunpack.c.l.b16 %v86
    %v219 = vunpack.c.l.b16 %v87
    %v220 = vunpack.c.l.b16 %v88
    %v221 = vunpack.c.l.b16 %v89
    %v222 = vunpack.c.l.b16 %v90
    %v223 = vunpack.c.l.b16 %v91
    %v224 = vunpack.c.l.b16 %v92
    %v225 = vunpack.c.l.b16 %v93
    %v226 = vunpack.c.l.b16 %v94
    %v227 = vunpack.c.l.b16 %v95
    %v228 = vunpack.c.l.b16 %v96
    %v229 = vunpack.c.l.b16 %v97
    %v230 = vunpack.c.l.b16 %v98
    %v231 = vunpack.c.l.b16 %v99
    %v232 = vunpack.c.l.b16 %v100
    %v233 = vunpack.c.l.b16 %v101
    %v234 = vunpack.c.l.b16 %v102
    %v235 = vunpack.c.l.b16 %v103
    %v236 = vunpack.c.l.b16 %v104
    %v237 = vunpack.c.l.b16 %v105
    %v238 = vunpack.c.l.b16 %v106
    %v239 = vunpack.c.l.b16 %v107
    %v240 = vunpack.c.l.b16 %v108
    %v241 = vunpack.c.l.b16 %v109
    %v242 = vunpack.c.l.b16 %v110
    %v243 = vunpack.c.l.b16 %v111
    %v244 = vunpack.c.l.b16 %v112
    %v245 = vunpack.c.l.b16 %v113
    %v246 = vunpack.c.l.b16 %v114
    %v247 = vunpack.c.l.b16 %v115
    %v248 = vunpack.c.l.b16 %v116
    %v249 = vunpack.c.l.b16 %v117
    %v250 = vunpack.c.l.b16 %v118
    %v251 = vunpack.c.l.b16 %v119
    %v252 = vunpack.c.l.b16 %v120
    %v253 = vunpack.c.l.b16 %v121
    %v254 = vunpack.c.l.b16 %v122
    %v255 = vunpack.c.l.b16 %v123
    %v256 = vunpack.c.l.b16 %v124
    %v257 = vunpack.c.l.b16 %v125
    %v258 = vunpack.c.l.b16 %v126
    %v259 = vunpack.c.l.b16 %v127
    %v260 = vunpack.c.l.b16 %v128
    %v261 = vunpack.c.l.b16 %v129
    %v262 = vunpack.c.l.b16 %v130
    %v263 = vunpack.c.l.b16 %v131
    %v264 = vunpack.c.l.b16 %v132
    %v265 = vunpack.c.l.b16 %v133
    %v266 = vunpack.c.l.b16 %v134
    %v267 = vunpack.c.l.b16 %v135
    %v268 = vunpack.c.l.b16 %v136
    %v269 = vunpack.c.l.b16 %v137
    %v270 = vunpack.c.l.b16 %v138
    %v271 = vunpack.c.l.b16 %v139
    %v272 = vunpack.c.l.b16 %v140
    %v273 = vunpack.c.l.b16 %v141
    %v274 = vunpack.c.l.b16 %v142
    %v275 = vunpack.c.l.b16 %v143
    %v276 = vunpack.c.l.b16 %v144
    %v277 = vunpack.c.l.b16 %v145
    %v278 = vpack.c.b16 %v215, %v214
    %v279 = vpack.c.b16 %v217, %v216
    %v280 = vpack.c.b16 %v219, %v218
    %v281 = vpack.c.b16 %v221, %v220
    %v282 = vpack.c.b16 %v223, %v222
    %v283 = vpack.c.b16 %v225, %v224
    %v284 = vpack.c.b16 %v227, %v226
    %v285 = vpack.c.b16 %v229, %v228
    %v286 = vpack.c.b16 %v231, %v230
    %v287 = vpack.c.b16 %v233, %v232
    %v288 = vpack.c.b16 %v235, %v234
    %v289 = vpack.c.b16 %v237, %v236
    %v290 = vpack.c.b16 %v239, %v238
    %v291 = vpack.c.b16 %v241, %v240
    %v292 = vpack.c.b16 %v243, %v242
    %v293 = vpack.c.b16 %v245, %v244
    %v294 = vpack.c.b16 %v247, %v246
    %v295 = vpack.c.b16 %v249, %v248
    %v296 = vpack.c.b16 %v251, %v250
    %v297 = vpack.c.b16 %v253, %v252
    %v298 = vpack.c.b16 %v255, %v254
    %v299 = vpack.c.b16 %v257, %v256
    %v300 = vpack.c.b16 %v259, %v258
    %v301 = vpack.c.b16 %v261, %v260
    %v302 = vpack.c.b16 %v263, %v262
    %v303 = vpack.c.b16 %v265, %v264
    %v304 = vpack.c.b16 %v267, %v266
    %v305 = vpack.c.b16 %v269, %v268
    %v306 = vpack.c.b16 %v271, %v270
    %v307 = vpack.c.b16 %v273, %v272
    %v308 = vpack.c.b16 %v275, %v274
    %v309 = vpack.c.b16 %v277, %v276
    %v314 = vunpack.c.l.b16 %v146
    %v315 = vunpack.c.l.b16 %v147
    %v316 = vunpack.c.l.b16 %v148
    %v317 = vunpack.c.l.b16 %v149
    %v318 = vpack.c.b16 %v315, %v314
    %v319 = vpack.c.b16 %v317, %v316
    %vm321 = vcmask 220160
    %v323 = vsel %vm321, %v278, 0
    %v326 = vsel %vm321, %v279, 0
    %v329 = vsel %vm321, %v280, 0
    %v332 = vsel %vm321, %v281, 0
    %v335 = vsel %vm321, %v282, 0
    %v338 = vsel %vm321, %v283, 0
    %v341 = vsel %vm321, %v284, 0
    %v344 = vsel %vm321, %v285, 0
    %v347 = vsel %vm321, %v286, 0
    %v350 = vsel %vm321, %v287, 0
    %v353 = vsel %vm321, %v288, 0
    %v356 = vsel %vm321, %v289, 0
    %v359 = vsel %vm321, %v290, 0
    %v362 = vsel %vm321, %v291, 0
    %v365 = vsel %vm321, %v292, 0
    %v368 = vsel %vm321, %v293, 0
    %v371 = vsel %vm321, %v294, 0
    %v374 = vsel %vm321, %v295, 0
    %v377 = vsel %vm321, %v296, 0
    %v380 = vsel %vm321, %v297, 0
    %v383 = vsel %vm321, %v298, 0
    %v386 = vsel %vm321, %v299, 0
    %v389 = vsel %vm321, %v300, 0
    %v392 = vsel %vm321, %v301, 0
    %v395 = vsel %vm321, %v302, 0
    %v398 = vsel %vm321, %v303, 0
    %v401 = vsel %vm321, %v304, 0
    %v404 = vsel %vm321, %v305, 0
    %v407 = vsel %vm321, %v306, 0
    %v410 = vsel %vm321, %v307, 0
    %v413 = vsel %vm321, %v308, 0
    %v416 = vsel %vm321, %v309, 0
    %vm418 = vcmask 1044480
    %vm419 = vcmask 1045504
    %v420 = vsel %vm418, 4294967295, 65535
    %v421 = vsel %vm419, %v420, 0
    %v423 = vand.u32 %v319, %v421
    %425 = vmatprep.subr.bf16.mxu0 0
    %426 = vmatpush1.bf16.msra.mxu0 %v318
    %427 = vmatprep.subr.bf16.mxu0 0
    %428 = vmatpush1.bf16.msra.mxu0 %v423
    %429 = vmatprep.subr.bf16.mxu0 0
    %430 = vmatpush1.bf16.msra.mxu0 0
    %431 = vmatprep.subr.bf16.mxu0 0
    %432 = vmatpush1.bf16.msra.mxu0 0
    %433 = vmatprep.subr.bf16.mxu0 0
    %434 = vmatpush1.bf16.msra.mxu0 0
    %435 = vmatprep.subr.bf16.mxu0 0
    %436 = vmatpush1.bf16.msra.mxu0 0
    %437 = vmatprep.subr.bf16.mxu0 0
    %438 = vmatpush1.bf16.msra.mxu0 0
    %439 = vmatprep.subr.bf16.mxu0 0
    %440 = vmatpush1.bf16.msra.mxu0 0
    %441 = vmatprep.subr.bf16.mxu0 0
    %442 = vmatpush1.bf16.msra.mxu0 0
    %443 = vmatprep.subr.bf16.mxu0 0
    %444 = vmatpush1.bf16.msra.mxu0 0
    %445 = vmatprep.subr.bf16.mxu0 0
    %446 = vmatpush1.bf16.msra.mxu0 0
    %447 = vmatprep.subr.bf16.mxu0 0
    %448 = vmatpush1.bf16.msra.mxu0 0
    %449 = vmatprep.subr.bf16.mxu0 0
    %450 = vmatpush1.bf16.msra.mxu0 0
    %451 = vmatprep.subr.bf16.mxu0 0
    %452 = vmatpush1.bf16.msra.mxu0 0
    %453 = vmatprep.subr.bf16.mxu0 0
    %454 = vmatpush1.bf16.msra.mxu0 0
    %455 = vmatprep.subr.bf16.mxu0 0
    %456 = vmatpush1.bf16.msra.mxu0 0
    %457 = vmatprep.mubr.bf16.mxu0 0
    %458 = vmatmul.mubr.bf16.gmra.mrb[0].mxu0 %v323
    %v459 = vpop.f32.mrb[0].mxu0
    %v460 = vadd.f32 0.0, %v459
    %v461 = vpop.f32.mrb[0].mxu0
    %v462 = vpop.f32.mrb[0].mxu0
    %v463 = vadd.f32 0.0, %v462
    %v464 = vpop.f32.mrb[0].mxu0
    %465 = vmatprep.mubr.bf16.mxu0 0
    %466 = vmatmul.mubr.bf16.gmra.mrb[0].mxu0 %v326
    %v467 = vpop.f32.mrb[0].mxu0
    %v468 = vadd.f32 0.0, %v467
    %v469 = vpop.f32.mrb[0].mxu0
    %v470 = vpop.f32.mrb[0].mxu0
    %v471 = vadd.f32 0.0, %v470
    %v472 = vpop.f32.mrb[0].mxu0
    %473 = vmatprep.mubr.bf16.mxu0 0
    %474 = vmatmul.mubr.bf16.gmra.mrb[0].mxu0 %v329
    %v475 = vpop.f32.mrb[0].mxu0
    %v476 = vadd.f32 0.0, %v475
    %v477 = vpop.f32.mrb[0].mxu0
    %v478 = vpop.f32.mrb[0].mxu0
    %v479 = vadd.f32 0.0, %v478
    %v480 = vpop.f32.mrb[0].mxu0
    %481 = vmatprep.mubr.bf16.mxu0 0
    %482 = vmatmul.mubr.bf16.gmra.mrb[0].mxu0 %v332
    %v483 = vpop.f32.mrb[0].mxu0
    %v484 = vadd.f32 0.0, %v483
    %v485 = vpop.f32.mrb[0].mxu0
    %v486 = vpop.f32.mrb[0].mxu0
    %v487 = vadd.f32 0.0, %v486
    %v488 = vpop.f32.mrb[0].mxu0
    %489 = vmatprep.mubr.bf16.mxu0 0
    %490 = vmatmul.mubr.bf16.gmra.mrb[0].mxu0 %v335
    %v491 = vpop.f32.mrb[0].mxu0
    %v492 = vadd.f32 0.0, %v491
    %v493 = vpop.f32.mrb[0].mxu0
    %v494 = vpop.f32.mrb[0].mxu0
    %v495 = vadd.f32 0.0, %v494
    %v496 = vpop.f32.mrb[0].mxu0
    %497 = vmatprep.mubr.bf16.mxu0 0
    %498 = vmatmul.mubr.bf16.gmra.mrb[0].mxu0 %v338
    %v499 = vpop.f32.mrb[0].mxu0
    %v500 = vadd.f32 0.0, %v499
    %v501 = vpop.f32.mrb[0].mxu0
    %v502 = vpop.f32.mrb[0].mxu0
    %v503 = vadd.f32 0.0, %v502
    %v504 = vpop.f32.mrb[0].mxu0
    %505 = vmatprep.mubr.bf16.mxu0 0
    %506 = vmatmul.mubr.bf16.gmra.mrb[0].mxu0 %v341
    %v507 = vpop.f32.mrb[0].mxu0
    %v508 = vadd.f32 0.0, %v507
    %v509 = vpop.f32.mrb[0].mxu0
    %v510 = vpop.f32.mrb[0].mxu0
    %v511 = vadd.f32 0.0, %v510
    %v512 = vpop.f32.mrb[0].mxu0
    %513 = vmatprep.mubr.bf16.mxu0 0
    %514 = vmatmul.mubr.bf16.gmra.mrb[0].mxu0 %v344
    %v515 = vpop.f32.mrb[0].mxu0
    %v516 = vadd.f32 0.0, %v515
    %v517 = vpop.f32.mrb[0].mxu0
    %v518 = vpop.f32.mrb[0].mxu0
    %v519 = vadd.f32 0.0, %v518
    %v520 = vpop.f32.mrb[0].mxu0
    %521 = vmatprep.mubr.bf16.mxu0 0
    %522 = vmatmul.mubr.bf16.gmra.mrb[0].mxu0 %v347
    %v523 = vpop.f32.mrb[0].mxu0
    %v524 = vadd.f32 0.0, %v523
    %v525 = vpop.f32.mrb[0].mxu0
    %v526 = vpop.f32.mrb[0].mxu0
    %v527 = vadd.f32 0.0, %v526
    %v528 = vpop.f32.mrb[0].mxu0
    %529 = vmatprep.mubr.bf16.mxu0 0
    %530 = vmatmul.mubr.bf16.gmra.mrb[0].mxu0 %v350
    %v531 = vpop.f32.mrb[0].mxu0
    %v532 = vadd.f32 0.0, %v531
    %v533 = vpop.f32.mrb[0].mxu0
    %v534 = vpop.f32.mrb[0].mxu0
    %v535 = vadd.f32 0.0, %v534
    %v536 = vpop.f32.mrb[0].mxu0
    %537 = vmatprep.mubr.bf16.mxu0 0
    %538 = vmatmul.mubr.bf16.gmra.mrb[0].mxu0 %v353
    %v539 = vpop.f32.mrb[0].mxu0
    %v540 = vadd.f32 0.0, %v539
    %v541 = vpop.f32.mrb[0].mxu0
    %v542 = vpop.f32.mrb[0].mxu0
    %v543 = vadd.f32 0.0, %v542
    %v544 = vpop.f32.mrb[0].mxu0
    %545 = vmatprep.mubr.bf16.mxu0 0
    %546 = vmatmul.mubr.bf16.gmra.mrb[0].mxu0 %v356
    %v547 = vpop.f32.mrb[0].mxu0
    %v548 = vadd.f32 0.0, %v547
    %v549 = vpop.f32.mrb[0].mxu0
    %v550 = vpop.f32.mrb[0].mxu0
    %v551 = vadd.f32 0.0, %v550
    %v552 = vpop.f32.mrb[0].mxu0
    %553 = vmatprep.mubr.bf16.mxu0 0
    %554 = vmatmul.mubr.bf16.gmra.mrb[0].mxu0 %v359
    %v555 = vpop.f32.mrb[0].mxu0
    %v556 = vadd.f32 0.0, %v555
    %v557 = vpop.f32.mrb[0].mxu0
    %v558 = vpop.f32.mrb[0].mxu0
    %v559 = vadd.f32 0.0, %v558
    %v560 = vpop.f32.mrb[0].mxu0
    %561 = vmatprep.mubr.bf16.mxu0 0
    %562 = vmatmul.mubr.bf16.gmra.mrb[0].mxu0 %v362
    %v563 = vpop.f32.mrb[0].mxu0
    %v564 = vadd.f32 0.0, %v563
    %v565 = vpop.f32.mrb[0].mxu0
    %v566 = vpop.f32.mrb[0].mxu0
    %v567 = vadd.f32 0.0, %v566
    %v568 = vpop.f32.mrb[0].mxu0
    %569 = vmatprep.mubr.bf16.mxu0 0
    %570 = vmatmul.mubr.bf16.gmra.mrb[0].mxu0 %v365
    %v571 = vpop.f32.mrb[0].mxu0
    %v572 = vadd.f32 0.0, %v571
    %v573 = vpop.f32.mrb[0].mxu0
    %v574 = vpop.f32.mrb[0].mxu0
    %v575 = vadd.f32 0.0, %v574
    %v576 = vpop.f32.mrb[0].mxu0
    %577 = vmatprep.mubr.bf16.mxu0 0
    %578 = vmatmul.mubr.bf16.gmra.mrb[0].mxu0 %v368
    %v579 = vpop.f32.mrb[0].mxu0
    %v580 = vadd.f32 0.0, %v579
    %v581 = vpop.f32.mrb[0].mxu0
    %v582 = vpop.f32.mrb[0].mxu0
    %v583 = vadd.f32 0.0, %v582
    %v584 = vpop.f32.mrb[0].mxu0
    %585 = vmatprep.mubr.bf16.mxu0 0
    %586 = vmatmul.mubr.bf16.gmra.mrb[0].mxu0 %v371
    %v587 = vpop.f32.mrb[0].mxu0
    %v588 = vadd.f32 0.0, %v587
    %v589 = vpop.f32.mrb[0].mxu0
    %v590 = vpop.f32.mrb[0].mxu0
    %v591 = vadd.f32 0.0, %v590
    %v592 = vpop.f32.mrb[0].mxu0
    %593 = vmatprep.mubr.bf16.mxu0 0
    %594 = vmatmul.mubr.bf16.gmra.mrb[0].mxu0 %v374
    %v595 = vpop.f32.mrb[0].mxu0
    %v596 = vadd.f32 0.0, %v595
    %v597 = vpop.f32.mrb[0].mxu0
    %v598 = vpop.f32.mrb[0].mxu0
    %v599 = vadd.f32 0.0, %v598
    %v600 = vpop.f32.mrb[0].mxu0
    %601 = vmatprep.mubr.bf16.mxu0 0
    %602 = vmatmul.mubr.bf16.gmra.mrb[0].mxu0 %v377
    %v603 = vpop.f32.mrb[0].mxu0
    %v604 = vadd.f32 0.0, %v603
    %v605 = vpop.f32.mrb[0].mxu0
    %v606 = vpop.f32.mrb[0].mxu0
    %v607 = vadd.f32 0.0, %v606
    %v608 = vpop.f32.mrb[0].mxu0
    %609 = vmatprep.mubr.bf16.mxu0 0
    %610 = vmatmul.mubr.bf16.gmra.mrb[0].mxu0 %v380
    %v611 = vpop.f32.mrb[0].mxu0
    %v612 = vadd.f32 0.0, %v611
    %v613 = vpop.f32.mrb[0].mxu0
    %v614 = vpop.f32.mrb[0].mxu0
    %v615 = vadd.f32 0.0, %v614
    %v616 = vpop.f32.mrb[0].mxu0
    %617 = vmatprep.mubr.bf16.mxu0 0
    %618 = vmatmul.mubr.bf16.gmra.mrb[0].mxu0 %v383
    %v619 = vpop.f32.mrb[0].mxu0
    %v620 = vadd.f32 0.0, %v619
    %v621 = vpop.f32.mrb[0].mxu0
    %v622 = vpop.f32.mrb[0].mxu0
    %v623 = vadd.f32 0.0, %v622
    %v624 = vpop.f32.mrb[0].mxu0
    %625 = vmatprep.mubr.bf16.mxu0 0
    %626 = vmatmul.mubr.bf16.gmra.mrb[0].mxu0 %v386
    %v627 = vpop.f32.mrb[0].mxu0
    %v628 = vadd.f32 0.0, %v627
    %v629 = vpop.f32.mrb[0].mxu0
    %v630 = vpop.f32.mrb[0].mxu0
    %v631 = vadd.f32 0.0, %v630
    %v632 = vpop.f32.mrb[0].mxu0
    %633 = vmatprep.mubr.bf16.mxu0 0
    %634 = vmatmul.mubr.bf16.gmra.mrb[0].mxu0 %v389
    %v635 = vpop.f32.mrb[0].mxu0
    %v636 = vadd.f32 0.0, %v635
    %v637 = vpop.f32.mrb[0].mxu0
    %v638 = vpop.f32.mrb[0].mxu0
    %v639 = vadd.f32 0.0, %v638
    %v640 = vpop.f32.mrb[0].mxu0
    %641 = vmatprep.mubr.bf16.mxu0 0
    %642 = vmatmul.mubr.bf16.gmra.mrb[0].mxu0 %v392
    %v643 = vpop.f32.mrb[0].mxu0
    %v644 = vadd.f32 0.0, %v643
    %v645 = vpop.f32.mrb[0].mxu0
    %v646 = vpop.f32.mrb[0].mxu0
    %v647 = vadd.f32 0.0, %v646
    %v648 = vpop.f32.mrb[0].mxu0
    %649 = vmatprep.mubr.bf16.mxu0 0
    %650 = vmatmul.mubr.bf16.gmra.mrb[0].mxu0 %v395
    %v651 = vpop.f32.mrb[0].mxu0
    %v652 = vadd.f32 0.0, %v651
    %v653 = vpop.f32.mrb[0].mxu0
    %v654 = vpop.f32.mrb[0].mxu0
    %v655 = vadd.f32 0.0, %v654
    %v656 = vpop.f32.mrb[0].mxu0
    %657 = vmatprep.mubr.bf16.mxu0 0
    %658 = vmatmul.mubr.bf16.gmra.mrb[0].mxu0 %v398
    %v659 = vpop.f32.mrb[0].mxu0
    %v660 = vadd.f32 0.0, %v659
    %v661 = vpop.f32.mrb[0].mxu0
    %v662 = vpop.f32.mrb[0].mxu0
    %v663 = vadd.f32 0.0, %v662
    %v664 = vpop.f32.mrb[0].mxu0
    %665 = vmatprep.mubr.bf16.mxu0 0
    %666 = vmatmul.mubr.bf16.gmra.mrb[0].mxu0 %v401
    %v667 = vpop.f32.mrb[0].mxu0
    %v668 = vadd.f32 0.0, %v667
    %v669 = vpop.f32.mrb[0].mxu0
    %v670 = vpop.f32.mrb[0].mxu0
    %v671 = vadd.f32 0.0, %v670
    %v672 = vpop.f32.mrb[0].mxu0
    %673 = vmatprep.mubr.bf16.mxu0 0
    %674 = vmatmul.mubr.bf16.gmra.mrb[0].mxu0 %v404
    %v675 = vpop.f32.mrb[0].mxu0
    %v676 = vadd.f32 0.0, %v675
    %v677 = vpop.f32.mrb[0].mxu0
    %v678 = vpop.f32.mrb[0].mxu0
    %v679 = vadd.f32 0.0, %v678
    %v680 = vpop.f32.mrb[0].mxu0
    %681 = vmatprep.mubr.bf16.mxu0 0
    %682 = vmatmul.mubr.bf16.gmra.mrb[0].mxu0 %v407
    %v683 = vpop.f32.mrb[0].mxu0
    %v684 = vadd.f32 0.0, %v683
    %v685 = vpop.f32.mrb[0].mxu0
    %v686 = vpop.f32.mrb[0].mxu0
    %v687 = vadd.f32 0.0, %v686
    %v688 = vpop.f32.mrb[0].mxu0
    %689 = vmatprep.mubr.bf16.mxu0 0
    %690 = vmatmul.mubr.bf16.gmra.mrb[0].mxu0 %v410
    %v691 = vpop.f32.mrb[0].mxu0
    %v692 = vadd.f32 0.0, %v691
    %v693 = vpop.f32.mrb[0].mxu0
    %v694 = vpop.f32.mrb[0].mxu0
    %v695 = vadd.f32 0.0, %v694
    %v696 = vpop.f32.mrb[0].mxu0
    %697 = vmatprep.mubr.bf16.mxu0 0
    %698 = vmatmul.mubr.bf16.gmra.mrb[0].mxu0 %v413
    %v699 = vpop.f32.mrb[0].mxu0
    %v700 = vadd.f32 0.0, %v699
    %v701 = vpop.f32.mrb[0].mxu0
    %v702 = vpop.f32.mrb[0].mxu0
    %v703 = vadd.f32 0.0, %v702
    %v704 = vpop.f32.mrb[0].mxu0
    %705 = vmatprep.mubr.bf16.mxu0 0
    %706 = vmatmul.mubr.bf16.gmra.mrb[0].mxu0 %v416
    %v707 = vpop.f32.mrb[0].mxu0
    %v708 = vadd.f32 0.0, %v707
    %v709 = vpop.f32.mrb[0].mxu0
    %v710 = vpop.f32.mrb[0].mxu0
    %v711 = vadd.f32 0.0, %v710
    %v712 = vpop.f32.mrb[0].mxu0
    %713 = vdwg.mxu0
    %v714 = vld [vmem:[%s2] sm:$0x1]
    %v715 = vld [vmem:[%s3] sm:$0x1]
    %vm716 = vcmask 130048
    %v717 = vsel %vm716, %v460, 0.0
    %v718 = vsel %vm716, %v463, 0.0
    %v719 = vadd.f32 %v717, %v718
    %v720 = vsel %vm716, %v468, 0.0
    %v721 = vadd.f32 %v719, %v720
    %v722 = vsel %vm716, %v471, 0.0
    %v723 = vadd.f32 %v721, %v722
    %v724 = vsel %vm716, %v476, 0.0
    %v725 = vadd.f32 %v723, %v724
    %v726 = vsel %vm716, %v479, 0.0
    %v727 = vadd.f32 %v725, %v726
    %v728 = vsel %vm716, %v484, 0.0
    %v729 = vadd.f32 %v727, %v728
    %v730 = vsel %vm716, %v487, 0.0
    %v731 = vadd.f32 %v729, %v730
    %v732 = vsel %vm716, %v492, 0.0
    %v733 = vadd.f32 %v731, %v732
    %v734 = vsel %vm716, %v495, 0.0
    %v735 = vadd.f32 %v733, %v734
    %v736 = vsel %vm716, %v500, 0.0
    %v737 = vadd.f32 %v735, %v736
    %v738 = vsel %vm716, %v503, 0.0
    %v739 = vadd.f32 %v737, %v738
    %v740 = vsel %vm716, %v508, 0.0
    %v741 = vadd.f32 %v739, %v740
    %v742 = vsel %vm716, %v511, 0.0
    %v743 = vadd.f32 %v741, %v742
    %v744 = vsel %vm716, %v516, 0.0
    %v745 = vadd.f32 %v743, %v744
    %v746 = vsel %vm716, %v519, 0.0
    %v747 = vadd.f32 %v745, %v746
    %v748 = vsel %vm716, %v524, 0.0
    %v749 = vadd.f32 %v747, %v748
    %v750 = vsel %vm716, %v527, 0.0
    %v751 = vadd.f32 %v749, %v750
    %v752 = vsel %vm716, %v532, 0.0
    %v753 = vadd.f32 %v751, %v752
    %v754 = vsel %vm716, %v535, 0.0
    %v755 = vadd.f32 %v753, %v754
    %v756 = vsel %vm716, %v540, 0.0
    %v757 = vadd.f32 %v755, %v756
    %v758 = vsel %vm716, %v543, 0.0
    %v759 = vadd.f32 %v757, %v758
    %v760 = vsel %vm716, %v548, 0.0
    %v761 = vadd.f32 %v759, %v760
    %v762 = vsel %vm716, %v551, 0.0
    %v763 = vadd.f32 %v761, %v762
    %v764 = vsel %vm716, %v556, 0.0
    %v765 = vadd.f32 %v763, %v764
    %v766 = vsel %vm716, %v559, 0.0
    %v767 = vadd.f32 %v765, %v766
    %v768 = vsel %vm716, %v564, 0.0
    %v769 = vadd.f32 %v767, %v768
    %v770 = vsel %vm716, %v567, 0.0
    %v771 = vadd.f32 %v769, %v770
    %v772 = vsel %vm716, %v572, 0.0
    %v773 = vadd.f32 %v771, %v772
    %v774 = vsel %vm716, %v575, 0.0
    %v775 = vadd.f32 %v773, %v774
    %v776 = vsel %vm716, %v580, 0.0
    %v777 = vadd.f32 %v775, %v776
    %v778 = vsel %vm716, %v583, 0.0
    %v779 = vadd.f32 %v777, %v778
    %v780 = vsel %vm716, %v588, 0.0
    %v781 = vadd.f32 %v779, %v780
    %v782 = vsel %vm716, %v591, 0.0
    %v783 = vadd.f32 %v781, %v782
    %v784 = vsel %vm716, %v596, 0.0
    %v785 = vadd.f32 %v783, %v784
    %v786 = vsel %vm716, %v599, 0.0
    %v787 = vadd.f32 %v785, %v786
    %v788 = vsel %vm716, %v604, 0.0
    %v789 = vadd.f32 %v787, %v788
    %v790 = vsel %vm716, %v607, 0.0
    %v791 = vadd.f32 %v789, %v790
    %v792 = vsel %vm716, %v612, 0.0
    %v793 = vadd.f32 %v791, %v792
    %v794 = vsel %vm716, %v615, 0.0
    %v795 = vadd.f32 %v793, %v794
    %v796 = vsel %vm716, %v620, 0.0
    %v797 = vadd.f32 %v795, %v796
    %v798 = vsel %vm716, %v623, 0.0
    %v799 = vadd.f32 %v797, %v798
    %v800 = vsel %vm716, %v628, 0.0
    %v801 = vadd.f32 %v799, %v800
    %v802 = vsel %vm716, %v631, 0.0
    %v803 = vadd.f32 %v801, %v802
    %v804 = vsel %vm716, %v636, 0.0
    %v805 = vadd.f32 %v803, %v804
    %v806 = vsel %vm716, %v639, 0.0
    %v807 = vadd.f32 %v805, %v806
    %v808 = vsel %vm716, %v644, 0.0
    %v809 = vadd.f32 %v807, %v808
    %v810 = vsel %vm716, %v647, 0.0
    %v811 = vadd.f32 %v809, %v810
    %v812 = vsel %vm716, %v652, 0.0
    %v813 = vadd.f32 %v811, %v812
    %v814 = vsel %vm716, %v655, 0.0
    %v815 = vadd.f32 %v813, %v814
    %v816 = vsel %vm716, %v660, 0.0
    %v817 = vadd.f32 %v815, %v816
    %v818 = vsel %vm716, %v663, 0.0
    %v819 = vadd.f32 %v817, %v818
    %v820 = vsel %vm716, %v668, 0.0
    %v821 = vadd.f32 %v819, %v820
    %v822 = vsel %vm716, %v671, 0.0
    %v823 = vadd.f32 %v821, %v822
    %v824 = vsel %vm716, %v676, 0.0
    %v825 = vadd.f32 %v823, %v824
    %v826 = vsel %vm716, %v679, 0.0
    %v827 = vadd.f32 %v825, %v826
    %v828 = vsel %vm716, %v684, 0.0
    %v829 = vadd.f32 %v827, %v828
    %v830 = vsel %vm716, %v687, 0.0
    %v831 = vadd.f32 %v829, %v830
    %v832 = vsel %vm716, %v692, 0.0
    %v833 = vadd.f32 %v831, %v832
    %v834 = vsel %vm716, %v695, 0.0
    %v835 = vadd.f32 %v833, %v834
    %v836 = vsel %vm716, %v700, 0.0
    %v837 = vadd.f32 %v835, %v836
    %v838 = vsel %vm716, %v703, 0.0
    %v839 = vadd.f32 %v837, %v838
    %v840 = vsel %vm716, %v708, 0.0
    %v841 = vadd.f32 %v839, %v840
    %v842 = vsel %vm716, %v711, 0.0
    %v843 = vadd.f32 %v841, %v842
    %v844 = vrot.slane %v843, 4
    %v845 = vadd.f32 %v843, %v844
    %v846 = vrot.slane %v845, 2
    %v847 = vadd.f32 %v845, %v846
    %v848 = vrot.slane %v847, 1
    %v849 = vadd.f32 %v847, %v848
    %v850 = vmul.f32 %v849, 0.001953125
    %v851 = vsub.f32 %v460, %v850
    %v852 = vsub.f32 %v463, %v850
    %v853 = vsub.f32 %v468, %v850
    %v854 = vsub.f32 %v471, %v850
    %v855 = vsub.f32 %v476, %v850
    %v856 = vsub.f32 %v479, %v850
    %v857 = vsub.f32 %v484, %v850
    %v858 = vsub.f32 %v487, %v850
    %v859 = vsub.f32 %v492, %v850
    %v860 = vsub.f32 %v495, %v850
    %v861 = vsub.f32 %v500, %v850
    %v862 = vsub.f32 %v503, %v850
    %v863 = vsub.f32 %v508, %v850
    %v864 = vsub.f32 %v511, %v850
    %v865 = vsub.f32 %v516, %v850
    %v866 = vsub.f32 %v519, %v850
    %v867 = vsub.f32 %v524, %v850
    %v868 = vsub.f32 %v527, %v850
    %v869 = vsub.f32 %v532, %v850
    %v870 = vsub.f32 %v535, %v850
    %v871 = vsub.f32 %v540, %v850
    %v872 = vsub.f32 %v543, %v850
    %v873 = vsub.f32 %v548, %v850
    %v874 = vsub.f32 %v551, %v850
    %v875 = vsub.f32 %v556, %v850
    %v876 = vsub.f32 %v559, %v850
    %v877 = vsub.f32 %v564, %v850
    %v878 = vsub.f32 %v567, %v850
    %v879 = vsub.f32 %v572, %v850
    %v880 = vsub.f32 %v575, %v850
    %v881 = vsub.f32 %v580, %v850
    %v882 = vsub.f32 %v583, %v850
    %v883 = vsub.f32 %v588, %v850
    %v884 = vsub.f32 %v591, %v850
    %v885 = vsub.f32 %v596, %v850
    %v886 = vsub.f32 %v599, %v850
    %v887 = vsub.f32 %v604, %v850
    %v888 = vsub.f32 %v607, %v850
    %v889 = vsub.f32 %v612, %v850
    %v890 = vsub.f32 %v615, %v850
    %v891 = vsub.f32 %v620, %v850
    %v892 = vsub.f32 %v623, %v850
    %v893 = vsub.f32 %v628, %v850
    %v894 = vsub.f32 %v631, %v850
    %v895 = vsub.f32 %v636, %v850
    %v896 = vsub.f32 %v639, %v850
    %v897 = vsub.f32 %v644, %v850
    %v898 = vsub.f32 %v647, %v850
    %v899 = vsub.f32 %v652, %v850
    %v900 = vsub.f32 %v655, %v850
    %v901 = vsub.f32 %v660, %v850
    %v902 = vsub.f32 %v663, %v850
    %v903 = vsub.f32 %v668, %v850
    %v904 = vsub.f32 %v671, %v850
    %v905 = vsub.f32 %v676, %v850
    %v906 = vsub.f32 %v679, %v850
    %v907 = vsub.f32 %v684, %v850
    %v908 = vsub.f32 %v687, %v850
    %v909 = vsub.f32 %v692, %v850
    %v910 = vsub.f32 %v695, %v850
    %v911 = vsub.f32 %v700, %v850
    %v912 = vsub.f32 %v703, %v850
    %v913 = vsub.f32 %v708, %v850
    %v914 = vsub.f32 %v711, %v850
    %v915 = vmul.f32 %v851, %v851
    %v916 = vmul.f32 %v852, %v852
    %v917 = vmul.f32 %v853, %v853
    %v918 = vmul.f32 %v854, %v854
    %v919 = vmul.f32 %v855, %v855
    %v920 = vmul.f32 %v856, %v856
    %v921 = vmul.f32 %v857, %v857
    %v922 = vmul.f32 %v858, %v858
    %v923 = vmul.f32 %v859, %v859
    %v924 = vmul.f32 %v860, %v860
    %v925 = vmul.f32 %v861, %v861
    %v926 = vmul.f32 %v862, %v862
    %v927 = vmul.f32 %v863, %v863
    %v928 = vmul.f32 %v864, %v864
    %v929 = vmul.f32 %v865, %v865
    %v930 = vmul.f32 %v866, %v866
    %v931 = vmul.f32 %v867, %v867
    %v932 = vmul.f32 %v868, %v868
    %v933 = vmul.f32 %v869, %v869
    %v934 = vmul.f32 %v870, %v870
    %v935 = vmul.f32 %v871, %v871
    %v936 = vmul.f32 %v872, %v872
    %v937 = vmul.f32 %v873, %v873
    %v938 = vmul.f32 %v874, %v874
    %v939 = vmul.f32 %v875, %v875
    %v940 = vmul.f32 %v876, %v876
    %v941 = vmul.f32 %v877, %v877
    %v942 = vmul.f32 %v878, %v878
    %v943 = vmul.f32 %v879, %v879
    %v944 = vmul.f32 %v880, %v880
    %v945 = vmul.f32 %v881, %v881
    %v946 = vmul.f32 %v882, %v882
    %v947 = vmul.f32 %v883, %v883
    %v948 = vmul.f32 %v884, %v884
    %v949 = vmul.f32 %v885, %v885
    %v950 = vmul.f32 %v886, %v886
    %v951 = vmul.f32 %v887, %v887
    %v952 = vmul.f32 %v888, %v888
    %v953 = vmul.f32 %v889, %v889
    %v954 = vmul.f32 %v890, %v890
    %v955 = vmul.f32 %v891, %v891
    %v956 = vmul.f32 %v892, %v892
    %v957 = vmul.f32 %v893, %v893
    %v958 = vmul.f32 %v894, %v894
    %v959 = vmul.f32 %v895, %v895
    %v960 = vmul.f32 %v896, %v896
    %v961 = vmul.f32 %v897, %v897
    %v962 = vmul.f32 %v898, %v898
    %v963 = vmul.f32 %v899, %v899
    %v964 = vmul.f32 %v900, %v900
    %v965 = vmul.f32 %v901, %v901
    %v966 = vmul.f32 %v902, %v902
    %v967 = vmul.f32 %v903, %v903
    %v968 = vmul.f32 %v904, %v904
    %v969 = vmul.f32 %v905, %v905
    %v970 = vmul.f32 %v906, %v906
    %v971 = vmul.f32 %v907, %v907
    %v972 = vmul.f32 %v908, %v908
    %v973 = vmul.f32 %v909, %v909
    %v974 = vmul.f32 %v910, %v910
    %v975 = vmul.f32 %v911, %v911
    %v976 = vmul.f32 %v912, %v912
    %v977 = vmul.f32 %v913, %v913
    %v978 = vmul.f32 %v914, %v914
    %v979 = vsel %vm716, %v915, 0.0
    %v980 = vsel %vm716, %v916, 0.0
    %v981 = vadd.f32 %v979, %v980
    %v982 = vsel %vm716, %v917, 0.0
    %v983 = vadd.f32 %v981, %v982
    %v984 = vsel %vm716, %v918, 0.0
    %v985 = vadd.f32 %v983, %v984
    %v986 = vsel %vm716, %v919, 0.0
    %v987 = vadd.f32 %v985, %v986
    %v988 = vsel %vm716, %v920, 0.0
    %v989 = vadd.f32 %v987, %v988
    %v990 = vsel %vm716, %v921, 0.0
    %v991 = vadd.f32 %v989, %v990
    %v992 = vsel %vm716, %v922, 0.0
    %v993 = vadd.f32 %v991, %v992
    %v994 = vsel %vm716, %v923, 0.0
    %v995 = vadd.f32 %v993, %v994
    %v996 = vsel %vm716, %v924, 0.0
    %v997 = vadd.f32 %v995, %v996
    %v998 = vsel %vm716, %v925, 0.0
    %v999 = vadd.f32 %v997, %v998
    %v1000 = vsel %vm716, %v926, 0.0
    %v1001 = vadd.f32 %v999, %v1000
    %v1002 = vsel %vm716, %v927, 0.0
    %v1003 = vadd.f32 %v1001, %v1002
    %v1004 = vsel %vm716, %v928, 0.0
    %v1005 = vadd.f32 %v1003, %v1004
    %v1006 = vsel %vm716, %v929, 0.0
    %v1007 = vadd.f32 %v1005, %v1006
    %v1008 = vsel %vm716, %v930, 0.0
    %v1009 = vadd.f32 %v1007, %v1008
    %v1010 = vsel %vm716, %v931, 0.0
    %v1011 = vadd.f32 %v1009, %v1010
    %v1012 = vsel %vm716, %v932, 0.0
    %v1013 = vadd.f32 %v1011, %v1012
    %v1014 = vsel %vm716, %v933, 0.0
    %v1015 = vadd.f32 %v1013, %v1014
    %v1016 = vsel %vm716, %v934, 0.0
    %v1017 = vadd.f32 %v1015, %v1016
    %v1018 = vsel %vm716, %v935, 0.0
    %v1019 = vadd.f32 %v1017, %v1018
    %v1020 = vsel %vm716, %v936, 0.0
    %v1021 = vadd.f32 %v1019, %v1020
    %v1022 = vsel %vm716, %v937, 0.0
    %v1023 = vadd.f32 %v1021, %v1022
    %v1024 = vsel %vm716, %v938, 0.0
    %v1025 = vadd.f32 %v1023, %v1024
    %v1026 = vsel %vm716, %v939, 0.0
    %v1027 = vadd.f32 %v1025, %v1026
    %v1028 = vsel %vm716, %v940, 0.0
    %v1029 = vadd.f32 %v1027, %v1028
    %v1030 = vsel %vm716, %v941, 0.0
    %v1031 = vadd.f32 %v1029, %v1030
    %v1032 = vsel %vm716, %v942, 0.0
    %v1033 = vadd.f32 %v1031, %v1032
    %v1034 = vsel %vm716, %v943, 0.0
    %v1035 = vadd.f32 %v1033, %v1034
    %v1036 = vsel %vm716, %v944, 0.0
    %v1037 = vadd.f32 %v1035, %v1036
    %v1038 = vsel %vm716, %v945, 0.0
    %v1039 = vadd.f32 %v1037, %v1038
    %v1040 = vsel %vm716, %v946, 0.0
    %v1041 = vadd.f32 %v1039, %v1040
    %v1042 = vsel %vm716, %v947, 0.0
    %v1043 = vadd.f32 %v1041, %v1042
    %v1044 = vsel %vm716, %v948, 0.0
    %v1045 = vadd.f32 %v1043, %v1044
    %v1046 = vsel %vm716, %v949, 0.0
    %v1047 = vadd.f32 %v1045, %v1046
    %v1048 = vsel %vm716, %v950, 0.0
    %v1049 = vadd.f32 %v1047, %v1048
    %v1050 = vsel %vm716, %v951, 0.0
    %v1051 = vadd.f32 %v1049, %v1050
    %v1052 = vsel %vm716, %v952, 0.0
    %v1053 = vadd.f32 %v1051, %v1052
    %v1054 = vsel %vm716, %v953, 0.0
    %v1055 = vadd.f32 %v1053, %v1054
    %v1056 = vsel %vm716, %v954, 0.0
    %v1057 = vadd.f32 %v1055, %v1056
    %v1058 = vsel %vm716, %v955, 0.0
    %v1059 = vadd.f32 %v1057, %v1058
    %v1060 = vsel %vm716, %v956, 0.0
    %v1061 = vadd.f32 %v1059, %v1060
    %v1062 = vsel %vm716, %v957, 0.0
    %v1063 = vadd.f32 %v1061, %v1062
    %v1064 = vsel %vm716, %v958, 0.0
    %v1065 = vadd.f32 %v1063, %v1064
    %v1066 = vsel %vm716, %v959, 0.0
    %v1067 = vadd.f32 %v1065, %v1066
    %v1068 = vsel %vm716, %v960, 0.0
    %v1069 = vadd.f32 %v1067, %v1068
    %v1070 = vsel %vm716, %v961, 0.0
    %v1071 = vadd.f32 %v1069, %v1070
    %v1072 = vsel %vm716, %v962, 0.0
    %v1073 = vadd.f32 %v1071, %v1072
    %v1074 = vsel %vm716, %v963, 0.0
    %v1075 = vadd.f32 %v1073, %v1074
    %v1076 = vsel %vm716, %v964, 0.0
    %v1077 = vadd.f32 %v1075, %v1076
    %v1078 = vsel %vm716, %v965, 0.0
    %v1079 = vadd.f32 %v1077, %v1078
    %v1080 = vsel %vm716, %v966, 0.0
    %v1081 = vadd.f32 %v1079, %v1080
    %v1082 = vsel %vm716, %v967, 0.0
    %v1083 = vadd.f32 %v1081, %v1082
    %v1084 = vsel %vm716, %v968, 0.0
    %v1085 = vadd.f32 %v1083, %v1084
    %v1086 = vsel %vm716, %v969, 0.0
    %v1087 = vadd.f32 %v1085, %v1086
    %v1088 = vsel %vm716, %v970, 0.0
    %v1089 = vadd.f32 %v1087, %v1088
    %v1090 = vsel %vm716, %v971, 0.0
    %v1091 = vadd.f32 %v1089, %v1090
    %v1092 = vsel %vm716, %v972, 0.0
    %v1093 = vadd.f32 %v1091, %v1092
    %v1094 = vsel %vm716, %v973, 0.0
    %v1095 = vadd.f32 %v1093, %v1094
    %v1096 = vsel %vm716, %v974, 0.0
    %v1097 = vadd.f32 %v1095, %v1096
    %v1098 = vsel %vm716, %v975, 0.0
    %v1099 = vadd.f32 %v1097, %v1098
    %v1100 = vsel %vm716, %v976, 0.0
    %v1101 = vadd.f32 %v1099, %v1100
    %v1102 = vsel %vm716, %v977, 0.0
    %v1103 = vadd.f32 %v1101, %v1102
    %v1104 = vsel %vm716, %v978, 0.0
    %v1105 = vadd.f32 %v1103, %v1104
    %v1106 = vrot.slane %v1105, 4
    %v1107 = vadd.f32 %v1105, %v1106
    %v1108 = vrot.slane %v1107, 2
    %v1109 = vadd.f32 %v1107, %v1108
    %v1110 = vrot.slane %v1109, 1
    %v1111 = vadd.f32 %v1109, %v1110
    %v1112 = vmul.f32 %v1111, 0.001953125
    %v1113 = vadd.f32 %v1112, 1e-05
    %v1114 = vrsqrt.pop %v1113
    %v1115 = vmul.f32 %v714, %v1114
    %v1117 = vlaneseq
    %v1118 = vshrl.u32 %v1117, 7
    %v1119 = vsub.s32 0, %v1118
    %v1120 = vrot.slane %v1115, %v1119
    %v1122 = vmul.f32 %v851, %v1120
    %v1123 = vmul.f32 %v852, %v1120
    %v1124 = vmul.f32 %v853, %v1120
    %v1125 = vmul.f32 %v854, %v1120
    %v1126 = vmul.f32 %v855, %v1120
    %v1127 = vmul.f32 %v856, %v1120
    %v1128 = vmul.f32 %v857, %v1120
    %v1129 = vmul.f32 %v858, %v1120
    %v1130 = vmul.f32 %v859, %v1120
    %v1131 = vmul.f32 %v860, %v1120
    %v1132 = vmul.f32 %v861, %v1120
    %v1133 = vmul.f32 %v862, %v1120
    %v1134 = vmul.f32 %v863, %v1120
    %v1135 = vmul.f32 %v864, %v1120
    %v1136 = vmul.f32 %v865, %v1120
    %v1137 = vmul.f32 %v866, %v1120
    %v1138 = vmul.f32 %v867, %v1120
    %v1139 = vmul.f32 %v868, %v1120
    %v1140 = vmul.f32 %v869, %v1120
    %v1141 = vmul.f32 %v870, %v1120
    %v1142 = vmul.f32 %v871, %v1120
    %v1143 = vmul.f32 %v872, %v1120
    %v1144 = vmul.f32 %v873, %v1120
    %v1145 = vmul.f32 %v874, %v1120
    %v1146 = vmul.f32 %v875, %v1120
    %v1147 = vmul.f32 %v876, %v1120
    %v1148 = vmul.f32 %v877, %v1120
    %v1149 = vmul.f32 %v878, %v1120
    %v1150 = vmul.f32 %v879, %v1120
    %v1151 = vmul.f32 %v880, %v1120
    %v1152 = vmul.f32 %v881, %v1120
    %v1153 = vmul.f32 %v882, %v1120
    %v1154 = vmul.f32 %v883, %v1120
    %v1155 = vmul.f32 %v884, %v1120
    %v1156 = vmul.f32 %v885, %v1120
    %v1157 = vmul.f32 %v886, %v1120
    %v1158 = vmul.f32 %v887, %v1120
    %v1159 = vmul.f32 %v888, %v1120
    %v1160 = vmul.f32 %v889, %v1120
    %v1161 = vmul.f32 %v890, %v1120
    %v1162 = vmul.f32 %v891, %v1120
    %v1163 = vmul.f32 %v892, %v1120
    %v1164 = vmul.f32 %v893, %v1120
    %v1165 = vmul.f32 %v894, %v1120
    %v1166 = vmul.f32 %v895, %v1120
    %v1167 = vmul.f32 %v896, %v1120
    %v1168 = vmul.f32 %v897, %v1120
    %v1169 = vmul.f32 %v898, %v1120
    %v1170 = vmul.f32 %v899, %v1120
    %v1171 = vmul.f32 %v900, %v1120
    %v1172 = vmul.f32 %v901, %v1120
    %v1173 = vmul.f32 %v902, %v1120
    %v1174 = vmul.f32 %v903, %v1120
    %v1175 = vmul.f32 %v904, %v1120
    %v1176 = vmul.f32 %v905, %v1120
    %v1177 = vmul.f32 %v906, %v1120
    %v1178 = vmul.f32 %v907, %v1120
    %v1179 = vmul.f32 %v908, %v1120
    %v1180 = vmul.f32 %v909, %v1120
    %v1181 = vmul.f32 %v910, %v1120
    %v1182 = vmul.f32 %v911, %v1120
    %v1183 = vmul.f32 %v912, %v1120
    %v1184 = vmul.f32 %v913, %v1120
    %v1185 = vmul.f32 %v914, %v1120
    %v1187 = vlaneseq
    %v1188 = vshrl.u32 %v1187, 7
    %v1189 = vsub.s32 0, %v1188
    %v1190 = vrot.slane %v715, %v1189
    %v1192 = vadd.f32 %v1122, %v1190
    %v1193 = vadd.f32 %v1123, %v1190
    %v1194 = vadd.f32 %v1124, %v1190
    %v1195 = vadd.f32 %v1125, %v1190
    %v1196 = vadd.f32 %v1126, %v1190
    %v1197 = vadd.f32 %v1127, %v1190
    %v1198 = vadd.f32 %v1128, %v1190
    %v1199 = vadd.f32 %v1129, %v1190
    %v1200 = vadd.f32 %v1130, %v1190
    %v1201 = vadd.f32 %v1131, %v1190
    %v1202 = vadd.f32 %v1132, %v1190
    %v1203 = vadd.f32 %v1133, %v1190
    %v1204 = vadd.f32 %v1134, %v1190
    %v1205 = vadd.f32 %v1135, %v1190
    %v1206 = vadd.f32 %v1136, %v1190
    %v1207 = vadd.f32 %v1137, %v1190
    %v1208 = vadd.f32 %v1138, %v1190
    %v1209 = vadd.f32 %v1139, %v1190
    %v1210 = vadd.f32 %v1140, %v1190
    %v1211 = vadd.f32 %v1141, %v1190
    %v1212 = vadd.f32 %v1142, %v1190
    %v1213 = vadd.f32 %v1143, %v1190
    %v1214 = vadd.f32 %v1144, %v1190
    %v1215 = vadd.f32 %v1145, %v1190
    %v1216 = vadd.f32 %v1146, %v1190
    %v1217 = vadd.f32 %v1147, %v1190
    %v1218 = vadd.f32 %v1148, %v1190
    %v1219 = vadd.f32 %v1149, %v1190
    %v1220 = vadd.f32 %v1150, %v1190
    %v1221 = vadd.f32 %v1151, %v1190
    %v1222 = vadd.f32 %v1152, %v1190
    %v1223 = vadd.f32 %v1153, %v1190
    %v1224 = vadd.f32 %v1154, %v1190
    %v1225 = vadd.f32 %v1155, %v1190
    %v1226 = vadd.f32 %v1156, %v1190
    %v1227 = vadd.f32 %v1157, %v1190
    %v1228 = vadd.f32 %v1158, %v1190
    %v1229 = vadd.f32 %v1159, %v1190
    %v1230 = vadd.f32 %v1160, %v1190
    %v1231 = vadd.f32 %v1161, %v1190
    %v1232 = vadd.f32 %v1162, %v1190
    %v1233 = vadd.f32 %v1163, %v1190
    %v1234 = vadd.f32 %v1164, %v1190
    %v1235 = vadd.f32 %v1165, %v1190
    %v1236 = vadd.f32 %v1166, %v1190
    %v1237 = vadd.f32 %v1167, %v1190
    %v1238 = vadd.f32 %v1168, %v1190
    %v1239 = vadd.f32 %v1169, %v1190
    %v1240 = vadd.f32 %v1170, %v1190
    %v1241 = vadd.f32 %v1171, %v1190
    %v1242 = vadd.f32 %v1172, %v1190
    %v1243 = vadd.f32 %v1173, %v1190
    %v1244 = vadd.f32 %v1174, %v1190
    %v1245 = vadd.f32 %v1175, %v1190
    %v1246 = vadd.f32 %v1176, %v1190
    %v1247 = vadd.f32 %v1177, %v1190
    %v1248 = vadd.f32 %v1178, %v1190
    %v1249 = vadd.f32 %v1179, %v1190
    %v1250 = vadd.f32 %v1180, %v1190
    %v1251 = vadd.f32 %v1181, %v1190
    %v1252 = vadd.f32 %v1182, %v1190
    %v1253 = vadd.f32 %v1183, %v1190
    %v1254 = vadd.f32 %v1184, %v1190
    %v1255 = vadd.f32 %v1185, %v1190
    %v1256 = vmax.f32 %v1192, 0.0
    %v1257 = vmax.f32 %v1193, 0.0
    %v1258 = vmax.f32 %v1194, 0.0
    %v1259 = vmax.f32 %v1195, 0.0
    %v1260 = vmax.f32 %v1196, 0.0
    %v1261 = vmax.f32 %v1197, 0.0
    %v1262 = vmax.f32 %v1198, 0.0
    %v1263 = vmax.f32 %v1199, 0.0
    %v1264 = vmax.f32 %v1200, 0.0
    %v1265 = vmax.f32 %v1201, 0.0
    %v1266 = vmax.f32 %v1202, 0.0
    %v1267 = vmax.f32 %v1203, 0.0
    %v1268 = vmax.f32 %v1204, 0.0
    %v1269 = vmax.f32 %v1205, 0.0
    %v1270 = vmax.f32 %v1206, 0.0
    %v1271 = vmax.f32 %v1207, 0.0
    %v1272 = vmax.f32 %v1208, 0.0
    %v1273 = vmax.f32 %v1209, 0.0
    %v1274 = vmax.f32 %v1210, 0.0
    %v1275 = vmax.f32 %v1211, 0.0
    %v1276 = vmax.f32 %v1212, 0.0
    %v1277 = vmax.f32 %v1213, 0.0
    %v1278 = vmax.f32 %v1214, 0.0
    %v1279 = vmax.f32 %v1215, 0.0
    %v1280 = vmax.f32 %v1216, 0.0
    %v1281 = vmax.f32 %v1217, 0.0
    %v1282 = vmax.f32 %v1218, 0.0
    %v1283 = vmax.f32 %v1219, 0.0
    %v1284 = vmax.f32 %v1220, 0.0
    %v1285 = vmax.f32 %v1221, 0.0
    %v1286 = vmax.f32 %v1222, 0.0
    %v1287 = vmax.f32 %v1223, 0.0
    %v1288 = vmax.f32 %v1224, 0.0
    %v1289 = vmax.f32 %v1225, 0.0
    %v1290 = vmax.f32 %v1226, 0.0
    %v1291 = vmax.f32 %v1227, 0.0
    %v1292 = vmax.f32 %v1228, 0.0
    %v1293 = vmax.f32 %v1229, 0.0
    %v1294 = vmax.f32 %v1230, 0.0
    %v1295 = vmax.f32 %v1231, 0.0
    %v1296 = vmax.f32 %v1232, 0.0
    %v1297 = vmax.f32 %v1233, 0.0
    %v1298 = vmax.f32 %v1234, 0.0
    %v1299 = vmax.f32 %v1235, 0.0
    %v1300 = vmax.f32 %v1236, 0.0
    %v1301 = vmax.f32 %v1237, 0.0
    %v1302 = vmax.f32 %v1238, 0.0
    %v1303 = vmax.f32 %v1239, 0.0
    %v1304 = vmax.f32 %v1240, 0.0
    %v1305 = vmax.f32 %v1241, 0.0
    %v1306 = vmax.f32 %v1242, 0.0
    %v1307 = vmax.f32 %v1243, 0.0
    %v1308 = vmax.f32 %v1244, 0.0
    %v1309 = vmax.f32 %v1245, 0.0
    %v1310 = vmax.f32 %v1246, 0.0
    %v1311 = vmax.f32 %v1247, 0.0
    %v1312 = vmax.f32 %v1248, 0.0
    %v1313 = vmax.f32 %v1249, 0.0
    %v1314 = vmax.f32 %v1250, 0.0
    %v1315 = vmax.f32 %v1251, 0.0
    %v1316 = vmax.f32 %v1252, 0.0
    %v1317 = vmax.f32 %v1253, 0.0
    %v1318 = vmax.f32 %v1254, 0.0
    %v1319 = vmax.f32 %v1255, 0.0
    %v1320 = vlaneseq
    %v1321 = vshrl.u32 %v1320, 7
    %v1322 = vadd.s32 %v1321, 8
    %v1323 = vadd.s32 %v1321, 16
    %v1324 = vadd.s32 %v1321, 24
    %v1325 = vadd.s32 %v1321, 32
    %v1326 = vadd.s32 %v1321, 40
    %v1327 = vadd.s32 %v1321, 48
    %v1328 = vadd.s32 %v1321, 56
    %v1329 = vadd.s32 %v1321, 64
    %v1330 = vadd.s32 %v1321, 72
    %v1331 = vadd.s32 %v1321, 80
    %v1332 = vadd.s32 %v1321, 88
    %v1333 = vadd.s32 %v1321, 96
    %v1334 = vadd.s32 %v1321, 104
    %v1335 = vadd.s32 %v1321, 112
    %v1336 = vadd.s32 %v1321, 120
    %v1337 = vadd.s32 %v1321, 128
    %v1338 = vadd.s32 %v1321, 136
    %v1339 = vadd.s32 %v1321, 144
    %v1340 = vadd.s32 %v1321, 152
    %v1341 = vadd.s32 %v1321, 160
    %v1342 = vadd.s32 %v1321, 168
    %v1343 = vadd.s32 %v1321, 176
    %v1344 = vadd.s32 %v1321, 184
    %v1345 = vadd.s32 %v1321, 192
    %v1346 = vadd.s32 %v1321, 200
    %v1347 = vadd.s32 %v1321, 208
    %v1348 = vadd.s32 %v1321, 216
    %v1349 = vadd.s32 %v1321, 224
    %v1350 = vadd.s32 %v1321, 232
    %v1351 = vadd.s32 %v1321, 240
    %v1352 = vadd.s32 %v1321, 248
    %v1353 = vadd.s32 %v1321, 256
    %v1354 = vadd.s32 %v1321, 264
    %v1355 = vadd.s32 %v1321, 272
    %v1356 = vadd.s32 %v1321, 280
    %v1357 = vadd.s32 %v1321, 288
    %v1358 = vadd.s32 %v1321, 296
    %v1359 = vadd.s32 %v1321, 304
    %v1360 = vadd.s32 %v1321, 312
    %v1361 = vadd.s32 %v1321, 320
    %v1362 = vadd.s32 %v1321, 328
    %v1363 = vadd.s32 %v1321, 336
    %v1364 = vadd.s32 %v1321, 344
    %v1365 = vadd.s32 %v1321, 352
    %v1366 = vadd.s32 %v1321, 360
    %v1367 = vadd.s32 %v1321, 368
    %v1368 = vadd.s32 %v1321, 376
    %v1369 = vadd.s32 %v1321, 384
    %v1370 = vadd.s32 %v1321, 392
    %v1371 = vadd.s32 %v1321, 400
    %v1372 = vadd.s32 %v1321, 408
    %v1373 = vadd.s32 %v1321, 416
    %v1374 = vadd.s32 %v1321, 424
    %v1375 = vadd.s32 %v1321, 432
    %v1376 = vadd.s32 %v1321, 440
    %v1377 = vadd.s32 %v1321, 448
    %v1378 = vadd.s32 %v1321, 456
    %v1379 = vadd.s32 %v1321, 464
    %v1380 = vadd.s32 %v1321, 472
    %v1381 = vadd.s32 %v1321, 480
    %v1382 = vadd.s32 %v1321, 488
    %v1383 = vadd.s32 %v1321, 496
    %v1384 = vadd.s32 %v1321, 504
    %v1385 = vshra.s32 %v1321, 4
    %v1386 = vshra.s32 %v1322, 4
    %v1387 = vshra.s32 %v1323, 4
    %v1388 = vshra.s32 %v1324, 4
    %v1389 = vshra.s32 %v1325, 4
    %v1390 = vshra.s32 %v1326, 4
    %v1391 = vshra.s32 %v1327, 4
    %v1392 = vshra.s32 %v1328, 4
    %v1393 = vshra.s32 %v1329, 4
    %v1394 = vshra.s32 %v1330, 4
    %v1395 = vshra.s32 %v1331, 4
    %v1396 = vshra.s32 %v1332, 4
    %v1397 = vshra.s32 %v1333, 4
    %v1398 = vshra.s32 %v1334, 4
    %v1399 = vshra.s32 %v1335, 4
    %v1400 = vshra.s32 %v1336, 4
    %v1401 = vshra.s32 %v1337, 4
    %v1402 = vshra.s32 %v1338, 4
    %v1403 = vshra.s32 %v1339, 4
    %v1404 = vshra.s32 %v1340, 4
    %v1405 = vshra.s32 %v1341, 4
    %v1406 = vshra.s32 %v1342, 4
    %v1407 = vshra.s32 %v1343, 4
    %v1408 = vshra.s32 %v1344, 4
    %v1409 = vshra.s32 %v1345, 4
    %v1410 = vshra.s32 %v1346, 4
    %v1411 = vshra.s32 %v1347, 4
    %v1412 = vshra.s32 %v1348, 4
    %v1413 = vshra.s32 %v1349, 4
    %v1414 = vshra.s32 %v1350, 4
    %v1415 = vshra.s32 %v1351, 4
    %v1416 = vshra.s32 %v1352, 4
    %v1417 = vshra.s32 %v1353, 4
    %v1418 = vshra.s32 %v1354, 4
    %v1419 = vshra.s32 %v1355, 4
    %v1420 = vshra.s32 %v1356, 4
    %v1421 = vshra.s32 %v1357, 4
    %v1422 = vshra.s32 %v1358, 4
    %v1423 = vshra.s32 %v1359, 4
    %v1424 = vshra.s32 %v1360, 4
    %v1425 = vshra.s32 %v1361, 4
    %v1426 = vshra.s32 %v1362, 4
    %v1427 = vshra.s32 %v1363, 4
    %v1428 = vshra.s32 %v1364, 4
    %v1429 = vshra.s32 %v1365, 4
    %v1430 = vshra.s32 %v1366, 4
    %v1431 = vshra.s32 %v1367, 4
    %v1432 = vshra.s32 %v1368, 4
    %v1433 = vshra.s32 %v1369, 4
    %v1434 = vshra.s32 %v1370, 4
    %v1435 = vshra.s32 %v1371, 4
    %v1436 = vshra.s32 %v1372, 4
    %v1437 = vshra.s32 %v1373, 4
    %v1438 = vshra.s32 %v1374, 4
    %v1439 = vshra.s32 %v1375, 4
    %v1440 = vshra.s32 %v1376, 4
    %v1441 = vshra.s32 %v1377, 4
    %v1442 = vshra.s32 %v1378, 4
    %v1443 = vshra.s32 %v1379, 4
    %v1444 = vshra.s32 %v1380, 4
    %v1445 = vshra.s32 %v1381, 4
    %v1446 = vshra.s32 %v1382, 4
    %v1447 = vshra.s32 %v1383, 4
    %v1448 = vshra.s32 %v1384, 4
    %v1449 = vand.u32 %v1385, 15
    %v1450 = vand.u32 %v1386, 15
    %v1451 = vand.u32 %v1387, 15
    %v1452 = vand.u32 %v1388, 15
    %v1453 = vand.u32 %v1389, 15
    %v1454 = vand.u32 %v1390, 15
    %v1455 = vand.u32 %v1391, 15
    %v1456 = vand.u32 %v1392, 15
    %v1457 = vand.u32 %v1393, 15
    %v1458 = vand.u32 %v1394, 15
    %v1459 = vand.u32 %v1395, 15
    %v1460 = vand.u32 %v1396, 15
    %v1461 = vand.u32 %v1397, 15
    %v1462 = vand.u32 %v1398, 15
    %v1463 = vand.u32 %v1399, 15
    %v1464 = vand.u32 %v1400, 15
    %v1465 = vand.u32 %v1401, 15
    %v1466 = vand.u32 %v1402, 15
    %v1467 = vand.u32 %v1403, 15
    %v1468 = vand.u32 %v1404, 15
    %v1469 = vand.u32 %v1405, 15
    %v1470 = vand.u32 %v1406, 15
    %v1471 = vand.u32 %v1407, 15
    %v1472 = vand.u32 %v1408, 15
    %v1473 = vand.u32 %v1409, 15
    %v1474 = vand.u32 %v1410, 15
    %v1475 = vand.u32 %v1411, 15
    %v1476 = vand.u32 %v1412, 15
    %v1477 = vand.u32 %v1413, 15
    %v1478 = vand.u32 %v1414, 15
    %v1479 = vand.u32 %v1415, 15
    %v1480 = vand.u32 %v1416, 15
    %v1481 = vand.u32 %v1417, 15
    %v1482 = vand.u32 %v1418, 15
    %v1483 = vand.u32 %v1419, 15
    %v1484 = vand.u32 %v1420, 15
    %v1485 = vand.u32 %v1421, 15
    %v1486 = vand.u32 %v1422, 15
    %v1487 = vand.u32 %v1423, 15
    %v1488 = vand.u32 %v1424, 15
    %v1489 = vand.u32 %v1425, 15
    %v1490 = vand.u32 %v1426, 15
    %v1491 = vand.u32 %v1427, 15
    %v1492 = vand.u32 %v1428, 15
    %v1493 = vand.u32 %v1429, 15
    %v1494 = vand.u32 %v1430, 15
    %v1495 = vand.u32 %v1431, 15
    %v1496 = vand.u32 %v1432, 15
    %v1497 = vand.u32 %v1433, 15
    %v1498 = vand.u32 %v1434, 15
    %v1499 = vand.u32 %v1435, 15
    %v1500 = vand.u32 %v1436, 15
    %v1501 = vand.u32 %v1437, 15
    %v1502 = vand.u32 %v1438, 15
    %v1503 = vand.u32 %v1439, 15
    %v1504 = vand.u32 %v1440, 15
    %v1505 = vand.u32 %v1441, 15
    %v1506 = vand.u32 %v1442, 15
    %v1507 = vand.u32 %v1443, 15
    %v1508 = vand.u32 %v1444, 15
    %v1509 = vand.u32 %v1445, 15
    %v1510 = vand.u32 %v1446, 15
    %v1511 = vand.u32 %v1447, 15
    %v1512 = vand.u32 %v1448, 15
    %v1513 = vand.u32 %v1321, 15
    %v1514 = vand.u32 %v1322, 15
    %v1515 = vand.u32 %v1323, 15
    %v1516 = vand.u32 %v1324, 15
    %v1517 = vand.u32 %v1325, 15
    %v1518 = vand.u32 %v1326, 15
    %v1519 = vand.u32 %v1327, 15
    %v1520 = vand.u32 %v1328, 15
    %v1521 = vand.u32 %v1329, 15
    %v1522 = vand.u32 %v1330, 15
    %v1523 = vand.u32 %v1331, 15
    %v1524 = vand.u32 %v1332, 15
    %v1525 = vand.u32 %v1333, 15
    %v1526 = vand.u32 %v1334, 15
    %v1527 = vand.u32 %v1335, 15
    %v1528 = vand.u32 %v1336, 15
    %v1529 = vand.u32 %v1337, 15
    %v1530 = vand.u32 %v1338, 15
    %v1531 = vand.u32 %v1339, 15
    %v1532 = vand.u32 %v1340, 15
    %v1533 = vand.u32 %v1341, 15
    %v1534 = vand.u32 %v1342, 15
    %v1535 = vand.u32 %v1343, 15
    %v1536 = vand.u32 %v1344, 15
    %v1537 = vand.u32 %v1345, 15
    %v1538 = vand.u32 %v1346, 15
    %v1539 = vand.u32 %v1347, 15
    %v1540 = vand.u32 %v1348, 15
    %v1541 = vand.u32 %v1349, 15
    %v1542 = vand.u32 %v1350, 15
    %v1543 = vand.u32 %v1351, 15
    %v1544 = vand.u32 %v1352, 15
    %v1545 = vand.u32 %v1353, 15
    %v1546 = vand.u32 %v1354, 15
    %v1547 = vand.u32 %v1355, 15
    %v1548 = vand.u32 %v1356, 15
    %v1549 = vand.u32 %v1357, 15
    %v1550 = vand.u32 %v1358, 15
    %v1551 = vand.u32 %v1359, 15
    %v1552 = vand.u32 %v1360, 15
    %v1553 = vand.u32 %v1361, 15
    %v1554 = vand.u32 %v1362, 15
    %v1555 = vand.u32 %v1363, 15
    %v1556 = vand.u32 %v1364, 15
    %v1557 = vand.u32 %v1365, 15
    %v1558 = vand.u32 %v1366, 15
    %v1559 = vand.u32 %v1367, 15
    %v1560 = vand.u32 %v1368, 15
    %v1561 = vand.u32 %v1369, 15
    %v1562 = vand.u32 %v1370, 15
    %v1563 = vand.u32 %v1371, 15
    %v1564 = vand.u32 %v1372, 15
    %v1565 = vand.u32 %v1373, 15
    %v1566 = vand.u32 %v1374, 15
    %v1567 = vand.u32 %v1375, 15
    %v1568 = vand.u32 %v1376, 15
    %v1569 = vand.u32 %v1377, 15
    %v1570 = vand.u32 %v1378, 15
    %v1571 = vand.u32 %v1379, 15
    %v1572 = vand.u32 %v1380, 15
    %v1573 = vand.u32 %v1381, 15
    %v1574 = vand.u32 %v1382, 15
    %v1575 = vand.u32 %v1383, 15
    %v1576 = vand.u32 %v1384, 15
    %v1577 = vld [vmem:[%s4] sm:$0xff]
    %v1578 = vld [vmem:[%s4 + $0x8] sm:$0x1]
    %vm1641 = vcmask 1040384
    %v1642 = vrot.slane %v1256, 7
    %v1643 = vrot.slane %v1257, 7
    %v1644 = vsel %vm1641, %v1642, %v1643
    %v1645 = vrot.slane %v1258, 7
    %v1646 = vsel %vm1641, %v1643, %v1645
    %v1647 = vrot.slane %v1259, 7
    %v1648 = vsel %vm1641, %v1645, %v1647
    %v1649 = vrot.slane %v1260, 7
    %v1650 = vsel %vm1641, %v1647, %v1649
    %v1651 = vrot.slane %v1261, 7
    %v1652 = vsel %vm1641, %v1649, %v1651
    %v1653 = vrot.slane %v1262, 7
    %v1654 = vsel %vm1641, %v1651, %v1653
    %v1655 = vrot.slane %v1263, 7
    %v1656 = vsel %vm1641, %v1653, %v1655
    %v1657 = vrot.slane %v1264, 7
    %v1658 = vsel %vm1641, %v1655, %v1657
    %v1659 = vrot.slane %v1265, 7
    %v1660 = vsel %vm1641, %v1657, %v1659
    %v1661 = vrot.slane %v1266, 7
    %v1662 = vsel %vm1641, %v1659, %v1661
    %v1663 = vrot.slane %v1267, 7
    %v1664 = vsel %vm1641, %v1661, %v1663
    %v1665 = vrot.slane %v1268, 7
    %v1666 = vsel %vm1641, %v1663, %v1665
    %v1667 = vrot.slane %v1269, 7
    %v1668 = vsel %vm1641, %v1665, %v1667
    %v1669 = vrot.slane %v1270, 7
    %v1670 = vsel %vm1641, %v1667, %v1669
    %v1671 = vrot.slane %v1271, 7
    %v1672 = vsel %vm1641, %v1669, %v1671
    %v1673 = vrot.slane %v1272, 7
    %v1674 = vsel %vm1641, %v1671, %v1673
    %v1675 = vrot.slane %v1273, 7
    %v1676 = vsel %vm1641, %v1673, %v1675
    %v1677 = vrot.slane %v1274, 7
    %v1678 = vsel %vm1641, %v1675, %v1677
    %v1679 = vrot.slane %v1275, 7
    %v1680 = vsel %vm1641, %v1677, %v1679
    %v1681 = vrot.slane %v1276, 7
    %v1682 = vsel %vm1641, %v1679, %v1681
    %v1683 = vrot.slane %v1277, 7
    %v1684 = vsel %vm1641, %v1681, %v1683
    %v1685 = vrot.slane %v1278, 7
    %v1686 = vsel %vm1641, %v1683, %v1685
    %v1687 = vrot.slane %v1279, 7
    %v1688 = vsel %vm1641, %v1685, %v1687
    %v1689 = vrot.slane %v1280, 7
    %v1690 = vsel %vm1641, %v1687, %v1689
    %v1691 = vrot.slane %v1281, 7
    %v1692 = vsel %vm1641, %v1689, %v1691
    %v1693 = vrot.slane %v1282, 7
    %v1694 = vsel %vm1641, %v1691, %v1693
    %v1695 = vrot.slane %v1283, 7
    %v1696 = vsel %vm1641, %v1693, %v1695
    %v1697 = vrot.slane %v1284, 7
    %v1698 = vsel %vm1641, %v1695, %v1697
    %v1699 = vrot.slane %v1285, 7
    %v1700 = vsel %vm1641, %v1697, %v1699
    %v1701 = vrot.slane %v1286, 7
    %v1702 = vsel %vm1641, %v1699, %v1701
    %v1703 = vrot.slane %v1287, 7
    %v1704 = vsel %vm1641, %v1701, %v1703
    %v1705 = vrot.slane %v1288, 7
    %v1706 = vsel %vm1641, %v1703, %v1705
    %v1707 = vrot.slane %v1289, 7
    %v1708 = vsel %vm1641, %v1705, %v1707
    %v1709 = vrot.slane %v1290, 7
    %v1710 = vsel %vm1641, %v1707, %v1709
    %v1711 = vrot.slane %v1291, 7
    %v1712 = vsel %vm1641, %v1709, %v1711
    %v1713 = vrot.slane %v1292, 7
    %v1714 = vsel %vm1641, %v1711, %v1713
    %v1715 = vrot.slane %v1293, 7
    %v1716 = vsel %vm1641, %v1713, %v1715
    %v1717 = vrot.slane %v1294, 7
    %v1718 = vsel %vm1641, %v1715, %v1717
    %v1719 = vrot.slane %v1295, 7
    %v1720 = vsel %vm1641, %v1717, %v1719
    %v1721 = vrot.slane %v1296, 7
    %v1722 = vsel %vm1641, %v1719, %v1721
    %v1723 = vrot.slane %v1297, 7
    %v1724 = vsel %vm1641, %v1721, %v1723
    %v1725 = vrot.slane %v1298, 7
    %v1726 = vsel %vm1641, %v1723, %v1725
    %v1727 = vrot.slane %v1299, 7
    %v1728 = vsel %vm1641, %v1725, %v1727
    %v1729 = vrot.slane %v1300, 7
    %v1730 = vsel %vm1641, %v1727, %v1729
    %v1731 = vrot.slane %v1301, 7
    %v1732 = vsel %vm1641, %v1729, %v1731
    %v1733 = vrot.slane %v1302, 7
    %v1734 = vsel %vm1641, %v1731, %v1733
    %v1735 = vrot.slane %v1303, 7
    %v1736 = vsel %vm1641, %v1733, %v1735
    %v1737 = vrot.slane %v1304, 7
    %v1738 = vsel %vm1641, %v1735, %v1737
    %v1739 = vrot.slane %v1305, 7
    %v1740 = vsel %vm1641, %v1737, %v1739
    %v1741 = vrot.slane %v1306, 7
    %v1742 = vsel %vm1641, %v1739, %v1741
    %v1743 = vrot.slane %v1307, 7
    %v1744 = vsel %vm1641, %v1741, %v1743
    %v1745 = vrot.slane %v1308, 7
    %v1746 = vsel %vm1641, %v1743, %v1745
    %v1747 = vrot.slane %v1309, 7
    %v1748 = vsel %vm1641, %v1745, %v1747
    %v1749 = vrot.slane %v1310, 7
    %v1750 = vsel %vm1641, %v1747, %v1749
    %v1751 = vrot.slane %v1311, 7
    %v1752 = vsel %vm1641, %v1749, %v1751
    %v1753 = vrot.slane %v1312, 7
    %v1754 = vsel %vm1641, %v1751, %v1753
    %v1755 = vrot.slane %v1313, 7
    %v1756 = vsel %vm1641, %v1753, %v1755
    %v1757 = vrot.slane %v1314, 7
    %v1758 = vsel %vm1641, %v1755, %v1757
    %v1759 = vrot.slane %v1315, 7
    %v1760 = vsel %vm1641, %v1757, %v1759
    %v1761 = vrot.slane %v1316, 7
    %v1762 = vsel %vm1641, %v1759, %v1761
    %v1763 = vrot.slane %v1317, 7
    %v1764 = vsel %vm1641, %v1761, %v1763
    %v1827 = vsel %vm1641, 0.0, %v1642
    %vm1828 = vcmp.ge.s32.totalorder %v1450, 1
    %vm1829 = vcmp.ge.s32.totalorder %v1451, 1
    %vm1830 = vcmp.ge.s32.totalorder %v1452, 1
    %vm1831 = vcmp.ge.s32.totalorder %v1453, 1
    %vm1832 = vcmp.ge.s32.totalorder %v1454, 1
    %vm1833 = vcmp.ge.s32.totalorder %v1455, 1
    %vm1834 = vcmp.ge.s32.totalorder %v1456, 1
    %vm1835 = vcmp.ge.s32.totalorder %v1457, 1
    %vm1836 = vcmp.ge.s32.totalorder %v1458, 1
    %vm1837 = vcmp.ge.s32.totalorder %v1459, 1
    %vm1838 = vcmp.ge.s32.totalorder %v1460, 1
    %vm1839 = vcmp.ge.s32.totalorder %v1461, 1
    %vm1840 = vcmp.ge.s32.totalorder %v1462, 1
    %vm1841 = vcmp.ge.s32.totalorder %v1463, 1
    %vm1842 = vcmp.ge.s32.totalorder %v1464, 1
    %vm1843 = vcmp.ge.s32.totalorder %v1465, 1
    %vm1844 = vcmp.ge.s32.totalorder %v1466, 1
    %vm1845 = vcmp.ge.s32.totalorder %v1467, 1
    %vm1846 = vcmp.ge.s32.totalorder %v1468, 1
    %vm1847 = vcmp.ge.s32.totalorder %v1469, 1
    %vm1848 = vcmp.ge.s32.totalorder %v1470, 1
    %vm1849 = vcmp.ge.s32.totalorder %v1471, 1
    %vm1850 = vcmp.ge.s32.totalorder %v1472, 1
    %vm1851 = vcmp.ge.s32.totalorder %v1473, 1
    %vm1852 = vcmp.ge.s32.totalorder %v1474, 1
    %vm1853 = vcmp.ge.s32.totalorder %v1475, 1
    %vm1854 = vcmp.ge.s32.totalorder %v1476, 1
    %vm1855 = vcmp.ge.s32.totalorder %v1477, 1
    %vm1856 = vcmp.ge.s32.totalorder %v1478, 1
    %vm1857 = vcmp.ge.s32.totalorder %v1479, 1
    %vm1858 = vcmp.ge.s32.totalorder %v1480, 1
    %vm1859 = vcmp.ge.s32.totalorder %v1481, 1
    %vm1860 = vcmp.ge.s32.totalorder %v1482, 1
    %vm1861 = vcmp.ge.s32.totalorder %v1483, 1
    %vm1862 = vcmp.ge.s32.totalorder %v1484, 1
    %vm1863 = vcmp.ge.s32.totalorder %v1485, 1
    %vm1864 = vcmp.ge.s32.totalorder %v1486, 1
    %vm1865 = vcmp.ge.s32.totalorder %v1487, 1
    %vm1866 = vcmp.ge.s32.totalorder %v1488, 1
    %vm1867 = vcmp.ge.s32.totalorder %v1489, 1
    %vm1868 = vcmp.ge.s32.totalorder %v1490, 1
    %vm1869 = vcmp.ge.s32.totalorder %v1491, 1
    %vm1870 = vcmp.ge.s32.totalorder %v1492, 1
    %vm1871 = vcmp.ge.s32.totalorder %v1493, 1
    %vm1872 = vcmp.ge.s32.totalorder %v1494, 1
    %vm1873 = vcmp.ge.s32.totalorder %v1495, 1
    %vm1874 = vcmp.ge.s32.totalorder %v1496, 1
    %vm1875 = vcmp.ge.s32.totalorder %v1497, 1
    %vm1876 = vcmp.ge.s32.totalorder %v1498, 1
    %vm1877 = vcmp.ge.s32.totalorder %v1499, 1
    %vm1878 = vcmp.ge.s32.totalorder %v1500, 1
    %vm1879 = vcmp.ge.s32.totalorder %v1501, 1
    %vm1880 = vcmp.ge.s32.totalorder %v1502, 1
    %vm1881 = vcmp.ge.s32.totalorder %v1503, 1
    %vm1882 = vcmp.ge.s32.totalorder %v1504, 1
    %vm1883 = vcmp.ge.s32.totalorder %v1505, 1
    %vm1884 = vcmp.ge.s32.totalorder %v1506, 1
    %vm1885 = vcmp.ge.s32.totalorder %v1507, 1
    %vm1886 = vcmp.ge.s32.totalorder %v1508, 1
    %vm1887 = vcmp.ge.s32.totalorder %v1509, 1
    %vm1888 = vcmp.ge.s32.totalorder %v1510, 1
    %vm1889 = vcmp.ge.s32.totalorder %v1511, 1
    %vm1890 = vcmp.ge.s32.totalorder %v1512, 1
    %vm1891 = vcmp.ge.s32.totalorder %v1513, 1
    %vm1892 = vcmp.ge.s32.totalorder %v1514, 1
    %vm1893 = vcmp.ge.s32.totalorder %v1515, 1
    %vm1894 = vcmp.ge.s32.totalorder %v1516, 1
    %vm1895 = vcmp.ge.s32.totalorder %v1517, 1
    %vm1896 = vcmp.ge.s32.totalorder %v1518, 1
    %vm1897 = vcmp.ge.s32.totalorder %v1519, 1
    %vm1898 = vcmp.ge.s32.totalorder %v1520, 1
    %vm1899 = vcmp.ge.s32.totalorder %v1521, 1
    %vm1900 = vcmp.ge.s32.totalorder %v1522, 1
    %vm1901 = vcmp.ge.s32.totalorder %v1523, 1
    %vm1902 = vcmp.ge.s32.totalorder %v1524, 1
    %vm1903 = vcmp.ge.s32.totalorder %v1525, 1
    %vm1904 = vcmp.ge.s32.totalorder %v1526, 1
    %vm1905 = vcmp.ge.s32.totalorder %v1527, 1
    %vm1906 = vcmp.ge.s32.totalorder %v1528, 1
    %vm1907 = vcmp.ge.s32.totalorder %v1529, 1
    %vm1908 = vcmp.ge.s32.totalorder %v1530, 1
    %vm1909 = vcmp.ge.s32.totalorder %v1531, 1
    %vm1910 = vcmp.ge.s32.totalorder %v1532, 1
    %vm1911 = vcmp.ge.s32.totalorder %v1533, 1
    %vm1912 = vcmp.ge.s32.totalorder %v1534, 1
    %vm1913 = vcmp.ge.s32.totalorder %v1535, 1
    %vm1914 = vcmp.ge.s32.totalorder %v1536, 1
    %vm1915 = vcmp.ge.s32.totalorder %v1537, 1
    %vm1916 = vcmp.ge.s32.totalorder %v1538, 1
    %vm1917 = vcmp.ge.s32.totalorder %v1539, 1
    %vm1918 = vcmp.ge.s32.totalorder %v1540, 1
    %vm1919 = vcmp.ge.s32.totalorder %v1541, 1
    %vm1920 = vcmp.ge.s32.totalorder %v1542, 1
    %vm1921 = vcmp.ge.s32.totalorder %v1543, 1
    %vm1922 = vcmp.ge.s32.totalorder %v1544, 1
    %vm1923 = vcmp.ge.s32.totalorder %v1545, 1
    %vm1924 = vcmp.ge.s32.totalorder %v1546, 1
    %vm1925 = vcmp.ge.s32.totalorder %v1547, 1
    %vm1926 = vcmp.ge.s32.totalorder %v1548, 1
    %vm1927 = vcmp.ge.s32.totalorder %v1549, 1
    %vm1928 = vcmp.ge.s32.totalorder %v1550, 1
    %vm1929 = vcmp.ge.s32.totalorder %v1551, 1
    %vm1930 = vcmp.ge.s32.totalorder %v1552, 1
    %vm1931 = vcmp.ge.s32.totalorder %v1553, 1
    %vm1932 = vcmp.ge.s32.totalorder %v1554, 1
    %vm1933 = vcmp.ge.s32.totalorder %v1555, 1
    %vm1934 = vcmp.ge.s32.totalorder %v1556, 1
    %vm1935 = vcmp.ge.s32.totalorder %v1557, 1
    %vm1936 = vcmp.ge.s32.totalorder %v1558, 1
    %vm1937 = vcmp.ge.s32.totalorder %v1559, 1
    %vm1938 = vcmp.ge.s32.totalorder %v1560, 1
    %vm1939 = vcmp.ge.s32.totalorder %v1561, 1
    %vm1940 = vcmp.ge.s32.totalorder %v1562, 1
    %vm1941 = vcmp.ge.s32.totalorder %v1563, 1
    %vm1942 = vcmp.ge.s32.totalorder %v1564, 1
    %vm1943 = vcmp.ge.s32.totalorder %v1565, 1
    %vm1944 = vcmp.ge.s32.totalorder %v1566, 1
    %vm1945 = vcmp.ge.s32.totalorder %v1567, 1
    %vm1946 = vcmp.ge.s32.totalorder %v1568, 1
    %vm1947 = vcmp.ge.s32.totalorder %v1569, 1
    %vm1948 = vcmp.ge.s32.totalorder %v1570, 1
    %vm1949 = vcmp.ge.s32.totalorder %v1571, 1
    %vm1950 = vcmp.ge.s32.totalorder %v1572, 1
    %vm1951 = vcmp.ge.s32.totalorder %v1573, 1
    %vm1952 = vcmp.ge.s32.totalorder %v1574, 1
    %vm1953 = vcmp.ge.s32.totalorder %v1575, 1
    %vm1954 = vcmp.ge.s32.totalorder %v1576, 1
    %vm1955 = vmand %vm1829, %vm1893
    %vm1956 = vmand %vm1830, %vm1894
    %vm1957 = vmand %vm1831, %vm1895
    %vm1958 = vmand %vm1832, %vm1896
    %vm1959 = vmand %vm1833, %vm1897
    %vm1960 = vmand %vm1834, %vm1898
    %vm1961 = vmand %vm1835, %vm1899
    %vm1962 = vmand %vm1836, %vm1900
    %vm1963 = vmand %vm1837, %vm1901
    %vm1964 = vmand %vm1838, %vm1902
    %vm1965 = vmand %vm1839, %vm1903
    %vm1966 = vmand %vm1840, %vm1904
    %vm1967 = vmand %vm1841, %vm1905
    %vm1968 = vmand %vm1842, %vm1906
    %vm1969 = vmand %vm1843, %vm1907
    %vm1970 = vmand %vm1844, %vm1908
    %vm1971 = vmand %vm1845, %vm1909
    %vm1972 = vmand %vm1846, %vm1910
    %vm1973 = vmand %vm1847, %vm1911
    %vm1974 = vmand %vm1848, %vm1912
    %vm1975 = vmand %vm1849, %vm1913
    %vm1976 = vmand %vm1850, %vm1914
    %vm1977 = vmand %vm1851, %vm1915
    %vm1978 = vmand %vm1852, %vm1916
    %vm1979 = vmand %vm1853, %vm1917
    %vm1980 = vmand %vm1854, %vm1918
    %vm1981 = vmand %vm1855, %vm1919
    %vm1982 = vmand %vm1856, %vm1920
    %vm1983 = vmand %vm1857, %vm1921
    %vm1984 = vmand %vm1858, %vm1922
    %vm1985 = vmand %vm1859, %vm1923
    %vm1986 = vmand %vm1860, %vm1924
    %vm1987 = vmand %vm1861, %vm1925
    %vm1988 = vmand %vm1862, %vm1926
    %vm1989 = vmand %vm1863, %vm1927
    %vm1990 = vmand %vm1864, %vm1928
    %vm1991 = vmand %vm1865, %vm1929
    %vm1992 = vmand %vm1866, %vm1930
    %vm1993 = vmand %vm1867, %vm1931
    %vm1994 = vmand %vm1868, %vm1932
    %vm1995 = vmand %vm1869, %vm1933
    %vm1996 = vmand %vm1870, %vm1934
    %vm1997 = vmand %vm1871, %vm1935
    %vm1998 = vmand %vm1872, %vm1936
    %vm1999 = vmand %vm1873, %vm1937
    %vm2000 = vmand %vm1874, %vm1938
    %vm2001 = vmand %vm1875, %vm1939
    %vm2002 = vmand %vm1876, %vm1940
    %vm2003 = vmand %vm1877, %vm1941
    %vm2004 = vmand %vm1878, %vm1942
    %vm2005 = vmand %vm1879, %vm1943
    %vm2006 = vmand %vm1880, %vm1944
    %vm2007 = vmand %vm1881, %vm1945
    %vm2008 = vmand %vm1882, %vm1946
    %vm2009 = vmand %vm1883, %vm1947
    %vm2010 = vmand %vm1884, %vm1948
    %vm2011 = vmand %vm1885, %vm1949
    %vm2012 = vmand %vm1886, %vm1950
    %vm2013 = vmand %vm1887, %vm1951
    %vm2014 = vmand %vm1888, %vm1952
    %vm2015 = vmand %vm1889, %vm1953
    %vm2016 = vmand %vm1890, %vm1954
    %v2017 = vsel %vm1955, 1, 0
    %v2018 = vsel %vm1956, 1, 0
    %v2019 = vsel %vm1957, 1, 0
    %v2020 = vsel %vm1958, 1, 0
    %v2021 = vsel %vm1959, 1, 0
    %v2022 = vsel %vm1960, 1, 0
    %v2023 = vsel %vm1961, 1, 0
    %v2024 = vsel %vm1962, 1, 0
    %v2025 = vsel %vm1963, 1, 0
    %v2026 = vsel %vm1964, 1, 0
    %v2027 = vsel %vm1965, 1, 0
    %v2028 = vsel %vm1966, 1, 0
    %v2029 = vsel %vm1967, 1, 0
    %v2030 = vsel %vm1968, 1, 0
    %v2031 = vsel %vm1969, 1, 0
    %v2032 = vsel %vm1970, 1, 0
    %v2033 = vsel %vm1971, 1, 0
    %v2034 = vsel %vm1972, 1, 0
    %v2035 = vsel %vm1973, 1, 0
    %v2036 = vsel %vm1974, 1, 0
    %v2037 = vsel %vm1975, 1, 0
    %v2038 = vsel %vm1976, 1, 0
    %v2039 = vsel %vm1977, 1, 0
    %v2040 = vsel %vm1978, 1, 0
    %v2041 = vsel %vm1979, 1, 0
    %v2042 = vsel %vm1980, 1, 0
    %v2043 = vsel %vm1981, 1, 0
    %v2044 = vsel %vm1982, 1, 0
    %v2045 = vsel %vm1983, 1, 0
    %v2046 = vsel %vm1984, 1, 0
    %v2047 = vsel %vm1985, 1, 0
    %v2048 = vsel %vm1986, 1, 0
    %v2049 = vsel %vm1987, 1, 0
    %v2050 = vsel %vm1988, 1, 0
    %v2051 = vsel %vm1989, 1, 0
    %v2052 = vsel %vm1990, 1, 0
    %v2053 = vsel %vm1991, 1, 0
    %v2054 = vsel %vm1992, 1, 0
    %v2055 = vsel %vm1993, 1, 0
    %v2056 = vsel %vm1994, 1, 0
    %v2057 = vsel %vm1995, 1, 0
    %v2058 = vsel %vm1996, 1, 0
    %v2059 = vsel %vm1997, 1, 0
    %v2060 = vsel %vm1998, 1, 0
    %v2061 = vsel %vm1999, 1, 0
    %v2062 = vsel %vm2000, 1, 0
    %v2063 = vsel %vm2001, 1, 0
    %v2064 = vsel %vm2002, 1, 0
    %v2065 = vsel %vm2003, 1, 0
    %v2066 = vsel %vm2004, 1, 0
    %v2067 = vsel %vm2005, 1, 0
    %v2068 = vsel %vm2006, 1, 0
    %v2069 = vsel %vm2007, 1, 0
    %v2070 = vsel %vm2008, 1, 0
    %v2071 = vsel %vm2009, 1, 0
    %v2072 = vsel %vm2010, 1, 0
    %v2073 = vsel %vm2011, 1, 0
    %v2074 = vsel %vm2012, 1, 0
    %v2075 = vsel %vm2013, 1, 0
    %v2076 = vsel %vm2014, 1, 0
    %v2077 = vsel %vm2015, 1, 0
    %v2078 = vsel %vm2016, 1, 0
    %vm2079 = vcmp.eq.s32.totalorder %v2017, 1
    %vm2080 = vcmp.eq.s32.totalorder %v2018, 1
    %vm2081 = vcmp.eq.s32.totalorder %v2019, 1
    %vm2082 = vcmp.eq.s32.totalorder %v2020, 1
    %vm2083 = vcmp.eq.s32.totalorder %v2021, 1
    %vm2084 = vcmp.eq.s32.totalorder %v2022, 1
    %vm2085 = vcmp.eq.s32.totalorder %v2023, 1
    %vm2086 = vcmp.eq.s32.totalorder %v2024, 1
    %vm2087 = vcmp.eq.s32.totalorder %v2025, 1
    %vm2088 = vcmp.eq.s32.totalorder %v2026, 1
    %vm2089 = vcmp.eq.s32.totalorder %v2027, 1
    %vm2090 = vcmp.eq.s32.totalorder %v2028, 1
    %vm2091 = vcmp.eq.s32.totalorder %v2029, 1
    %vm2092 = vcmp.eq.s32.totalorder %v2030, 1
    %vm2093 = vcmp.eq.s32.totalorder %v2031, 1
    %vm2094 = vcmp.eq.s32.totalorder %v2032, 1
    %vm2095 = vcmp.eq.s32.totalorder %v2033, 1
    %vm2096 = vcmp.eq.s32.totalorder %v2034, 1
    %vm2097 = vcmp.eq.s32.totalorder %v2035, 1
    %vm2098 = vcmp.eq.s32.totalorder %v2036, 1
    %vm2099 = vcmp.eq.s32.totalorder %v2037, 1
    %vm2100 = vcmp.eq.s32.totalorder %v2038, 1
    %vm2101 = vcmp.eq.s32.totalorder %v2039, 1
    %vm2102 = vcmp.eq.s32.totalorder %v2040, 1
    %vm2103 = vcmp.eq.s32.totalorder %v2041, 1
    %vm2104 = vcmp.eq.s32.totalorder %v2042, 1
    %vm2105 = vcmp.eq.s32.totalorder %v2043, 1
    %vm2106 = vcmp.eq.s32.totalorder %v2044, 1
    %vm2107 = vcmp.eq.s32.totalorder %v2045, 1
    %vm2108 = vcmp.eq.s32.totalorder %v2046, 1
    %vm2109 = vcmp.eq.s32.totalorder %v2047, 1
    %vm2110 = vcmp.eq.s32.totalorder %v2048, 1
    %vm2111 = vcmp.eq.s32.totalorder %v2049, 1
    %vm2112 = vcmp.eq.s32.totalorder %v2050, 1
    %vm2113 = vcmp.eq.s32.totalorder %v2051, 1
    %vm2114 = vcmp.eq.s32.totalorder %v2052, 1
    %vm2115 = vcmp.eq.s32.totalorder %v2053, 1
    %vm2116 = vcmp.eq.s32.totalorder %v2054, 1
    %vm2117 = vcmp.eq.s32.totalorder %v2055, 1
    %vm2118 = vcmp.eq.s32.totalorder %v2056, 1
    %vm2119 = vcmp.eq.s32.totalorder %v2057, 1
    %vm2120 = vcmp.eq.s32.totalorder %v2058, 1
    %vm2121 = vcmp.eq.s32.totalorder %v2059, 1
    %vm2122 = vcmp.eq.s32.totalorder %v2060, 1
    %vm2123 = vcmp.eq.s32.totalorder %v2061, 1
    %vm2124 = vcmp.eq.s32.totalorder %v2062, 1
    %vm2125 = vcmp.eq.s32.totalorder %v2063, 1
    %vm2126 = vcmp.eq.s32.totalorder %v2064, 1
    %vm2127 = vcmp.eq.s32.totalorder %v2065, 1
    %vm2128 = vcmp.eq.s32.totalorder %v2066, 1
    %vm2129 = vcmp.eq.s32.totalorder %v2067, 1
    %vm2130 = vcmp.eq.s32.totalorder %v2068, 1
    %vm2131 = vcmp.eq.s32.totalorder %v2069, 1
    %vm2132 = vcmp.eq.s32.totalorder %v2070, 1
    %vm2133 = vcmp.eq.s32.totalorder %v2071, 1
    %vm2134 = vcmp.eq.s32.totalorder %v2072, 1
    %vm2135 = vcmp.eq.s32.totalorder %v2073, 1
    %vm2136 = vcmp.eq.s32.totalorder %v2074, 1
    %vm2137 = vcmp.eq.s32.totalorder %v2075, 1
    %vm2138 = vcmp.eq.s32.totalorder %v2076, 1
    %vm2139 = vcmp.eq.s32.totalorder %v2077, 1
    %vm2140 = vcmp.eq.s32.totalorder %v2078, 1
    %v2141 = vsel %vm2079, %v1827, 0.0
    %v2142 = vsel %vm2080, %v1644, 0.0
    %v2143 = vsel %vm2081, %v1646, 0.0
    %v2144 = vsel %vm2082, %v1648, 0.0
    %v2145 = vsel %vm2083, %v1650, 0.0
    %v2146 = vsel %vm2084, %v1652, 0.0
    %v2147 = vsel %vm2085, %v1654, 0.0
    %v2148 = vsel %vm2086, %v1656, 0.0
    %v2149 = vsel %vm2087, %v1658, 0.0
    %v2150 = vsel %vm2088, %v1660, 0.0
    %v2151 = vsel %vm2089, %v1662, 0.0
    %v2152 = vsel %vm2090, %v1664, 0.0
    %v2153 = vsel %vm2091, %v1666, 0.0
    %v2154 = vsel %vm2092, %v1668, 0.0
    %v2155 = vsel %vm2093, %v1670, 0.0
    %v2156 = vsel %vm2094, %v1672, 0.0
    %v2157 = vsel %vm2095, %v1674, 0.0
    %v2158 = vsel %vm2096, %v1676, 0.0
    %v2159 = vsel %vm2097, %v1678, 0.0
    %v2160 = vsel %vm2098, %v1680, 0.0
    %v2161 = vsel %vm2099, %v1682, 0.0
    %v2162 = vsel %vm2100, %v1684, 0.0
    %v2163 = vsel %vm2101, %v1686, 0.0
    %v2164 = vsel %vm2102, %v1688, 0.0
    %v2165 = vsel %vm2103, %v1690, 0.0
    %v2166 = vsel %vm2104, %v1692, 0.0
    %v2167 = vsel %vm2105, %v1694, 0.0
    %v2168 = vsel %vm2106, %v1696, 0.0
    %v2169 = vsel %vm2107, %v1698, 0.0
    %v2170 = vsel %vm2108, %v1700, 0.0
    %v2171 = vsel %vm2109, %v1702, 0.0
    %v2172 = vsel %vm2110, %v1704, 0.0
    %v2173 = vsel %vm2111, %v1706, 0.0
    %v2174 = vsel %vm2112, %v1708, 0.0
    %v2175 = vsel %vm2113, %v1710, 0.0
    %v2176 = vsel %vm2114, %v1712, 0.0
    %v2177 = vsel %vm2115, %v1714, 0.0
    %v2178 = vsel %vm2116, %v1716, 0.0
    %v2179 = vsel %vm2117, %v1718, 0.0
    %v2180 = vsel %vm2118, %v1720, 0.0
    %v2181 = vsel %vm2119, %v1722, 0.0
    %v2182 = vsel %vm2120, %v1724, 0.0
    %v2183 = vsel %vm2121, %v1726, 0.0
    %v2184 = vsel %vm2122, %v1728, 0.0
    %v2185 = vsel %vm2123, %v1730, 0.0
    %v2186 = vsel %vm2124, %v1732, 0.0
    %v2187 = vsel %vm2125, %v1734, 0.0
    %v2188 = vsel %vm2126, %v1736, 0.0
    %v2189 = vsel %vm2127, %v1738, 0.0
    %v2190 = vsel %vm2128, %v1740, 0.0
    %v2191 = vsel %vm2129, %v1742, 0.0
    %v2192 = vsel %vm2130, %v1744, 0.0
    %v2193 = vsel %vm2131, %v1746, 0.0
    %v2194 = vsel %vm2132, %v1748, 0.0
    %v2195 = vsel %vm2133, %v1750, 0.0
    %v2196 = vsel %vm2134, %v1752, 0.0
    %v2197 = vsel %vm2135, %v1754, 0.0
    %v2198 = vsel %vm2136, %v1756, 0.0
    %v2199 = vsel %vm2137, %v1758, 0.0
    %v2200 = vsel %vm2138, %v1760, 0.0
    %v2201 = vsel %vm2139, %v1762, 0.0
    %v2202 = vsel %vm2140, %v1764, 0.0
    %v2203 = vlaneseq
    %v2204 = vshrl.u32 %v2203, 7
    %v2205 = vsub.s32 0, %v2204
    %v2206 = vrot.slane %v1577, %v2205
    %v2207 = vmul.f32 %v2206, 0.0
    %v2208 = vmul.f32 %v2141, %v2206
    %v2209 = vmul.f32 %v2142, %v2206
    %v2210 = vmul.f32 %v2143, %v2206
    %v2211 = vmul.f32 %v2144, %v2206
    %v2212 = vmul.f32 %v2145, %v2206
    %v2213 = vmul.f32 %v2146, %v2206
    %v2214 = vmul.f32 %v2147, %v2206
    %v2215 = vmul.f32 %v2148, %v2206
    %v2216 = vmul.f32 %v2149, %v2206
    %v2217 = vmul.f32 %v2150, %v2206
    %v2218 = vmul.f32 %v2151, %v2206
    %v2219 = vmul.f32 %v2152, %v2206
    %v2220 = vmul.f32 %v2153, %v2206
    %v2221 = vmul.f32 %v2154, %v2206
    %v2222 = vmul.f32 %v2155, %v2206
    %v2223 = vmul.f32 %v2156, %v2206
    %v2224 = vmul.f32 %v2157, %v2206
    %v2225 = vmul.f32 %v2158, %v2206
    %v2226 = vmul.f32 %v2159, %v2206
    %v2227 = vmul.f32 %v2160, %v2206
    %v2228 = vmul.f32 %v2161, %v2206
    %v2229 = vmul.f32 %v2162, %v2206
    %v2230 = vmul.f32 %v2163, %v2206
    %v2231 = vmul.f32 %v2164, %v2206
    %v2232 = vmul.f32 %v2165, %v2206
    %v2233 = vmul.f32 %v2166, %v2206
    %v2234 = vmul.f32 %v2167, %v2206
    %v2235 = vmul.f32 %v2168, %v2206
    %v2236 = vmul.f32 %v2169, %v2206
    %v2237 = vmul.f32 %v2170, %v2206
    %v2238 = vmul.f32 %v2171, %v2206
    %v2239 = vmul.f32 %v2172, %v2206
    %v2240 = vmul.f32 %v2173, %v2206
    %v2241 = vmul.f32 %v2174, %v2206
    %v2242 = vmul.f32 %v2175, %v2206
    %v2243 = vmul.f32 %v2176, %v2206
    %v2244 = vmul.f32 %v2177, %v2206
    %v2245 = vmul.f32 %v2178, %v2206
    %v2246 = vmul.f32 %v2179, %v2206
    %v2247 = vmul.f32 %v2180, %v2206
    %v2248 = vmul.f32 %v2181, %v2206
    %v2249 = vmul.f32 %v2182, %v2206
    %v2250 = vmul.f32 %v2183, %v2206
    %v2251 = vmul.f32 %v2184, %v2206
    %v2252 = vmul.f32 %v2185, %v2206
    %v2253 = vmul.f32 %v2186, %v2206
    %v2254 = vmul.f32 %v2187, %v2206
    %v2255 = vmul.f32 %v2188, %v2206
    %v2256 = vmul.f32 %v2189, %v2206
    %v2257 = vmul.f32 %v2190, %v2206
    %v2258 = vmul.f32 %v2191, %v2206
    %v2259 = vmul.f32 %v2192, %v2206
    %v2260 = vmul.f32 %v2193, %v2206
    %v2261 = vmul.f32 %v2194, %v2206
    %v2262 = vmul.f32 %v2195, %v2206
    %v2263 = vmul.f32 %v2196, %v2206
    %v2264 = vmul.f32 %v2197, %v2206
    %v2265 = vmul.f32 %v2198, %v2206
    %v2266 = vmul.f32 %v2199, %v2206
    %v2267 = vmul.f32 %v2200, %v2206
    %v2268 = vmul.f32 %v2201, %v2206
    %v2269 = vmul.f32 %v2202, %v2206
    %v2270 = vsel %vm1829, 1, 0
    %v2271 = vsel %vm1830, 1, 0
    %v2272 = vsel %vm1831, 1, 0
    %v2273 = vsel %vm1832, 1, 0
    %v2274 = vsel %vm1833, 1, 0
    %v2275 = vsel %vm1834, 1, 0
    %v2276 = vsel %vm1835, 1, 0
    %v2277 = vsel %vm1836, 1, 0
    %v2278 = vsel %vm1837, 1, 0
    %v2279 = vsel %vm1838, 1, 0
    %v2280 = vsel %vm1839, 1, 0
    %v2281 = vsel %vm1840, 1, 0
    %v2282 = vsel %vm1841, 1, 0
    %v2283 = vsel %vm1842, 1, 0
    %v2284 = vsel %vm1843, 1, 0
    %v2285 = vsel %vm1844, 1, 0
    %v2286 = vsel %vm1845, 1, 0
    %v2287 = vsel %vm1846, 1, 0
    %v2288 = vsel %vm1847, 1, 0
    %v2289 = vsel %vm1848, 1, 0
    %v2290 = vsel %vm1849, 1, 0
    %v2291 = vsel %vm1850, 1, 0
    %v2292 = vsel %vm1851, 1, 0
    %v2293 = vsel %vm1852, 1, 0
    %v2294 = vsel %vm1853, 1, 0
    %v2295 = vsel %vm1854, 1, 0
    %v2296 = vsel %vm1855, 1, 0
    %v2297 = vsel %vm1856, 1, 0
    %v2298 = vsel %vm1857, 1, 0
    %v2299 = vsel %vm1858, 1, 0
    %v2300 = vsel %vm1859, 1, 0
    %v2301 = vsel %vm1860, 1, 0
    %v2302 = vsel %vm1861, 1, 0
    %v2303 = vsel %vm1862, 1, 0
    %v2304 = vsel %vm1863, 1, 0
    %v2305 = vsel %vm1864, 1, 0
    %v2306 = vsel %vm1865, 1, 0
    %v2307 = vsel %vm1866, 1, 0
    %v2308 = vsel %vm1867, 1, 0
    %v2309 = vsel %vm1868, 1, 0
    %v2310 = vsel %vm1869, 1, 0
    %v2311 = vsel %vm1870, 1, 0
    %v2312 = vsel %vm1871, 1, 0
    %v2313 = vsel %vm1872, 1, 0
    %v2314 = vsel %vm1873, 1, 0
    %v2315 = vsel %vm1874, 1, 0
    %v2316 = vsel %vm1875, 1, 0
    %v2317 = vsel %vm1876, 1, 0
    %v2318 = vsel %vm1877, 1, 0
    %v2319 = vsel %vm1878, 1, 0
    %v2320 = vsel %vm1879, 1, 0
    %v2321 = vsel %vm1880, 1, 0
    %v2322 = vsel %vm1881, 1, 0
    %v2323 = vsel %vm1882, 1, 0
    %v2324 = vsel %vm1883, 1, 0
    %v2325 = vsel %vm1884, 1, 0
    %v2326 = vsel %vm1885, 1, 0
    %v2327 = vsel %vm1886, 1, 0
    %v2328 = vsel %vm1887, 1, 0
    %v2329 = vsel %vm1888, 1, 0
    %v2330 = vsel %vm1889, 1, 0
    %v2331 = vsel %vm1890, 1, 0
    %vm2332 = vcmp.eq.s32.totalorder %v2270, 1
    %vm2333 = vcmp.eq.s32.totalorder %v2271, 1
    %vm2334 = vcmp.eq.s32.totalorder %v2272, 1
    %vm2335 = vcmp.eq.s32.totalorder %v2273, 1
    %vm2336 = vcmp.eq.s32.totalorder %v2274, 1
    %vm2337 = vcmp.eq.s32.totalorder %v2275, 1
    %vm2338 = vcmp.eq.s32.totalorder %v2276, 1
    %vm2339 = vcmp.eq.s32.totalorder %v2277, 1
    %vm2340 = vcmp.eq.s32.totalorder %v2278, 1
    %vm2341 = vcmp.eq.s32.totalorder %v2279, 1
    %vm2342 = vcmp.eq.s32.totalorder %v2280, 1
    %vm2343 = vcmp.eq.s32.totalorder %v2281, 1
    %vm2344 = vcmp.eq.s32.totalorder %v2282, 1
    %vm2345 = vcmp.eq.s32.totalorder %v2283, 1
    %vm2346 = vcmp.eq.s32.totalorder %v2284, 1
    %vm2347 = vcmp.eq.s32.totalorder %v2285, 1
    %vm2348 = vcmp.eq.s32.totalorder %v2286, 1
    %vm2349 = vcmp.eq.s32.totalorder %v2287, 1
    %vm2350 = vcmp.eq.s32.totalorder %v2288, 1
    %vm2351 = vcmp.eq.s32.totalorder %v2289, 1
    %vm2352 = vcmp.eq.s32.totalorder %v2290, 1
    %vm2353 = vcmp.eq.s32.totalorder %v2291, 1
    %vm2354 = vcmp.eq.s32.totalorder %v2292, 1
    %vm2355 = vcmp.eq.s32.totalorder %v2293, 1
    %vm2356 = vcmp.eq.s32.totalorder %v2294, 1
    %vm2357 = vcmp.eq.s32.totalorder %v2295, 1
    %vm2358 = vcmp.eq.s32.totalorder %v2296, 1
    %vm2359 = vcmp.eq.s32.totalorder %v2297, 1
    %vm2360 = vcmp.eq.s32.totalorder %v2298, 1
    %vm2361 = vcmp.eq.s32.totalorder %v2299, 1
    %vm2362 = vcmp.eq.s32.totalorder %v2300, 1
    %vm2363 = vcmp.eq.s32.totalorder %v2301, 1
    %vm2364 = vcmp.eq.s32.totalorder %v2302, 1
    %vm2365 = vcmp.eq.s32.totalorder %v2303, 1
    %vm2366 = vcmp.eq.s32.totalorder %v2304, 1
    %vm2367 = vcmp.eq.s32.totalorder %v2305, 1
    %vm2368 = vcmp.eq.s32.totalorder %v2306, 1
    %vm2369 = vcmp.eq.s32.totalorder %v2307, 1
    %vm2370 = vcmp.eq.s32.totalorder %v2308, 1
    %vm2371 = vcmp.eq.s32.totalorder %v2309, 1
    %vm2372 = vcmp.eq.s32.totalorder %v2310, 1
    %vm2373 = vcmp.eq.s32.totalorder %v2311, 1
    %vm2374 = vcmp.eq.s32.totalorder %v2312, 1
    %vm2375 = vcmp.eq.s32.totalorder %v2313, 1
    %vm2376 = vcmp.eq.s32.totalorder %v2314, 1
    %vm2377 = vcmp.eq.s32.totalorder %v2315, 1
    %vm2378 = vcmp.eq.s32.totalorder %v2316, 1
    %vm2379 = vcmp.eq.s32.totalorder %v2317, 1
    %vm2380 = vcmp.eq.s32.totalorder %v2318, 1
    %vm2381 = vcmp.eq.s32.totalorder %v2319, 1
    %vm2382 = vcmp.eq.s32.totalorder %v2320, 1
    %vm2383 = vcmp.eq.s32.totalorder %v2321, 1
    %vm2384 = vcmp.eq.s32.totalorder %v2322, 1
    %vm2385 = vcmp.eq.s32.totalorder %v2323, 1
    %vm2386 = vcmp.eq.s32.totalorder %v2324, 1
    %vm2387 = vcmp.eq.s32.totalorder %v2325, 1
    %vm2388 = vcmp.eq.s32.totalorder %v2326, 1
    %vm2389 = vcmp.eq.s32.totalorder %v2327, 1
    %vm2390 = vcmp.eq.s32.totalorder %v2328, 1
    %vm2391 = vcmp.eq.s32.totalorder %v2329, 1
    %vm2392 = vcmp.eq.s32.totalorder %v2330, 1
    %vm2393 = vcmp.eq.s32.totalorder %v2331, 1
    %v2394 = vsel %vm2332, %v1256, 0.0
    %v2395 = vsel %vm2333, %v1257, 0.0
    %v2396 = vsel %vm2334, %v1258, 0.0
    %v2397 = vsel %vm2335, %v1259, 0.0
    %v2398 = vsel %vm2336, %v1260, 0.0
    %v2399 = vsel %vm2337, %v1261, 0.0
    %v2400 = vsel %vm2338, %v1262, 0.0
    %v2401 = vsel %vm2339, %v1263, 0.0
    %v2402 = vsel %vm2340, %v1264, 0.0
    %v2403 = vsel %vm2341, %v1265, 0.0
    %v2404 = vsel %vm2342, %v1266, 0.0
    %v2405 = vsel %vm2343, %v1267, 0.0
    %v2406 = vsel %vm2344, %v1268, 0.0
    %v2407 = vsel %vm2345, %v1269, 0.0
    %v2408 = vsel %vm2346, %v1270, 0.0
    %v2409 = vsel %vm2347, %v1271, 0.0
    %v2410 = vsel %vm2348, %v1272, 0.0
    %v2411 = vsel %vm2349, %v1273, 0.0
    %v2412 = vsel %vm2350, %v1274, 0.0
    %v2413 = vsel %vm2351, %v1275, 0.0
    %v2414 = vsel %vm2352, %v1276, 0.0
    %v2415 = vsel %vm2353, %v1277, 0.0
    %v2416 = vsel %vm2354, %v1278, 0.0
    %v2417 = vsel %vm2355, %v1279, 0.0
    %v2418 = vsel %vm2356, %v1280, 0.0
    %v2419 = vsel %vm2357, %v1281, 0.0
    %v2420 = vsel %vm2358, %v1282, 0.0
    %v2421 = vsel %vm2359, %v1283, 0.0
    %v2422 = vsel %vm2360, %v1284, 0.0
    %v2423 = vsel %vm2361, %v1285, 0.0
    %v2424 = vsel %vm2362, %v1286, 0.0
    %v2425 = vsel %vm2363, %v1287, 0.0
    %v2426 = vsel %vm2364, %v1288, 0.0
    %v2427 = vsel %vm2365, %v1289, 0.0
    %v2428 = vsel %vm2366, %v1290, 0.0
    %v2429 = vsel %vm2367, %v1291, 0.0
    %v2430 = vsel %vm2368, %v1292, 0.0
    %v2431 = vsel %vm2369, %v1293, 0.0
    %v2432 = vsel %vm2370, %v1294, 0.0
    %v2433 = vsel %vm2371, %v1295, 0.0
    %v2434 = vsel %vm2372, %v1296, 0.0
    %v2435 = vsel %vm2373, %v1297, 0.0
    %v2436 = vsel %vm2374, %v1298, 0.0
    %v2437 = vsel %vm2375, %v1299, 0.0
    %v2438 = vsel %vm2376, %v1300, 0.0
    %v2439 = vsel %vm2377, %v1301, 0.0
    %v2440 = vsel %vm2378, %v1302, 0.0
    %v2441 = vsel %vm2379, %v1303, 0.0
    %v2442 = vsel %vm2380, %v1304, 0.0
    %v2443 = vsel %vm2381, %v1305, 0.0
    %v2444 = vsel %vm2382, %v1306, 0.0
    %v2445 = vsel %vm2383, %v1307, 0.0
    %v2446 = vsel %vm2384, %v1308, 0.0
    %v2447 = vsel %vm2385, %v1309, 0.0
    %v2448 = vsel %vm2386, %v1310, 0.0
    %v2449 = vsel %vm2387, %v1311, 0.0
    %v2450 = vsel %vm2388, %v1312, 0.0
    %v2451 = vsel %vm2389, %v1313, 0.0
    %v2452 = vsel %vm2390, %v1314, 0.0
    %v2453 = vsel %vm2391, %v1315, 0.0
    %v2454 = vsel %vm2392, %v1316, 0.0
    %v2455 = vsel %vm2393, %v1317, 0.0
    %v2456 = vlaneseq
    %v2457 = vshrl.u32 %v2456, 7
    %v2458 = vsub.s32 1, %v2457
    %v2459 = vrot.slane %v1577, %v2458
    %v2460 = vmul.f32 %v2459, 0.0
    %v2461 = vmul.f32 %v2394, %v2459
    %v2462 = vmul.f32 %v2395, %v2459
    %v2463 = vmul.f32 %v2396, %v2459
    %v2464 = vmul.f32 %v2397, %v2459
    %v2465 = vmul.f32 %v2398, %v2459
    %v2466 = vmul.f32 %v2399, %v2459
    %v2467 = vmul.f32 %v2400, %v2459
    %v2468 = vmul.f32 %v2401, %v2459
    %v2469 = vmul.f32 %v2402, %v2459
    %v2470 = vmul.f32 %v2403, %v2459
    %v2471 = vmul.f32 %v2404, %v2459
    %v2472 = vmul.f32 %v2405, %v2459
    %v2473 = vmul.f32 %v2406, %v2459
    %v2474 = vmul.f32 %v2407, %v2459
    %v2475 = vmul.f32 %v2408, %v2459
    %v2476 = vmul.f32 %v2409, %v2459
    %v2477 = vmul.f32 %v2410, %v2459
    %v2478 = vmul.f32 %v2411, %v2459
    %v2479 = vmul.f32 %v2412, %v2459
    %v2480 = vmul.f32 %v2413, %v2459
    %v2481 = vmul.f32 %v2414, %v2459
    %v2482 = vmul.f32 %v2415, %v2459
    %v2483 = vmul.f32 %v2416, %v2459
    %v2484 = vmul.f32 %v2417, %v2459
    %v2485 = vmul.f32 %v2418, %v2459
    %v2486 = vmul.f32 %v2419, %v2459
    %v2487 = vmul.f32 %v2420, %v2459
    %v2488 = vmul.f32 %v2421, %v2459
    %v2489 = vmul.f32 %v2422, %v2459
    %v2490 = vmul.f32 %v2423, %v2459
    %v2491 = vmul.f32 %v2424, %v2459
    %v2492 = vmul.f32 %v2425, %v2459
    %v2493 = vmul.f32 %v2426, %v2459
    %v2494 = vmul.f32 %v2427, %v2459
    %v2495 = vmul.f32 %v2428, %v2459
    %v2496 = vmul.f32 %v2429, %v2459
    %v2497 = vmul.f32 %v2430, %v2459
    %v2498 = vmul.f32 %v2431, %v2459
    %v2499 = vmul.f32 %v2432, %v2459
    %v2500 = vmul.f32 %v2433, %v2459
    %v2501 = vmul.f32 %v2434, %v2459
    %v2502 = vmul.f32 %v2435, %v2459
    %v2503 = vmul.f32 %v2436, %v2459
    %v2504 = vmul.f32 %v2437, %v2459
    %v2505 = vmul.f32 %v2438, %v2459
    %v2506 = vmul.f32 %v2439, %v2459
    %v2507 = vmul.f32 %v2440, %v2459
    %v2508 = vmul.f32 %v2441, %v2459
    %v2509 = vmul.f32 %v2442, %v2459
    %v2510 = vmul.f32 %v2443, %v2459
    %v2511 = vmul.f32 %v2444, %v2459
    %v2512 = vmul.f32 %v2445, %v2459
    %v2513 = vmul.f32 %v2446, %v2459
    %v2514 = vmul.f32 %v2447, %v2459
    %v2515 = vmul.f32 %v2448, %v2459
    %v2516 = vmul.f32 %v2449, %v2459
    %v2517 = vmul.f32 %v2450, %v2459
    %v2518 = vmul.f32 %v2451, %v2459
    %v2519 = vmul.f32 %v2452, %v2459
    %v2520 = vmul.f32 %v2453, %v2459
    %v2521 = vmul.f32 %v2454, %v2459
    %v2522 = vmul.f32 %v2455, %v2459
    %v2523 = vadd.f32 %v2207, %v2460
    %v2524 = vadd.f32 %v2208, %v2461
    %v2525 = vadd.f32 %v2209, %v2462
    %v2526 = vadd.f32 %v2210, %v2463
    %v2527 = vadd.f32 %v2211, %v2464
    %v2528 = vadd.f32 %v2212, %v2465
    %v2529 = vadd.f32 %v2213, %v2466
    %v2530 = vadd.f32 %v2214, %v2467
    %v2531 = vadd.f32 %v2215, %v2468
    %v2532 = vadd.f32 %v2216, %v2469
    %v2533 = vadd.f32 %v2217, %v2470
    %v2534 = vadd.f32 %v2218, %v2471
    %v2535 = vadd.f32 %v2219, %v2472
    %v2536 = vadd.f32 %v2220, %v2473
    %v2537 = vadd.f32 %v2221, %v2474
    %v2538 = vadd.f32 %v2222, %v2475
    %v2539 = vadd.f32 %v2223, %v2476
    %v2540 = vadd.f32 %v2224, %v2477
    %v2541 = vadd.f32 %v2225, %v2478
    %v2542 = vadd.f32 %v2226, %v2479
    %v2543 = vadd.f32 %v2227, %v2480
    %v2544 = vadd.f32 %v2228, %v2481
    %v2545 = vadd.f32 %v2229, %v2482
    %v2546 = vadd.f32 %v2230, %v2483
    %v2547 = vadd.f32 %v2231, %v2484
    %v2548 = vadd.f32 %v2232, %v2485
    %v2549 = vadd.f32 %v2233, %v2486
    %v2550 = vadd.f32 %v2234, %v2487
    %v2551 = vadd.f32 %v2235, %v2488
    %v2552 = vadd.f32 %v2236, %v2489
    %v2553 = vadd.f32 %v2237, %v2490
    %v2554 = vadd.f32 %v2238, %v2491
    %v2555 = vadd.f32 %v2239, %v2492
    %v2556 = vadd.f32 %v2240, %v2493
    %v2557 = vadd.f32 %v2241, %v2494
    %v2558 = vadd.f32 %v2242, %v2495
    %v2559 = vadd.f32 %v2243, %v2496
    %v2560 = vadd.f32 %v2244, %v2497
    %v2561 = vadd.f32 %v2245, %v2498
    %v2562 = vadd.f32 %v2246, %v2499
    %v2563 = vadd.f32 %v2247, %v2500
    %v2564 = vadd.f32 %v2248, %v2501
    %v2565 = vadd.f32 %v2249, %v2502
    %v2566 = vadd.f32 %v2250, %v2503
    %v2567 = vadd.f32 %v2251, %v2504
    %v2568 = vadd.f32 %v2252, %v2505
    %v2569 = vadd.f32 %v2253, %v2506
    %v2570 = vadd.f32 %v2254, %v2507
    %v2571 = vadd.f32 %v2255, %v2508
    %v2572 = vadd.f32 %v2256, %v2509
    %v2573 = vadd.f32 %v2257, %v2510
    %v2574 = vadd.f32 %v2258, %v2511
    %v2575 = vadd.f32 %v2259, %v2512
    %v2576 = vadd.f32 %v2260, %v2513
    %v2577 = vadd.f32 %v2261, %v2514
    %v2578 = vadd.f32 %v2262, %v2515
    %v2579 = vadd.f32 %v2263, %v2516
    %v2580 = vadd.f32 %v2264, %v2517
    %v2581 = vadd.f32 %v2265, %v2518
    %v2582 = vadd.f32 %v2266, %v2519
    %v2583 = vadd.f32 %v2267, %v2520
    %v2584 = vadd.f32 %v2268, %v2521
    %v2585 = vadd.f32 %v2269, %v2522
    %vm2587 = vcmask 1046528
    %v2588 = vrot.slane %v1256, 1
    %v2589 = vrot.slane %v1257, 1
    %v2590 = vsel %vm2587, %v2588, %v2589
    %v2591 = vrot.slane %v1258, 1
    %v2592 = vsel %vm2587, %v2589, %v2591
    %v2593 = vrot.slane %v1259, 1
    %v2594 = vsel %vm2587, %v2591, %v2593
    %v2595 = vrot.slane %v1260, 1
    %v2596 = vsel %vm2587, %v2593, %v2595
    %v2597 = vrot.slane %v1261, 1
    %v2598 = vsel %vm2587, %v2595, %v2597
    %v2599 = vrot.slane %v1262, 1
    %v2600 = vsel %vm2587, %v2597, %v2599
    %v2601 = vrot.slane %v1263, 1
    %v2602 = vsel %vm2587, %v2599, %v2601
    %v2603 = vrot.slane %v1264, 1
    %v2604 = vsel %vm2587, %v2601, %v2603
    %v2605 = vrot.slane %v1265, 1
    %v2606 = vsel %vm2587, %v2603, %v2605
    %v2607 = vrot.slane %v1266, 1
    %v2608 = vsel %vm2587, %v2605, %v2607
    %v2609 = vrot.slane %v1267, 1
    %v2610 = vsel %vm2587, %v2607, %v2609
    %v2611 = vrot.slane %v1268, 1
    %v2612 = vsel %vm2587, %v2609, %v2611
    %v2613 = vrot.slane %v1269, 1
    %v2614 = vsel %vm2587, %v2611, %v2613
    %v2615 = vrot.slane %v1270, 1
    %v2616 = vsel %vm2587, %v2613, %v2615
    %v2617 = vrot.slane %v1271, 1
    %v2618 = vsel %vm2587, %v2615, %v2617
    %v2619 = vrot.slane %v1272, 1
    %v2620 = vsel %vm2587, %v2617, %v2619
    %v2621 = vrot.slane %v1273, 1
    %v2622 = vsel %vm2587, %v2619, %v2621
    %v2623 = vrot.slane %v1274, 1
    %v2624 = vsel %vm2587, %v2621, %v2623
    %v2625 = vrot.slane %v1275, 1
    %v2626 = vsel %vm2587, %v2623, %v2625
    %v2627 = vrot.slane %v1276, 1
    %v2628 = vsel %vm2587, %v2625, %v2627
    %v2629 = vrot.slane %v1277, 1
    %v2630 = vsel %vm2587, %v2627, %v2629
    %v2631 = vrot.slane %v1278, 1
    %v2632 = vsel %vm2587, %v2629, %v2631
    %v2633 = vrot.slane %v1279, 1
    %v2634 = vsel %vm2587, %v2631, %v2633
    %v2635 = vrot.slane %v1280, 1
    %v2636 = vsel %vm2587, %v2633, %v2635
    %v2637 = vrot.slane %v1281, 1
    %v2638 = vsel %vm2587, %v2635, %v2637
    %v2639 = vrot.slane %v1282, 1
    %v2640 = vsel %vm2587, %v2637, %v2639
    %v2641 = vrot.slane %v1283, 1
    %v2642 = vsel %vm2587, %v2639, %v2641
    %v2643 = vrot.slane %v1284, 1
    %v2644 = vsel %vm2587, %v2641, %v2643
    %v2645 = vrot.slane %v1285, 1
    %v2646 = vsel %vm2587, %v2643, %v2645
    %v2647 = vrot.slane %v1286, 1
    %v2648 = vsel %vm2587, %v2645, %v2647
    %v2649 = vrot.slane %v1287, 1
    %v2650 = vsel %vm2587, %v2647, %v2649
    %v2651 = vrot.slane %v1288, 1
    %v2652 = vsel %vm2587, %v2649, %v2651
    %v2653 = vrot.slane %v1289, 1
    %v2654 = vsel %vm2587, %v2651, %v2653
    %v2655 = vrot.slane %v1290, 1
    %v2656 = vsel %vm2587, %v2653, %v2655
    %v2657 = vrot.slane %v1291, 1
    %v2658 = vsel %vm2587, %v2655, %v2657
    %v2659 = vrot.slane %v1292, 1
    %v2660 = vsel %vm2587, %v2657, %v2659
    %v2661 = vrot.slane %v1293, 1
    %v2662 = vsel %vm2587, %v2659, %v2661
    %v2663 = vrot.slane %v1294, 1
    %v2664 = vsel %vm2587, %v2661, %v2663
    %v2665 = vrot.slane %v1295, 1
    %v2666 = vsel %vm2587, %v2663, %v2665
    %v2667 = vrot.slane %v1296, 1
    %v2668 = vsel %vm2587, %v2665, %v2667
    %v2669 = vrot.slane %v1297, 1
    %v2670 = vsel %vm2587, %v2667, %v2669
    %v2671 = vrot.slane %v1298, 1
    %v2672 = vsel %vm2587, %v2669, %v2671
    %v2673 = vrot.slane %v1299, 1
    %v2674 = vsel %vm2587, %v2671, %v2673
    %v2675 = vrot.slane %v1300, 1
    %v2676 = vsel %vm2587, %v2673, %v2675
    %v2677 = vrot.slane %v1301, 1
    %v2678 = vsel %vm2587, %v2675, %v2677
    %v2679 = vrot.slane %v1302, 1
    %v2680 = vsel %vm2587, %v2677, %v2679
    %v2681 = vrot.slane %v1303, 1
    %v2682 = vsel %vm2587, %v2679, %v2681
    %v2683 = vrot.slane %v1304, 1
    %v2684 = vsel %vm2587, %v2681, %v2683
    %v2685 = vrot.slane %v1305, 1
    %v2686 = vsel %vm2587, %v2683, %v2685
    %v2687 = vrot.slane %v1306, 1
    %v2688 = vsel %vm2587, %v2685, %v2687
    %v2689 = vrot.slane %v1307, 1
    %v2690 = vsel %vm2587, %v2687, %v2689
    %v2691 = vrot.slane %v1308, 1
    %v2692 = vsel %vm2587, %v2689, %v2691
    %v2693 = vrot.slane %v1309, 1
    %v2694 = vsel %vm2587, %v2691, %v2693
    %v2695 = vrot.slane %v1310, 1
    %v2696 = vsel %vm2587, %v2693, %v2695
    %v2697 = vrot.slane %v1311, 1
    %v2698 = vsel %vm2587, %v2695, %v2697
    %v2699 = vrot.slane %v1312, 1
    %v2700 = vsel %vm2587, %v2697, %v2699
    %v2701 = vrot.slane %v1313, 1
    %v2702 = vsel %vm2587, %v2699, %v2701
    %v2703 = vrot.slane %v1314, 1
    %v2704 = vsel %vm2587, %v2701, %v2703
    %v2705 = vrot.slane %v1315, 1
    %v2706 = vsel %vm2587, %v2703, %v2705
    %v2707 = vrot.slane %v1316, 1
    %v2708 = vsel %vm2587, %v2705, %v2707
    %v2709 = vrot.slane %v1317, 1
    %v2710 = vsel %vm2587, %v2707, %v2709
    %v2711 = vrot.slane %v1318, 1
    %v2712 = vsel %vm2587, %v2709, %v2711
    %v2776 = vsel %vm2587, 0.0, %v2588
    %vm2777 = vcmp.lt.s32.totalorder %v1513, 15
    %vm2778 = vcmp.lt.s32.totalorder %v1514, 15
    %vm2779 = vcmp.lt.s32.totalorder %v1515, 15
    %vm2780 = vcmp.lt.s32.totalorder %v1516, 15
    %vm2781 = vcmp.lt.s32.totalorder %v1517, 15
    %vm2782 = vcmp.lt.s32.totalorder %v1518, 15
    %vm2783 = vcmp.lt.s32.totalorder %v1519, 15
    %vm2784 = vcmp.lt.s32.totalorder %v1520, 15
    %vm2785 = vcmp.lt.s32.totalorder %v1521, 15
    %vm2786 = vcmp.lt.s32.totalorder %v1522, 15
    %vm2787 = vcmp.lt.s32.totalorder %v1523, 15
    %vm2788 = vcmp.lt.s32.totalorder %v1524, 15
    %vm2789 = vcmp.lt.s32.totalorder %v1525, 15
    %vm2790 = vcmp.lt.s32.totalorder %v1526, 15
    %vm2791 = vcmp.lt.s32.totalorder %v1527, 15
    %vm2792 = vcmp.lt.s32.totalorder %v1528, 15
    %vm2793 = vcmp.lt.s32.totalorder %v1529, 15
    %vm2794 = vcmp.lt.s32.totalorder %v1530, 15
    %vm2795 = vcmp.lt.s32.totalorder %v1531, 15
    %vm2796 = vcmp.lt.s32.totalorder %v1532, 15
    %vm2797 = vcmp.lt.s32.totalorder %v1533, 15
    %vm2798 = vcmp.lt.s32.totalorder %v1534, 15
    %vm2799 = vcmp.lt.s32.totalorder %v1535, 15
    %vm2800 = vcmp.lt.s32.totalorder %v1536, 15
    %vm2801 = vcmp.lt.s32.totalorder %v1537, 15
    %vm2802 = vcmp.lt.s32.totalorder %v1538, 15
    %vm2803 = vcmp.lt.s32.totalorder %v1539, 15
    %vm2804 = vcmp.lt.s32.totalorder %v1540, 15
    %vm2805 = vcmp.lt.s32.totalorder %v1541, 15
    %vm2806 = vcmp.lt.s32.totalorder %v1542, 15
    %vm2807 = vcmp.lt.s32.totalorder %v1543, 15
    %vm2808 = vcmp.lt.s32.totalorder %v1544, 15
    %vm2809 = vcmp.lt.s32.totalorder %v1545, 15
    %vm2810 = vcmp.lt.s32.totalorder %v1546, 15
    %vm2811 = vcmp.lt.s32.totalorder %v1547, 15
    %vm2812 = vcmp.lt.s32.totalorder %v1548, 15
    %vm2813 = vcmp.lt.s32.totalorder %v1549, 15
    %vm2814 = vcmp.lt.s32.totalorder %v1550, 15
    %vm2815 = vcmp.lt.s32.totalorder %v1551, 15
    %vm2816 = vcmp.lt.s32.totalorder %v1552, 15
    %vm2817 = vcmp.lt.s32.totalorder %v1553, 15
    %vm2818 = vcmp.lt.s32.totalorder %v1554, 15
    %vm2819 = vcmp.lt.s32.totalorder %v1555, 15
    %vm2820 = vcmp.lt.s32.totalorder %v1556, 15
    %vm2821 = vcmp.lt.s32.totalorder %v1557, 15
    %vm2822 = vcmp.lt.s32.totalorder %v1558, 15
    %vm2823 = vcmp.lt.s32.totalorder %v1559, 15
    %vm2824 = vcmp.lt.s32.totalorder %v1560, 15
    %vm2825 = vcmp.lt.s32.totalorder %v1561, 15
    %vm2826 = vcmp.lt.s32.totalorder %v1562, 15
    %vm2827 = vcmp.lt.s32.totalorder %v1563, 15
    %vm2828 = vcmp.lt.s32.totalorder %v1564, 15
    %vm2829 = vcmp.lt.s32.totalorder %v1565, 15
    %vm2830 = vcmp.lt.s32.totalorder %v1566, 15
    %vm2831 = vcmp.lt.s32.totalorder %v1567, 15
    %vm2832 = vcmp.lt.s32.totalorder %v1568, 15
    %vm2833 = vcmp.lt.s32.totalorder %v1569, 15
    %vm2834 = vcmp.lt.s32.totalorder %v1570, 15
    %vm2835 = vcmp.lt.s32.totalorder %v1571, 15
    %vm2836 = vcmp.lt.s32.totalorder %v1572, 15
    %vm2837 = vcmp.lt.s32.totalorder %v1573, 15
    %vm2838 = vcmp.lt.s32.totalorder %v1574, 15
    %vm2839 = vcmp.lt.s32.totalorder %v1575, 15
    %vm2840 = vcmp.lt.s32.totalorder %v1576, 15
    %vm2841 = vmand %vm1828, %vm2778
    %vm2842 = vmand %vm1829, %vm2779
    %vm2843 = vmand %vm1830, %vm2780
    %vm2844 = vmand %vm1831, %vm2781
    %vm2845 = vmand %vm1832, %vm2782
    %vm2846 = vmand %vm1833, %vm2783
    %vm2847 = vmand %vm1834, %vm2784
    %vm2848 = vmand %vm1835, %vm2785
    %vm2849 = vmand %vm1836, %vm2786
    %vm2850 = vmand %vm1837, %vm2787
    %vm2851 = vmand %vm1838, %vm2788
    %vm2852 = vmand %vm1839, %vm2789
    %vm2853 = vmand %vm1840, %vm2790
    %vm2854 = vmand %vm1841, %vm2791
    %vm2855 = vmand %vm1842, %vm2792
    %vm2856 = vmand %vm1843, %vm2793
    %vm2857 = vmand %vm1844, %vm2794
    %vm2858 = vmand %vm1845, %vm2795
    %vm2859 = vmand %vm1846, %vm2796
    %vm2860 = vmand %vm1847, %vm2797
    %vm2861 = vmand %vm1848, %vm2798
    %vm2862 = vmand %vm1849, %vm2799
    %vm2863 = vmand %vm1850, %vm2800
    %vm2864 = vmand %vm1851, %vm2801
    %vm2865 = vmand %vm1852, %vm2802
    %vm2866 = vmand %vm1853, %vm2803
    %vm2867 = vmand %vm1854, %vm2804
    %vm2868 = vmand %vm1855, %vm2805
    %vm2869 = vmand %vm1856, %vm2806
    %vm2870 = vmand %vm1857, %vm2807
    %vm2871 = vmand %vm1858, %vm2808
    %vm2872 = vmand %vm1859, %vm2809
    %vm2873 = vmand %vm1860, %vm2810
    %vm2874 = vmand %vm1861, %vm2811
    %vm2875 = vmand %vm1862, %vm2812
    %vm2876 = vmand %vm1863, %vm2813
    %vm2877 = vmand %vm1864, %vm2814
    %vm2878 = vmand %vm1865, %vm2815
    %vm2879 = vmand %vm1866, %vm2816
    %vm2880 = vmand %vm1867, %vm2817
    %vm2881 = vmand %vm1868, %vm2818
    %vm2882 = vmand %vm1869, %vm2819
    %vm2883 = vmand %vm1870, %vm2820
    %vm2884 = vmand %vm1871, %vm2821
    %vm2885 = vmand %vm1872, %vm2822
    %vm2886 = vmand %vm1873, %vm2823
    %vm2887 = vmand %vm1874, %vm2824
    %vm2888 = vmand %vm1875, %vm2825
    %vm2889 = vmand %vm1876, %vm2826
    %vm2890 = vmand %vm1877, %vm2827
    %vm2891 = vmand %vm1878, %vm2828
    %vm2892 = vmand %vm1879, %vm2829
    %vm2893 = vmand %vm1880, %vm2830
    %vm2894 = vmand %vm1881, %vm2831
    %vm2895 = vmand %vm1882, %vm2832
    %vm2896 = vmand %vm1883, %vm2833
    %vm2897 = vmand %vm1884, %vm2834
    %vm2898 = vmand %vm1885, %vm2835
    %vm2899 = vmand %vm1886, %vm2836
    %vm2900 = vmand %vm1887, %vm2837
    %vm2901 = vmand %vm1888, %vm2838
    %vm2902 = vmand %vm1889, %vm2839
    %vm2903 = vmand %vm1890, %vm2840
    %v2904 = vsel %vm2841, 1, 0
    %v2905 = vsel %vm2842, 1, 0
    %v2906 = vsel %vm2843, 1, 0
    %v2907 = vsel %vm2844, 1, 0
    %v2908 = vsel %vm2845, 1, 0
    %v2909 = vsel %vm2846, 1, 0
    %v2910 = vsel %vm2847, 1, 0
    %v2911 = vsel %vm2848, 1, 0
    %v2912 = vsel %vm2849, 1, 0
    %v2913 = vsel %vm2850, 1, 0
    %v2914 = vsel %vm2851, 1, 0
    %v2915 = vsel %vm2852, 1, 0
    %v2916 = vsel %vm2853, 1, 0
    %v2917 = vsel %vm2854, 1, 0
    %v2918 = vsel %vm2855, 1, 0
    %v2919 = vsel %vm2856, 1, 0
    %v2920 = vsel %vm2857, 1, 0
    %v2921 = vsel %vm2858, 1, 0
    %v2922 = vsel %vm2859, 1, 0
    %v2923 = vsel %vm2860, 1, 0
    %v2924 = vsel %vm2861, 1, 0
    %v2925 = vsel %vm2862, 1, 0
    %v2926 = vsel %vm2863, 1, 0
    %v2927 = vsel %vm2864, 1, 0
    %v2928 = vsel %vm2865, 1, 0
    %v2929 = vsel %vm2866, 1, 0
    %v2930 = vsel %vm2867, 1, 0
    %v2931 = vsel %vm2868, 1, 0
    %v2932 = vsel %vm2869, 1, 0
    %v2933 = vsel %vm2870, 1, 0
    %v2934 = vsel %vm2871, 1, 0
    %v2935 = vsel %vm2872, 1, 0
    %v2936 = vsel %vm2873, 1, 0
    %v2937 = vsel %vm2874, 1, 0
    %v2938 = vsel %vm2875, 1, 0
    %v2939 = vsel %vm2876, 1, 0
    %v2940 = vsel %vm2877, 1, 0
    %v2941 = vsel %vm2878, 1, 0
    %v2942 = vsel %vm2879, 1, 0
    %v2943 = vsel %vm2880, 1, 0
    %v2944 = vsel %vm2881, 1, 0
    %v2945 = vsel %vm2882, 1, 0
    %v2946 = vsel %vm2883, 1, 0
    %v2947 = vsel %vm2884, 1, 0
    %v2948 = vsel %vm2885, 1, 0
    %v2949 = vsel %vm2886, 1, 0
    %v2950 = vsel %vm2887, 1, 0
    %v2951 = vsel %vm2888, 1, 0
    %v2952 = vsel %vm2889, 1, 0
    %v2953 = vsel %vm2890, 1, 0
    %v2954 = vsel %vm2891, 1, 0
    %v2955 = vsel %vm2892, 1, 0
    %v2956 = vsel %vm2893, 1, 0
    %v2957 = vsel %vm2894, 1, 0
    %v2958 = vsel %vm2895, 1, 0
    %v2959 = vsel %vm2896, 1, 0
    %v2960 = vsel %vm2897, 1, 0
    %v2961 = vsel %vm2898, 1, 0
    %v2962 = vsel %vm2899, 1, 0
    %v2963 = vsel %vm2900, 1, 0
    %v2964 = vsel %vm2901, 1, 0
    %v2965 = vsel %vm2902, 1, 0
    %v2966 = vsel %vm2903, 1, 0
    %vm2967 = vcmp.eq.s32.totalorder %v2904, 1
    %vm2968 = vcmp.eq.s32.totalorder %v2905, 1
    %vm2969 = vcmp.eq.s32.totalorder %v2906, 1
    %vm2970 = vcmp.eq.s32.totalorder %v2907, 1
    %vm2971 = vcmp.eq.s32.totalorder %v2908, 1
    %vm2972 = vcmp.eq.s32.totalorder %v2909, 1
    %vm2973 = vcmp.eq.s32.totalorder %v2910, 1
    %vm2974 = vcmp.eq.s32.totalorder %v2911, 1
    %vm2975 = vcmp.eq.s32.totalorder %v2912, 1
    %vm2976 = vcmp.eq.s32.totalorder %v2913, 1
    %vm2977 = vcmp.eq.s32.totalorder %v2914, 1
    %vm2978 = vcmp.eq.s32.totalorder %v2915, 1
    %vm2979 = vcmp.eq.s32.totalorder %v2916, 1
    %vm2980 = vcmp.eq.s32.totalorder %v2917, 1
    %vm2981 = vcmp.eq.s32.totalorder %v2918, 1
    %vm2982 = vcmp.eq.s32.totalorder %v2919, 1
    %vm2983 = vcmp.eq.s32.totalorder %v2920, 1
    %vm2984 = vcmp.eq.s32.totalorder %v2921, 1
    %vm2985 = vcmp.eq.s32.totalorder %v2922, 1
    %vm2986 = vcmp.eq.s32.totalorder %v2923, 1
    %vm2987 = vcmp.eq.s32.totalorder %v2924, 1
    %vm2988 = vcmp.eq.s32.totalorder %v2925, 1
    %vm2989 = vcmp.eq.s32.totalorder %v2926, 1
    %vm2990 = vcmp.eq.s32.totalorder %v2927, 1
    %vm2991 = vcmp.eq.s32.totalorder %v2928, 1
    %vm2992 = vcmp.eq.s32.totalorder %v2929, 1
    %vm2993 = vcmp.eq.s32.totalorder %v2930, 1
    %vm2994 = vcmp.eq.s32.totalorder %v2931, 1
    %vm2995 = vcmp.eq.s32.totalorder %v2932, 1
    %vm2996 = vcmp.eq.s32.totalorder %v2933, 1
    %vm2997 = vcmp.eq.s32.totalorder %v2934, 1
    %vm2998 = vcmp.eq.s32.totalorder %v2935, 1
    %vm2999 = vcmp.eq.s32.totalorder %v2936, 1
    %vm3000 = vcmp.eq.s32.totalorder %v2937, 1
    %vm3001 = vcmp.eq.s32.totalorder %v2938, 1
    %vm3002 = vcmp.eq.s32.totalorder %v2939, 1
    %vm3003 = vcmp.eq.s32.totalorder %v2940, 1
    %vm3004 = vcmp.eq.s32.totalorder %v2941, 1
    %vm3005 = vcmp.eq.s32.totalorder %v2942, 1
    %vm3006 = vcmp.eq.s32.totalorder %v2943, 1
    %vm3007 = vcmp.eq.s32.totalorder %v2944, 1
    %vm3008 = vcmp.eq.s32.totalorder %v2945, 1
    %vm3009 = vcmp.eq.s32.totalorder %v2946, 1
    %vm3010 = vcmp.eq.s32.totalorder %v2947, 1
    %vm3011 = vcmp.eq.s32.totalorder %v2948, 1
    %vm3012 = vcmp.eq.s32.totalorder %v2949, 1
    %vm3013 = vcmp.eq.s32.totalorder %v2950, 1
    %vm3014 = vcmp.eq.s32.totalorder %v2951, 1
    %vm3015 = vcmp.eq.s32.totalorder %v2952, 1
    %vm3016 = vcmp.eq.s32.totalorder %v2953, 1
    %vm3017 = vcmp.eq.s32.totalorder %v2954, 1
    %vm3018 = vcmp.eq.s32.totalorder %v2955, 1
    %vm3019 = vcmp.eq.s32.totalorder %v2956, 1
    %vm3020 = vcmp.eq.s32.totalorder %v2957, 1
    %vm3021 = vcmp.eq.s32.totalorder %v2958, 1
    %vm3022 = vcmp.eq.s32.totalorder %v2959, 1
    %vm3023 = vcmp.eq.s32.totalorder %v2960, 1
    %vm3024 = vcmp.eq.s32.totalorder %v2961, 1
    %vm3025 = vcmp.eq.s32.totalorder %v2962, 1
    %vm3026 = vcmp.eq.s32.totalorder %v2963, 1
    %vm3027 = vcmp.eq.s32.totalorder %v2964, 1
    %vm3028 = vcmp.eq.s32.totalorder %v2965, 1
    %vm3029 = vcmp.eq.s32.totalorder %v2966, 1
    %v3030 = vsel %vm2967, %v2776, 0.0
    %v3031 = vsel %vm2968, %v2590, 0.0
    %v3032 = vsel %vm2969, %v2592, 0.0
    %v3033 = vsel %vm2970, %v2594, 0.0
    %v3034 = vsel %vm2971, %v2596, 0.0
    %v3035 = vsel %vm2972, %v2598, 0.0
    %v3036 = vsel %vm2973, %v2600, 0.0
    %v3037 = vsel %vm2974, %v2602, 0.0
    %v3038 = vsel %vm2975, %v2604, 0.0
    %v3039 = vsel %vm2976, %v2606, 0.0
    %v3040 = vsel %vm2977, %v2608, 0.0
    %v3041 = vsel %vm2978, %v2610, 0.0
    %v3042 = vsel %vm2979, %v2612, 0.0
    %v3043 = vsel %vm2980, %v2614, 0.0
    %v3044 = vsel %vm2981, %v2616, 0.0
    %v3045 = vsel %vm2982, %v2618, 0.0
    %v3046 = vsel %vm2983, %v2620, 0.0
    %v3047 = vsel %vm2984, %v2622, 0.0
    %v3048 = vsel %vm2985, %v2624, 0.0
    %v3049 = vsel %vm2986, %v2626, 0.0
    %v3050 = vsel %vm2987, %v2628, 0.0
    %v3051 = vsel %vm2988, %v2630, 0.0
    %v3052 = vsel %vm2989, %v2632, 0.0
    %v3053 = vsel %vm2990, %v2634, 0.0
    %v3054 = vsel %vm2991, %v2636, 0.0
    %v3055 = vsel %vm2992, %v2638, 0.0
    %v3056 = vsel %vm2993, %v2640, 0.0
    %v3057 = vsel %vm2994, %v2642, 0.0
    %v3058 = vsel %vm2995, %v2644, 0.0
    %v3059 = vsel %vm2996, %v2646, 0.0
    %v3060 = vsel %vm2997, %v2648, 0.0
    %v3061 = vsel %vm2998, %v2650, 0.0
    %v3062 = vsel %vm2999, %v2652, 0.0
    %v3063 = vsel %vm3000, %v2654, 0.0
    %v3064 = vsel %vm3001, %v2656, 0.0
    %v3065 = vsel %vm3002, %v2658, 0.0
    %v3066 = vsel %vm3003, %v2660, 0.0
    %v3067 = vsel %vm3004, %v2662, 0.0
    %v3068 = vsel %vm3005, %v2664, 0.0
    %v3069 = vsel %vm3006, %v2666, 0.0
    %v3070 = vsel %vm3007, %v2668, 0.0
    %v3071 = vsel %vm3008, %v2670, 0.0
    %v3072 = vsel %vm3009, %v2672, 0.0
    %v3073 = vsel %vm3010, %v2674, 0.0
    %v3074 = vsel %vm3011, %v2676, 0.0
    %v3075 = vsel %vm3012, %v2678, 0.0
    %v3076 = vsel %vm3013, %v2680, 0.0
    %v3077 = vsel %vm3014, %v2682, 0.0
    %v3078 = vsel %vm3015, %v2684, 0.0
    %v3079 = vsel %vm3016, %v2686, 0.0
    %v3080 = vsel %vm3017, %v2688, 0.0
    %v3081 = vsel %vm3018, %v2690, 0.0
    %v3082 = vsel %vm3019, %v2692, 0.0
    %v3083 = vsel %vm3020, %v2694, 0.0
    %v3084 = vsel %vm3021, %v2696, 0.0
    %v3085 = vsel %vm3022, %v2698, 0.0
    %v3086 = vsel %vm3023, %v2700, 0.0
    %v3087 = vsel %vm3024, %v2702, 0.0
    %v3088 = vsel %vm3025, %v2704, 0.0
    %v3089 = vsel %vm3026, %v2706, 0.0
    %v3090 = vsel %vm3027, %v2708, 0.0
    %v3091 = vsel %vm3028, %v2710, 0.0
    %v3092 = vsel %vm3029, %v2712, 0.0
    %v3093 = vlaneseq
    %v3094 = vshrl.u32 %v3093, 7
    %v3095 = vsub.s32 2, %v3094
    %v3096 = vrot.slane %v1577, %v3095
    %v3097 = vmul.f32 %v3096, 0.0
    %v3098 = vmul.f32 %v3030, %v3096
    %v3099 = vmul.f32 %v3031, %v3096
    %v3100 = vmul.f32 %v3032, %v3096
    %v3101 = vmul.f32 %v3033, %v3096
    %v3102 = vmul.f32 %v3034, %v3096
    %v3103 = vmul.f32 %v3035, %v3096
    %v3104 = vmul.f32 %v3036, %v3096
    %v3105 = vmul.f32 %v3037, %v3096
    %v3106 = vmul.f32 %v3038, %v3096
    %v3107 = vmul.f32 %v3039, %v3096
    %v3108 = vmul.f32 %v3040, %v3096
    %v3109 = vmul.f32 %v3041, %v3096
    %v3110 = vmul.f32 %v3042, %v3096
    %v3111 = vmul.f32 %v3043, %v3096
    %v3112 = vmul.f32 %v3044, %v3096
    %v3113 = vmul.f32 %v3045, %v3096
    %v3114 = vmul.f32 %v3046, %v3096
    %v3115 = vmul.f32 %v3047, %v3096
    %v3116 = vmul.f32 %v3048, %v3096
    %v3117 = vmul.f32 %v3049, %v3096
    %v3118 = vmul.f32 %v3050, %v3096
    %v3119 = vmul.f32 %v3051, %v3096
    %v3120 = vmul.f32 %v3052, %v3096
    %v3121 = vmul.f32 %v3053, %v3096
    %v3122 = vmul.f32 %v3054, %v3096
    %v3123 = vmul.f32 %v3055, %v3096
    %v3124 = vmul.f32 %v3056, %v3096
    %v3125 = vmul.f32 %v3057, %v3096
    %v3126 = vmul.f32 %v3058, %v3096
    %v3127 = vmul.f32 %v3059, %v3096
    %v3128 = vmul.f32 %v3060, %v3096
    %v3129 = vmul.f32 %v3061, %v3096
    %v3130 = vmul.f32 %v3062, %v3096
    %v3131 = vmul.f32 %v3063, %v3096
    %v3132 = vmul.f32 %v3064, %v3096
    %v3133 = vmul.f32 %v3065, %v3096
    %v3134 = vmul.f32 %v3066, %v3096
    %v3135 = vmul.f32 %v3067, %v3096
    %v3136 = vmul.f32 %v3068, %v3096
    %v3137 = vmul.f32 %v3069, %v3096
    %v3138 = vmul.f32 %v3070, %v3096
    %v3139 = vmul.f32 %v3071, %v3096
    %v3140 = vmul.f32 %v3072, %v3096
    %v3141 = vmul.f32 %v3073, %v3096
    %v3142 = vmul.f32 %v3074, %v3096
    %v3143 = vmul.f32 %v3075, %v3096
    %v3144 = vmul.f32 %v3076, %v3096
    %v3145 = vmul.f32 %v3077, %v3096
    %v3146 = vmul.f32 %v3078, %v3096
    %v3147 = vmul.f32 %v3079, %v3096
    %v3148 = vmul.f32 %v3080, %v3096
    %v3149 = vmul.f32 %v3081, %v3096
    %v3150 = vmul.f32 %v3082, %v3096
    %v3151 = vmul.f32 %v3083, %v3096
    %v3152 = vmul.f32 %v3084, %v3096
    %v3153 = vmul.f32 %v3085, %v3096
    %v3154 = vmul.f32 %v3086, %v3096
    %v3155 = vmul.f32 %v3087, %v3096
    %v3156 = vmul.f32 %v3088, %v3096
    %v3157 = vmul.f32 %v3089, %v3096
    %v3158 = vmul.f32 %v3090, %v3096
    %v3159 = vmul.f32 %v3091, %v3096
    %v3160 = vmul.f32 %v3092, %v3096
    %v3161 = vadd.f32 %v2523, %v3097
    %v3162 = vadd.f32 %v2523, %v3098
    %v3163 = vadd.f32 %v2524, %v3099
    %v3164 = vadd.f32 %v2525, %v3100
    %v3165 = vadd.f32 %v2526, %v3101
    %v3166 = vadd.f32 %v2527, %v3102
    %v3167 = vadd.f32 %v2528, %v3103
    %v3168 = vadd.f32 %v2529, %v3104
    %v3169 = vadd.f32 %v2530, %v3105
    %v3170 = vadd.f32 %v2531, %v3106
    %v3171 = vadd.f32 %v2532, %v3107
    %v3172 = vadd.f32 %v2533, %v3108
    %v3173 = vadd.f32 %v2534, %v3109
    %v3174 = vadd.f32 %v2535, %v3110
    %v3175 = vadd.f32 %v2536, %v3111
    %v3176 = vadd.f32 %v2537, %v3112
    %v3177 = vadd.f32 %v2538, %v3113
    %v3178 = vadd.f32 %v2539, %v3114
    %v3179 = vadd.f32 %v2540, %v3115
    %v3180 = vadd.f32 %v2541, %v3116
    %v3181 = vadd.f32 %v2542, %v3117
    %v3182 = vadd.f32 %v2543, %v3118
    %v3183 = vadd.f32 %v2544, %v3119
    %v3184 = vadd.f32 %v2545, %v3120
    %v3185 = vadd.f32 %v2546, %v3121
    %v3186 = vadd.f32 %v2547, %v3122
    %v3187 = vadd.f32 %v2548, %v3123
    %v3188 = vadd.f32 %v2549, %v3124
    %v3189 = vadd.f32 %v2550, %v3125
    %v3190 = vadd.f32 %v2551, %v3126
    %v3191 = vadd.f32 %v2552, %v3127
    %v3192 = vadd.f32 %v2553, %v3128
    %v3193 = vadd.f32 %v2554, %v3129
    %v3194 = vadd.f32 %v2555, %v3130
    %v3195 = vadd.f32 %v2556, %v3131
    %v3196 = vadd.f32 %v2557, %v3132
    %v3197 = vadd.f32 %v2558, %v3133
    %v3198 = vadd.f32 %v2559, %v3134
    %v3199 = vadd.f32 %v2560, %v3135
    %v3200 = vadd.f32 %v2561, %v3136
    %v3201 = vadd.f32 %v2562, %v3137
    %v3202 = vadd.f32 %v2563, %v3138
    %v3203 = vadd.f32 %v2564, %v3139
    %v3204 = vadd.f32 %v2565, %v3140
    %v3205 = vadd.f32 %v2566, %v3141
    %v3206 = vadd.f32 %v2567, %v3142
    %v3207 = vadd.f32 %v2568, %v3143
    %v3208 = vadd.f32 %v2569, %v3144
    %v3209 = vadd.f32 %v2570, %v3145
    %v3210 = vadd.f32 %v2571, %v3146
    %v3211 = vadd.f32 %v2572, %v3147
    %v3212 = vadd.f32 %v2573, %v3148
    %v3213 = vadd.f32 %v2574, %v3149
    %v3214 = vadd.f32 %v2575, %v3150
    %v3215 = vadd.f32 %v2576, %v3151
    %v3216 = vadd.f32 %v2577, %v3152
    %v3217 = vadd.f32 %v2578, %v3153
    %v3218 = vadd.f32 %v2579, %v3154
    %v3219 = vadd.f32 %v2580, %v3155
    %v3220 = vadd.f32 %v2581, %v3156
    %v3221 = vadd.f32 %v2582, %v3157
    %v3222 = vadd.f32 %v2583, %v3158
    %v3223 = vadd.f32 %v2584, %v3159
    %v3224 = vadd.f32 %v2585, %v3160
    %v3226 = vrot.slane %v1318, 7
    %v3227 = vsel %vm1641, %v1763, %v3226
    %v3228 = vrot.slane %v1319, 7
    %v3229 = vsel %vm1641, %v3226, %v3228
    %v3232 = vsel %vm1891, 1, 0
    %v3233 = vsel %vm1892, 1, 0
    %v3234 = vsel %vm1893, 1, 0
    %v3235 = vsel %vm1894, 1, 0
    %v3236 = vsel %vm1895, 1, 0
    %v3237 = vsel %vm1896, 1, 0
    %v3238 = vsel %vm1897, 1, 0
    %v3239 = vsel %vm1898, 1, 0
    %v3240 = vsel %vm1899, 1, 0
    %v3241 = vsel %vm1900, 1, 0
    %v3242 = vsel %vm1901, 1, 0
    %v3243 = vsel %vm1902, 1, 0
    %v3244 = vsel %vm1903, 1, 0
    %v3245 = vsel %vm1904, 1, 0
    %v3246 = vsel %vm1905, 1, 0
    %v3247 = vsel %vm1906, 1, 0
    %v3248 = vsel %vm1907, 1, 0
    %v3249 = vsel %vm1908, 1, 0
    %v3250 = vsel %vm1909, 1, 0
    %v3251 = vsel %vm1910, 1, 0
    %v3252 = vsel %vm1911, 1, 0
    %v3253 = vsel %vm1912, 1, 0
    %v3254 = vsel %vm1913, 1, 0
    %v3255 = vsel %vm1914, 1, 0
    %v3256 = vsel %vm1915, 1, 0
    %v3257 = vsel %vm1916, 1, 0
    %v3258 = vsel %vm1917, 1, 0
    %v3259 = vsel %vm1918, 1, 0
    %v3260 = vsel %vm1919, 1, 0
    %v3261 = vsel %vm1920, 1, 0
    %v3262 = vsel %vm1921, 1, 0
    %v3263 = vsel %vm1922, 1, 0
    %v3264 = vsel %vm1923, 1, 0
    %v3265 = vsel %vm1924, 1, 0
    %v3266 = vsel %vm1925, 1, 0
    %v3267 = vsel %vm1926, 1, 0
    %v3268 = vsel %vm1927, 1, 0
    %v3269 = vsel %vm1928, 1, 0
    %v3270 = vsel %vm1929, 1, 0
    %v3271 = vsel %vm1930, 1, 0
    %v3272 = vsel %vm1931, 1, 0
    %v3273 = vsel %vm1932, 1, 0
    %v3274 = vsel %vm1933, 1, 0
    %v3275 = vsel %vm1934, 1, 0
    %v3276 = vsel %vm1935, 1, 0
    %v3277 = vsel %vm1936, 1, 0
    %v3278 = vsel %vm1937, 1, 0
    %v3279 = vsel %vm1938, 1, 0
    %v3280 = vsel %vm1939, 1, 0
    %v3281 = vsel %vm1940, 1, 0
    %v3282 = vsel %vm1941, 1, 0
    %v3283 = vsel %vm1942, 1, 0
    %v3284 = vsel %vm1943, 1, 0
    %v3285 = vsel %vm1944, 1, 0
    %v3286 = vsel %vm1945, 1, 0
    %v3287 = vsel %vm1946, 1, 0
    %v3288 = vsel %vm1947, 1, 0
    %v3289 = vsel %vm1948, 1, 0
    %v3290 = vsel %vm1949, 1, 0
    %v3291 = vsel %vm1950, 1, 0
    %v3292 = vsel %vm1951, 1, 0
    %v3293 = vsel %vm1952, 1, 0
    %v3294 = vsel %vm1953, 1, 0
    %v3295 = vsel %vm1954, 1, 0
    %vm3296 = vcmp.eq.s32.totalorder %v3232, 1
    %vm3297 = vcmp.eq.s32.totalorder %v3233, 1
    %vm3298 = vcmp.eq.s32.totalorder %v3234, 1
    %vm3299 = vcmp.eq.s32.totalorder %v3235, 1
    %vm3300 = vcmp.eq.s32.totalorder %v3236, 1
    %vm3301 = vcmp.eq.s32.totalorder %v3237, 1
    %vm3302 = vcmp.eq.s32.totalorder %v3238, 1
    %vm3303 = vcmp.eq.s32.totalorder %v3239, 1
    %vm3304 = vcmp.eq.s32.totalorder %v3240, 1
    %vm3305 = vcmp.eq.s32.totalorder %v3241, 1
    %vm3306 = vcmp.eq.s32.totalorder %v3242, 1
    %vm3307 = vcmp.eq.s32.totalorder %v3243, 1
    %vm3308 = vcmp.eq.s32.totalorder %v3244, 1
    %vm3309 = vcmp.eq.s32.totalorder %v3245, 1
    %vm3310 = vcmp.eq.s32.totalorder %v3246, 1
    %vm3311 = vcmp.eq.s32.totalorder %v3247, 1
    %vm3312 = vcmp.eq.s32.totalorder %v3248, 1
    %vm3313 = vcmp.eq.s32.totalorder %v3249, 1
    %vm3314 = vcmp.eq.s32.totalorder %v3250, 1
    %vm3315 = vcmp.eq.s32.totalorder %v3251, 1
    %vm3316 = vcmp.eq.s32.totalorder %v3252, 1
    %vm3317 = vcmp.eq.s32.totalorder %v3253, 1
    %vm3318 = vcmp.eq.s32.totalorder %v3254, 1
    %vm3319 = vcmp.eq.s32.totalorder %v3255, 1
    %vm3320 = vcmp.eq.s32.totalorder %v3256, 1
    %vm3321 = vcmp.eq.s32.totalorder %v3257, 1
    %vm3322 = vcmp.eq.s32.totalorder %v3258, 1
    %vm3323 = vcmp.eq.s32.totalorder %v3259, 1
    %vm3324 = vcmp.eq.s32.totalorder %v3260, 1
    %vm3325 = vcmp.eq.s32.totalorder %v3261, 1
    %vm3326 = vcmp.eq.s32.totalorder %v3262, 1
    %vm3327 = vcmp.eq.s32.totalorder %v3263, 1
    %vm3328 = vcmp.eq.s32.totalorder %v3264, 1
    %vm3329 = vcmp.eq.s32.totalorder %v3265, 1
    %vm3330 = vcmp.eq.s32.totalorder %v3266, 1
    %vm3331 = vcmp.eq.s32.totalorder %v3267, 1
    %vm3332 = vcmp.eq.s32.totalorder %v3268, 1
    %vm3333 = vcmp.eq.s32.totalorder %v3269, 1
    %vm3334 = vcmp.eq.s32.totalorder %v3270, 1
    %vm3335 = vcmp.eq.s32.totalorder %v3271, 1
    %vm3336 = vcmp.eq.s32.totalorder %v3272, 1
    %vm3337 = vcmp.eq.s32.totalorder %v3273, 1
    %vm3338 = vcmp.eq.s32.totalorder %v3274, 1
    %vm3339 = vcmp.eq.s32.totalorder %v3275, 1
    %vm3340 = vcmp.eq.s32.totalorder %v3276, 1
    %vm3341 = vcmp.eq.s32.totalorder %v3277, 1
    %vm3342 = vcmp.eq.s32.totalorder %v3278, 1
    %vm3343 = vcmp.eq.s32.totalorder %v3279, 1
    %vm3344 = vcmp.eq.s32.totalorder %v3280, 1
    %vm3345 = vcmp.eq.s32.totalorder %v3281, 1
    %vm3346 = vcmp.eq.s32.totalorder %v3282, 1
    %vm3347 = vcmp.eq.s32.totalorder %v3283, 1
    %vm3348 = vcmp.eq.s32.totalorder %v3284, 1
    %vm3349 = vcmp.eq.s32.totalorder %v3285, 1
    %vm3350 = vcmp.eq.s32.totalorder %v3286, 1
    %vm3351 = vcmp.eq.s32.totalorder %v3287, 1
    %vm3352 = vcmp.eq.s32.totalorder %v3288, 1
    %vm3353 = vcmp.eq.s32.totalorder %v3289, 1
    %vm3354 = vcmp.eq.s32.totalorder %v3290, 1
    %vm3355 = vcmp.eq.s32.totalorder %v3291, 1
    %vm3356 = vcmp.eq.s32.totalorder %v3292, 1
    %vm3357 = vcmp.eq.s32.totalorder %v3293, 1
    %vm3358 = vcmp.eq.s32.totalorder %v3294, 1
    %vm3359 = vcmp.eq.s32.totalorder %v3295, 1
    %v3360 = vsel %vm3296, %v1827, 0.0
    %v3361 = vsel %vm3297, %v1644, 0.0
    %v3362 = vsel %vm3298, %v1646, 0.0
    %v3363 = vsel %vm3299, %v1648, 0.0
    %v3364 = vsel %vm3300, %v1650, 0.0
    %v3365 = vsel %vm3301, %v1652, 0.0
    %v3366 = vsel %vm3302, %v1654, 0.0
    %v3367 = vsel %vm3303, %v1656, 0.0
    %v3368 = vsel %vm3304, %v1658, 0.0
    %v3369 = vsel %vm3305, %v1660, 0.0
    %v3370 = vsel %vm3306, %v1662, 0.0
    %v3371 = vsel %vm3307, %v1664, 0.0
    %v3372 = vsel %vm3308, %v1666, 0.0
    %v3373 = vsel %vm3309, %v1668, 0.0
    %v3374 = vsel %vm3310, %v1670, 0.0
    %v3375 = vsel %vm3311, %v1672, 0.0
    %v3376 = vsel %vm3312, %v1674, 0.0
    %v3377 = vsel %vm3313, %v1676, 0.0
    %v3378 = vsel %vm3314, %v1678, 0.0
    %v3379 = vsel %vm3315, %v1680, 0.0
    %v3380 = vsel %vm3316, %v1682, 0.0
    %v3381 = vsel %vm3317, %v1684, 0.0
    %v3382 = vsel %vm3318, %v1686, 0.0
    %v3383 = vsel %vm3319, %v1688, 0.0
    %v3384 = vsel %vm3320, %v1690, 0.0
    %v3385 = vsel %vm3321, %v1692, 0.0
    %v3386 = vsel %vm3322, %v1694, 0.0
    %v3387 = vsel %vm3323, %v1696, 0.0
    %v3388 = vsel %vm3324, %v1698, 0.0
    %v3389 = vsel %vm3325, %v1700, 0.0
    %v3390 = vsel %vm3326, %v1702, 0.0
    %v3391 = vsel %vm3327, %v1704, 0.0
    %v3392 = vsel %vm3328, %v1706, 0.0
    %v3393 = vsel %vm3329, %v1708, 0.0
    %v3394 = vsel %vm3330, %v1710, 0.0
    %v3395 = vsel %vm3331, %v1712, 0.0
    %v3396 = vsel %vm3332, %v1714, 0.0
    %v3397 = vsel %vm3333, %v1716, 0.0
    %v3398 = vsel %vm3334, %v1718, 0.0
    %v3399 = vsel %vm3335, %v1720, 0.0
    %v3400 = vsel %vm3336, %v1722, 0.0
    %v3401 = vsel %vm3337, %v1724, 0.0
    %v3402 = vsel %vm3338, %v1726, 0.0
    %v3403 = vsel %vm3339, %v1728, 0.0
    %v3404 = vsel %vm3340, %v1730, 0.0
    %v3405 = vsel %vm3341, %v1732, 0.0
    %v3406 = vsel %vm3342, %v1734, 0.0
    %v3407 = vsel %vm3343, %v1736, 0.0
    %v3408 = vsel %vm3344, %v1738, 0.0
    %v3409 = vsel %vm3345, %v1740, 0.0
    %v3410 = vsel %vm3346, %v1742, 0.0
    %v3411 = vsel %vm3347, %v1744, 0.0
    %v3412 = vsel %vm3348, %v1746, 0.0
    %v3413 = vsel %vm3349, %v1748, 0.0
    %v3414 = vsel %vm3350, %v1750, 0.0
    %v3415 = vsel %vm3351, %v1752, 0.0
    %v3416 = vsel %vm3352, %v1754, 0.0
    %v3417 = vsel %vm3353, %v1756, 0.0
    %v3418 = vsel %vm3354, %v1758, 0.0
    %v3419 = vsel %vm3355, %v1760, 0.0
    %v3420 = vsel %vm3356, %v1762, 0.0
    %v3421 = vsel %vm3357, %v1764, 0.0
    %v3422 = vsel %vm3358, %v3227, 0.0
    %v3423 = vsel %vm3359, %v3229, 0.0
    %v3424 = vlaneseq
    %v3425 = vshrl.u32 %v3424, 7
    %v3426 = vsub.s32 3, %v3425
    %v3427 = vrot.slane %v1577, %v3426
    %v3428 = vmul.f32 %v3360, %v3427
    %v3429 = vmul.f32 %v3361, %v3427
    %v3430 = vmul.f32 %v3362, %v3427
    %v3431 = vmul.f32 %v3363, %v3427
    %v3432 = vmul.f32 %v3364, %v3427
    %v3433 = vmul.f32 %v3365, %v3427
    %v3434 = vmul.f32 %v3366, %v3427
    %v3435 = vmul.f32 %v3367, %v3427
    %v3436 = vmul.f32 %v3368, %v3427
    %v3437 = vmul.f32 %v3369, %v3427
    %v3438 = vmul.f32 %v3370, %v3427
    %v3439 = vmul.f32 %v3371, %v3427
    %v3440 = vmul.f32 %v3372, %v3427
    %v3441 = vmul.f32 %v3373, %v3427
    %v3442 = vmul.f32 %v3374, %v3427
    %v3443 = vmul.f32 %v3375, %v3427
    %v3444 = vmul.f32 %v3376, %v3427
    %v3445 = vmul.f32 %v3377, %v3427
    %v3446 = vmul.f32 %v3378, %v3427
    %v3447 = vmul.f32 %v3379, %v3427
    %v3448 = vmul.f32 %v3380, %v3427
    %v3449 = vmul.f32 %v3381, %v3427
    %v3450 = vmul.f32 %v3382, %v3427
    %v3451 = vmul.f32 %v3383, %v3427
    %v3452 = vmul.f32 %v3384, %v3427
    %v3453 = vmul.f32 %v3385, %v3427
    %v3454 = vmul.f32 %v3386, %v3427
    %v3455 = vmul.f32 %v3387, %v3427
    %v3456 = vmul.f32 %v3388, %v3427
    %v3457 = vmul.f32 %v3389, %v3427
    %v3458 = vmul.f32 %v3390, %v3427
    %v3459 = vmul.f32 %v3391, %v3427
    %v3460 = vmul.f32 %v3392, %v3427
    %v3461 = vmul.f32 %v3393, %v3427
    %v3462 = vmul.f32 %v3394, %v3427
    %v3463 = vmul.f32 %v3395, %v3427
    %v3464 = vmul.f32 %v3396, %v3427
    %v3465 = vmul.f32 %v3397, %v3427
    %v3466 = vmul.f32 %v3398, %v3427
    %v3467 = vmul.f32 %v3399, %v3427
    %v3468 = vmul.f32 %v3400, %v3427
    %v3469 = vmul.f32 %v3401, %v3427
    %v3470 = vmul.f32 %v3402, %v3427
    %v3471 = vmul.f32 %v3403, %v3427
    %v3472 = vmul.f32 %v3404, %v3427
    %v3473 = vmul.f32 %v3405, %v3427
    %v3474 = vmul.f32 %v3406, %v3427
    %v3475 = vmul.f32 %v3407, %v3427
    %v3476 = vmul.f32 %v3408, %v3427
    %v3477 = vmul.f32 %v3409, %v3427
    %v3478 = vmul.f32 %v3410, %v3427
    %v3479 = vmul.f32 %v3411, %v3427
    %v3480 = vmul.f32 %v3412, %v3427
    %v3481 = vmul.f32 %v3413, %v3427
    %v3482 = vmul.f32 %v3414, %v3427
    %v3483 = vmul.f32 %v3415, %v3427
    %v3484 = vmul.f32 %v3416, %v3427
    %v3485 = vmul.f32 %v3417, %v3427
    %v3486 = vmul.f32 %v3418, %v3427
    %v3487 = vmul.f32 %v3419, %v3427
    %v3488 = vmul.f32 %v3420, %v3427
    %v3489 = vmul.f32 %v3421, %v3427
    %v3490 = vmul.f32 %v3422, %v3427
    %v3491 = vmul.f32 %v3423, %v3427
    %v3492 = vadd.f32 %v3161, %v3428
    %v3493 = vadd.f32 %v3162, %v3429
    %v3494 = vadd.f32 %v3163, %v3430
    %v3495 = vadd.f32 %v3164, %v3431
    %v3496 = vadd.f32 %v3165, %v3432
    %v3497 = vadd.f32 %v3166, %v3433
    %v3498 = vadd.f32 %v3167, %v3434
    %v3499 = vadd.f32 %v3168, %v3435
    %v3500 = vadd.f32 %v3169, %v3436
    %v3501 = vadd.f32 %v3170, %v3437
    %v3502 = vadd.f32 %v3171, %v3438
    %v3503 = vadd.f32 %v3172, %v3439
    %v3504 = vadd.f32 %v3173, %v3440
    %v3505 = vadd.f32 %v3174, %v3441
    %v3506 = vadd.f32 %v3175, %v3442
    %v3507 = vadd.f32 %v3176, %v3443
    %v3508 = vadd.f32 %v3177, %v3444
    %v3509 = vadd.f32 %v3178, %v3445
    %v3510 = vadd.f32 %v3179, %v3446
    %v3511 = vadd.f32 %v3180, %v3447
    %v3512 = vadd.f32 %v3181, %v3448
    %v3513 = vadd.f32 %v3182, %v3449
    %v3514 = vadd.f32 %v3183, %v3450
    %v3515 = vadd.f32 %v3184, %v3451
    %v3516 = vadd.f32 %v3185, %v3452
    %v3517 = vadd.f32 %v3186, %v3453
    %v3518 = vadd.f32 %v3187, %v3454
    %v3519 = vadd.f32 %v3188, %v3455
    %v3520 = vadd.f32 %v3189, %v3456
    %v3521 = vadd.f32 %v3190, %v3457
    %v3522 = vadd.f32 %v3191, %v3458
    %v3523 = vadd.f32 %v3192, %v3459
    %v3524 = vadd.f32 %v3193, %v3460
    %v3525 = vadd.f32 %v3194, %v3461
    %v3526 = vadd.f32 %v3195, %v3462
    %v3527 = vadd.f32 %v3196, %v3463
    %v3528 = vadd.f32 %v3197, %v3464
    %v3529 = vadd.f32 %v3198, %v3465
    %v3530 = vadd.f32 %v3199, %v3466
    %v3531 = vadd.f32 %v3200, %v3467
    %v3532 = vadd.f32 %v3201, %v3468
    %v3533 = vadd.f32 %v3202, %v3469
    %v3534 = vadd.f32 %v3203, %v3470
    %v3535 = vadd.f32 %v3204, %v3471
    %v3536 = vadd.f32 %v3205, %v3472
    %v3537 = vadd.f32 %v3206, %v3473
    %v3538 = vadd.f32 %v3207, %v3474
    %v3539 = vadd.f32 %v3208, %v3475
    %v3540 = vadd.f32 %v3209, %v3476
    %v3541 = vadd.f32 %v3210, %v3477
    %v3542 = vadd.f32 %v3211, %v3478
    %v3543 = vadd.f32 %v3212, %v3479
    %v3544 = vadd.f32 %v3213, %v3480
    %v3545 = vadd.f32 %v3214, %v3481
    %v3546 = vadd.f32 %v3215, %v3482
    %v3547 = vadd.f32 %v3216, %v3483
    %v3548 = vadd.f32 %v3217, %v3484
    %v3549 = vadd.f32 %v3218, %v3485
    %v3550 = vadd.f32 %v3219, %v3486
    %v3551 = vadd.f32 %v3220, %v3487
    %v3552 = vadd.f32 %v3221, %v3488
    %v3553 = vadd.f32 %v3222, %v3489
    %v3554 = vadd.f32 %v3223, %v3490
    %v3555 = vadd.f32 %v3224, %v3491
    %v3556 = vlaneseq
    %v3557 = vshrl.u32 %v3556, 7
    %v3558 = vsub.s32 4, %v3557
    %v3559 = vrot.slane %v1577, %v3558
    %v3560 = vmul.f32 %v1256, %v3559
    %v3561 = vmul.f32 %v1257, %v3559
    %v3562 = vmul.f32 %v1258, %v3559
    %v3563 = vmul.f32 %v1259, %v3559
    %v3564 = vmul.f32 %v1260, %v3559
    %v3565 = vmul.f32 %v1261, %v3559
    %v3566 = vmul.f32 %v1262, %v3559
    %v3567 = vmul.f32 %v1263, %v3559
    %v3568 = vmul.f32 %v1264, %v3559
    %v3569 = vmul.f32 %v1265, %v3559
    %v3570 = vmul.f32 %v1266, %v3559
    %v3571 = vmul.f32 %v1267, %v3559
    %v3572 = vmul.f32 %v1268, %v3559
    %v3573 = vmul.f32 %v1269, %v3559
    %v3574 = vmul.f32 %v1270, %v3559
    %v3575 = vmul.f32 %v1271, %v3559
    %v3576 = vmul.f32 %v1272, %v3559
    %v3577 = vmul.f32 %v1273, %v3559
    %v3578 = vmul.f32 %v1274, %v3559
    %v3579 = vmul.f32 %v1275, %v3559
    %v3580 = vmul.f32 %v1276, %v3559
    %v3581 = vmul.f32 %v1277, %v3559
    %v3582 = vmul.f32 %v1278, %v3559
    %v3583 = vmul.f32 %v1279, %v3559
    %v3584 = vmul.f32 %v1280, %v3559
    %v3585 = vmul.f32 %v1281, %v3559
    %v3586 = vmul.f32 %v1282, %v3559
    %v3587 = vmul.f32 %v1283, %v3559
    %v3588 = vmul.f32 %v1284, %v3559
    %v3589 = vmul.f32 %v1285, %v3559
    %v3590 = vmul.f32 %v1286, %v3559
    %v3591 = vmul.f32 %v1287, %v3559
    %v3592 = vmul.f32 %v1288, %v3559
    %v3593 = vmul.f32 %v1289, %v3559
    %v3594 = vmul.f32 %v1290, %v3559
    %v3595 = vmul.f32 %v1291, %v3559
    %v3596 = vmul.f32 %v1292, %v3559
    %v3597 = vmul.f32 %v1293, %v3559
    %v3598 = vmul.f32 %v1294, %v3559
    %v3599 = vmul.f32 %v1295, %v3559
    %v3600 = vmul.f32 %v1296, %v3559
    %v3601 = vmul.f32 %v1297, %v3559
    %v3602 = vmul.f32 %v1298, %v3559
    %v3603 = vmul.f32 %v1299, %v3559
    %v3604 = vmul.f32 %v1300, %v3559
    %v3605 = vmul.f32 %v1301, %v3559
    %v3606 = vmul.f32 %v1302, %v3559
    %v3607 = vmul.f32 %v1303, %v3559
    %v3608 = vmul.f32 %v1304, %v3559
    %v3609 = vmul.f32 %v1305, %v3559
    %v3610 = vmul.f32 %v1306, %v3559
    %v3611 = vmul.f32 %v1307, %v3559
    %v3612 = vmul.f32 %v1308, %v3559
    %v3613 = vmul.f32 %v1309, %v3559
    %v3614 = vmul.f32 %v1310, %v3559
    %v3615 = vmul.f32 %v1311, %v3559
    %v3616 = vmul.f32 %v1312, %v3559
    %v3617 = vmul.f32 %v1313, %v3559
    %v3618 = vmul.f32 %v1314, %v3559
    %v3619 = vmul.f32 %v1315, %v3559
    %v3620 = vmul.f32 %v1316, %v3559
    %v3621 = vmul.f32 %v1317, %v3559
    %v3622 = vmul.f32 %v1318, %v3559
    %v3623 = vmul.f32 %v1319, %v3559
    %v3624 = vadd.f32 %v3492, %v3560
    %v3625 = vadd.f32 %v3493, %v3561
    %v3626 = vadd.f32 %v3494, %v3562
    %v3627 = vadd.f32 %v3495, %v3563
    %v3628 = vadd.f32 %v3496, %v3564
    %v3629 = vadd.f32 %v3497, %v3565
    %v3630 = vadd.f32 %v3498, %v3566
    %v3631 = vadd.f32 %v3499, %v3567
    %v3632 = vadd.f32 %v3500, %v3568
    %v3633 = vadd.f32 %v3501, %v3569
    %v3634 = vadd.f32 %v3502, %v3570
    %v3635 = vadd.f32 %v3503, %v3571
    %v3636 = vadd.f32 %v3504, %v3572
    %v3637 = vadd.f32 %v3505, %v3573
    %v3638 = vadd.f32 %v3506, %v3574
    %v3639 = vadd.f32 %v3507, %v3575
    %v3640 = vadd.f32 %v3508, %v3576
    %v3641 = vadd.f32 %v3509, %v3577
    %v3642 = vadd.f32 %v3510, %v3578
    %v3643 = vadd.f32 %v3511, %v3579
    %v3644 = vadd.f32 %v3512, %v3580
    %v3645 = vadd.f32 %v3513, %v3581
    %v3646 = vadd.f32 %v3514, %v3582
    %v3647 = vadd.f32 %v3515, %v3583
    %v3648 = vadd.f32 %v3516, %v3584
    %v3649 = vadd.f32 %v3517, %v3585
    %v3650 = vadd.f32 %v3518, %v3586
    %v3651 = vadd.f32 %v3519, %v3587
    %v3652 = vadd.f32 %v3520, %v3588
    %v3653 = vadd.f32 %v3521, %v3589
    %v3654 = vadd.f32 %v3522, %v3590
    %v3655 = vadd.f32 %v3523, %v3591
    %v3656 = vadd.f32 %v3524, %v3592
    %v3657 = vadd.f32 %v3525, %v3593
    %v3658 = vadd.f32 %v3526, %v3594
    %v3659 = vadd.f32 %v3527, %v3595
    %v3660 = vadd.f32 %v3528, %v3596
    %v3661 = vadd.f32 %v3529, %v3597
    %v3662 = vadd.f32 %v3530, %v3598
    %v3663 = vadd.f32 %v3531, %v3599
    %v3664 = vadd.f32 %v3532, %v3600
    %v3665 = vadd.f32 %v3533, %v3601
    %v3666 = vadd.f32 %v3534, %v3602
    %v3667 = vadd.f32 %v3535, %v3603
    %v3668 = vadd.f32 %v3536, %v3604
    %v3669 = vadd.f32 %v3537, %v3605
    %v3670 = vadd.f32 %v3538, %v3606
    %v3671 = vadd.f32 %v3539, %v3607
    %v3672 = vadd.f32 %v3540, %v3608
    %v3673 = vadd.f32 %v3541, %v3609
    %v3674 = vadd.f32 %v3542, %v3610
    %v3675 = vadd.f32 %v3543, %v3611
    %v3676 = vadd.f32 %v3544, %v3612
    %v3677 = vadd.f32 %v3545, %v3613
    %v3678 = vadd.f32 %v3546, %v3614
    %v3679 = vadd.f32 %v3547, %v3615
    %v3680 = vadd.f32 %v3548, %v3616
    %v3681 = vadd.f32 %v3549, %v3617
    %v3682 = vadd.f32 %v3550, %v3618
    %v3683 = vadd.f32 %v3551, %v3619
    %v3684 = vadd.f32 %v3552, %v3620
    %v3685 = vadd.f32 %v3553, %v3621
    %v3686 = vadd.f32 %v3554, %v3622
    %v3687 = vadd.f32 %v3555, %v3623
    %v3688 = vrot.slane %v1319, 1
    %v3689 = vsel %vm2587, %v2711, %v3688
    %v3692 = vsel %vm2587, %v3688, 0.0
    %v3693 = vsel %vm2777, 1, 0
    %v3694 = vsel %vm2778, 1, 0
    %v3695 = vsel %vm2779, 1, 0
    %v3696 = vsel %vm2780, 1, 0
    %v3697 = vsel %vm2781, 1, 0
    %v3698 = vsel %vm2782, 1, 0
    %v3699 = vsel %vm2783, 1, 0
    %v3700 = vsel %vm2784, 1, 0
    %v3701 = vsel %vm2785, 1, 0
    %v3702 = vsel %vm2786, 1, 0
    %v3703 = vsel %vm2787, 1, 0
    %v3704 = vsel %vm2788, 1, 0
    %v3705 = vsel %vm2789, 1, 0
    %v3706 = vsel %vm2790, 1, 0
    %v3707 = vsel %vm2791, 1, 0
    %v3708 = vsel %vm2792, 1, 0
    %v3709 = vsel %vm2793, 1, 0
    %v3710 = vsel %vm2794, 1, 0
    %v3711 = vsel %vm2795, 1, 0
    %v3712 = vsel %vm2796, 1, 0
    %v3713 = vsel %vm2797, 1, 0
    %v3714 = vsel %vm2798, 1, 0
    %v3715 = vsel %vm2799, 1, 0
    %v3716 = vsel %vm2800, 1, 0
    %v3717 = vsel %vm2801, 1, 0
    %v3718 = vsel %vm2802, 1, 0
    %v3719 = vsel %vm2803, 1, 0
    %v3720 = vsel %vm2804, 1, 0
    %v3721 = vsel %vm2805, 1, 0
    %v3722 = vsel %vm2806, 1, 0
    %v3723 = vsel %vm2807, 1, 0
    %v3724 = vsel %vm2808, 1, 0
    %v3725 = vsel %vm2809, 1, 0
    %v3726 = vsel %vm2810, 1, 0
    %v3727 = vsel %vm2811, 1, 0
    %v3728 = vsel %vm2812, 1, 0
    %v3729 = vsel %vm2813, 1, 0
    %v3730 = vsel %vm2814, 1, 0
    %v3731 = vsel %vm2815, 1, 0
    %v3732 = vsel %vm2816, 1, 0
    %v3733 = vsel %vm2817, 1, 0
    %v3734 = vsel %vm2818, 1, 0
    %v3735 = vsel %vm2819, 1, 0
    %v3736 = vsel %vm2820, 1, 0
    %v3737 = vsel %vm2821, 1, 0
    %v3738 = vsel %vm2822, 1, 0
    %v3739 = vsel %vm2823, 1, 0
    %v3740 = vsel %vm2824, 1, 0
    %v3741 = vsel %vm2825, 1, 0
    %v3742 = vsel %vm2826, 1, 0
    %v3743 = vsel %vm2827, 1, 0
    %v3744 = vsel %vm2828, 1, 0
    %v3745 = vsel %vm2829, 1, 0
    %v3746 = vsel %vm2830, 1, 0
    %v3747 = vsel %vm2831, 1, 0
    %v3748 = vsel %vm2832, 1, 0
    %v3749 = vsel %vm2833, 1, 0
    %v3750 = vsel %vm2834, 1, 0
    %v3751 = vsel %vm2835, 1, 0
    %v3752 = vsel %vm2836, 1, 0
    %v3753 = vsel %vm2837, 1, 0
    %v3754 = vsel %vm2838, 1, 0
    %v3755 = vsel %vm2839, 1, 0
    %v3756 = vsel %vm2840, 1, 0
    %vm3757 = vcmp.eq.s32.totalorder %v3693, 1
    %vm3758 = vcmp.eq.s32.totalorder %v3694, 1
    %vm3759 = vcmp.eq.s32.totalorder %v3695, 1
    %vm3760 = vcmp.eq.s32.totalorder %v3696, 1
    %vm3761 = vcmp.eq.s32.totalorder %v3697, 1
    %vm3762 = vcmp.eq.s32.totalorder %v3698, 1
    %vm3763 = vcmp.eq.s32.totalorder %v3699, 1
    %vm3764 = vcmp.eq.s32.totalorder %v3700, 1
    %vm3765 = vcmp.eq.s32.totalorder %v3701, 1
    %vm3766 = vcmp.eq.s32.totalorder %v3702, 1
    %vm3767 = vcmp.eq.s32.totalorder %v3703, 1
    %vm3768 = vcmp.eq.s32.totalorder %v3704, 1
    %vm3769 = vcmp.eq.s32.totalorder %v3705, 1
    %vm3770 = vcmp.eq.s32.totalorder %v3706, 1
    %vm3771 = vcmp.eq.s32.totalorder %v3707, 1
    %vm3772 = vcmp.eq.s32.totalorder %v3708, 1
    %vm3773 = vcmp.eq.s32.totalorder %v3709, 1
    %vm3774 = vcmp.eq.s32.totalorder %v3710, 1
    %vm3775 = vcmp.eq.s32.totalorder %v3711, 1
    %vm3776 = vcmp.eq.s32.totalorder %v3712, 1
    %vm3777 = vcmp.eq.s32.totalorder %v3713, 1
    %vm3778 = vcmp.eq.s32.totalorder %v3714, 1
    %vm3779 = vcmp.eq.s32.totalorder %v3715, 1
    %vm3780 = vcmp.eq.s32.totalorder %v3716, 1
    %vm3781 = vcmp.eq.s32.totalorder %v3717, 1
    %vm3782 = vcmp.eq.s32.totalorder %v3718, 1
    %vm3783 = vcmp.eq.s32.totalorder %v3719, 1
    %vm3784 = vcmp.eq.s32.totalorder %v3720, 1
    %vm3785 = vcmp.eq.s32.totalorder %v3721, 1
    %vm3786 = vcmp.eq.s32.totalorder %v3722, 1
    %vm3787 = vcmp.eq.s32.totalorder %v3723, 1
    %vm3788 = vcmp.eq.s32.totalorder %v3724, 1
    %vm3789 = vcmp.eq.s32.totalorder %v3725, 1
    %vm3790 = vcmp.eq.s32.totalorder %v3726, 1
    %vm3791 = vcmp.eq.s32.totalorder %v3727, 1
    %vm3792 = vcmp.eq.s32.totalorder %v3728, 1
    %vm3793 = vcmp.eq.s32.totalorder %v3729, 1
    %vm3794 = vcmp.eq.s32.totalorder %v3730, 1
    %vm3795 = vcmp.eq.s32.totalorder %v3731, 1
    %vm3796 = vcmp.eq.s32.totalorder %v3732, 1
    %vm3797 = vcmp.eq.s32.totalorder %v3733, 1
    %vm3798 = vcmp.eq.s32.totalorder %v3734, 1
    %vm3799 = vcmp.eq.s32.totalorder %v3735, 1
    %vm3800 = vcmp.eq.s32.totalorder %v3736, 1
    %vm3801 = vcmp.eq.s32.totalorder %v3737, 1
    %vm3802 = vcmp.eq.s32.totalorder %v3738, 1
    %vm3803 = vcmp.eq.s32.totalorder %v3739, 1
    %vm3804 = vcmp.eq.s32.totalorder %v3740, 1
    %vm3805 = vcmp.eq.s32.totalorder %v3741, 1
    %vm3806 = vcmp.eq.s32.totalorder %v3742, 1
    %vm3807 = vcmp.eq.s32.totalorder %v3743, 1
    %vm3808 = vcmp.eq.s32.totalorder %v3744, 1
    %vm3809 = vcmp.eq.s32.totalorder %v3745, 1
    %vm3810 = vcmp.eq.s32.totalorder %v3746, 1
    %vm3811 = vcmp.eq.s32.totalorder %v3747, 1
    %vm3812 = vcmp.eq.s32.totalorder %v3748, 1
    %vm3813 = vcmp.eq.s32.totalorder %v3749, 1
    %vm3814 = vcmp.eq.s32.totalorder %v3750, 1
    %vm3815 = vcmp.eq.s32.totalorder %v3751, 1
    %vm3816 = vcmp.eq.s32.totalorder %v3752, 1
    %vm3817 = vcmp.eq.s32.totalorder %v3753, 1
    %vm3818 = vcmp.eq.s32.totalorder %v3754, 1
    %vm3819 = vcmp.eq.s32.totalorder %v3755, 1
    %vm3820 = vcmp.eq.s32.totalorder %v3756, 1
    %v3821 = vsel %vm3757, %v2590, 0.0
    %v3822 = vsel %vm3758, %v2592, 0.0
    %v3823 = vsel %vm3759, %v2594, 0.0
    %v3824 = vsel %vm3760, %v2596, 0.0
    %v3825 = vsel %vm3761, %v2598, 0.0
    %v3826 = vsel %vm3762, %v2600, 0.0
    %v3827 = vsel %vm3763, %v2602, 0.0
    %v3828 = vsel %vm3764, %v2604, 0.0
    %v3829 = vsel %vm3765, %v2606, 0.0
    %v3830 = vsel %vm3766, %v2608, 0.0
    %v3831 = vsel %vm3767, %v2610, 0.0
    %v3832 = vsel %vm3768, %v2612, 0.0
    %v3833 = vsel %vm3769, %v2614, 0.0
    %v3834 = vsel %vm3770, %v2616, 0.0
    %v3835 = vsel %vm3771, %v2618, 0.0
    %v3836 = vsel %vm3772, %v2620, 0.0
    %v3837 = vsel %vm3773, %v2622, 0.0
    %v3838 = vsel %vm3774, %v2624, 0.0
    %v3839 = vsel %vm3775, %v2626, 0.0
    %v3840 = vsel %vm3776, %v2628, 0.0
    %v3841 = vsel %vm3777, %v2630, 0.0
    %v3842 = vsel %vm3778, %v2632, 0.0
    %v3843 = vsel %vm3779, %v2634, 0.0
    %v3844 = vsel %vm3780, %v2636, 0.0
    %v3845 = vsel %vm3781, %v2638, 0.0
    %v3846 = vsel %vm3782, %v2640, 0.0
    %v3847 = vsel %vm3783, %v2642, 0.0
    %v3848 = vsel %vm3784, %v2644, 0.0
    %v3849 = vsel %vm3785, %v2646, 0.0
    %v3850 = vsel %vm3786, %v2648, 0.0
    %v3851 = vsel %vm3787, %v2650, 0.0
    %v3852 = vsel %vm3788, %v2652, 0.0
    %v3853 = vsel %vm3789, %v2654, 0.0
    %v3854 = vsel %vm3790, %v2656, 0.0
    %v3855 = vsel %vm3791, %v2658, 0.0
    %v3856 = vsel %vm3792, %v2660, 0.0
    %v3857 = vsel %vm3793, %v2662, 0.0
    %v3858 = vsel %vm3794, %v2664, 0.0
    %v3859 = vsel %vm3795, %v2666, 0.0
    %v3860 = vsel %vm3796, %v2668, 0.0
    %v3861 = vsel %vm3797, %v2670, 0.0
    %v3862 = vsel %vm3798, %v2672, 0.0
    %v3863 = vsel %vm3799, %v2674, 0.0
    %v3864 = vsel %vm3800, %v2676, 0.0
    %v3865 = vsel %vm3801, %v2678, 0.0
    %v3866 = vsel %vm3802, %v2680, 0.0
    %v3867 = vsel %vm3803, %v2682, 0.0
    %v3868 = vsel %vm3804, %v2684, 0.0
    %v3869 = vsel %vm3805, %v2686, 0.0
    %v3870 = vsel %vm3806, %v2688, 0.0
    %v3871 = vsel %vm3807, %v2690, 0.0
    %v3872 = vsel %vm3808, %v2692, 0.0
    %v3873 = vsel %vm3809, %v2694, 0.0
    %v3874 = vsel %vm3810, %v2696, 0.0
    %v3875 = vsel %vm3811, %v2698, 0.0
    %v3876 = vsel %vm3812, %v2700, 0.0
    %v3877 = vsel %vm3813, %v2702, 0.0
    %v3878 = vsel %vm3814, %v2704, 0.0
    %v3879 = vsel %vm3815, %v2706, 0.0
    %v3880 = vsel %vm3816, %v2708, 0.0
    %v3881 = vsel %vm3817, %v2710, 0.0
    %v3882 = vsel %vm3818, %v2712, 0.0
    %v3883 = vsel %vm3819, %v3689, 0.0
    %v3884 = vsel %vm3820, %v3692, 0.0
    %v3885 = vlaneseq
    %v3886 = vshrl.u32 %v3885, 7
    %v3887 = vsub.s32 5, %v3886
    %v3888 = vrot.slane %v1577, %v3887
    %v3889 = vmul.f32 %v3821, %v3888
    %v3890 = vmul.f32 %v3822, %v3888
    %v3891 = vmul.f32 %v3823, %v3888
    %v3892 = vmul.f32 %v3824, %v3888
    %v3893 = vmul.f32 %v3825, %v3888
    %v3894 = vmul.f32 %v3826, %v3888
    %v3895 = vmul.f32 %v3827, %v3888
    %v3896 = vmul.f32 %v3828, %v3888
    %v3897 = vmul.f32 %v3829, %v3888
    %v3898 = vmul.f32 %v3830, %v3888
    %v3899 = vmul.f32 %v3831, %v3888
    %v3900 = vmul.f32 %v3832, %v3888
    %v3901 = vmul.f32 %v3833, %v3888
    %v3902 = vmul.f32 %v3834, %v3888
    %v3903 = vmul.f32 %v3835, %v3888
    %v3904 = vmul.f32 %v3836, %v3888
    %v3905 = vmul.f32 %v3837, %v3888
    %v3906 = vmul.f32 %v3838, %v3888
    %v3907 = vmul.f32 %v3839, %v3888
    %v3908 = vmul.f32 %v3840, %v3888
    %v3909 = vmul.f32 %v3841, %v3888
    %v3910 = vmul.f32 %v3842, %v3888
    %v3911 = vmul.f32 %v3843, %v3888
    %v3912 = vmul.f32 %v3844, %v3888
    %v3913 = vmul.f32 %v3845, %v3888
    %v3914 = vmul.f32 %v3846, %v3888
    %v3915 = vmul.f32 %v3847, %v3888
    %v3916 = vmul.f32 %v3848, %v3888
    %v3917 = vmul.f32 %v3849, %v3888
    %v3918 = vmul.f32 %v3850, %v3888
    %v3919 = vmul.f32 %v3851, %v3888
    %v3920 = vmul.f32 %v3852, %v3888
    %v3921 = vmul.f32 %v3853, %v3888
    %v3922 = vmul.f32 %v3854, %v3888
    %v3923 = vmul.f32 %v3855, %v3888
    %v3924 = vmul.f32 %v3856, %v3888
    %v3925 = vmul.f32 %v3857, %v3888
    %v3926 = vmul.f32 %v3858, %v3888
    %v3927 = vmul.f32 %v3859, %v3888
    %v3928 = vmul.f32 %v3860, %v3888
    %v3929 = vmul.f32 %v3861, %v3888
    %v3930 = vmul.f32 %v3862, %v3888
    %v3931 = vmul.f32 %v3863, %v3888
    %v3932 = vmul.f32 %v3864, %v3888
    %v3933 = vmul.f32 %v3865, %v3888
    %v3934 = vmul.f32 %v3866, %v3888
    %v3935 = vmul.f32 %v3867, %v3888
    %v3936 = vmul.f32 %v3868, %v3888
    %v3937 = vmul.f32 %v3869, %v3888
    %v3938 = vmul.f32 %v3870, %v3888
    %v3939 = vmul.f32 %v3871, %v3888
    %v3940 = vmul.f32 %v3872, %v3888
    %v3941 = vmul.f32 %v3873, %v3888
    %v3942 = vmul.f32 %v3874, %v3888
    %v3943 = vmul.f32 %v3875, %v3888
    %v3944 = vmul.f32 %v3876, %v3888
    %v3945 = vmul.f32 %v3877, %v3888
    %v3946 = vmul.f32 %v3878, %v3888
    %v3947 = vmul.f32 %v3879, %v3888
    %v3948 = vmul.f32 %v3880, %v3888
    %v3949 = vmul.f32 %v3881, %v3888
    %v3950 = vmul.f32 %v3882, %v3888
    %v3951 = vmul.f32 %v3883, %v3888
    %v3952 = vmul.f32 %v3884, %v3888
    %v3953 = vadd.f32 %v3624, %v3889
    %v3954 = vadd.f32 %v3625, %v3890
    %v3955 = vadd.f32 %v3626, %v3891
    %v3956 = vadd.f32 %v3627, %v3892
    %v3957 = vadd.f32 %v3628, %v3893
    %v3958 = vadd.f32 %v3629, %v3894
    %v3959 = vadd.f32 %v3630, %v3895
    %v3960 = vadd.f32 %v3631, %v3896
    %v3961 = vadd.f32 %v3632, %v3897
    %v3962 = vadd.f32 %v3633, %v3898
    %v3963 = vadd.f32 %v3634, %v3899
    %v3964 = vadd.f32 %v3635, %v3900
    %v3965 = vadd.f32 %v3636, %v3901
    %v3966 = vadd.f32 %v3637, %v3902
    %v3967 = vadd.f32 %v3638, %v3903
    %v3968 = vadd.f32 %v3639, %v3904
    %v3969 = vadd.f32 %v3640, %v3905
    %v3970 = vadd.f32 %v3641, %v3906
    %v3971 = vadd.f32 %v3642, %v3907
    %v3972 = vadd.f32 %v3643, %v3908
    %v3973 = vadd.f32 %v3644, %v3909
    %v3974 = vadd.f32 %v3645, %v3910
    %v3975 = vadd.f32 %v3646, %v3911
    %v3976 = vadd.f32 %v3647, %v3912
    %v3977 = vadd.f32 %v3648, %v3913
    %v3978 = vadd.f32 %v3649, %v3914
    %v3979 = vadd.f32 %v3650, %v3915
    %v3980 = vadd.f32 %v3651, %v3916
    %v3981 = vadd.f32 %v3652, %v3917
    %v3982 = vadd.f32 %v3653, %v3918
    %v3983 = vadd.f32 %v3654, %v3919
    %v3984 = vadd.f32 %v3655, %v3920
    %v3985 = vadd.f32 %v3656, %v3921
    %v3986 = vadd.f32 %v3657, %v3922
    %v3987 = vadd.f32 %v3658, %v3923
    %v3988 = vadd.f32 %v3659, %v3924
    %v3989 = vadd.f32 %v3660, %v3925
    %v3990 = vadd.f32 %v3661, %v3926
    %v3991 = vadd.f32 %v3662, %v3927
    %v3992 = vadd.f32 %v3663, %v3928
    %v3993 = vadd.f32 %v3664, %v3929
    %v3994 = vadd.f32 %v3665, %v3930
    %v3995 = vadd.f32 %v3666, %v3931
    %v3996 = vadd.f32 %v3667, %v3932
    %v3997 = vadd.f32 %v3668, %v3933
    %v3998 = vadd.f32 %v3669, %v3934
    %v3999 = vadd.f32 %v3670, %v3935
    %v4000 = vadd.f32 %v3671, %v3936
    %v4001 = vadd.f32 %v3672, %v3937
    %v4002 = vadd.f32 %v3673, %v3938
    %v4003 = vadd.f32 %v3674, %v3939
    %v4004 = vadd.f32 %v3675, %v3940
    %v4005 = vadd.f32 %v3676, %v3941
    %v4006 = vadd.f32 %v3677, %v3942
    %v4007 = vadd.f32 %v3678, %v3943
    %v4008 = vadd.f32 %v3679, %v3944
    %v4009 = vadd.f32 %v3680, %v3945
    %v4010 = vadd.f32 %v3681, %v3946
    %v4011 = vadd.f32 %v3682, %v3947
    %v4012 = vadd.f32 %v3683, %v3948
    %v4013 = vadd.f32 %v3684, %v3949
    %v4014 = vadd.f32 %v3685, %v3950
    %v4015 = vadd.f32 %v3686, %v3951
    %v4016 = vadd.f32 %v3687, %v3952
    %v4018 = vsel %vm1641, %v3228, 0.0
    %vm4019 = vcmp.lt.s32.totalorder %v1449, 15
    %vm4020 = vcmp.lt.s32.totalorder %v1450, 15
    %vm4021 = vcmp.lt.s32.totalorder %v1451, 15
    %vm4022 = vcmp.lt.s32.totalorder %v1452, 15
    %vm4023 = vcmp.lt.s32.totalorder %v1453, 15
    %vm4024 = vcmp.lt.s32.totalorder %v1454, 15
    %vm4025 = vcmp.lt.s32.totalorder %v1455, 15
    %vm4026 = vcmp.lt.s32.totalorder %v1456, 15
    %vm4027 = vcmp.lt.s32.totalorder %v1457, 15
    %vm4028 = vcmp.lt.s32.totalorder %v1458, 15
    %vm4029 = vcmp.lt.s32.totalorder %v1459, 15
    %vm4030 = vcmp.lt.s32.totalorder %v1460, 15
    %vm4031 = vcmp.lt.s32.totalorder %v1461, 15
    %vm4032 = vcmp.lt.s32.totalorder %v1462, 15
    %vm4033 = vcmp.lt.s32.totalorder %v1463, 15
    %vm4034 = vcmp.lt.s32.totalorder %v1464, 15
    %vm4035 = vcmp.lt.s32.totalorder %v1465, 15
    %vm4036 = vcmp.lt.s32.totalorder %v1466, 15
    %vm4037 = vcmp.lt.s32.totalorder %v1467, 15
    %vm4038 = vcmp.lt.s32.totalorder %v1468, 15
    %vm4039 = vcmp.lt.s32.totalorder %v1469, 15
    %vm4040 = vcmp.lt.s32.totalorder %v1470, 15
    %vm4041 = vcmp.lt.s32.totalorder %v1471, 15
    %vm4042 = vcmp.lt.s32.totalorder %v1472, 15
    %vm4043 = vcmp.lt.s32.totalorder %v1473, 15
    %vm4044 = vcmp.lt.s32.totalorder %v1474, 15
    %vm4045 = vcmp.lt.s32.totalorder %v1475, 15
    %vm4046 = vcmp.lt.s32.totalorder %v1476, 15
    %vm4047 = vcmp.lt.s32.totalorder %v1477, 15
    %vm4048 = vcmp.lt.s32.totalorder %v1478, 15
    %vm4049 = vcmp.lt.s32.totalorder %v1479, 15
    %vm4050 = vcmp.lt.s32.totalorder %v1480, 15
    %vm4051 = vcmp.lt.s32.totalorder %v1481, 15
    %vm4052 = vcmp.lt.s32.totalorder %v1482, 15
    %vm4053 = vcmp.lt.s32.totalorder %v1483, 15
    %vm4054 = vcmp.lt.s32.totalorder %v1484, 15
    %vm4055 = vcmp.lt.s32.totalorder %v1485, 15
    %vm4056 = vcmp.lt.s32.totalorder %v1486, 15
    %vm4057 = vcmp.lt.s32.totalorder %v1487, 15
    %vm4058 = vcmp.lt.s32.totalorder %v1488, 15
    %vm4059 = vcmp.lt.s32.totalorder %v1489, 15
    %vm4060 = vcmp.lt.s32.totalorder %v1490, 15
    %vm4061 = vcmp.lt.s32.totalorder %v1491, 15
    %vm4062 = vcmp.lt.s32.totalorder %v1492, 15
    %vm4063 = vcmp.lt.s32.totalorder %v1493, 15
    %vm4064 = vcmp.lt.s32.totalorder %v1494, 15
    %vm4065 = vcmp.lt.s32.totalorder %v1495, 15
    %vm4066 = vcmp.lt.s32.totalorder %v1496, 15
    %vm4067 = vcmp.lt.s32.totalorder %v1497, 15
    %vm4068 = vcmp.lt.s32.totalorder %v1498, 15
    %vm4069 = vcmp.lt.s32.totalorder %v1499, 15
    %vm4070 = vcmp.lt.s32.totalorder %v1500, 15
    %vm4071 = vcmp.lt.s32.totalorder %v1501, 15
    %vm4072 = vcmp.lt.s32.totalorder %v1502, 15
    %vm4073 = vcmp.lt.s32.totalorder %v1503, 15
    %vm4074 = vcmp.lt.s32.totalorder %v1504, 15
    %vm4075 = vcmp.lt.s32.totalorder %v1505, 15
    %vm4076 = vcmp.lt.s32.totalorder %v1506, 15
    %vm4077 = vcmp.lt.s32.totalorder %v1507, 15
    %vm4078 = vcmp.lt.s32.totalorder %v1508, 15
    %vm4079 = vcmp.lt.s32.totalorder %v1509, 15
    %vm4080 = vcmp.lt.s32.totalorder %v1510, 15
    %vm4081 = vcmp.lt.s32.totalorder %v1511, 15
    %vm4082 = vmand %vm4019, %vm1891
    %vm4083 = vmand %vm4020, %vm1892
    %vm4084 = vmand %vm4021, %vm1893
    %vm4085 = vmand %vm4022, %vm1894
    %vm4086 = vmand %vm4023, %vm1895
    %vm4087 = vmand %vm4024, %vm1896
    %vm4088 = vmand %vm4025, %vm1897
    %vm4089 = vmand %vm4026, %vm1898
    %vm4090 = vmand %vm4027, %vm1899
    %vm4091 = vmand %vm4028, %vm1900
    %vm4092 = vmand %vm4029, %vm1901
    %vm4093 = vmand %vm4030, %vm1902
    %vm4094 = vmand %vm4031, %vm1903
    %vm4095 = vmand %vm4032, %vm1904
    %vm4096 = vmand %vm4033, %vm1905
    %vm4097 = vmand %vm4034, %vm1906
    %vm4098 = vmand %vm4035, %vm1907
    %vm4099 = vmand %vm4036, %vm1908
    %vm4100 = vmand %vm4037, %vm1909
    %vm4101 = vmand %vm4038, %vm1910
    %vm4102 = vmand %vm4039, %vm1911
    %vm4103 = vmand %vm4040, %vm1912
    %vm4104 = vmand %vm4041, %vm1913
    %vm4105 = vmand %vm4042, %vm1914
    %vm4106 = vmand %vm4043, %vm1915
    %vm4107 = vmand %vm4044, %vm1916
    %vm4108 = vmand %vm4045, %vm1917
    %vm4109 = vmand %vm4046, %vm1918
    %vm4110 = vmand %vm4047, %vm1919
    %vm4111 = vmand %vm4048, %vm1920
    %vm4112 = vmand %vm4049, %vm1921
    %vm4113 = vmand %vm4050, %vm1922
    %vm4114 = vmand %vm4051, %vm1923
    %vm4115 = vmand %vm4052, %vm1924
    %vm4116 = vmand %vm4053, %vm1925
    %vm4117 = vmand %vm4054, %vm1926
    %vm4118 = vmand %vm4055, %vm1927
    %vm4119 = vmand %vm4056, %vm1928
    %vm4120 = vmand %vm4057, %vm1929
    %vm4121 = vmand %vm4058, %vm1930
    %vm4122 = vmand %vm4059, %vm1931
    %vm4123 = vmand %vm4060, %vm1932
    %vm4124 = vmand %vm4061, %vm1933
    %vm4125 = vmand %vm4062, %vm1934
    %vm4126 = vmand %vm4063, %vm1935
    %vm4127 = vmand %vm4064, %vm1936
    %vm4128 = vmand %vm4065, %vm1937
    %vm4129 = vmand %vm4066, %vm1938
    %vm4130 = vmand %vm4067, %vm1939
    %vm4131 = vmand %vm4068, %vm1940
    %vm4132 = vmand %vm4069, %vm1941
    %vm4133 = vmand %vm4070, %vm1942
    %vm4134 = vmand %vm4071, %vm1943
    %vm4135 = vmand %vm4072, %vm1944
    %vm4136 = vmand %vm4073, %vm1945
    %vm4137 = vmand %vm4074, %vm1946
    %vm4138 = vmand %vm4075, %vm1947
    %vm4139 = vmand %vm4076, %vm1948
    %vm4140 = vmand %vm4077, %vm1949
    %vm4141 = vmand %vm4078, %vm1950
    %vm4142 = vmand %vm4079, %vm1951
    %vm4143 = vmand %vm4080, %vm1952
    %vm4144 = vmand %vm4081, %vm1953
    %v4145 = vsel %vm4082, 1, 0
    %v4146 = vsel %vm4083, 1, 0
    %v4147 = vsel %vm4084, 1, 0
    %v4148 = vsel %vm4085, 1, 0
    %v4149 = vsel %vm4086, 1, 0
    %v4150 = vsel %vm4087, 1, 0
    %v4151 = vsel %vm4088, 1, 0
    %v4152 = vsel %vm4089, 1, 0
    %v4153 = vsel %vm4090, 1, 0
    %v4154 = vsel %vm4091, 1, 0
    %v4155 = vsel %vm4092, 1, 0
    %v4156 = vsel %vm4093, 1, 0
    %v4157 = vsel %vm4094, 1, 0
    %v4158 = vsel %vm4095, 1, 0
    %v4159 = vsel %vm4096, 1, 0
    %v4160 = vsel %vm4097, 1, 0
    %v4161 = vsel %vm4098, 1, 0
    %v4162 = vsel %vm4099, 1, 0
    %v4163 = vsel %vm4100, 1, 0
    %v4164 = vsel %vm4101, 1, 0
    %v4165 = vsel %vm4102, 1, 0
    %v4166 = vsel %vm4103, 1, 0
    %v4167 = vsel %vm4104, 1, 0
    %v4168 = vsel %vm4105, 1, 0
    %v4169 = vsel %vm4106, 1, 0
    %v4170 = vsel %vm4107, 1, 0
    %v4171 = vsel %vm4108, 1, 0
    %v4172 = vsel %vm4109, 1, 0
    %v4173 = vsel %vm4110, 1, 0
    %v4174 = vsel %vm4111, 1, 0
    %v4175 = vsel %vm4112, 1, 0
    %v4176 = vsel %vm4113, 1, 0
    %v4177 = vsel %vm4114, 1, 0
    %v4178 = vsel %vm4115, 1, 0
    %v4179 = vsel %vm4116, 1, 0
    %v4180 = vsel %vm4117, 1, 0
    %v4181 = vsel %vm4118, 1, 0
    %v4182 = vsel %vm4119, 1, 0
    %v4183 = vsel %vm4120, 1, 0
    %v4184 = vsel %vm4121, 1, 0
    %v4185 = vsel %vm4122, 1, 0
    %v4186 = vsel %vm4123, 1, 0
    %v4187 = vsel %vm4124, 1, 0
    %v4188 = vsel %vm4125, 1, 0
    %v4189 = vsel %vm4126, 1, 0
    %v4190 = vsel %vm4127, 1, 0
    %v4191 = vsel %vm4128, 1, 0
    %v4192 = vsel %vm4129, 1, 0
    %v4193 = vsel %vm4130, 1, 0
    %v4194 = vsel %vm4131, 1, 0
    %v4195 = vsel %vm4132, 1, 0
    %v4196 = vsel %vm4133, 1, 0
    %v4197 = vsel %vm4134, 1, 0
    %v4198 = vsel %vm4135, 1, 0
    %v4199 = vsel %vm4136, 1, 0
    %v4200 = vsel %vm4137, 1, 0
    %v4201 = vsel %vm4138, 1, 0
    %v4202 = vsel %vm4139, 1, 0
    %v4203 = vsel %vm4140, 1, 0
    %v4204 = vsel %vm4141, 1, 0
    %v4205 = vsel %vm4142, 1, 0
    %v4206 = vsel %vm4143, 1, 0
    %v4207 = vsel %vm4144, 1, 0
    %vm4208 = vcmp.eq.s32.totalorder %v4145, 1
    %vm4209 = vcmp.eq.s32.totalorder %v4146, 1
    %vm4210 = vcmp.eq.s32.totalorder %v4147, 1
    %vm4211 = vcmp.eq.s32.totalorder %v4148, 1
    %vm4212 = vcmp.eq.s32.totalorder %v4149, 1
    %vm4213 = vcmp.eq.s32.totalorder %v4150, 1
    %vm4214 = vcmp.eq.s32.totalorder %v4151, 1
    %vm4215 = vcmp.eq.s32.totalorder %v4152, 1
    %vm4216 = vcmp.eq.s32.totalorder %v4153, 1
    %vm4217 = vcmp.eq.s32.totalorder %v4154, 1
    %vm4218 = vcmp.eq.s32.totalorder %v4155, 1
    %vm4219 = vcmp.eq.s32.totalorder %v4156, 1
    %vm4220 = vcmp.eq.s32.totalorder %v4157, 1
    %vm4221 = vcmp.eq.s32.totalorder %v4158, 1
    %vm4222 = vcmp.eq.s32.totalorder %v4159, 1
    %vm4223 = vcmp.eq.s32.totalorder %v4160, 1
    %vm4224 = vcmp.eq.s32.totalorder %v4161, 1
    %vm4225 = vcmp.eq.s32.totalorder %v4162, 1
    %vm4226 = vcmp.eq.s32.totalorder %v4163, 1
    %vm4227 = vcmp.eq.s32.totalorder %v4164, 1
    %vm4228 = vcmp.eq.s32.totalorder %v4165, 1
    %vm4229 = vcmp.eq.s32.totalorder %v4166, 1
    %vm4230 = vcmp.eq.s32.totalorder %v4167, 1
    %vm4231 = vcmp.eq.s32.totalorder %v4168, 1
    %vm4232 = vcmp.eq.s32.totalorder %v4169, 1
    %vm4233 = vcmp.eq.s32.totalorder %v4170, 1
    %vm4234 = vcmp.eq.s32.totalorder %v4171, 1
    %vm4235 = vcmp.eq.s32.totalorder %v4172, 1
    %vm4236 = vcmp.eq.s32.totalorder %v4173, 1
    %vm4237 = vcmp.eq.s32.totalorder %v4174, 1
    %vm4238 = vcmp.eq.s32.totalorder %v4175, 1
    %vm4239 = vcmp.eq.s32.totalorder %v4176, 1
    %vm4240 = vcmp.eq.s32.totalorder %v4177, 1
    %vm4241 = vcmp.eq.s32.totalorder %v4178, 1
    %vm4242 = vcmp.eq.s32.totalorder %v4179, 1
    %vm4243 = vcmp.eq.s32.totalorder %v4180, 1
    %vm4244 = vcmp.eq.s32.totalorder %v4181, 1
    %vm4245 = vcmp.eq.s32.totalorder %v4182, 1
    %vm4246 = vcmp.eq.s32.totalorder %v4183, 1
    %vm4247 = vcmp.eq.s32.totalorder %v4184, 1
    %vm4248 = vcmp.eq.s32.totalorder %v4185, 1
    %vm4249 = vcmp.eq.s32.totalorder %v4186, 1
    %vm4250 = vcmp.eq.s32.totalorder %v4187, 1
    %vm4251 = vcmp.eq.s32.totalorder %v4188, 1
    %vm4252 = vcmp.eq.s32.totalorder %v4189, 1
    %vm4253 = vcmp.eq.s32.totalorder %v4190, 1
    %vm4254 = vcmp.eq.s32.totalorder %v4191, 1
    %vm4255 = vcmp.eq.s32.totalorder %v4192, 1
    %vm4256 = vcmp.eq.s32.totalorder %v4193, 1
    %vm4257 = vcmp.eq.s32.totalorder %v4194, 1
    %vm4258 = vcmp.eq.s32.totalorder %v4195, 1
    %vm4259 = vcmp.eq.s32.totalorder %v4196, 1
    %vm4260 = vcmp.eq.s32.totalorder %v4197, 1
    %vm4261 = vcmp.eq.s32.totalorder %v4198, 1
    %vm4262 = vcmp.eq.s32.totalorder %v4199, 1
    %vm4263 = vcmp.eq.s32.totalorder %v4200, 1
    %vm4264 = vcmp.eq.s32.totalorder %v4201, 1
    %vm4265 = vcmp.eq.s32.totalorder %v4202, 1
    %vm4266 = vcmp.eq.s32.totalorder %v4203, 1
    %vm4267 = vcmp.eq.s32.totalorder %v4204, 1
    %vm4268 = vcmp.eq.s32.totalorder %v4205, 1
    %vm4269 = vcmp.eq.s32.totalorder %v4206, 1
    %vm4270 = vcmp.eq.s32.totalorder %v4207, 1
    %v4271 = vsel %vm4208, %v1646, 0.0
    %v4272 = vsel %vm4209, %v1648, 0.0
    %v4273 = vsel %vm4210, %v1650, 0.0
    %v4274 = vsel %vm4211, %v1652, 0.0
    %v4275 = vsel %vm4212, %v1654, 0.0
    %v4276 = vsel %vm4213, %v1656, 0.0
    %v4277 = vsel %vm4214, %v1658, 0.0
    %v4278 = vsel %vm4215, %v1660, 0.0
    %v4279 = vsel %vm4216, %v1662, 0.0
    %v4280 = vsel %vm4217, %v1664, 0.0
    %v4281 = vsel %vm4218, %v1666, 0.0
    %v4282 = vsel %vm4219, %v1668, 0.0
    %v4283 = vsel %vm4220, %v1670, 0.0
    %v4284 = vsel %vm4221, %v1672, 0.0
    %v4285 = vsel %vm4222, %v1674, 0.0
    %v4286 = vsel %vm4223, %v1676, 0.0
    %v4287 = vsel %vm4224, %v1678, 0.0
    %v4288 = vsel %vm4225, %v1680, 0.0
    %v4289 = vsel %vm4226, %v1682, 0.0
    %v4290 = vsel %vm4227, %v1684, 0.0
    %v4291 = vsel %vm4228, %v1686, 0.0
    %v4292 = vsel %vm4229, %v1688, 0.0
    %v4293 = vsel %vm4230, %v1690, 0.0
    %v4294 = vsel %vm4231, %v1692, 0.0
    %v4295 = vsel %vm4232, %v1694, 0.0
    %v4296 = vsel %vm4233, %v1696, 0.0
    %v4297 = vsel %vm4234, %v1698, 0.0
    %v4298 = vsel %vm4235, %v1700, 0.0
    %v4299 = vsel %vm4236, %v1702, 0.0
    %v4300 = vsel %vm4237, %v1704, 0.0
    %v4301 = vsel %vm4238, %v1706, 0.0
    %v4302 = vsel %vm4239, %v1708, 0.0
    %v4303 = vsel %vm4240, %v1710, 0.0
    %v4304 = vsel %vm4241, %v1712, 0.0
    %v4305 = vsel %vm4242, %v1714, 0.0
    %v4306 = vsel %vm4243, %v1716, 0.0
    %v4307 = vsel %vm4244, %v1718, 0.0
    %v4308 = vsel %vm4245, %v1720, 0.0
    %v4309 = vsel %vm4246, %v1722, 0.0
    %v4310 = vsel %vm4247, %v1724, 0.0
    %v4311 = vsel %vm4248, %v1726, 0.0
    %v4312 = vsel %vm4249, %v1728, 0.0
    %v4313 = vsel %vm4250, %v1730, 0.0
    %v4314 = vsel %vm4251, %v1732, 0.0
    %v4315 = vsel %vm4252, %v1734, 0.0
    %v4316 = vsel %vm4253, %v1736, 0.0
    %v4317 = vsel %vm4254, %v1738, 0.0
    %v4318 = vsel %vm4255, %v1740, 0.0
    %v4319 = vsel %vm4256, %v1742, 0.0
    %v4320 = vsel %vm4257, %v1744, 0.0
    %v4321 = vsel %vm4258, %v1746, 0.0
    %v4322 = vsel %vm4259, %v1748, 0.0
    %v4323 = vsel %vm4260, %v1750, 0.0
    %v4324 = vsel %vm4261, %v1752, 0.0
    %v4325 = vsel %vm4262, %v1754, 0.0
    %v4326 = vsel %vm4263, %v1756, 0.0
    %v4327 = vsel %vm4264, %v1758, 0.0
    %v4328 = vsel %vm4265, %v1760, 0.0
    %v4329 = vsel %vm4266, %v1762, 0.0
    %v4330 = vsel %vm4267, %v1764, 0.0
    %v4331 = vsel %vm4268, %v3227, 0.0
    %v4332 = vsel %vm4269, %v3229, 0.0
    %v4333 = vsel %vm4270, %v4018, 0.0
    %v4334 = vlaneseq
    %v4335 = vshrl.u32 %v4334, 7
    %v4336 = vsub.s32 6, %v4335
    %v4337 = vrot.slane %v1577, %v4336
    %v4338 = vmul.f32 %v4271, %v4337
    %v4339 = vmul.f32 %v4272, %v4337
    %v4340 = vmul.f32 %v4273, %v4337
    %v4341 = vmul.f32 %v4274, %v4337
    %v4342 = vmul.f32 %v4275, %v4337
    %v4343 = vmul.f32 %v4276, %v4337
    %v4344 = vmul.f32 %v4277, %v4337
    %v4345 = vmul.f32 %v4278, %v4337
    %v4346 = vmul.f32 %v4279, %v4337
    %v4347 = vmul.f32 %v4280, %v4337
    %v4348 = vmul.f32 %v4281, %v4337
    %v4349 = vmul.f32 %v4282, %v4337
    %v4350 = vmul.f32 %v4283, %v4337
    %v4351 = vmul.f32 %v4284, %v4337
    %v4352 = vmul.f32 %v4285, %v4337
    %v4353 = vmul.f32 %v4286, %v4337
    %v4354 = vmul.f32 %v4287, %v4337
    %v4355 = vmul.f32 %v4288, %v4337
    %v4356 = vmul.f32 %v4289, %v4337
    %v4357 = vmul.f32 %v4290, %v4337
    %v4358 = vmul.f32 %v4291, %v4337
    %v4359 = vmul.f32 %v4292, %v4337
    %v4360 = vmul.f32 %v4293, %v4337
    %v4361 = vmul.f32 %v4294, %v4337
    %v4362 = vmul.f32 %v4295, %v4337
    %v4363 = vmul.f32 %v4296, %v4337
    %v4364 = vmul.f32 %v4297, %v4337
    %v4365 = vmul.f32 %v4298, %v4337
    %v4366 = vmul.f32 %v4299, %v4337
    %v4367 = vmul.f32 %v4300, %v4337
    %v4368 = vmul.f32 %v4301, %v4337
    %v4369 = vmul.f32 %v4302, %v4337
    %v4370 = vmul.f32 %v4303, %v4337
    %v4371 = vmul.f32 %v4304, %v4337
    %v4372 = vmul.f32 %v4305, %v4337
    %v4373 = vmul.f32 %v4306, %v4337
    %v4374 = vmul.f32 %v4307, %v4337
    %v4375 = vmul.f32 %v4308, %v4337
    %v4376 = vmul.f32 %v4309, %v4337
    %v4377 = vmul.f32 %v4310, %v4337
    %v4378 = vmul.f32 %v4311, %v4337
    %v4379 = vmul.f32 %v4312, %v4337
    %v4380 = vmul.f32 %v4313, %v4337
    %v4381 = vmul.f32 %v4314, %v4337
    %v4382 = vmul.f32 %v4315, %v4337
    %v4383 = vmul.f32 %v4316, %v4337
    %v4384 = vmul.f32 %v4317, %v4337
    %v4385 = vmul.f32 %v4318, %v4337
    %v4386 = vmul.f32 %v4319, %v4337
    %v4387 = vmul.f32 %v4320, %v4337
    %v4388 = vmul.f32 %v4321, %v4337
    %v4389 = vmul.f32 %v4322, %v4337
    %v4390 = vmul.f32 %v4323, %v4337
    %v4391 = vmul.f32 %v4324, %v4337
    %v4392 = vmul.f32 %v4325, %v4337
    %v4393 = vmul.f32 %v4326, %v4337
    %v4394 = vmul.f32 %v4327, %v4337
    %v4395 = vmul.f32 %v4328, %v4337
    %v4396 = vmul.f32 %v4329, %v4337
    %v4397 = vmul.f32 %v4330, %v4337
    %v4398 = vmul.f32 %v4331, %v4337
    %v4399 = vmul.f32 %v4332, %v4337
    %v4400 = vmul.f32 %v4333, %v4337
    %v4401 = vmul.f32 %v4337, 0.0
    %v4402 = vadd.f32 %v3953, %v4338
    %v4403 = vadd.f32 %v3954, %v4339
    %v4404 = vadd.f32 %v3955, %v4340
    %v4405 = vadd.f32 %v3956, %v4341
    %v4406 = vadd.f32 %v3957, %v4342
    %v4407 = vadd.f32 %v3958, %v4343
    %v4408 = vadd.f32 %v3959, %v4344
    %v4409 = vadd.f32 %v3960, %v4345
    %v4410 = vadd.f32 %v3961, %v4346
    %v4411 = vadd.f32 %v3962, %v4347
    %v4412 = vadd.f32 %v3963, %v4348
    %v4413 = vadd.f32 %v3964, %v4349
    %v4414 = vadd.f32 %v3965, %v4350
    %v4415 = vadd.f32 %v3966, %v4351
    %v4416 = vadd.f32 %v3967, %v4352
    %v4417 = vadd.f32 %v3968, %v4353
    %v4418 = vadd.f32 %v3969, %v4354
    %v4419 = vadd.f32 %v3970, %v4355
    %v4420 = vadd.f32 %v3971, %v4356
    %v4421 = vadd.f32 %v3972, %v4357
    %v4422 = vadd.f32 %v3973, %v4358
    %v4423 = vadd.f32 %v3974, %v4359
    %v4424 = vadd.f32 %v3975, %v4360
    %v4425 = vadd.f32 %v3976, %v4361
    %v4426 = vadd.f32 %v3977, %v4362
    %v4427 = vadd.f32 %v3978, %v4363
    %v4428 = vadd.f32 %v3979, %v4364
    %v4429 = vadd.f32 %v3980, %v4365
    %v4430 = vadd.f32 %v3981, %v4366
    %v4431 = vadd.f32 %v3982, %v4367
    %v4432 = vadd.f32 %v3983, %v4368
    %v4433 = vadd.f32 %v3984, %v4369
    %v4434 = vadd.f32 %v3985, %v4370
    %v4435 = vadd.f32 %v3986, %v4371
    %v4436 = vadd.f32 %v3987, %v4372
    %v4437 = vadd.f32 %v3988, %v4373
    %v4438 = vadd.f32 %v3989, %v4374
    %v4439 = vadd.f32 %v3990, %v4375
    %v4440 = vadd.f32 %v3991, %v4376
    %v4441 = vadd.f32 %v3992, %v4377
    %v4442 = vadd.f32 %v3993, %v4378
    %v4443 = vadd.f32 %v3994, %v4379
    %v4444 = vadd.f32 %v3995, %v4380
    %v4445 = vadd.f32 %v3996, %v4381
    %v4446 = vadd.f32 %v3997, %v4382
    %v4447 = vadd.f32 %v3998, %v4383
    %v4448 = vadd.f32 %v3999, %v4384
    %v4449 = vadd.f32 %v4000, %v4385
    %v4450 = vadd.f32 %v4001, %v4386
    %v4451 = vadd.f32 %v4002, %v4387
    %v4452 = vadd.f32 %v4003, %v4388
    %v4453 = vadd.f32 %v4004, %v4389
    %v4454 = vadd.f32 %v4005, %v4390
    %v4455 = vadd.f32 %v4006, %v4391
    %v4456 = vadd.f32 %v4007, %v4392
    %v4457 = vadd.f32 %v4008, %v4393
    %v4458 = vadd.f32 %v4009, %v4394
    %v4459 = vadd.f32 %v4010, %v4395
    %v4460 = vadd.f32 %v4011, %v4396
    %v4461 = vadd.f32 %v4012, %v4397
    %v4462 = vadd.f32 %v4013, %v4398
    %v4463 = vadd.f32 %v4014, %v4399
    %v4464 = vadd.f32 %v4015, %v4400
    %v4465 = vadd.f32 %v4016, %v4401
    %v4466 = vsel %vm4019, 1, 0
    %v4467 = vsel %vm4020, 1, 0
    %v4468 = vsel %vm4021, 1, 0
    %v4469 = vsel %vm4022, 1, 0
    %v4470 = vsel %vm4023, 1, 0
    %v4471 = vsel %vm4024, 1, 0
    %v4472 = vsel %vm4025, 1, 0
    %v4473 = vsel %vm4026, 1, 0
    %v4474 = vsel %vm4027, 1, 0
    %v4475 = vsel %vm4028, 1, 0
    %v4476 = vsel %vm4029, 1, 0
    %v4477 = vsel %vm4030, 1, 0
    %v4478 = vsel %vm4031, 1, 0
    %v4479 = vsel %vm4032, 1, 0
    %v4480 = vsel %vm4033, 1, 0
    %v4481 = vsel %vm4034, 1, 0
    %v4482 = vsel %vm4035, 1, 0
    %v4483 = vsel %vm4036, 1, 0
    %v4484 = vsel %vm4037, 1, 0
    %v4485 = vsel %vm4038, 1, 0
    %v4486 = vsel %vm4039, 1, 0
    %v4487 = vsel %vm4040, 1, 0
    %v4488 = vsel %vm4041, 1, 0
    %v4489 = vsel %vm4042, 1, 0
    %v4490 = vsel %vm4043, 1, 0
    %v4491 = vsel %vm4044, 1, 0
    %v4492 = vsel %vm4045, 1, 0
    %v4493 = vsel %vm4046, 1, 0
    %v4494 = vsel %vm4047, 1, 0
    %v4495 = vsel %vm4048, 1, 0
    %v4496 = vsel %vm4049, 1, 0
    %v4497 = vsel %vm4050, 1, 0
    %v4498 = vsel %vm4051, 1, 0
    %v4499 = vsel %vm4052, 1, 0
    %v4500 = vsel %vm4053, 1, 0
    %v4501 = vsel %vm4054, 1, 0
    %v4502 = vsel %vm4055, 1, 0
    %v4503 = vsel %vm4056, 1, 0
    %v4504 = vsel %vm4057, 1, 0
    %v4505 = vsel %vm4058, 1, 0
    %v4506 = vsel %vm4059, 1, 0
    %v4507 = vsel %vm4060, 1, 0
    %v4508 = vsel %vm4061, 1, 0
    %v4509 = vsel %vm4062, 1, 0
    %v4510 = vsel %vm4063, 1, 0
    %v4511 = vsel %vm4064, 1, 0
    %v4512 = vsel %vm4065, 1, 0
    %v4513 = vsel %vm4066, 1, 0
    %v4514 = vsel %vm4067, 1, 0
    %v4515 = vsel %vm4068, 1, 0
    %v4516 = vsel %vm4069, 1, 0
    %v4517 = vsel %vm4070, 1, 0
    %v4518 = vsel %vm4071, 1, 0
    %v4519 = vsel %vm4072, 1, 0
    %v4520 = vsel %vm4073, 1, 0
    %v4521 = vsel %vm4074, 1, 0
    %v4522 = vsel %vm4075, 1, 0
    %v4523 = vsel %vm4076, 1, 0
    %v4524 = vsel %vm4077, 1, 0
    %v4525 = vsel %vm4078, 1, 0
    %v4526 = vsel %vm4079, 1, 0
    %v4527 = vsel %vm4080, 1, 0
    %vm4528 = vcmp.eq.s32.totalorder %v4466, 1
    %vm4529 = vcmp.eq.s32.totalorder %v4467, 1
    %vm4530 = vcmp.eq.s32.totalorder %v4468, 1
    %vm4531 = vcmp.eq.s32.totalorder %v4469, 1
    %vm4532 = vcmp.eq.s32.totalorder %v4470, 1
    %vm4533 = vcmp.eq.s32.totalorder %v4471, 1
    %vm4534 = vcmp.eq.s32.totalorder %v4472, 1
    %vm4535 = vcmp.eq.s32.totalorder %v4473, 1
    %vm4536 = vcmp.eq.s32.totalorder %v4474, 1
    %vm4537 = vcmp.eq.s32.totalorder %v4475, 1
    %vm4538 = vcmp.eq.s32.totalorder %v4476, 1
    %vm4539 = vcmp.eq.s32.totalorder %v4477, 1
    %vm4540 = vcmp.eq.s32.totalorder %v4478, 1
    %vm4541 = vcmp.eq.s32.totalorder %v4479, 1
    %vm4542 = vcmp.eq.s32.totalorder %v4480, 1
    %vm4543 = vcmp.eq.s32.totalorder %v4481, 1
    %vm4544 = vcmp.eq.s32.totalorder %v4482, 1
    %vm4545 = vcmp.eq.s32.totalorder %v4483, 1
    %vm4546 = vcmp.eq.s32.totalorder %v4484, 1
    %vm4547 = vcmp.eq.s32.totalorder %v4485, 1
    %vm4548 = vcmp.eq.s32.totalorder %v4486, 1
    %vm4549 = vcmp.eq.s32.totalorder %v4487, 1
    %vm4550 = vcmp.eq.s32.totalorder %v4488, 1
    %vm4551 = vcmp.eq.s32.totalorder %v4489, 1
    %vm4552 = vcmp.eq.s32.totalorder %v4490, 1
    %vm4553 = vcmp.eq.s32.totalorder %v4491, 1
    %vm4554 = vcmp.eq.s32.totalorder %v4492, 1
    %vm4555 = vcmp.eq.s32.totalorder %v4493, 1
    %vm4556 = vcmp.eq.s32.totalorder %v4494, 1
    %vm4557 = vcmp.eq.s32.totalorder %v4495, 1
    %vm4558 = vcmp.eq.s32.totalorder %v4496, 1
    %vm4559 = vcmp.eq.s32.totalorder %v4497, 1
    %vm4560 = vcmp.eq.s32.totalorder %v4498, 1
    %vm4561 = vcmp.eq.s32.totalorder %v4499, 1
    %vm4562 = vcmp.eq.s32.totalorder %v4500, 1
    %vm4563 = vcmp.eq.s32.totalorder %v4501, 1
    %vm4564 = vcmp.eq.s32.totalorder %v4502, 1
    %vm4565 = vcmp.eq.s32.totalorder %v4503, 1
    %vm4566 = vcmp.eq.s32.totalorder %v4504, 1
    %vm4567 = vcmp.eq.s32.totalorder %v4505, 1
    %vm4568 = vcmp.eq.s32.totalorder %v4506, 1
    %vm4569 = vcmp.eq.s32.totalorder %v4507, 1
    %vm4570 = vcmp.eq.s32.totalorder %v4508, 1
    %vm4571 = vcmp.eq.s32.totalorder %v4509, 1
    %vm4572 = vcmp.eq.s32.totalorder %v4510, 1
    %vm4573 = vcmp.eq.s32.totalorder %v4511, 1
    %vm4574 = vcmp.eq.s32.totalorder %v4512, 1
    %vm4575 = vcmp.eq.s32.totalorder %v4513, 1
    %vm4576 = vcmp.eq.s32.totalorder %v4514, 1
    %vm4577 = vcmp.eq.s32.totalorder %v4515, 1
    %vm4578 = vcmp.eq.s32.totalorder %v4516, 1
    %vm4579 = vcmp.eq.s32.totalorder %v4517, 1
    %vm4580 = vcmp.eq.s32.totalorder %v4518, 1
    %vm4581 = vcmp.eq.s32.totalorder %v4519, 1
    %vm4582 = vcmp.eq.s32.totalorder %v4520, 1
    %vm4583 = vcmp.eq.s32.totalorder %v4521, 1
    %vm4584 = vcmp.eq.s32.totalorder %v4522, 1
    %vm4585 = vcmp.eq.s32.totalorder %v4523, 1
    %vm4586 = vcmp.eq.s32.totalorder %v4524, 1
    %vm4587 = vcmp.eq.s32.totalorder %v4525, 1
    %vm4588 = vcmp.eq.s32.totalorder %v4526, 1
    %vm4589 = vcmp.eq.s32.totalorder %v4527, 1
    %v4590 = vsel %vm4528, %v1258, 0.0
    %v4591 = vsel %vm4529, %v1259, 0.0
    %v4592 = vsel %vm4530, %v1260, 0.0
    %v4593 = vsel %vm4531, %v1261, 0.0
    %v4594 = vsel %vm4532, %v1262, 0.0
    %v4595 = vsel %vm4533, %v1263, 0.0
    %v4596 = vsel %vm4534, %v1264, 0.0
    %v4597 = vsel %vm4535, %v1265, 0.0
    %v4598 = vsel %vm4536, %v1266, 0.0
    %v4599 = vsel %vm4537, %v1267, 0.0
    %v4600 = vsel %vm4538, %v1268, 0.0
    %v4601 = vsel %vm4539, %v1269, 0.0
    %v4602 = vsel %vm4540, %v1270, 0.0
    %v4603 = vsel %vm4541, %v1271, 0.0
    %v4604 = vsel %vm4542, %v1272, 0.0
    %v4605 = vsel %vm4543, %v1273, 0.0
    %v4606 = vsel %vm4544, %v1274, 0.0
    %v4607 = vsel %vm4545, %v1275, 0.0
    %v4608 = vsel %vm4546, %v1276, 0.0
    %v4609 = vsel %vm4547, %v1277, 0.0
    %v4610 = vsel %vm4548, %v1278, 0.0
    %v4611 = vsel %vm4549, %v1279, 0.0
    %v4612 = vsel %vm4550, %v1280, 0.0
    %v4613 = vsel %vm4551, %v1281, 0.0
    %v4614 = vsel %vm4552, %v1282, 0.0
    %v4615 = vsel %vm4553, %v1283, 0.0
    %v4616 = vsel %vm4554, %v1284, 0.0
    %v4617 = vsel %vm4555, %v1285, 0.0
    %v4618 = vsel %vm4556, %v1286, 0.0
    %v4619 = vsel %vm4557, %v1287, 0.0
    %v4620 = vsel %vm4558, %v1288, 0.0
    %v4621 = vsel %vm4559, %v1289, 0.0
    %v4622 = vsel %vm4560, %v1290, 0.0
    %v4623 = vsel %vm4561, %v1291, 0.0
    %v4624 = vsel %vm4562, %v1292, 0.0
    %v4625 = vsel %vm4563, %v1293, 0.0
    %v4626 = vsel %vm4564, %v1294, 0.0
    %v4627 = vsel %vm4565, %v1295, 0.0
    %v4628 = vsel %vm4566, %v1296, 0.0
    %v4629 = vsel %vm4567, %v1297, 0.0
    %v4630 = vsel %vm4568, %v1298, 0.0
    %v4631 = vsel %vm4569, %v1299, 0.0
    %v4632 = vsel %vm4570, %v1300, 0.0
    %v4633 = vsel %vm4571, %v1301, 0.0
    %v4634 = vsel %vm4572, %v1302, 0.0
    %v4635 = vsel %vm4573, %v1303, 0.0
    %v4636 = vsel %vm4574, %v1304, 0.0
    %v4637 = vsel %vm4575, %v1305, 0.0
    %v4638 = vsel %vm4576, %v1306, 0.0
    %v4639 = vsel %vm4577, %v1307, 0.0
    %v4640 = vsel %vm4578, %v1308, 0.0
    %v4641 = vsel %vm4579, %v1309, 0.0
    %v4642 = vsel %vm4580, %v1310, 0.0
    %v4643 = vsel %vm4581, %v1311, 0.0
    %v4644 = vsel %vm4582, %v1312, 0.0
    %v4645 = vsel %vm4583, %v1313, 0.0
    %v4646 = vsel %vm4584, %v1314, 0.0
    %v4647 = vsel %vm4585, %v1315, 0.0
    %v4648 = vsel %vm4586, %v1316, 0.0
    %v4649 = vsel %vm4587, %v1317, 0.0
    %v4650 = vsel %vm4588, %v1318, 0.0
    %v4651 = vsel %vm4589, %v1319, 0.0
    %v4652 = vlaneseq
    %v4653 = vshrl.u32 %v4652, 7
    %v4654 = vsub.s32 7, %v4653
    %v4655 = vrot.slane %v1577, %v4654
    %v4656 = vmul.f32 %v4590, %v4655
    %v4657 = vmul.f32 %v4591, %v4655
    %v4658 = vmul.f32 %v4592, %v4655
    %v4659 = vmul.f32 %v4593, %v4655
    %v4660 = vmul.f32 %v4594, %v4655
    %v4661 = vmul.f32 %v4595, %v4655
    %v4662 = vmul.f32 %v4596, %v4655
    %v4663 = vmul.f32 %v4597, %v4655
    %v4664 = vmul.f32 %v4598, %v4655
    %v4665 = vmul.f32 %v4599, %v4655
    %v4666 = vmul.f32 %v4600, %v4655
    %v4667 = vmul.f32 %v4601, %v4655
    %v4668 = vmul.f32 %v4602, %v4655
    %v4669 = vmul.f32 %v4603, %v4655
    %v4670 = vmul.f32 %v4604, %v4655
    %v4671 = vmul.f32 %v4605, %v4655
    %v4672 = vmul.f32 %v4606, %v4655
    %v4673 = vmul.f32 %v4607, %v4655
    %v4674 = vmul.f32 %v4608, %v4655
    %v4675 = vmul.f32 %v4609, %v4655
    %v4676 = vmul.f32 %v4610, %v4655
    %v4677 = vmul.f32 %v4611, %v4655
    %v4678 = vmul.f32 %v4612, %v4655
    %v4679 = vmul.f32 %v4613, %v4655
    %v4680 = vmul.f32 %v4614, %v4655
    %v4681 = vmul.f32 %v4615, %v4655
    %v4682 = vmul.f32 %v4616, %v4655
    %v4683 = vmul.f32 %v4617, %v4655
    %v4684 = vmul.f32 %v4618, %v4655
    %v4685 = vmul.f32 %v4619, %v4655
    %v4686 = vmul.f32 %v4620, %v4655
    %v4687 = vmul.f32 %v4621, %v4655
    %v4688 = vmul.f32 %v4622, %v4655
    %v4689 = vmul.f32 %v4623, %v4655
    %v4690 = vmul.f32 %v4624, %v4655
    %v4691 = vmul.f32 %v4625, %v4655
    %v4692 = vmul.f32 %v4626, %v4655
    %v4693 = vmul.f32 %v4627, %v4655
    %v4694 = vmul.f32 %v4628, %v4655
    %v4695 = vmul.f32 %v4629, %v4655
    %v4696 = vmul.f32 %v4630, %v4655
    %v4697 = vmul.f32 %v4631, %v4655
    %v4698 = vmul.f32 %v4632, %v4655
    %v4699 = vmul.f32 %v4633, %v4655
    %v4700 = vmul.f32 %v4634, %v4655
    %v4701 = vmul.f32 %v4635, %v4655
    %v4702 = vmul.f32 %v4636, %v4655
    %v4703 = vmul.f32 %v4637, %v4655
    %v4704 = vmul.f32 %v4638, %v4655
    %v4705 = vmul.f32 %v4639, %v4655
    %v4706 = vmul.f32 %v4640, %v4655
    %v4707 = vmul.f32 %v4641, %v4655
    %v4708 = vmul.f32 %v4642, %v4655
    %v4709 = vmul.f32 %v4643, %v4655
    %v4710 = vmul.f32 %v4644, %v4655
    %v4711 = vmul.f32 %v4645, %v4655
    %v4712 = vmul.f32 %v4646, %v4655
    %v4713 = vmul.f32 %v4647, %v4655
    %v4714 = vmul.f32 %v4648, %v4655
    %v4715 = vmul.f32 %v4649, %v4655
    %v4716 = vmul.f32 %v4650, %v4655
    %v4717 = vmul.f32 %v4651, %v4655
    %v4718 = vmul.f32 %v4655, 0.0
    %v4719 = vadd.f32 %v4402, %v4656
    %v4720 = vadd.f32 %v4403, %v4657
    %v4721 = vadd.f32 %v4404, %v4658
    %v4722 = vadd.f32 %v4405, %v4659
    %v4723 = vadd.f32 %v4406, %v4660
    %v4724 = vadd.f32 %v4407, %v4661
    %v4725 = vadd.f32 %v4408, %v4662
    %v4726 = vadd.f32 %v4409, %v4663
    %v4727 = vadd.f32 %v4410, %v4664
    %v4728 = vadd.f32 %v4411, %v4665
    %v4729 = vadd.f32 %v4412, %v4666
    %v4730 = vadd.f32 %v4413, %v4667
    %v4731 = vadd.f32 %v4414, %v4668
    %v4732 = vadd.f32 %v4415, %v4669
    %v4733 = vadd.f32 %v4416, %v4670
    %v4734 = vadd.f32 %v4417, %v4671
    %v4735 = vadd.f32 %v4418, %v4672
    %v4736 = vadd.f32 %v4419, %v4673
    %v4737 = vadd.f32 %v4420, %v4674
    %v4738 = vadd.f32 %v4421, %v4675
    %v4739 = vadd.f32 %v4422, %v4676
    %v4740 = vadd.f32 %v4423, %v4677
    %v4741 = vadd.f32 %v4424, %v4678
    %v4742 = vadd.f32 %v4425, %v4679
    %v4743 = vadd.f32 %v4426, %v4680
    %v4744 = vadd.f32 %v4427, %v4681
    %v4745 = vadd.f32 %v4428, %v4682
    %v4746 = vadd.f32 %v4429, %v4683
    %v4747 = vadd.f32 %v4430, %v4684
    %v4748 = vadd.f32 %v4431, %v4685
    %v4749 = vadd.f32 %v4432, %v4686
    %v4750 = vadd.f32 %v4433, %v4687
    %v4751 = vadd.f32 %v4434, %v4688
    %v4752 = vadd.f32 %v4435, %v4689
    %v4753 = vadd.f32 %v4436, %v4690
    %v4754 = vadd.f32 %v4437, %v4691
    %v4755 = vadd.f32 %v4438, %v4692
    %v4756 = vadd.f32 %v4439, %v4693
    %v4757 = vadd.f32 %v4440, %v4694
    %v4758 = vadd.f32 %v4441, %v4695
    %v4759 = vadd.f32 %v4442, %v4696
    %v4760 = vadd.f32 %v4443, %v4697
    %v4761 = vadd.f32 %v4444, %v4698
    %v4762 = vadd.f32 %v4445, %v4699
    %v4763 = vadd.f32 %v4446, %v4700
    %v4764 = vadd.f32 %v4447, %v4701
    %v4765 = vadd.f32 %v4448, %v4702
    %v4766 = vadd.f32 %v4449, %v4703
    %v4767 = vadd.f32 %v4450, %v4704
    %v4768 = vadd.f32 %v4451, %v4705
    %v4769 = vadd.f32 %v4452, %v4706
    %v4770 = vadd.f32 %v4453, %v4707
    %v4771 = vadd.f32 %v4454, %v4708
    %v4772 = vadd.f32 %v4455, %v4709
    %v4773 = vadd.f32 %v4456, %v4710
    %v4774 = vadd.f32 %v4457, %v4711
    %v4775 = vadd.f32 %v4458, %v4712
    %v4776 = vadd.f32 %v4459, %v4713
    %v4777 = vadd.f32 %v4460, %v4714
    %v4778 = vadd.f32 %v4461, %v4715
    %v4779 = vadd.f32 %v4462, %v4716
    %v4780 = vadd.f32 %v4463, %v4717
    %v4781 = vadd.f32 %v4464, %v4718
    %v4782 = vadd.f32 %v4465, %v4718
    %vm4783 = vmand %vm4019, %vm2777
    %vm4784 = vmand %vm4020, %vm2778
    %vm4785 = vmand %vm4021, %vm2779
    %vm4786 = vmand %vm4022, %vm2780
    %vm4787 = vmand %vm4023, %vm2781
    %vm4788 = vmand %vm4024, %vm2782
    %vm4789 = vmand %vm4025, %vm2783
    %vm4790 = vmand %vm4026, %vm2784
    %vm4791 = vmand %vm4027, %vm2785
    %vm4792 = vmand %vm4028, %vm2786
    %vm4793 = vmand %vm4029, %vm2787
    %vm4794 = vmand %vm4030, %vm2788
    %vm4795 = vmand %vm4031, %vm2789
    %vm4796 = vmand %vm4032, %vm2790
    %vm4797 = vmand %vm4033, %vm2791
    %vm4798 = vmand %vm4034, %vm2792
    %vm4799 = vmand %vm4035, %vm2793
    %vm4800 = vmand %vm4036, %vm2794
    %vm4801 = vmand %vm4037, %vm2795
    %vm4802 = vmand %vm4038, %vm2796
    %vm4803 = vmand %vm4039, %vm2797
    %vm4804 = vmand %vm4040, %vm2798
    %vm4805 = vmand %vm4041, %vm2799
    %vm4806 = vmand %vm4042, %vm2800
    %vm4807 = vmand %vm4043, %vm2801
    %vm4808 = vmand %vm4044, %vm2802
    %vm4809 = vmand %vm4045, %vm2803
    %vm4810 = vmand %vm4046, %vm2804
    %vm4811 = vmand %vm4047, %vm2805
    %vm4812 = vmand %vm4048, %vm2806
    %vm4813 = vmand %vm4049, %vm2807
    %vm4814 = vmand %vm4050, %vm2808
    %vm4815 = vmand %vm4051, %vm2809
    %vm4816 = vmand %vm4052, %vm2810
    %vm4817 = vmand %vm4053, %vm2811
    %vm4818 = vmand %vm4054, %vm2812
    %vm4819 = vmand %vm4055, %vm2813
    %vm4820 = vmand %vm4056, %vm2814
    %vm4821 = vmand %vm4057, %vm2815
    %vm4822 = vmand %vm4058, %vm2816
    %vm4823 = vmand %vm4059, %vm2817
    %vm4824 = vmand %vm4060, %vm2818
    %vm4825 = vmand %vm4061, %vm2819
    %vm4826 = vmand %vm4062, %vm2820
    %vm4827 = vmand %vm4063, %vm2821
    %vm4828 = vmand %vm4064, %vm2822
    %vm4829 = vmand %vm4065, %vm2823
    %vm4830 = vmand %vm4066, %vm2824
    %vm4831 = vmand %vm4067, %vm2825
    %vm4832 = vmand %vm4068, %vm2826
    %vm4833 = vmand %vm4069, %vm2827
    %vm4834 = vmand %vm4070, %vm2828
    %vm4835 = vmand %vm4071, %vm2829
    %vm4836 = vmand %vm4072, %vm2830
    %vm4837 = vmand %vm4073, %vm2831
    %vm4838 = vmand %vm4074, %vm2832
    %vm4839 = vmand %vm4075, %vm2833
    %vm4840 = vmand %vm4076, %vm2834
    %vm4841 = vmand %vm4077, %vm2835
    %vm4842 = vmand %vm4078, %vm2836
    %vm4843 = vmand %vm4079, %vm2837
    %vm4844 = vmand %vm4080, %vm2838
    %v4845 = vsel %vm4783, 1, 0
    %v4846 = vsel %vm4784, 1, 0
    %v4847 = vsel %vm4785, 1, 0
    %v4848 = vsel %vm4786, 1, 0
    %v4849 = vsel %vm4787, 1, 0
    %v4850 = vsel %vm4788, 1, 0
    %v4851 = vsel %vm4789, 1, 0
    %v4852 = vsel %vm4790, 1, 0
    %v4853 = vsel %vm4791, 1, 0
    %v4854 = vsel %vm4792, 1, 0
    %v4855 = vsel %vm4793, 1, 0
    %v4856 = vsel %vm4794, 1, 0
    %v4857 = vsel %vm4795, 1, 0
    %v4858 = vsel %vm4796, 1, 0
    %v4859 = vsel %vm4797, 1, 0
    %v4860 = vsel %vm4798, 1, 0
    %v4861 = vsel %vm4799, 1, 0
    %v4862 = vsel %vm4800, 1, 0
    %v4863 = vsel %vm4801, 1, 0
    %v4864 = vsel %vm4802, 1, 0
    %v4865 = vsel %vm4803, 1, 0
    %v4866 = vsel %vm4804, 1, 0
    %v4867 = vsel %vm4805, 1, 0
    %v4868 = vsel %vm4806, 1, 0
    %v4869 = vsel %vm4807, 1, 0
    %v4870 = vsel %vm4808, 1, 0
    %v4871 = vsel %vm4809, 1, 0
    %v4872 = vsel %vm4810, 1, 0
    %v4873 = vsel %vm4811, 1, 0
    %v4874 = vsel %vm4812, 1, 0
    %v4875 = vsel %vm4813, 1, 0
    %v4876 = vsel %vm4814, 1, 0
    %v4877 = vsel %vm4815, 1, 0
    %v4878 = vsel %vm4816, 1, 0
    %v4879 = vsel %vm4817, 1, 0
    %v4880 = vsel %vm4818, 1, 0
    %v4881 = vsel %vm4819, 1, 0
    %v4882 = vsel %vm4820, 1, 0
    %v4883 = vsel %vm4821, 1, 0
    %v4884 = vsel %vm4822, 1, 0
    %v4885 = vsel %vm4823, 1, 0
    %v4886 = vsel %vm4824, 1, 0
    %v4887 = vsel %vm4825, 1, 0
    %v4888 = vsel %vm4826, 1, 0
    %v4889 = vsel %vm4827, 1, 0
    %v4890 = vsel %vm4828, 1, 0
    %v4891 = vsel %vm4829, 1, 0
    %v4892 = vsel %vm4830, 1, 0
    %v4893 = vsel %vm4831, 1, 0
    %v4894 = vsel %vm4832, 1, 0
    %v4895 = vsel %vm4833, 1, 0
    %v4896 = vsel %vm4834, 1, 0
    %v4897 = vsel %vm4835, 1, 0
    %v4898 = vsel %vm4836, 1, 0
    %v4899 = vsel %vm4837, 1, 0
    %v4900 = vsel %vm4838, 1, 0
    %v4901 = vsel %vm4839, 1, 0
    %v4902 = vsel %vm4840, 1, 0
    %v4903 = vsel %vm4841, 1, 0
    %v4904 = vsel %vm4842, 1, 0
    %v4905 = vsel %vm4843, 1, 0
    %v4906 = vsel %vm4844, 1, 0
    %vm4907 = vcmp.eq.s32.totalorder %v4845, 1
    %vm4908 = vcmp.eq.s32.totalorder %v4846, 1
    %vm4909 = vcmp.eq.s32.totalorder %v4847, 1
    %vm4910 = vcmp.eq.s32.totalorder %v4848, 1
    %vm4911 = vcmp.eq.s32.totalorder %v4849, 1
    %vm4912 = vcmp.eq.s32.totalorder %v4850, 1
    %vm4913 = vcmp.eq.s32.totalorder %v4851, 1
    %vm4914 = vcmp.eq.s32.totalorder %v4852, 1
    %vm4915 = vcmp.eq.s32.totalorder %v4853, 1
    %vm4916 = vcmp.eq.s32.totalorder %v4854, 1
    %vm4917 = vcmp.eq.s32.totalorder %v4855, 1
    %vm4918 = vcmp.eq.s32.totalorder %v4856, 1
    %vm4919 = vcmp.eq.s32.totalorder %v4857, 1
    %vm4920 = vcmp.eq.s32.totalorder %v4858, 1
    %vm4921 = vcmp.eq.s32.totalorder %v4859, 1
    %vm4922 = vcmp.eq.s32.totalorder %v4860, 1
    %vm4923 = vcmp.eq.s32.totalorder %v4861, 1
    %vm4924 = vcmp.eq.s32.totalorder %v4862, 1
    %vm4925 = vcmp.eq.s32.totalorder %v4863, 1
    %vm4926 = vcmp.eq.s32.totalorder %v4864, 1
    %vm4927 = vcmp.eq.s32.totalorder %v4865, 1
    %vm4928 = vcmp.eq.s32.totalorder %v4866, 1
    %vm4929 = vcmp.eq.s32.totalorder %v4867, 1
    %vm4930 = vcmp.eq.s32.totalorder %v4868, 1
    %vm4931 = vcmp.eq.s32.totalorder %v4869, 1
    %vm4932 = vcmp.eq.s32.totalorder %v4870, 1
    %vm4933 = vcmp.eq.s32.totalorder %v4871, 1
    %vm4934 = vcmp.eq.s32.totalorder %v4872, 1
    %vm4935 = vcmp.eq.s32.totalorder %v4873, 1
    %vm4936 = vcmp.eq.s32.totalorder %v4874, 1
    %vm4937 = vcmp.eq.s32.totalorder %v4875, 1
    %vm4938 = vcmp.eq.s32.totalorder %v4876, 1
    %vm4939 = vcmp.eq.s32.totalorder %v4877, 1
    %vm4940 = vcmp.eq.s32.totalorder %v4878, 1
    %vm4941 = vcmp.eq.s32.totalorder %v4879, 1
    %vm4942 = vcmp.eq.s32.totalorder %v4880, 1
    %vm4943 = vcmp.eq.s32.totalorder %v4881, 1
    %vm4944 = vcmp.eq.s32.totalorder %v4882, 1
    %vm4945 = vcmp.eq.s32.totalorder %v4883, 1
    %vm4946 = vcmp.eq.s32.totalorder %v4884, 1
    %vm4947 = vcmp.eq.s32.totalorder %v4885, 1
    %vm4948 = vcmp.eq.s32.totalorder %v4886, 1
    %vm4949 = vcmp.eq.s32.totalorder %v4887, 1
    %vm4950 = vcmp.eq.s32.totalorder %v4888, 1
    %vm4951 = vcmp.eq.s32.totalorder %v4889, 1
    %vm4952 = vcmp.eq.s32.totalorder %v4890, 1
    %vm4953 = vcmp.eq.s32.totalorder %v4891, 1
    %vm4954 = vcmp.eq.s32.totalorder %v4892, 1
    %vm4955 = vcmp.eq.s32.totalorder %v4893, 1
    %vm4956 = vcmp.eq.s32.totalorder %v4894, 1
    %vm4957 = vcmp.eq.s32.totalorder %v4895, 1
    %vm4958 = vcmp.eq.s32.totalorder %v4896, 1
    %vm4959 = vcmp.eq.s32.totalorder %v4897, 1
    %vm4960 = vcmp.eq.s32.totalorder %v4898, 1
    %vm4961 = vcmp.eq.s32.totalorder %v4899, 1
    %vm4962 = vcmp.eq.s32.totalorder %v4900, 1
    %vm4963 = vcmp.eq.s32.totalorder %v4901, 1
    %vm4964 = vcmp.eq.s32.totalorder %v4902, 1
    %vm4965 = vcmp.eq.s32.totalorder %v4903, 1
    %vm4966 = vcmp.eq.s32.totalorder %v4904, 1
    %vm4967 = vcmp.eq.s32.totalorder %v4905, 1
    %vm4968 = vcmp.eq.s32.totalorder %v4906, 1
    %v4969 = vsel %vm4907, %v2594, 0.0
    %v4970 = vsel %vm4908, %v2596, 0.0
    %v4971 = vsel %vm4909, %v2598, 0.0
    %v4972 = vsel %vm4910, %v2600, 0.0
    %v4973 = vsel %vm4911, %v2602, 0.0
    %v4974 = vsel %vm4912, %v2604, 0.0
    %v4975 = vsel %vm4913, %v2606, 0.0
    %v4976 = vsel %vm4914, %v2608, 0.0
    %v4977 = vsel %vm4915, %v2610, 0.0
    %v4978 = vsel %vm4916, %v2612, 0.0
    %v4979 = vsel %vm4917, %v2614, 0.0
    %v4980 = vsel %vm4918, %v2616, 0.0
    %v4981 = vsel %vm4919, %v2618, 0.0
    %v4982 = vsel %vm4920, %v2620, 0.0
    %v4983 = vsel %vm4921, %v2622, 0.0
    %v4984 = vsel %vm4922, %v2624, 0.0
    %v4985 = vsel %vm4923, %v2626, 0.0
    %v4986 = vsel %vm4924, %v2628, 0.0
    %v4987 = vsel %vm4925, %v2630, 0.0
    %v4988 = vsel %vm4926, %v2632, 0.0
    %v4989 = vsel %vm4927, %v2634, 0.0
    %v4990 = vsel %vm4928, %v2636, 0.0
    %v4991 = vsel %vm4929, %v2638, 0.0
    %v4992 = vsel %vm4930, %v2640, 0.0
    %v4993 = vsel %vm4931, %v2642, 0.0
    %v4994 = vsel %vm4932, %v2644, 0.0
    %v4995 = vsel %vm4933, %v2646, 0.0
    %v4996 = vsel %vm4934, %v2648, 0.0
    %v4997 = vsel %vm4935, %v2650, 0.0
    %v4998 = vsel %vm4936, %v2652, 0.0
    %v4999 = vsel %vm4937, %v2654, 0.0
    %v5000 = vsel %vm4938, %v2656, 0.0
    %v5001 = vsel %vm4939, %v2658, 0.0
    %v5002 = vsel %vm4940, %v2660, 0.0
    %v5003 = vsel %vm4941, %v2662, 0.0
    %v5004 = vsel %vm4942, %v2664, 0.0
    %v5005 = vsel %vm4943, %v2666, 0.0
    %v5006 = vsel %vm4944, %v2668, 0.0
    %v5007 = vsel %vm4945, %v2670, 0.0
    %v5008 = vsel %vm4946, %v2672, 0.0
    %v5009 = vsel %vm4947, %v2674, 0.0
    %v5010 = vsel %vm4948, %v2676, 0.0
    %v5011 = vsel %vm4949, %v2678, 0.0
    %v5012 = vsel %vm4950, %v2680, 0.0
    %v5013 = vsel %vm4951, %v2682, 0.0
    %v5014 = vsel %vm4952, %v2684, 0.0
    %v5015 = vsel %vm4953, %v2686, 0.0
    %v5016 = vsel %vm4954, %v2688, 0.0
    %v5017 = vsel %vm4955, %v2690, 0.0
    %v5018 = vsel %vm4956, %v2692, 0.0
    %v5019 = vsel %vm4957, %v2694, 0.0
    %v5020 = vsel %vm4958, %v2696, 0.0
    %v5021 = vsel %vm4959, %v2698, 0.0
    %v5022 = vsel %vm4960, %v2700, 0.0
    %v5023 = vsel %vm4961, %v2702, 0.0
    %v5024 = vsel %vm4962, %v2704, 0.0
    %v5025 = vsel %vm4963, %v2706, 0.0
    %v5026 = vsel %vm4964, %v2708, 0.0
    %v5027 = vsel %vm4965, %v2710, 0.0
    %v5028 = vsel %vm4966, %v2712, 0.0
    %v5029 = vsel %vm4967, %v3689, 0.0
    %v5030 = vsel %vm4968, %v3692, 0.0
    %v5031 = vlaneseq
    %v5032 = vshrl.u32 %v5031, 7
    %v5033 = vsub.s32 0, %v5032
    %v5034 = vrot.slane %v1578, %v5033
    %v5035 = vmul.f32 %v4969, %v5034
    %v5036 = vmul.f32 %v4970, %v5034
    %v5037 = vmul.f32 %v4971, %v5034
    %v5038 = vmul.f32 %v4972, %v5034
    %v5039 = vmul.f32 %v4973, %v5034
    %v5040 = vmul.f32 %v4974, %v5034
    %v5041 = vmul.f32 %v4975, %v5034
    %v5042 = vmul.f32 %v4976, %v5034
    %v5043 = vmul.f32 %v4977, %v5034
    %v5044 = vmul.f32 %v4978, %v5034
    %v5045 = vmul.f32 %v4979, %v5034
    %v5046 = vmul.f32 %v4980, %v5034
    %v5047 = vmul.f32 %v4981, %v5034
    %v5048 = vmul.f32 %v4982, %v5034
    %v5049 = vmul.f32 %v4983, %v5034
    %v5050 = vmul.f32 %v4984, %v5034
    %v5051 = vmul.f32 %v4985, %v5034
    %v5052 = vmul.f32 %v4986, %v5034
    %v5053 = vmul.f32 %v4987, %v5034
    %v5054 = vmul.f32 %v4988, %v5034
    %v5055 = vmul.f32 %v4989, %v5034
    %v5056 = vmul.f32 %v4990, %v5034
    %v5057 = vmul.f32 %v4991, %v5034
    %v5058 = vmul.f32 %v4992, %v5034
    %v5059 = vmul.f32 %v4993, %v5034
    %v5060 = vmul.f32 %v4994, %v5034
    %v5061 = vmul.f32 %v4995, %v5034
    %v5062 = vmul.f32 %v4996, %v5034
    %v5063 = vmul.f32 %v4997, %v5034
    %v5064 = vmul.f32 %v4998, %v5034
    %v5065 = vmul.f32 %v4999, %v5034
    %v5066 = vmul.f32 %v5000, %v5034
    %v5067 = vmul.f32 %v5001, %v5034
    %v5068 = vmul.f32 %v5002, %v5034
    %v5069 = vmul.f32 %v5003, %v5034
    %v5070 = vmul.f32 %v5004, %v5034
    %v5071 = vmul.f32 %v5005, %v5034
    %v5072 = vmul.f32 %v5006, %v5034
    %v5073 = vmul.f32 %v5007, %v5034
    %v5074 = vmul.f32 %v5008, %v5034
    %v5075 = vmul.f32 %v5009, %v5034
    %v5076 = vmul.f32 %v5010, %v5034
    %v5077 = vmul.f32 %v5011, %v5034
    %v5078 = vmul.f32 %v5012, %v5034
    %v5079 = vmul.f32 %v5013, %v5034
    %v5080 = vmul.f32 %v5014, %v5034
    %v5081 = vmul.f32 %v5015, %v5034
    %v5082 = vmul.f32 %v5016, %v5034
    %v5083 = vmul.f32 %v5017, %v5034
    %v5084 = vmul.f32 %v5018, %v5034
    %v5085 = vmul.f32 %v5019, %v5034
    %v5086 = vmul.f32 %v5020, %v5034
    %v5087 = vmul.f32 %v5021, %v5034
    %v5088 = vmul.f32 %v5022, %v5034
    %v5089 = vmul.f32 %v5023, %v5034
    %v5090 = vmul.f32 %v5024, %v5034
    %v5091 = vmul.f32 %v5025, %v5034
    %v5092 = vmul.f32 %v5026, %v5034
    %v5093 = vmul.f32 %v5027, %v5034
    %v5094 = vmul.f32 %v5028, %v5034
    %v5095 = vmul.f32 %v5029, %v5034
    %v5096 = vmul.f32 %v5030, %v5034
    %v5097 = vmul.f32 %v5034, 0.0
    %v5098 = vadd.f32 %v4719, %v5035
    %v5099 = vadd.f32 %v4720, %v5036
    %v5100 = vadd.f32 %v4721, %v5037
    %v5101 = vadd.f32 %v4722, %v5038
    %v5102 = vadd.f32 %v4723, %v5039
    %v5103 = vadd.f32 %v4724, %v5040
    %v5104 = vadd.f32 %v4725, %v5041
    %v5105 = vadd.f32 %v4726, %v5042
    %v5106 = vadd.f32 %v4727, %v5043
    %v5107 = vadd.f32 %v4728, %v5044
    %v5108 = vadd.f32 %v4729, %v5045
    %v5109 = vadd.f32 %v4730, %v5046
    %v5110 = vadd.f32 %v4731, %v5047
    %v5111 = vadd.f32 %v4732, %v5048
    %v5112 = vadd.f32 %v4733, %v5049
    %v5113 = vadd.f32 %v4734, %v5050
    %v5114 = vadd.f32 %v4735, %v5051
    %v5115 = vadd.f32 %v4736, %v5052
    %v5116 = vadd.f32 %v4737, %v5053
    %v5117 = vadd.f32 %v4738, %v5054
    %v5118 = vadd.f32 %v4739, %v5055
    %v5119 = vadd.f32 %v4740, %v5056
    %v5120 = vadd.f32 %v4741, %v5057
    %v5121 = vadd.f32 %v4742, %v5058
    %v5122 = vadd.f32 %v4743, %v5059
    %v5123 = vadd.f32 %v4744, %v5060
    %v5124 = vadd.f32 %v4745, %v5061
    %v5125 = vadd.f32 %v4746, %v5062
    %v5126 = vadd.f32 %v4747, %v5063
    %v5127 = vadd.f32 %v4748, %v5064
    %v5128 = vadd.f32 %v4749, %v5065
    %v5129 = vadd.f32 %v4750, %v5066
    %v5130 = vadd.f32 %v4751, %v5067
    %v5131 = vadd.f32 %v4752, %v5068
    %v5132 = vadd.f32 %v4753, %v5069
    %v5133 = vadd.f32 %v4754, %v5070
    %v5134 = vadd.f32 %v4755, %v5071
    %v5135 = vadd.f32 %v4756, %v5072
    %v5136 = vadd.f32 %v4757, %v5073
    %v5137 = vadd.f32 %v4758, %v5074
    %v5138 = vadd.f32 %v4759, %v5075
    %v5139 = vadd.f32 %v4760, %v5076
    %v5140 = vadd.f32 %v4761, %v5077
    %v5141 = vadd.f32 %v4762, %v5078
    %v5142 = vadd.f32 %v4763, %v5079
    %v5143 = vadd.f32 %v4764, %v5080
    %v5144 = vadd.f32 %v4765, %v5081
    %v5145 = vadd.f32 %v4766, %v5082
    %v5146 = vadd.f32 %v4767, %v5083
    %v5147 = vadd.f32 %v4768, %v5084
    %v5148 = vadd.f32 %v4769, %v5085
    %v5149 = vadd.f32 %v4770, %v5086
    %v5150 = vadd.f32 %v4771, %v5087
    %v5151 = vadd.f32 %v4772, %v5088
    %v5152 = vadd.f32 %v4773, %v5089
    %v5153 = vadd.f32 %v4774, %v5090
    %v5154 = vadd.f32 %v4775, %v5091
    %v5155 = vadd.f32 %v4776, %v5092
    %v5156 = vadd.f32 %v4777, %v5093
    %v5157 = vadd.f32 %v4778, %v5094
    %v5158 = vadd.f32 %v4779, %v5095
    %v5159 = vadd.f32 %v4780, %v5096
    %v5160 = vadd.f32 %v4781, %v5097
    %v5161 = vadd.f32 %v4782, %v5097
    %v5162 = vpack.c.bf16 %v5099, %v5098
    %v5163 = vpack.c.bf16 %v5101, %v5100
    %v5164 = vpack.c.bf16 %v5103, %v5102
    %v5165 = vpack.c.bf16 %v5105, %v5104
    %v5166 = vpack.c.bf16 %v5107, %v5106
    %v5167 = vpack.c.bf16 %v5109, %v5108
    %v5168 = vpack.c.bf16 %v5111, %v5110
    %v5169 = vpack.c.bf16 %v5113, %v5112
    %v5170 = vpack.c.bf16 %v5115, %v5114
    %v5171 = vpack.c.bf16 %v5117, %v5116
    %v5172 = vpack.c.bf16 %v5119, %v5118
    %v5173 = vpack.c.bf16 %v5121, %v5120
    %v5174 = vpack.c.bf16 %v5123, %v5122
    %v5175 = vpack.c.bf16 %v5125, %v5124
    %v5176 = vpack.c.bf16 %v5127, %v5126
    %v5177 = vpack.c.bf16 %v5129, %v5128
    %v5178 = vpack.c.bf16 %v5131, %v5130
    %v5179 = vpack.c.bf16 %v5133, %v5132
    %v5180 = vpack.c.bf16 %v5135, %v5134
    %v5181 = vpack.c.bf16 %v5137, %v5136
    %v5182 = vpack.c.bf16 %v5139, %v5138
    %v5183 = vpack.c.bf16 %v5141, %v5140
    %v5184 = vpack.c.bf16 %v5143, %v5142
    %v5185 = vpack.c.bf16 %v5145, %v5144
    %v5186 = vpack.c.bf16 %v5147, %v5146
    %v5187 = vpack.c.bf16 %v5149, %v5148
    %v5188 = vpack.c.bf16 %v5151, %v5150
    %v5189 = vpack.c.bf16 %v5153, %v5152
    %v5190 = vpack.c.bf16 %v5155, %v5154
    %v5191 = vpack.c.bf16 %v5157, %v5156
    %v5192 = vpack.c.bf16 %v5159, %v5158
    %v5193 = vpack.c.bf16 %v5161, %v5160
    %v5194 = vld [vmem:[%s5] sm:$0xf]
    %v5195 = vld [vmem:[%s5 + $0x4] sm:$0xf]
    %v5198 = vunpack.c.l.b16 %v5194
    %v5199 = vunpack.c.l.b16 %v5195
    %v5200 = vpack.c.b16 %v5199, %v5198
    %v5203 = vsel %vm716, %v5162, 0
    %v5206 = vsel %vm716, %v5163, 0
    %v5209 = vsel %vm716, %v5164, 0
    %v5212 = vsel %vm716, %v5165, 0
    %v5215 = vsel %vm716, %v5166, 0
    %v5218 = vsel %vm716, %v5167, 0
    %v5221 = vsel %vm716, %v5168, 0
    %v5224 = vsel %vm716, %v5169, 0
    %v5227 = vsel %vm716, %v5170, 0
    %v5230 = vsel %vm716, %v5171, 0
    %v5233 = vsel %vm716, %v5172, 0
    %v5236 = vsel %vm716, %v5173, 0
    %v5239 = vsel %vm716, %v5174, 0
    %v5242 = vsel %vm716, %v5175, 0
    %v5245 = vsel %vm716, %v5176, 0
    %v5248 = vsel %vm716, %v5177, 0
    %v5251 = vsel %vm716, %v5178, 0
    %v5254 = vsel %vm716, %v5179, 0
    %v5257 = vsel %vm716, %v5180, 0
    %v5260 = vsel %vm716, %v5181, 0
    %v5263 = vsel %vm716, %v5182, 0
    %v5266 = vsel %vm716, %v5183, 0
    %v5269 = vsel %vm716, %v5184, 0
    %v5272 = vsel %vm716, %v5185, 0
    %v5275 = vsel %vm716, %v5186, 0
    %v5278 = vsel %vm716, %v5187, 0
    %v5281 = vsel %vm716, %v5188, 0
    %v5284 = vsel %vm716, %v5189, 0
    %v5287 = vsel %vm716, %v5190, 0
    %v5290 = vsel %vm716, %v5191, 0
    %v5293 = vsel %vm716, %v5192, 0
    %v5296 = vsel %vm716, %v5193, 0
    %5298 = vmatprep.subr.bf16.mxu0 0
    %5299 = vmatpush1.bf16.msra.mxu0 %v5200
    %5300 = vmatprep.subr.bf16.mxu0 0
    %5301 = vmatpush1.bf16.msra.mxu0 0
    %5302 = vmatprep.subr.bf16.mxu0 0
    %5303 = vmatpush1.bf16.msra.mxu0 0
    %5304 = vmatprep.subr.bf16.mxu0 0
    %5305 = vmatpush1.bf16.msra.mxu0 0
    %5306 = vmatprep.subr.bf16.mxu0 0
    %5307 = vmatpush1.bf16.msra.mxu0 0
    %5308 = vmatprep.subr.bf16.mxu0 0
    %5309 = vmatpush1.bf16.msra.mxu0 0
    %5310 = vmatprep.subr.bf16.mxu0 0
    %5311 = vmatpush1.bf16.msra.mxu0 0
    %5312 = vmatprep.subr.bf16.mxu0 0
    %5313 = vmatpush1.bf16.msra.mxu0 0
    %5314 = vmatprep.subr.bf16.mxu0 0
    %5315 = vmatpush1.bf16.msra.mxu0 0
    %5316 = vmatprep.subr.bf16.mxu0 0
    %5317 = vmatpush1.bf16.msra.mxu0 0
    %5318 = vmatprep.subr.bf16.mxu0 0
    %5319 = vmatpush1.bf16.msra.mxu0 0
    %5320 = vmatprep.subr.bf16.mxu0 0
    %5321 = vmatpush1.bf16.msra.mxu0 0
    %5322 = vmatprep.subr.bf16.mxu0 0
    %5323 = vmatpush1.bf16.msra.mxu0 0
    %5324 = vmatprep.subr.bf16.mxu0 0
    %5325 = vmatpush1.bf16.msra.mxu0 0
    %5326 = vmatprep.subr.bf16.mxu0 0
    %5327 = vmatpush1.bf16.msra.mxu0 0
    %5328 = vmatprep.subr.bf16.mxu0 0
    %5329 = vmatpush1.bf16.msra.mxu0 0
    %5330 = vmatprep.mubr.bf16.mxu0 0
    %5331 = vmatmul.mubr.bf16.gmra.mrb[0].mxu0 %v5203
    %v5332 = vpop.f32.mrb[0].mxu0
    %v5333 = vadd.f32 0.0, %v5332
    %v5334 = vpop.f32.mrb[0].mxu0
    %v5335 = vpop.f32.mrb[0].mxu0
    %v5336 = vadd.f32 0.0, %v5335
    %v5337 = vpop.f32.mrb[0].mxu0
    %5338 = vmatprep.mubr.bf16.mxu0 0
    %5339 = vmatmul.mubr.bf16.gmra.mrb[0].mxu0 %v5206
    %v5340 = vpop.f32.mrb[0].mxu0
    %v5341 = vadd.f32 0.0, %v5340
    %v5342 = vpop.f32.mrb[0].mxu0
    %v5343 = vpop.f32.mrb[0].mxu0
    %v5344 = vadd.f32 0.0, %v5343
    %v5345 = vpop.f32.mrb[0].mxu0
    %5346 = vmatprep.mubr.bf16.mxu0 0
    %5347 = vmatmul.mubr.bf16.gmra.mrb[0].mxu0 %v5209
    %v5348 = vpop.f32.mrb[0].mxu0
    %v5349 = vadd.f32 0.0, %v5348
    %v5350 = vpop.f32.mrb[0].mxu0
    %v5351 = vpop.f32.mrb[0].mxu0
    %v5352 = vadd.f32 0.0, %v5351
    %v5353 = vpop.f32.mrb[0].mxu0
    %5354 = vmatprep.mubr.bf16.mxu0 0
    %5355 = vmatmul.mubr.bf16.gmra.mrb[0].mxu0 %v5212
    %v5356 = vpop.f32.mrb[0].mxu0
    %v5357 = vadd.f32 0.0, %v5356
    %v5358 = vpop.f32.mrb[0].mxu0
    %v5359 = vpop.f32.mrb[0].mxu0
    %v5360 = vadd.f32 0.0, %v5359
    %v5361 = vpop.f32.mrb[0].mxu0
    %5362 = vmatprep.mubr.bf16.mxu0 0
    %5363 = vmatmul.mubr.bf16.gmra.mrb[0].mxu0 %v5215
    %v5364 = vpop.f32.mrb[0].mxu0
    %v5365 = vadd.f32 0.0, %v5364
    %v5366 = vpop.f32.mrb[0].mxu0
    %v5367 = vpop.f32.mrb[0].mxu0
    %v5368 = vadd.f32 0.0, %v5367
    %v5369 = vpop.f32.mrb[0].mxu0
    %5370 = vmatprep.mubr.bf16.mxu0 0
    %5371 = vmatmul.mubr.bf16.gmra.mrb[0].mxu0 %v5218
    %v5372 = vpop.f32.mrb[0].mxu0
    %v5373 = vadd.f32 0.0, %v5372
    %v5374 = vpop.f32.mrb[0].mxu0
    %v5375 = vpop.f32.mrb[0].mxu0
    %v5376 = vadd.f32 0.0, %v5375
    %v5377 = vpop.f32.mrb[0].mxu0
    %5378 = vmatprep.mubr.bf16.mxu0 0
    %5379 = vmatmul.mubr.bf16.gmra.mrb[0].mxu0 %v5221
    %v5380 = vpop.f32.mrb[0].mxu0
    %v5381 = vadd.f32 0.0, %v5380
    %v5382 = vpop.f32.mrb[0].mxu0
    %v5383 = vpop.f32.mrb[0].mxu0
    %v5384 = vadd.f32 0.0, %v5383
    %v5385 = vpop.f32.mrb[0].mxu0
    %5386 = vmatprep.mubr.bf16.mxu0 0
    %5387 = vmatmul.mubr.bf16.gmra.mrb[0].mxu0 %v5224
    %v5388 = vpop.f32.mrb[0].mxu0
    %v5389 = vadd.f32 0.0, %v5388
    %v5390 = vpop.f32.mrb[0].mxu0
    %v5391 = vpop.f32.mrb[0].mxu0
    %v5392 = vadd.f32 0.0, %v5391
    %v5393 = vpop.f32.mrb[0].mxu0
    %5394 = vmatprep.mubr.bf16.mxu0 0
    %5395 = vmatmul.mubr.bf16.gmra.mrb[0].mxu0 %v5227
    %v5396 = vpop.f32.mrb[0].mxu0
    %v5397 = vadd.f32 0.0, %v5396
    %v5398 = vpop.f32.mrb[0].mxu0
    %v5399 = vpop.f32.mrb[0].mxu0
    %v5400 = vadd.f32 0.0, %v5399
    %v5401 = vpop.f32.mrb[0].mxu0
    %5402 = vmatprep.mubr.bf16.mxu0 0
    %5403 = vmatmul.mubr.bf16.gmra.mrb[0].mxu0 %v5230
    %v5404 = vpop.f32.mrb[0].mxu0
    %v5405 = vadd.f32 0.0, %v5404
    %v5406 = vpop.f32.mrb[0].mxu0
    %v5407 = vpop.f32.mrb[0].mxu0
    %v5408 = vadd.f32 0.0, %v5407
    %v5409 = vpop.f32.mrb[0].mxu0
    %5410 = vmatprep.mubr.bf16.mxu0 0
    %5411 = vmatmul.mubr.bf16.gmra.mrb[0].mxu0 %v5233
    %v5412 = vpop.f32.mrb[0].mxu0
    %v5413 = vadd.f32 0.0, %v5412
    %v5414 = vpop.f32.mrb[0].mxu0
    %v5415 = vpop.f32.mrb[0].mxu0
    %v5416 = vadd.f32 0.0, %v5415
    %v5417 = vpop.f32.mrb[0].mxu0
    %5418 = vmatprep.mubr.bf16.mxu0 0
    %5419 = vmatmul.mubr.bf16.gmra.mrb[0].mxu0 %v5236
    %v5420 = vpop.f32.mrb[0].mxu0
    %v5421 = vadd.f32 0.0, %v5420
    %v5422 = vpop.f32.mrb[0].mxu0
    %v5423 = vpop.f32.mrb[0].mxu0
    %v5424 = vadd.f32 0.0, %v5423
    %v5425 = vpop.f32.mrb[0].mxu0
    %5426 = vmatprep.mubr.bf16.mxu0 0
    %5427 = vmatmul.mubr.bf16.gmra.mrb[0].mxu0 %v5239
    %v5428 = vpop.f32.mrb[0].mxu0
    %v5429 = vadd.f32 0.0, %v5428
    %v5430 = vpop.f32.mrb[0].mxu0
    %v5431 = vpop.f32.mrb[0].mxu0
    %v5432 = vadd.f32 0.0, %v5431
    %v5433 = vpop.f32.mrb[0].mxu0
    %5434 = vmatprep.mubr.bf16.mxu0 0
    %5435 = vmatmul.mubr.bf16.gmra.mrb[0].mxu0 %v5242
    %v5436 = vpop.f32.mrb[0].mxu0
    %v5437 = vadd.f32 0.0, %v5436
    %v5438 = vpop.f32.mrb[0].mxu0
    %v5439 = vpop.f32.mrb[0].mxu0
    %v5440 = vadd.f32 0.0, %v5439
    %v5441 = vpop.f32.mrb[0].mxu0
    %5442 = vmatprep.mubr.bf16.mxu0 0
    %5443 = vmatmul.mubr.bf16.gmra.mrb[0].mxu0 %v5245
    %v5444 = vpop.f32.mrb[0].mxu0
    %v5445 = vadd.f32 0.0, %v5444
    %v5446 = vpop.f32.mrb[0].mxu0
    %v5447 = vpop.f32.mrb[0].mxu0
    %v5448 = vadd.f32 0.0, %v5447
    %v5449 = vpop.f32.mrb[0].mxu0
    %5450 = vmatprep.mubr.bf16.mxu0 0
    %5451 = vmatmul.mubr.bf16.gmra.mrb[0].mxu0 %v5248
    %v5452 = vpop.f32.mrb[0].mxu0
    %v5453 = vadd.f32 0.0, %v5452
    %v5454 = vpop.f32.mrb[0].mxu0
    %v5455 = vpop.f32.mrb[0].mxu0
    %v5456 = vadd.f32 0.0, %v5455
    %v5457 = vpop.f32.mrb[0].mxu0
    %5458 = vmatprep.mubr.bf16.mxu0 0
    %5459 = vmatmul.mubr.bf16.gmra.mrb[0].mxu0 %v5251
    %v5460 = vpop.f32.mrb[0].mxu0
    %v5461 = vadd.f32 0.0, %v5460
    %v5462 = vpop.f32.mrb[0].mxu0
    %v5463 = vpop.f32.mrb[0].mxu0
    %v5464 = vadd.f32 0.0, %v5463
    %v5465 = vpop.f32.mrb[0].mxu0
    %5466 = vmatprep.mubr.bf16.mxu0 0
    %5467 = vmatmul.mubr.bf16.gmra.mrb[0].mxu0 %v5254
    %v5468 = vpop.f32.mrb[0].mxu0
    %v5469 = vadd.f32 0.0, %v5468
    %v5470 = vpop.f32.mrb[0].mxu0
    %v5471 = vpop.f32.mrb[0].mxu0
    %v5472 = vadd.f32 0.0, %v5471
    %v5473 = vpop.f32.mrb[0].mxu0
    %5474 = vmatprep.mubr.bf16.mxu0 0
    %5475 = vmatmul.mubr.bf16.gmra.mrb[0].mxu0 %v5257
    %v5476 = vpop.f32.mrb[0].mxu0
    %v5477 = vadd.f32 0.0, %v5476
    %v5478 = vpop.f32.mrb[0].mxu0
    %v5479 = vpop.f32.mrb[0].mxu0
    %v5480 = vadd.f32 0.0, %v5479
    %v5481 = vpop.f32.mrb[0].mxu0
    %5482 = vmatprep.mubr.bf16.mxu0 0
    %5483 = vmatmul.mubr.bf16.gmra.mrb[0].mxu0 %v5260
    %v5484 = vpop.f32.mrb[0].mxu0
    %v5485 = vadd.f32 0.0, %v5484
    %v5486 = vpop.f32.mrb[0].mxu0
    %v5487 = vpop.f32.mrb[0].mxu0
    %v5488 = vadd.f32 0.0, %v5487
    %v5489 = vpop.f32.mrb[0].mxu0
    %5490 = vmatprep.mubr.bf16.mxu0 0
    %5491 = vmatmul.mubr.bf16.gmra.mrb[0].mxu0 %v5263
    %v5492 = vpop.f32.mrb[0].mxu0
    %v5493 = vadd.f32 0.0, %v5492
    %v5494 = vpop.f32.mrb[0].mxu0
    %v5495 = vpop.f32.mrb[0].mxu0
    %v5496 = vadd.f32 0.0, %v5495
    %v5497 = vpop.f32.mrb[0].mxu0
    %5498 = vmatprep.mubr.bf16.mxu0 0
    %5499 = vmatmul.mubr.bf16.gmra.mrb[0].mxu0 %v5266
    %v5500 = vpop.f32.mrb[0].mxu0
    %v5501 = vadd.f32 0.0, %v5500
    %v5502 = vpop.f32.mrb[0].mxu0
    %v5503 = vpop.f32.mrb[0].mxu0
    %v5504 = vadd.f32 0.0, %v5503
    %v5505 = vpop.f32.mrb[0].mxu0
    %5506 = vmatprep.mubr.bf16.mxu0 0
    %5507 = vmatmul.mubr.bf16.gmra.mrb[0].mxu0 %v5269
    %v5508 = vpop.f32.mrb[0].mxu0
    %v5509 = vadd.f32 0.0, %v5508
    %v5510 = vpop.f32.mrb[0].mxu0
    %v5511 = vpop.f32.mrb[0].mxu0
    %v5512 = vadd.f32 0.0, %v5511
    %v5513 = vpop.f32.mrb[0].mxu0
    %5514 = vmatprep.mubr.bf16.mxu0 0
    %5515 = vmatmul.mubr.bf16.gmra.mrb[0].mxu0 %v5272
    %v5516 = vpop.f32.mrb[0].mxu0
    %v5517 = vadd.f32 0.0, %v5516
    %v5518 = vpop.f32.mrb[0].mxu0
    %v5519 = vpop.f32.mrb[0].mxu0
    %v5520 = vadd.f32 0.0, %v5519
    %v5521 = vpop.f32.mrb[0].mxu0
    %5522 = vmatprep.mubr.bf16.mxu0 0
    %5523 = vmatmul.mubr.bf16.gmra.mrb[0].mxu0 %v5275
    %v5524 = vpop.f32.mrb[0].mxu0
    %v5525 = vadd.f32 0.0, %v5524
    %v5526 = vpop.f32.mrb[0].mxu0
    %v5527 = vpop.f32.mrb[0].mxu0
    %v5528 = vadd.f32 0.0, %v5527
    %v5529 = vpop.f32.mrb[0].mxu0
    %5530 = vmatprep.mubr.bf16.mxu0 0
    %5531 = vmatmul.mubr.bf16.gmra.mrb[0].mxu0 %v5278
    %v5532 = vpop.f32.mrb[0].mxu0
    %v5533 = vadd.f32 0.0, %v5532
    %v5534 = vpop.f32.mrb[0].mxu0
    %v5535 = vpop.f32.mrb[0].mxu0
    %v5536 = vadd.f32 0.0, %v5535
    %v5537 = vpop.f32.mrb[0].mxu0
    %5538 = vmatprep.mubr.bf16.mxu0 0
    %5539 = vmatmul.mubr.bf16.gmra.mrb[0].mxu0 %v5281
    %v5540 = vpop.f32.mrb[0].mxu0
    %v5541 = vadd.f32 0.0, %v5540
    %v5542 = vpop.f32.mrb[0].mxu0
    %v5543 = vpop.f32.mrb[0].mxu0
    %v5544 = vadd.f32 0.0, %v5543
    %v5545 = vpop.f32.mrb[0].mxu0
    %5546 = vmatprep.mubr.bf16.mxu0 0
    %5547 = vmatmul.mubr.bf16.gmra.mrb[0].mxu0 %v5284
    %v5548 = vpop.f32.mrb[0].mxu0
    %v5549 = vadd.f32 0.0, %v5548
    %v5550 = vpop.f32.mrb[0].mxu0
    %v5551 = vpop.f32.mrb[0].mxu0
    %v5552 = vadd.f32 0.0, %v5551
    %v5553 = vpop.f32.mrb[0].mxu0
    %5554 = vmatprep.mubr.bf16.mxu0 0
    %5555 = vmatmul.mubr.bf16.gmra.mrb[0].mxu0 %v5287
    %v5556 = vpop.f32.mrb[0].mxu0
    %v5557 = vadd.f32 0.0, %v5556
    %v5558 = vpop.f32.mrb[0].mxu0
    %v5559 = vpop.f32.mrb[0].mxu0
    %v5560 = vadd.f32 0.0, %v5559
    %v5561 = vpop.f32.mrb[0].mxu0
    %5562 = vmatprep.mubr.bf16.mxu0 0
    %5563 = vmatmul.mubr.bf16.gmra.mrb[0].mxu0 %v5290
    %v5564 = vpop.f32.mrb[0].mxu0
    %v5565 = vadd.f32 0.0, %v5564
    %v5566 = vpop.f32.mrb[0].mxu0
    %v5567 = vpop.f32.mrb[0].mxu0
    %v5568 = vadd.f32 0.0, %v5567
    %v5569 = vpop.f32.mrb[0].mxu0
    %5570 = vmatprep.mubr.bf16.mxu0 0
    %5571 = vmatmul.mubr.bf16.gmra.mrb[0].mxu0 %v5293
    %v5572 = vpop.f32.mrb[0].mxu0
    %v5573 = vadd.f32 0.0, %v5572
    %v5574 = vpop.f32.mrb[0].mxu0
    %v5575 = vpop.f32.mrb[0].mxu0
    %v5576 = vadd.f32 0.0, %v5575
    %v5577 = vpop.f32.mrb[0].mxu0
    %5578 = vmatprep.mubr.bf16.mxu0 0
    %5579 = vmatmul.mubr.bf16.gmra.mrb[0].mxu0 %v5296
    %v5580 = vpop.f32.mrb[0].mxu0
    %v5581 = vadd.f32 0.0, %v5580
    %v5582 = vpop.f32.mrb[0].mxu0
    %v5583 = vpop.f32.mrb[0].mxu0
    %v5584 = vadd.f32 0.0, %v5583
    %v5585 = vpop.f32.mrb[0].mxu0
    %5586 = vdwg.mxu0
    %v5587 = vld [vmem:[%s6] sm:$0x1]
    %v5588 = vld [vmem:[%s7] sm:$0x1]
    %vm5589 = vcmask 261120
    %v5590 = vsel %vm5589, %v5333, 0.0
    %v5591 = vsel %vm5589, %v5336, 0.0
    %v5592 = vadd.f32 %v5590, %v5591
    %v5593 = vsel %vm5589, %v5341, 0.0
    %v5594 = vadd.f32 %v5592, %v5593
    %v5595 = vsel %vm5589, %v5344, 0.0
    %v5596 = vadd.f32 %v5594, %v5595
    %v5597 = vsel %vm5589, %v5349, 0.0
    %v5598 = vadd.f32 %v5596, %v5597
    %v5599 = vsel %vm5589, %v5352, 0.0
    %v5600 = vadd.f32 %v5598, %v5599
    %v5601 = vsel %vm5589, %v5357, 0.0
    %v5602 = vadd.f32 %v5600, %v5601
    %v5603 = vsel %vm5589, %v5360, 0.0
    %v5604 = vadd.f32 %v5602, %v5603
    %v5605 = vsel %vm5589, %v5365, 0.0
    %v5606 = vadd.f32 %v5604, %v5605
    %v5607 = vsel %vm5589, %v5368, 0.0
    %v5608 = vadd.f32 %v5606, %v5607
    %v5609 = vsel %vm5589, %v5373, 0.0
    %v5610 = vadd.f32 %v5608, %v5609
    %v5611 = vsel %vm5589, %v5376, 0.0
    %v5612 = vadd.f32 %v5610, %v5611
    %v5613 = vsel %vm5589, %v5381, 0.0
    %v5614 = vadd.f32 %v5612, %v5613
    %v5615 = vsel %vm5589, %v5384, 0.0
    %v5616 = vadd.f32 %v5614, %v5615
    %v5617 = vsel %vm5589, %v5389, 0.0
    %v5618 = vadd.f32 %v5616, %v5617
    %v5619 = vsel %vm5589, %v5392, 0.0
    %v5620 = vadd.f32 %v5618, %v5619
    %v5621 = vsel %vm5589, %v5397, 0.0
    %v5622 = vadd.f32 %v5620, %v5621
    %v5623 = vsel %vm5589, %v5400, 0.0
    %v5624 = vadd.f32 %v5622, %v5623
    %v5625 = vsel %vm5589, %v5405, 0.0
    %v5626 = vadd.f32 %v5624, %v5625
    %v5627 = vsel %vm5589, %v5408, 0.0
    %v5628 = vadd.f32 %v5626, %v5627
    %v5629 = vsel %vm5589, %v5413, 0.0
    %v5630 = vadd.f32 %v5628, %v5629
    %v5631 = vsel %vm5589, %v5416, 0.0
    %v5632 = vadd.f32 %v5630, %v5631
    %v5633 = vsel %vm5589, %v5421, 0.0
    %v5634 = vadd.f32 %v5632, %v5633
    %v5635 = vsel %vm5589, %v5424, 0.0
    %v5636 = vadd.f32 %v5634, %v5635
    %v5637 = vsel %vm5589, %v5429, 0.0
    %v5638 = vadd.f32 %v5636, %v5637
    %v5639 = vsel %vm5589, %v5432, 0.0
    %v5640 = vadd.f32 %v5638, %v5639
    %v5641 = vsel %vm5589, %v5437, 0.0
    %v5642 = vadd.f32 %v5640, %v5641
    %v5643 = vsel %vm5589, %v5440, 0.0
    %v5644 = vadd.f32 %v5642, %v5643
    %v5645 = vsel %vm5589, %v5445, 0.0
    %v5646 = vadd.f32 %v5644, %v5645
    %v5647 = vsel %vm5589, %v5448, 0.0
    %v5648 = vadd.f32 %v5646, %v5647
    %v5649 = vsel %vm5589, %v5453, 0.0
    %v5650 = vadd.f32 %v5648, %v5649
    %v5651 = vsel %vm5589, %v5456, 0.0
    %v5652 = vadd.f32 %v5650, %v5651
    %v5653 = vsel %vm5589, %v5461, 0.0
    %v5654 = vadd.f32 %v5652, %v5653
    %v5655 = vsel %vm5589, %v5464, 0.0
    %v5656 = vadd.f32 %v5654, %v5655
    %v5657 = vsel %vm5589, %v5469, 0.0
    %v5658 = vadd.f32 %v5656, %v5657
    %v5659 = vsel %vm5589, %v5472, 0.0
    %v5660 = vadd.f32 %v5658, %v5659
    %v5661 = vsel %vm5589, %v5477, 0.0
    %v5662 = vadd.f32 %v5660, %v5661
    %v5663 = vsel %vm5589, %v5480, 0.0
    %v5664 = vadd.f32 %v5662, %v5663
    %v5665 = vsel %vm5589, %v5485, 0.0
    %v5666 = vadd.f32 %v5664, %v5665
    %v5667 = vsel %vm5589, %v5488, 0.0
    %v5668 = vadd.f32 %v5666, %v5667
    %v5669 = vsel %vm5589, %v5493, 0.0
    %v5670 = vadd.f32 %v5668, %v5669
    %v5671 = vsel %vm5589, %v5496, 0.0
    %v5672 = vadd.f32 %v5670, %v5671
    %v5673 = vsel %vm5589, %v5501, 0.0
    %v5674 = vadd.f32 %v5672, %v5673
    %v5675 = vsel %vm5589, %v5504, 0.0
    %v5676 = vadd.f32 %v5674, %v5675
    %v5677 = vsel %vm5589, %v5509, 0.0
    %v5678 = vadd.f32 %v5676, %v5677
    %v5679 = vsel %vm5589, %v5512, 0.0
    %v5680 = vadd.f32 %v5678, %v5679
    %v5681 = vsel %vm5589, %v5517, 0.0
    %v5682 = vadd.f32 %v5680, %v5681
    %v5683 = vsel %vm5589, %v5520, 0.0
    %v5684 = vadd.f32 %v5682, %v5683
    %v5685 = vsel %vm5589, %v5525, 0.0
    %v5686 = vadd.f32 %v5684, %v5685
    %v5687 = vsel %vm5589, %v5528, 0.0
    %v5688 = vadd.f32 %v5686, %v5687
    %v5689 = vsel %vm5589, %v5533, 0.0
    %v5690 = vadd.f32 %v5688, %v5689
    %v5691 = vsel %vm5589, %v5536, 0.0
    %v5692 = vadd.f32 %v5690, %v5691
    %v5693 = vsel %vm5589, %v5541, 0.0
    %v5694 = vadd.f32 %v5692, %v5693
    %v5695 = vsel %vm5589, %v5544, 0.0
    %v5696 = vadd.f32 %v5694, %v5695
    %v5697 = vsel %vm5589, %v5549, 0.0
    %v5698 = vadd.f32 %v5696, %v5697
    %v5699 = vsel %vm5589, %v5552, 0.0
    %v5700 = vadd.f32 %v5698, %v5699
    %v5701 = vsel %vm5589, %v5557, 0.0
    %v5702 = vadd.f32 %v5700, %v5701
    %v5703 = vsel %vm5589, %v5560, 0.0
    %v5704 = vadd.f32 %v5702, %v5703
    %v5705 = vsel %vm5589, %v5565, 0.0
    %v5706 = vadd.f32 %v5704, %v5705
    %v5707 = vsel %vm5589, %v5568, 0.0
    %v5708 = vadd.f32 %v5706, %v5707
    %v5709 = vsel %vm5589, %v5573, 0.0
    %v5710 = vadd.f32 %v5708, %v5709
    %v5711 = vsel %vm5589, %v5576, 0.0
    %v5712 = vadd.f32 %v5710, %v5711
    %v5713 = vsel %vm5589, %v5581, 0.0
    %v5714 = vadd.f32 %v5712, %v5713
    %v5715 = vsel %vm5589, %v5584, 0.0
    %v5716 = vadd.f32 %v5714, %v5715
    %v5717 = vrot.slane %v5716, 4
    %v5718 = vadd.f32 %v5716, %v5717
    %v5719 = vrot.slane %v5718, 2
    %v5720 = vadd.f32 %v5718, %v5719
    %v5721 = vrot.slane %v5720, 1
    %v5722 = vadd.f32 %v5720, %v5721
    %v5723 = vmul.f32 %v5722, 0.001953125
    %v5724 = vsub.f32 %v5333, %v5723
    %v5725 = vsub.f32 %v5336, %v5723
    %v5726 = vsub.f32 %v5341, %v5723
    %v5727 = vsub.f32 %v5344, %v5723
    %v5728 = vsub.f32 %v5349, %v5723
    %v5729 = vsub.f32 %v5352, %v5723
    %v5730 = vsub.f32 %v5357, %v5723
    %v5731 = vsub.f32 %v5360, %v5723
    %v5732 = vsub.f32 %v5365, %v5723
    %v5733 = vsub.f32 %v5368, %v5723
    %v5734 = vsub.f32 %v5373, %v5723
    %v5735 = vsub.f32 %v5376, %v5723
    %v5736 = vsub.f32 %v5381, %v5723
    %v5737 = vsub.f32 %v5384, %v5723
    %v5738 = vsub.f32 %v5389, %v5723
    %v5739 = vsub.f32 %v5392, %v5723
    %v5740 = vsub.f32 %v5397, %v5723
    %v5741 = vsub.f32 %v5400, %v5723
    %v5742 = vsub.f32 %v5405, %v5723
    %v5743 = vsub.f32 %v5408, %v5723
    %v5744 = vsub.f32 %v5413, %v5723
    %v5745 = vsub.f32 %v5416, %v5723
    %v5746 = vsub.f32 %v5421, %v5723
    %v5747 = vsub.f32 %v5424, %v5723
    %v5748 = vsub.f32 %v5429, %v5723
    %v5749 = vsub.f32 %v5432, %v5723
    %v5750 = vsub.f32 %v5437, %v5723
    %v5751 = vsub.f32 %v5440, %v5723
    %v5752 = vsub.f32 %v5445, %v5723
    %v5753 = vsub.f32 %v5448, %v5723
    %v5754 = vsub.f32 %v5453, %v5723
    %v5755 = vsub.f32 %v5456, %v5723
    %v5756 = vsub.f32 %v5461, %v5723
    %v5757 = vsub.f32 %v5464, %v5723
    %v5758 = vsub.f32 %v5469, %v5723
    %v5759 = vsub.f32 %v5472, %v5723
    %v5760 = vsub.f32 %v5477, %v5723
    %v5761 = vsub.f32 %v5480, %v5723
    %v5762 = vsub.f32 %v5485, %v5723
    %v5763 = vsub.f32 %v5488, %v5723
    %v5764 = vsub.f32 %v5493, %v5723
    %v5765 = vsub.f32 %v5496, %v5723
    %v5766 = vsub.f32 %v5501, %v5723
    %v5767 = vsub.f32 %v5504, %v5723
    %v5768 = vsub.f32 %v5509, %v5723
    %v5769 = vsub.f32 %v5512, %v5723
    %v5770 = vsub.f32 %v5517, %v5723
    %v5771 = vsub.f32 %v5520, %v5723
    %v5772 = vsub.f32 %v5525, %v5723
    %v5773 = vsub.f32 %v5528, %v5723
    %v5774 = vsub.f32 %v5533, %v5723
    %v5775 = vsub.f32 %v5536, %v5723
    %v5776 = vsub.f32 %v5541, %v5723
    %v5777 = vsub.f32 %v5544, %v5723
    %v5778 = vsub.f32 %v5549, %v5723
    %v5779 = vsub.f32 %v5552, %v5723
    %v5780 = vsub.f32 %v5557, %v5723
    %v5781 = vsub.f32 %v5560, %v5723
    %v5782 = vsub.f32 %v5565, %v5723
    %v5783 = vsub.f32 %v5568, %v5723
    %v5784 = vsub.f32 %v5573, %v5723
    %v5785 = vsub.f32 %v5576, %v5723
    %v5786 = vsub.f32 %v5581, %v5723
    %v5787 = vsub.f32 %v5584, %v5723
    %v5788 = vmul.f32 %v5724, %v5724
    %v5789 = vmul.f32 %v5725, %v5725
    %v5790 = vmul.f32 %v5726, %v5726
    %v5791 = vmul.f32 %v5727, %v5727
    %v5792 = vmul.f32 %v5728, %v5728
    %v5793 = vmul.f32 %v5729, %v5729
    %v5794 = vmul.f32 %v5730, %v5730
    %v5795 = vmul.f32 %v5731, %v5731
    %v5796 = vmul.f32 %v5732, %v5732
    %v5797 = vmul.f32 %v5733, %v5733
    %v5798 = vmul.f32 %v5734, %v5734
    %v5799 = vmul.f32 %v5735, %v5735
    %v5800 = vmul.f32 %v5736, %v5736
    %v5801 = vmul.f32 %v5737, %v5737
    %v5802 = vmul.f32 %v5738, %v5738
    %v5803 = vmul.f32 %v5739, %v5739
    %v5804 = vmul.f32 %v5740, %v5740
    %v5805 = vmul.f32 %v5741, %v5741
    %v5806 = vmul.f32 %v5742, %v5742
    %v5807 = vmul.f32 %v5743, %v5743
    %v5808 = vmul.f32 %v5744, %v5744
    %v5809 = vmul.f32 %v5745, %v5745
    %v5810 = vmul.f32 %v5746, %v5746
    %v5811 = vmul.f32 %v5747, %v5747
    %v5812 = vmul.f32 %v5748, %v5748
    %v5813 = vmul.f32 %v5749, %v5749
    %v5814 = vmul.f32 %v5750, %v5750
    %v5815 = vmul.f32 %v5751, %v5751
    %v5816 = vmul.f32 %v5752, %v5752
    %v5817 = vmul.f32 %v5753, %v5753
    %v5818 = vmul.f32 %v5754, %v5754
    %v5819 = vmul.f32 %v5755, %v5755
    %v5820 = vmul.f32 %v5756, %v5756
    %v5821 = vmul.f32 %v5757, %v5757
    %v5822 = vmul.f32 %v5758, %v5758
    %v5823 = vmul.f32 %v5759, %v5759
    %v5824 = vmul.f32 %v5760, %v5760
    %v5825 = vmul.f32 %v5761, %v5761
    %v5826 = vmul.f32 %v5762, %v5762
    %v5827 = vmul.f32 %v5763, %v5763
    %v5828 = vmul.f32 %v5764, %v5764
    %v5829 = vmul.f32 %v5765, %v5765
    %v5830 = vmul.f32 %v5766, %v5766
    %v5831 = vmul.f32 %v5767, %v5767
    %v5832 = vmul.f32 %v5768, %v5768
    %v5833 = vmul.f32 %v5769, %v5769
    %v5834 = vmul.f32 %v5770, %v5770
    %v5835 = vmul.f32 %v5771, %v5771
    %v5836 = vmul.f32 %v5772, %v5772
    %v5837 = vmul.f32 %v5773, %v5773
    %v5838 = vmul.f32 %v5774, %v5774
    %v5839 = vmul.f32 %v5775, %v5775
    %v5840 = vmul.f32 %v5776, %v5776
    %v5841 = vmul.f32 %v5777, %v5777
    %v5842 = vmul.f32 %v5778, %v5778
    %v5843 = vmul.f32 %v5779, %v5779
    %v5844 = vmul.f32 %v5780, %v5780
    %v5845 = vmul.f32 %v5781, %v5781
    %v5846 = vmul.f32 %v5782, %v5782
    %v5847 = vmul.f32 %v5783, %v5783
    %v5848 = vmul.f32 %v5784, %v5784
    %v5849 = vmul.f32 %v5785, %v5785
    %v5850 = vmul.f32 %v5786, %v5786
    %v5851 = vmul.f32 %v5787, %v5787
    %v5852 = vsel %vm5589, %v5788, 0.0
    %v5853 = vsel %vm5589, %v5789, 0.0
    %v5854 = vadd.f32 %v5852, %v5853
    %v5855 = vsel %vm5589, %v5790, 0.0
    %v5856 = vadd.f32 %v5854, %v5855
    %v5857 = vsel %vm5589, %v5791, 0.0
    %v5858 = vadd.f32 %v5856, %v5857
    %v5859 = vsel %vm5589, %v5792, 0.0
    %v5860 = vadd.f32 %v5858, %v5859
    %v5861 = vsel %vm5589, %v5793, 0.0
    %v5862 = vadd.f32 %v5860, %v5861
    %v5863 = vsel %vm5589, %v5794, 0.0
    %v5864 = vadd.f32 %v5862, %v5863
    %v5865 = vsel %vm5589, %v5795, 0.0
    %v5866 = vadd.f32 %v5864, %v5865
    %v5867 = vsel %vm5589, %v5796, 0.0
    %v5868 = vadd.f32 %v5866, %v5867
    %v5869 = vsel %vm5589, %v5797, 0.0
    %v5870 = vadd.f32 %v5868, %v5869
    %v5871 = vsel %vm5589, %v5798, 0.0
    %v5872 = vadd.f32 %v5870, %v5871
    %v5873 = vsel %vm5589, %v5799, 0.0
    %v5874 = vadd.f32 %v5872, %v5873
    %v5875 = vsel %vm5589, %v5800, 0.0
    %v5876 = vadd.f32 %v5874, %v5875
    %v5877 = vsel %vm5589, %v5801, 0.0
    %v5878 = vadd.f32 %v5876, %v5877
    %v5879 = vsel %vm5589, %v5802, 0.0
    %v5880 = vadd.f32 %v5878, %v5879
    %v5881 = vsel %vm5589, %v5803, 0.0
    %v5882 = vadd.f32 %v5880, %v5881
    %v5883 = vsel %vm5589, %v5804, 0.0
    %v5884 = vadd.f32 %v5882, %v5883
    %v5885 = vsel %vm5589, %v5805, 0.0
    %v5886 = vadd.f32 %v5884, %v5885
    %v5887 = vsel %vm5589, %v5806, 0.0
    %v5888 = vadd.f32 %v5886, %v5887
    %v5889 = vsel %vm5589, %v5807, 0.0
    %v5890 = vadd.f32 %v5888, %v5889
    %v5891 = vsel %vm5589, %v5808, 0.0
    %v5892 = vadd.f32 %v5890, %v5891
    %v5893 = vsel %vm5589, %v5809, 0.0
    %v5894 = vadd.f32 %v5892, %v5893
    %v5895 = vsel %vm5589, %v5810, 0.0
    %v5896 = vadd.f32 %v5894, %v5895
    %v5897 = vsel %vm5589, %v5811, 0.0
    %v5898 = vadd.f32 %v5896, %v5897
    %v5899 = vsel %vm5589, %v5812, 0.0
    %v5900 = vadd.f32 %v5898, %v5899
    %v5901 = vsel %vm5589, %v5813, 0.0
    %v5902 = vadd.f32 %v5900, %v5901
    %v5903 = vsel %vm5589, %v5814, 0.0
    %v5904 = vadd.f32 %v5902, %v5903
    %v5905 = vsel %vm5589, %v5815, 0.0
    %v5906 = vadd.f32 %v5904, %v5905
    %v5907 = vsel %vm5589, %v5816, 0.0
    %v5908 = vadd.f32 %v5906, %v5907
    %v5909 = vsel %vm5589, %v5817, 0.0
    %v5910 = vadd.f32 %v5908, %v5909
    %v5911 = vsel %vm5589, %v5818, 0.0
    %v5912 = vadd.f32 %v5910, %v5911
    %v5913 = vsel %vm5589, %v5819, 0.0
    %v5914 = vadd.f32 %v5912, %v5913
    %v5915 = vsel %vm5589, %v5820, 0.0
    %v5916 = vadd.f32 %v5914, %v5915
    %v5917 = vsel %vm5589, %v5821, 0.0
    %v5918 = vadd.f32 %v5916, %v5917
    %v5919 = vsel %vm5589, %v5822, 0.0
    %v5920 = vadd.f32 %v5918, %v5919
    %v5921 = vsel %vm5589, %v5823, 0.0
    %v5922 = vadd.f32 %v5920, %v5921
    %v5923 = vsel %vm5589, %v5824, 0.0
    %v5924 = vadd.f32 %v5922, %v5923
    %v5925 = vsel %vm5589, %v5825, 0.0
    %v5926 = vadd.f32 %v5924, %v5925
    %v5927 = vsel %vm5589, %v5826, 0.0
    %v5928 = vadd.f32 %v5926, %v5927
    %v5929 = vsel %vm5589, %v5827, 0.0
    %v5930 = vadd.f32 %v5928, %v5929
    %v5931 = vsel %vm5589, %v5828, 0.0
    %v5932 = vadd.f32 %v5930, %v5931
    %v5933 = vsel %vm5589, %v5829, 0.0
    %v5934 = vadd.f32 %v5932, %v5933
    %v5935 = vsel %vm5589, %v5830, 0.0
    %v5936 = vadd.f32 %v5934, %v5935
    %v5937 = vsel %vm5589, %v5831, 0.0
    %v5938 = vadd.f32 %v5936, %v5937
    %v5939 = vsel %vm5589, %v5832, 0.0
    %v5940 = vadd.f32 %v5938, %v5939
    %v5941 = vsel %vm5589, %v5833, 0.0
    %v5942 = vadd.f32 %v5940, %v5941
    %v5943 = vsel %vm5589, %v5834, 0.0
    %v5944 = vadd.f32 %v5942, %v5943
    %v5945 = vsel %vm5589, %v5835, 0.0
    %v5946 = vadd.f32 %v5944, %v5945
    %v5947 = vsel %vm5589, %v5836, 0.0
    %v5948 = vadd.f32 %v5946, %v5947
    %v5949 = vsel %vm5589, %v5837, 0.0
    %v5950 = vadd.f32 %v5948, %v5949
    %v5951 = vsel %vm5589, %v5838, 0.0
    %v5952 = vadd.f32 %v5950, %v5951
    %v5953 = vsel %vm5589, %v5839, 0.0
    %v5954 = vadd.f32 %v5952, %v5953
    %v5955 = vsel %vm5589, %v5840, 0.0
    %v5956 = vadd.f32 %v5954, %v5955
    %v5957 = vsel %vm5589, %v5841, 0.0
    %v5958 = vadd.f32 %v5956, %v5957
    %v5959 = vsel %vm5589, %v5842, 0.0
    %v5960 = vadd.f32 %v5958, %v5959
    %v5961 = vsel %vm5589, %v5843, 0.0
    %v5962 = vadd.f32 %v5960, %v5961
    %v5963 = vsel %vm5589, %v5844, 0.0
    %v5964 = vadd.f32 %v5962, %v5963
    %v5965 = vsel %vm5589, %v5845, 0.0
    %v5966 = vadd.f32 %v5964, %v5965
    %v5967 = vsel %vm5589, %v5846, 0.0
    %v5968 = vadd.f32 %v5966, %v5967
    %v5969 = vsel %vm5589, %v5847, 0.0
    %v5970 = vadd.f32 %v5968, %v5969
    %v5971 = vsel %vm5589, %v5848, 0.0
    %v5972 = vadd.f32 %v5970, %v5971
    %v5973 = vsel %vm5589, %v5849, 0.0
    %v5974 = vadd.f32 %v5972, %v5973
    %v5975 = vsel %vm5589, %v5850, 0.0
    %v5976 = vadd.f32 %v5974, %v5975
    %v5977 = vsel %vm5589, %v5851, 0.0
    %v5978 = vadd.f32 %v5976, %v5977
    %v5979 = vrot.slane %v5978, 4
    %v5980 = vadd.f32 %v5978, %v5979
    %v5981 = vrot.slane %v5980, 2
    %v5982 = vadd.f32 %v5980, %v5981
    %v5983 = vrot.slane %v5982, 1
    %v5984 = vadd.f32 %v5982, %v5983
    %v5985 = vmul.f32 %v5984, 0.001953125
    %v5986 = vadd.f32 %v5985, 1e-05
    %v5987 = vrsqrt.pop %v5986
    %v5988 = vmul.f32 %v5587, %v5987
    %v5990 = vlaneseq
    %v5991 = vshrl.u32 %v5990, 7
    %v5992 = vsub.s32 0, %v5991
    %v5993 = vrot.slane %v5988, %v5992
    %v5995 = vmul.f32 %v5724, %v5993
    %v5996 = vmul.f32 %v5725, %v5993
    %v5997 = vmul.f32 %v5726, %v5993
    %v5998 = vmul.f32 %v5727, %v5993
    %v5999 = vmul.f32 %v5728, %v5993
    %v6000 = vmul.f32 %v5729, %v5993
    %v6001 = vmul.f32 %v5730, %v5993
    %v6002 = vmul.f32 %v5731, %v5993
    %v6003 = vmul.f32 %v5732, %v5993
    %v6004 = vmul.f32 %v5733, %v5993
    %v6005 = vmul.f32 %v5734, %v5993
    %v6006 = vmul.f32 %v5735, %v5993
    %v6007 = vmul.f32 %v5736, %v5993
    %v6008 = vmul.f32 %v5737, %v5993
    %v6009 = vmul.f32 %v5738, %v5993
    %v6010 = vmul.f32 %v5739, %v5993
    %v6011 = vmul.f32 %v5740, %v5993
    %v6012 = vmul.f32 %v5741, %v5993
    %v6013 = vmul.f32 %v5742, %v5993
    %v6014 = vmul.f32 %v5743, %v5993
    %v6015 = vmul.f32 %v5744, %v5993
    %v6016 = vmul.f32 %v5745, %v5993
    %v6017 = vmul.f32 %v5746, %v5993
    %v6018 = vmul.f32 %v5747, %v5993
    %v6019 = vmul.f32 %v5748, %v5993
    %v6020 = vmul.f32 %v5749, %v5993
    %v6021 = vmul.f32 %v5750, %v5993
    %v6022 = vmul.f32 %v5751, %v5993
    %v6023 = vmul.f32 %v5752, %v5993
    %v6024 = vmul.f32 %v5753, %v5993
    %v6025 = vmul.f32 %v5754, %v5993
    %v6026 = vmul.f32 %v5755, %v5993
    %v6027 = vmul.f32 %v5756, %v5993
    %v6028 = vmul.f32 %v5757, %v5993
    %v6029 = vmul.f32 %v5758, %v5993
    %v6030 = vmul.f32 %v5759, %v5993
    %v6031 = vmul.f32 %v5760, %v5993
    %v6032 = vmul.f32 %v5761, %v5993
    %v6033 = vmul.f32 %v5762, %v5993
    %v6034 = vmul.f32 %v5763, %v5993
    %v6035 = vmul.f32 %v5764, %v5993
    %v6036 = vmul.f32 %v5765, %v5993
    %v6037 = vmul.f32 %v5766, %v5993
    %v6038 = vmul.f32 %v5767, %v5993
    %v6039 = vmul.f32 %v5768, %v5993
    %v6040 = vmul.f32 %v5769, %v5993
    %v6041 = vmul.f32 %v5770, %v5993
    %v6042 = vmul.f32 %v5771, %v5993
    %v6043 = vmul.f32 %v5772, %v5993
    %v6044 = vmul.f32 %v5773, %v5993
    %v6045 = vmul.f32 %v5774, %v5993
    %v6046 = vmul.f32 %v5775, %v5993
    %v6047 = vmul.f32 %v5776, %v5993
    %v6048 = vmul.f32 %v5777, %v5993
    %v6049 = vmul.f32 %v5778, %v5993
    %v6050 = vmul.f32 %v5779, %v5993
    %v6051 = vmul.f32 %v5780, %v5993
    %v6052 = vmul.f32 %v5781, %v5993
    %v6053 = vmul.f32 %v5782, %v5993
    %v6054 = vmul.f32 %v5783, %v5993
    %v6055 = vmul.f32 %v5784, %v5993
    %v6056 = vmul.f32 %v5785, %v5993
    %v6057 = vmul.f32 %v5786, %v5993
    %v6058 = vmul.f32 %v5787, %v5993
    %v6060 = vlaneseq
    %v6061 = vshrl.u32 %v6060, 7
    %v6062 = vsub.s32 0, %v6061
    %v6063 = vrot.slane %v5588, %v6062
    %v6065 = vadd.f32 %v5995, %v6063
    %v6066 = vadd.f32 %v5996, %v6063
    %v6067 = vadd.f32 %v5997, %v6063
    %v6068 = vadd.f32 %v5998, %v6063
    %v6069 = vadd.f32 %v5999, %v6063
    %v6070 = vadd.f32 %v6000, %v6063
    %v6071 = vadd.f32 %v6001, %v6063
    %v6072 = vadd.f32 %v6002, %v6063
    %v6073 = vadd.f32 %v6003, %v6063
    %v6074 = vadd.f32 %v6004, %v6063
    %v6075 = vadd.f32 %v6005, %v6063
    %v6076 = vadd.f32 %v6006, %v6063
    %v6077 = vadd.f32 %v6007, %v6063
    %v6078 = vadd.f32 %v6008, %v6063
    %v6079 = vadd.f32 %v6009, %v6063
    %v6080 = vadd.f32 %v6010, %v6063
    %v6081 = vadd.f32 %v6011, %v6063
    %v6082 = vadd.f32 %v6012, %v6063
    %v6083 = vadd.f32 %v6013, %v6063
    %v6084 = vadd.f32 %v6014, %v6063
    %v6085 = vadd.f32 %v6015, %v6063
    %v6086 = vadd.f32 %v6016, %v6063
    %v6087 = vadd.f32 %v6017, %v6063
    %v6088 = vadd.f32 %v6018, %v6063
    %v6089 = vadd.f32 %v6019, %v6063
    %v6090 = vadd.f32 %v6020, %v6063
    %v6091 = vadd.f32 %v6021, %v6063
    %v6092 = vadd.f32 %v6022, %v6063
    %v6093 = vadd.f32 %v6023, %v6063
    %v6094 = vadd.f32 %v6024, %v6063
    %v6095 = vadd.f32 %v6025, %v6063
    %v6096 = vadd.f32 %v6026, %v6063
    %v6097 = vadd.f32 %v6027, %v6063
    %v6098 = vadd.f32 %v6028, %v6063
    %v6099 = vadd.f32 %v6029, %v6063
    %v6100 = vadd.f32 %v6030, %v6063
    %v6101 = vadd.f32 %v6031, %v6063
    %v6102 = vadd.f32 %v6032, %v6063
    %v6103 = vadd.f32 %v6033, %v6063
    %v6104 = vadd.f32 %v6034, %v6063
    %v6105 = vadd.f32 %v6035, %v6063
    %v6106 = vadd.f32 %v6036, %v6063
    %v6107 = vadd.f32 %v6037, %v6063
    %v6108 = vadd.f32 %v6038, %v6063
    %v6109 = vadd.f32 %v6039, %v6063
    %v6110 = vadd.f32 %v6040, %v6063
    %v6111 = vadd.f32 %v6041, %v6063
    %v6112 = vadd.f32 %v6042, %v6063
    %v6113 = vadd.f32 %v6043, %v6063
    %v6114 = vadd.f32 %v6044, %v6063
    %v6115 = vadd.f32 %v6045, %v6063
    %v6116 = vadd.f32 %v6046, %v6063
    %v6117 = vadd.f32 %v6047, %v6063
    %v6118 = vadd.f32 %v6048, %v6063
    %v6119 = vadd.f32 %v6049, %v6063
    %v6120 = vadd.f32 %v6050, %v6063
    %v6121 = vadd.f32 %v6051, %v6063
    %v6122 = vadd.f32 %v6052, %v6063
    %v6123 = vadd.f32 %v6053, %v6063
    %v6124 = vadd.f32 %v6054, %v6063
    %v6125 = vadd.f32 %v6055, %v6063
    %v6126 = vadd.f32 %v6056, %v6063
    %v6127 = vadd.f32 %v6057, %v6063
    %v6128 = vadd.f32 %v6058, %v6063
    %v6129 = vmax.f32 %v6065, 0.0
    %v6130 = vmax.f32 %v6066, 0.0
    %v6131 = vmax.f32 %v6067, 0.0
    %v6132 = vmax.f32 %v6068, 0.0
    %v6133 = vmax.f32 %v6069, 0.0
    %v6134 = vmax.f32 %v6070, 0.0
    %v6135 = vmax.f32 %v6071, 0.0
    %v6136 = vmax.f32 %v6072, 0.0
    %v6137 = vmax.f32 %v6073, 0.0
    %v6138 = vmax.f32 %v6074, 0.0
    %v6139 = vmax.f32 %v6075, 0.0
    %v6140 = vmax.f32 %v6076, 0.0
    %v6141 = vmax.f32 %v6077, 0.0
    %v6142 = vmax.f32 %v6078, 0.0
    %v6143 = vmax.f32 %v6079, 0.0
    %v6144 = vmax.f32 %v6080, 0.0
    %v6145 = vmax.f32 %v6081, 0.0
    %v6146 = vmax.f32 %v6082, 0.0
    %v6147 = vmax.f32 %v6083, 0.0
    %v6148 = vmax.f32 %v6084, 0.0
    %v6149 = vmax.f32 %v6085, 0.0
    %v6150 = vmax.f32 %v6086, 0.0
    %v6151 = vmax.f32 %v6087, 0.0
    %v6152 = vmax.f32 %v6088, 0.0
    %v6153 = vmax.f32 %v6089, 0.0
    %v6154 = vmax.f32 %v6090, 0.0
    %v6155 = vmax.f32 %v6091, 0.0
    %v6156 = vmax.f32 %v6092, 0.0
    %v6157 = vmax.f32 %v6093, 0.0
    %v6158 = vmax.f32 %v6094, 0.0
    %v6159 = vmax.f32 %v6095, 0.0
    %v6160 = vmax.f32 %v6096, 0.0
    %v6161 = vmax.f32 %v6097, 0.0
    %v6162 = vmax.f32 %v6098, 0.0
    %v6163 = vmax.f32 %v6099, 0.0
    %v6164 = vmax.f32 %v6100, 0.0
    %v6165 = vmax.f32 %v6101, 0.0
    %v6166 = vmax.f32 %v6102, 0.0
    %v6167 = vmax.f32 %v6103, 0.0
    %v6168 = vmax.f32 %v6104, 0.0
    %v6169 = vmax.f32 %v6105, 0.0
    %v6170 = vmax.f32 %v6106, 0.0
    %v6171 = vmax.f32 %v6107, 0.0
    %v6172 = vmax.f32 %v6108, 0.0
    %v6173 = vmax.f32 %v6109, 0.0
    %v6174 = vmax.f32 %v6110, 0.0
    %v6175 = vmax.f32 %v6111, 0.0
    %v6176 = vmax.f32 %v6112, 0.0
    %v6177 = vmax.f32 %v6113, 0.0
    %v6178 = vmax.f32 %v6114, 0.0
    %v6179 = vmax.f32 %v6115, 0.0
    %v6180 = vmax.f32 %v6116, 0.0
    %v6181 = vmax.f32 %v6117, 0.0
    %v6182 = vmax.f32 %v6118, 0.0
    %v6183 = vmax.f32 %v6119, 0.0
    %v6184 = vmax.f32 %v6120, 0.0
    %v6185 = vmax.f32 %v6121, 0.0
    %v6186 = vmax.f32 %v6122, 0.0
    %v6187 = vmax.f32 %v6123, 0.0
    %v6188 = vmax.f32 %v6124, 0.0
    %v6189 = vmax.f32 %v6125, 0.0
    %v6190 = vmax.f32 %v6126, 0.0
    %v6191 = vmax.f32 %v6127, 0.0
    %v6192 = vmax.f32 %v6128, 0.0
    %v6193 = vld [vmem:[%s8] sm:$0xff]
    %v6194 = vld [vmem:[%s8 + $0x8] sm:$0x1]
    %v6257 = vrot.slane %v6129, 7
    %v6258 = vrot.slane %v6130, 7
    %v6259 = vsel %vm1641, %v6257, %v6258
    %v6260 = vrot.slane %v6131, 7
    %v6261 = vsel %vm1641, %v6258, %v6260
    %v6262 = vrot.slane %v6132, 7
    %v6263 = vsel %vm1641, %v6260, %v6262
    %v6264 = vrot.slane %v6133, 7
    %v6265 = vsel %vm1641, %v6262, %v6264
    %v6266 = vrot.slane %v6134, 7
    %v6267 = vsel %vm1641, %v6264, %v6266
    %v6268 = vrot.slane %v6135, 7
    %v6269 = vsel %vm1641, %v6266, %v6268
    %v6270 = vrot.slane %v6136, 7
    %v6271 = vsel %vm1641, %v6268, %v6270
    %v6272 = vrot.slane %v6137, 7
    %v6273 = vsel %vm1641, %v6270, %v6272
    %v6274 = vrot.slane %v6138, 7
    %v6275 = vsel %vm1641, %v6272, %v6274
    %v6276 = vrot.slane %v6139, 7
    %v6277 = vsel %vm1641, %v6274, %v6276
    %v6278 = vrot.slane %v6140, 7
    %v6279 = vsel %vm1641, %v6276, %v6278
    %v6280 = vrot.slane %v6141, 7
    %v6281 = vsel %vm1641, %v6278, %v6280
    %v6282 = vrot.slane %v6142, 7
    %v6283 = vsel %vm1641, %v6280, %v6282
    %v6284 = vrot.slane %v6143, 7
    %v6285 = vsel %vm1641, %v6282, %v6284
    %v6286 = vrot.slane %v6144, 7
    %v6287 = vsel %vm1641, %v6284, %v6286
    %v6288 = vrot.slane %v6145, 7
    %v6289 = vsel %vm1641, %v6286, %v6288
    %v6290 = vrot.slane %v6146, 7
    %v6291 = vsel %vm1641, %v6288, %v6290
    %v6292 = vrot.slane %v6147, 7
    %v6293 = vsel %vm1641, %v6290, %v6292
    %v6294 = vrot.slane %v6148, 7
    %v6295 = vsel %vm1641, %v6292, %v6294
    %v6296 = vrot.slane %v6149, 7
    %v6297 = vsel %vm1641, %v6294, %v6296
    %v6298 = vrot.slane %v6150, 7
    %v6299 = vsel %vm1641, %v6296, %v6298
    %v6300 = vrot.slane %v6151, 7
    %v6301 = vsel %vm1641, %v6298, %v6300
    %v6302 = vrot.slane %v6152, 7
    %v6303 = vsel %vm1641, %v6300, %v6302
    %v6304 = vrot.slane %v6153, 7
    %v6305 = vsel %vm1641, %v6302, %v6304
    %v6306 = vrot.slane %v6154, 7
    %v6307 = vsel %vm1641, %v6304, %v6306
    %v6308 = vrot.slane %v6155, 7
    %v6309 = vsel %vm1641, %v6306, %v6308
    %v6310 = vrot.slane %v6156, 7
    %v6311 = vsel %vm1641, %v6308, %v6310
    %v6312 = vrot.slane %v6157, 7
    %v6313 = vsel %vm1641, %v6310, %v6312
    %v6314 = vrot.slane %v6158, 7
    %v6315 = vsel %vm1641, %v6312, %v6314
    %v6316 = vrot.slane %v6159, 7
    %v6317 = vsel %vm1641, %v6314, %v6316
    %v6318 = vrot.slane %v6160, 7
    %v6319 = vsel %vm1641, %v6316, %v6318
    %v6320 = vrot.slane %v6161, 7
    %v6321 = vsel %vm1641, %v6318, %v6320
    %v6322 = vrot.slane %v6162, 7
    %v6323 = vsel %vm1641, %v6320, %v6322
    %v6324 = vrot.slane %v6163, 7
    %v6325 = vsel %vm1641, %v6322, %v6324
    %v6326 = vrot.slane %v6164, 7
    %v6327 = vsel %vm1641, %v6324, %v6326
    %v6328 = vrot.slane %v6165, 7
    %v6329 = vsel %vm1641, %v6326, %v6328
    %v6330 = vrot.slane %v6166, 7
    %v6331 = vsel %vm1641, %v6328, %v6330
    %v6332 = vrot.slane %v6167, 7
    %v6333 = vsel %vm1641, %v6330, %v6332
    %v6334 = vrot.slane %v6168, 7
    %v6335 = vsel %vm1641, %v6332, %v6334
    %v6336 = vrot.slane %v6169, 7
    %v6337 = vsel %vm1641, %v6334, %v6336
    %v6338 = vrot.slane %v6170, 7
    %v6339 = vsel %vm1641, %v6336, %v6338
    %v6340 = vrot.slane %v6171, 7
    %v6341 = vsel %vm1641, %v6338, %v6340
    %v6342 = vrot.slane %v6172, 7
    %v6343 = vsel %vm1641, %v6340, %v6342
    %v6344 = vrot.slane %v6173, 7
    %v6345 = vsel %vm1641, %v6342, %v6344
    %v6346 = vrot.slane %v6174, 7
    %v6347 = vsel %vm1641, %v6344, %v6346
    %v6348 = vrot.slane %v6175, 7
    %v6349 = vsel %vm1641, %v6346, %v6348
    %v6350 = vrot.slane %v6176, 7
    %v6351 = vsel %vm1641, %v6348, %v6350
    %v6352 = vrot.slane %v6177, 7
    %v6353 = vsel %vm1641, %v6350, %v6352
    %v6354 = vrot.slane %v6178, 7
    %v6355 = vsel %vm1641, %v6352, %v6354
    %v6356 = vrot.slane %v6179, 7
    %v6357 = vsel %vm1641, %v6354, %v6356
    %v6358 = vrot.slane %v6180, 7
    %v6359 = vsel %vm1641, %v6356, %v6358
    %v6360 = vrot.slane %v6181, 7
    %v6361 = vsel %vm1641, %v6358, %v6360
    %v6362 = vrot.slane %v6182, 7
    %v6363 = vsel %vm1641, %v6360, %v6362
    %v6364 = vrot.slane %v6183, 7
    %v6365 = vsel %vm1641, %v6362, %v6364
    %v6366 = vrot.slane %v6184, 7
    %v6367 = vsel %vm1641, %v6364, %v6366
    %v6368 = vrot.slane %v6185, 7
    %v6369 = vsel %vm1641, %v6366, %v6368
    %v6370 = vrot.slane %v6186, 7
    %v6371 = vsel %vm1641, %v6368, %v6370
    %v6372 = vrot.slane %v6187, 7
    %v6373 = vsel %vm1641, %v6370, %v6372
    %v6374 = vrot.slane %v6188, 7
    %v6375 = vsel %vm1641, %v6372, %v6374
    %v6376 = vrot.slane %v6189, 7
    %v6377 = vsel %vm1641, %v6374, %v6376
    %v6378 = vrot.slane %v6190, 7
    %v6379 = vsel %vm1641, %v6376, %v6378
    %v6442 = vsel %vm1641, 0.0, %v6257
    %v6443 = vsel %vm2079, %v6442, 0.0
    %v6444 = vsel %vm2080, %v6259, 0.0
    %v6445 = vsel %vm2081, %v6261, 0.0
    %v6446 = vsel %vm2082, %v6263, 0.0
    %v6447 = vsel %vm2083, %v6265, 0.0
    %v6448 = vsel %vm2084, %v6267, 0.0
    %v6449 = vsel %vm2085, %v6269, 0.0
    %v6450 = vsel %vm2086, %v6271, 0.0
    %v6451 = vsel %vm2087, %v6273, 0.0
    %v6452 = vsel %vm2088, %v6275, 0.0
    %v6453 = vsel %vm2089, %v6277, 0.0
    %v6454 = vsel %vm2090, %v6279, 0.0
    %v6455 = vsel %vm2091, %v6281, 0.0
    %v6456 = vsel %vm2092, %v6283, 0.0
    %v6457 = vsel %vm2093, %v6285, 0.0
    %v6458 = vsel %vm2094, %v6287, 0.0
    %v6459 = vsel %vm2095, %v6289, 0.0
    %v6460 = vsel %vm2096, %v6291, 0.0
    %v6461 = vsel %vm2097, %v6293, 0.0
    %v6462 = vsel %vm2098, %v6295, 0.0
    %v6463 = vsel %vm2099, %v6297, 0.0
    %v6464 = vsel %vm2100, %v6299, 0.0
    %v6465 = vsel %vm2101, %v6301, 0.0
    %v6466 = vsel %vm2102, %v6303, 0.0
    %v6467 = vsel %vm2103, %v6305, 0.0
    %v6468 = vsel %vm2104, %v6307, 0.0
    %v6469 = vsel %vm2105, %v6309, 0.0
    %v6470 = vsel %vm2106, %v6311, 0.0
    %v6471 = vsel %vm2107, %v6313, 0.0
    %v6472 = vsel %vm2108, %v6315, 0.0
    %v6473 = vsel %vm2109, %v6317, 0.0
    %v6474 = vsel %vm2110, %v6319, 0.0
    %v6475 = vsel %vm2111, %v6321, 0.0
    %v6476 = vsel %vm2112, %v6323, 0.0
    %v6477 = vsel %vm2113, %v6325, 0.0
    %v6478 = vsel %vm2114, %v6327, 0.0
    %v6479 = vsel %vm2115, %v6329, 0.0
    %v6480 = vsel %vm2116, %v6331, 0.0
    %v6481 = vsel %vm2117, %v6333, 0.0
    %v6482 = vsel %vm2118, %v6335, 0.0
    %v6483 = vsel %vm2119, %v6337, 0.0
    %v6484 = vsel %vm2120, %v6339, 0.0
    %v6485 = vsel %vm2121, %v6341, 0.0
    %v6486 = vsel %vm2122, %v6343, 0.0
    %v6487 = vsel %vm2123, %v6345, 0.0
    %v6488 = vsel %vm2124, %v6347, 0.0
    %v6489 = vsel %vm2125, %v6349, 0.0
    %v6490 = vsel %vm2126, %v6351, 0.0
    %v6491 = vsel %vm2127, %v6353, 0.0
    %v6492 = vsel %vm2128, %v6355, 0.0
    %v6493 = vsel %vm2129, %v6357, 0.0
    %v6494 = vsel %vm2130, %v6359, 0.0
    %v6495 = vsel %vm2131, %v6361, 0.0
    %v6496 = vsel %vm2132, %v6363, 0.0
    %v6497 = vsel %vm2133, %v6365, 0.0
    %v6498 = vsel %vm2134, %v6367, 0.0
    %v6499 = vsel %vm2135, %v6369, 0.0
    %v6500 = vsel %vm2136, %v6371, 0.0
    %v6501 = vsel %vm2137, %v6373, 0.0
    %v6502 = vsel %vm2138, %v6375, 0.0
    %v6503 = vsel %vm2139, %v6377, 0.0
    %v6504 = vsel %vm2140, %v6379, 0.0
    %v6505 = vlaneseq
    %v6506 = vshrl.u32 %v6505, 7
    %v6507 = vsub.s32 0, %v6506
    %v6508 = vrot.slane %v6193, %v6507
    %v6509 = vmul.f32 %v6508, 0.0
    %v6510 = vmul.f32 %v6443, %v6508
    %v6511 = vmul.f32 %v6444, %v6508
    %v6512 = vmul.f32 %v6445, %v6508
    %v6513 = vmul.f32 %v6446, %v6508
    %v6514 = vmul.f32 %v6447, %v6508
    %v6515 = vmul.f32 %v6448, %v6508
    %v6516 = vmul.f32 %v6449, %v6508
    %v6517 = vmul.f32 %v6450, %v6508
    %v6518 = vmul.f32 %v6451, %v6508
    %v6519 = vmul.f32 %v6452, %v6508
    %v6520 = vmul.f32 %v6453, %v6508
    %v6521 = vmul.f32 %v6454, %v6508
    %v6522 = vmul.f32 %v6455, %v6508
    %v6523 = vmul.f32 %v6456, %v6508
    %v6524 = vmul.f32 %v6457, %v6508
    %v6525 = vmul.f32 %v6458, %v6508
    %v6526 = vmul.f32 %v6459, %v6508
    %v6527 = vmul.f32 %v6460, %v6508
    %v6528 = vmul.f32 %v6461, %v6508
    %v6529 = vmul.f32 %v6462, %v6508
    %v6530 = vmul.f32 %v6463, %v6508
    %v6531 = vmul.f32 %v6464, %v6508
    %v6532 = vmul.f32 %v6465, %v6508
    %v6533 = vmul.f32 %v6466, %v6508
    %v6534 = vmul.f32 %v6467, %v6508
    %v6535 = vmul.f32 %v6468, %v6508
    %v6536 = vmul.f32 %v6469, %v6508
    %v6537 = vmul.f32 %v6470, %v6508
    %v6538 = vmul.f32 %v6471, %v6508
    %v6539 = vmul.f32 %v6472, %v6508
    %v6540 = vmul.f32 %v6473, %v6508
    %v6541 = vmul.f32 %v6474, %v6508
    %v6542 = vmul.f32 %v6475, %v6508
    %v6543 = vmul.f32 %v6476, %v6508
    %v6544 = vmul.f32 %v6477, %v6508
    %v6545 = vmul.f32 %v6478, %v6508
    %v6546 = vmul.f32 %v6479, %v6508
    %v6547 = vmul.f32 %v6480, %v6508
    %v6548 = vmul.f32 %v6481, %v6508
    %v6549 = vmul.f32 %v6482, %v6508
    %v6550 = vmul.f32 %v6483, %v6508
    %v6551 = vmul.f32 %v6484, %v6508
    %v6552 = vmul.f32 %v6485, %v6508
    %v6553 = vmul.f32 %v6486, %v6508
    %v6554 = vmul.f32 %v6487, %v6508
    %v6555 = vmul.f32 %v6488, %v6508
    %v6556 = vmul.f32 %v6489, %v6508
    %v6557 = vmul.f32 %v6490, %v6508
    %v6558 = vmul.f32 %v6491, %v6508
    %v6559 = vmul.f32 %v6492, %v6508
    %v6560 = vmul.f32 %v6493, %v6508
    %v6561 = vmul.f32 %v6494, %v6508
    %v6562 = vmul.f32 %v6495, %v6508
    %v6563 = vmul.f32 %v6496, %v6508
    %v6564 = vmul.f32 %v6497, %v6508
    %v6565 = vmul.f32 %v6498, %v6508
    %v6566 = vmul.f32 %v6499, %v6508
    %v6567 = vmul.f32 %v6500, %v6508
    %v6568 = vmul.f32 %v6501, %v6508
    %v6569 = vmul.f32 %v6502, %v6508
    %v6570 = vmul.f32 %v6503, %v6508
    %v6571 = vmul.f32 %v6504, %v6508
    %v6572 = vsel %vm2332, %v6129, 0.0
    %v6573 = vsel %vm2333, %v6130, 0.0
    %v6574 = vsel %vm2334, %v6131, 0.0
    %v6575 = vsel %vm2335, %v6132, 0.0
    %v6576 = vsel %vm2336, %v6133, 0.0
    %v6577 = vsel %vm2337, %v6134, 0.0
    %v6578 = vsel %vm2338, %v6135, 0.0
    %v6579 = vsel %vm2339, %v6136, 0.0
    %v6580 = vsel %vm2340, %v6137, 0.0
    %v6581 = vsel %vm2341, %v6138, 0.0
    %v6582 = vsel %vm2342, %v6139, 0.0
    %v6583 = vsel %vm2343, %v6140, 0.0
    %v6584 = vsel %vm2344, %v6141, 0.0
    %v6585 = vsel %vm2345, %v6142, 0.0
    %v6586 = vsel %vm2346, %v6143, 0.0
    %v6587 = vsel %vm2347, %v6144, 0.0
    %v6588 = vsel %vm2348, %v6145, 0.0
    %v6589 = vsel %vm2349, %v6146, 0.0
    %v6590 = vsel %vm2350, %v6147, 0.0
    %v6591 = vsel %vm2351, %v6148, 0.0
    %v6592 = vsel %vm2352, %v6149, 0.0
    %v6593 = vsel %vm2353, %v6150, 0.0
    %v6594 = vsel %vm2354, %v6151, 0.0
    %v6595 = vsel %vm2355, %v6152, 0.0
    %v6596 = vsel %vm2356, %v6153, 0.0
    %v6597 = vsel %vm2357, %v6154, 0.0
    %v6598 = vsel %vm2358, %v6155, 0.0
    %v6599 = vsel %vm2359, %v6156, 0.0
    %v6600 = vsel %vm2360, %v6157, 0.0
    %v6601 = vsel %vm2361, %v6158, 0.0
    %v6602 = vsel %vm2362, %v6159, 0.0
    %v6603 = vsel %vm2363, %v6160, 0.0
    %v6604 = vsel %vm2364, %v6161, 0.0
    %v6605 = vsel %vm2365, %v6162, 0.0
    %v6606 = vsel %vm2366, %v6163, 0.0
    %v6607 = vsel %vm2367, %v6164, 0.0
    %v6608 = vsel %vm2368, %v6165, 0.0
    %v6609 = vsel %vm2369, %v6166, 0.0
    %v6610 = vsel %vm2370, %v6167, 0.0
    %v6611 = vsel %vm2371, %v6168, 0.0
    %v6612 = vsel %vm2372, %v6169, 0.0
    %v6613 = vsel %vm2373, %v6170, 0.0
    %v6614 = vsel %vm2374, %v6171, 0.0
    %v6615 = vsel %vm2375, %v6172, 0.0
    %v6616 = vsel %vm2376, %v6173, 0.0
    %v6617 = vsel %vm2377, %v6174, 0.0
    %v6618 = vsel %vm2378, %v6175, 0.0
    %v6619 = vsel %vm2379, %v6176, 0.0
    %v6620 = vsel %vm2380, %v6177, 0.0
    %v6621 = vsel %vm2381, %v6178, 0.0
    %v6622 = vsel %vm2382, %v6179, 0.0
    %v6623 = vsel %vm2383, %v6180, 0.0
    %v6624 = vsel %vm2384, %v6181, 0.0
    %v6625 = vsel %vm2385, %v6182, 0.0
    %v6626 = vsel %vm2386, %v6183, 0.0
    %v6627 = vsel %vm2387, %v6184, 0.0
    %v6628 = vsel %vm2388, %v6185, 0.0
    %v6629 = vsel %vm2389, %v6186, 0.0
    %v6630 = vsel %vm2390, %v6187, 0.0
    %v6631 = vsel %vm2391, %v6188, 0.0
    %v6632 = vsel %vm2392, %v6189, 0.0
    %v6633 = vsel %vm2393, %v6190, 0.0
    %v6634 = vlaneseq
    %v6635 = vshrl.u32 %v6634, 7
    %v6636 = vsub.s32 1, %v6635
    %v6637 = vrot.slane %v6193, %v6636
    %v6638 = vmul.f32 %v6637, 0.0
    %v6639 = vmul.f32 %v6572, %v6637
    %v6640 = vmul.f32 %v6573, %v6637
    %v6641 = vmul.f32 %v6574, %v6637
    %v6642 = vmul.f32 %v6575, %v6637
    %v6643 = vmul.f32 %v6576, %v6637
    %v6644 = vmul.f32 %v6577, %v6637
    %v6645 = vmul.f32 %v6578, %v6637
    %v6646 = vmul.f32 %v6579, %v6637
    %v6647 = vmul.f32 %v6580, %v6637
    %v6648 = vmul.f32 %v6581, %v6637
    %v6649 = vmul.f32 %v6582, %v6637
    %v6650 = vmul.f32 %v6583, %v6637
    %v6651 = vmul.f32 %v6584, %v6637
    %v6652 = vmul.f32 %v6585, %v6637
    %v6653 = vmul.f32 %v6586, %v6637
    %v6654 = vmul.f32 %v6587, %v6637
    %v6655 = vmul.f32 %v6588, %v6637
    %v6656 = vmul.f32 %v6589, %v6637
    %v6657 = vmul.f32 %v6590, %v6637
    %v6658 = vmul.f32 %v6591, %v6637
    %v6659 = vmul.f32 %v6592, %v6637
    %v6660 = vmul.f32 %v6593, %v6637
    %v6661 = vmul.f32 %v6594, %v6637
    %v6662 = vmul.f32 %v6595, %v6637
    %v6663 = vmul.f32 %v6596, %v6637
    %v6664 = vmul.f32 %v6597, %v6637
    %v6665 = vmul.f32 %v6598, %v6637
    %v6666 = vmul.f32 %v6599, %v6637
    %v6667 = vmul.f32 %v6600, %v6637
    %v6668 = vmul.f32 %v6601, %v6637
    %v6669 = vmul.f32 %v6602, %v6637
    %v6670 = vmul.f32 %v6603, %v6637
    %v6671 = vmul.f32 %v6604, %v6637
    %v6672 = vmul.f32 %v6605, %v6637
    %v6673 = vmul.f32 %v6606, %v6637
    %v6674 = vmul.f32 %v6607, %v6637
    %v6675 = vmul.f32 %v6608, %v6637
    %v6676 = vmul.f32 %v6609, %v6637
    %v6677 = vmul.f32 %v6610, %v6637
    %v6678 = vmul.f32 %v6611, %v6637
    %v6679 = vmul.f32 %v6612, %v6637
    %v6680 = vmul.f32 %v6613, %v6637
    %v6681 = vmul.f32 %v6614, %v6637
    %v6682 = vmul.f32 %v6615, %v6637
    %v6683 = vmul.f32 %v6616, %v6637
    %v6684 = vmul.f32 %v6617, %v6637
    %v6685 = vmul.f32 %v6618, %v6637
    %v6686 = vmul.f32 %v6619, %v6637
    %v6687 = vmul.f32 %v6620, %v6637
    %v6688 = vmul.f32 %v6621, %v6637
    %v6689 = vmul.f32 %v6622, %v6637
    %v6690 = vmul.f32 %v6623, %v6637
    %v6691 = vmul.f32 %v6624, %v6637
    %v6692 = vmul.f32 %v6625, %v6637
    %v6693 = vmul.f32 %v6626, %v6637
    %v6694 = vmul.f32 %v6627, %v6637
    %v6695 = vmul.f32 %v6628, %v6637
    %v6696 = vmul.f32 %v6629, %v6637
    %v6697 = vmul.f32 %v6630, %v6637
    %v6698 = vmul.f32 %v6631, %v6637
    %v6699 = vmul.f32 %v6632, %v6637
    %v6700 = vmul.f32 %v6633, %v6637
    %v6701 = vadd.f32 %v6509, %v6638
    %v6702 = vadd.f32 %v6510, %v6639
    %v6703 = vadd.f32 %v6511, %v6640
    %v6704 = vadd.f32 %v6512, %v6641
    %v6705 = vadd.f32 %v6513, %v6642
    %v6706 = vadd.f32 %v6514, %v6643
    %v6707 = vadd.f32 %v6515, %v6644
    %v6708 = vadd.f32 %v6516, %v6645
    %v6709 = vadd.f32 %v6517, %v6646
    %v6710 = vadd.f32 %v6518, %v6647
    %v6711 = vadd.f32 %v6519, %v6648
    %v6712 = vadd.f32 %v6520, %v6649
    %v6713 = vadd.f32 %v6521, %v6650
    %v6714 = vadd.f32 %v6522, %v6651
    %v6715 = vadd.f32 %v6523, %v6652
    %v6716 = vadd.f32 %v6524, %v6653
    %v6717 = vadd.f32 %v6525, %v6654
    %v6718 = vadd.f32 %v6526, %v6655
    %v6719 = vadd.f32 %v6527, %v6656
    %v6720 = vadd.f32 %v6528, %v6657
    %v6721 = vadd.f32 %v6529, %v6658
    %v6722 = vadd.f32 %v6530, %v6659
    %v6723 = vadd.f32 %v6531, %v6660
    %v6724 = vadd.f32 %v6532, %v6661
    %v6725 = vadd.f32 %v6533, %v6662
    %v6726 = vadd.f32 %v6534, %v6663
    %v6727 = vadd.f32 %v6535, %v6664
    %v6728 = vadd.f32 %v6536, %v6665
    %v6729 = vadd.f32 %v6537, %v6666
    %v6730 = vadd.f32 %v6538, %v6667
    %v6731 = vadd.f32 %v6539, %v6668
    %v6732 = vadd.f32 %v6540, %v6669
    %v6733 = vadd.f32 %v6541, %v6670
    %v6734 = vadd.f32 %v6542, %v6671
    %v6735 = vadd.f32 %v6543, %v6672
    %v6736 = vadd.f32 %v6544, %v6673
    %v6737 = vadd.f32 %v6545, %v6674
    %v6738 = vadd.f32 %v6546, %v6675
    %v6739 = vadd.f32 %v6547, %v6676
    %v6740 = vadd.f32 %v6548, %v6677
    %v6741 = vadd.f32 %v6549, %v6678
    %v6742 = vadd.f32 %v6550, %v6679
    %v6743 = vadd.f32 %v6551, %v6680
    %v6744 = vadd.f32 %v6552, %v6681
    %v6745 = vadd.f32 %v6553, %v6682
    %v6746 = vadd.f32 %v6554, %v6683
    %v6747 = vadd.f32 %v6555, %v6684
    %v6748 = vadd.f32 %v6556, %v6685
    %v6749 = vadd.f32 %v6557, %v6686
    %v6750 = vadd.f32 %v6558, %v6687
    %v6751 = vadd.f32 %v6559, %v6688
    %v6752 = vadd.f32 %v6560, %v6689
    %v6753 = vadd.f32 %v6561, %v6690
    %v6754 = vadd.f32 %v6562, %v6691
    %v6755 = vadd.f32 %v6563, %v6692
    %v6756 = vadd.f32 %v6564, %v6693
    %v6757 = vadd.f32 %v6565, %v6694
    %v6758 = vadd.f32 %v6566, %v6695
    %v6759 = vadd.f32 %v6567, %v6696
    %v6760 = vadd.f32 %v6568, %v6697
    %v6761 = vadd.f32 %v6569, %v6698
    %v6762 = vadd.f32 %v6570, %v6699
    %v6763 = vadd.f32 %v6571, %v6700
    %v6765 = vrot.slane %v6129, 1
    %v6766 = vrot.slane %v6130, 1
    %v6767 = vsel %vm2587, %v6765, %v6766
    %v6768 = vrot.slane %v6131, 1
    %v6769 = vsel %vm2587, %v6766, %v6768
    %v6770 = vrot.slane %v6132, 1
    %v6771 = vsel %vm2587, %v6768, %v6770
    %v6772 = vrot.slane %v6133, 1
    %v6773 = vsel %vm2587, %v6770, %v6772
    %v6774 = vrot.slane %v6134, 1
    %v6775 = vsel %vm2587, %v6772, %v6774
    %v6776 = vrot.slane %v6135, 1
    %v6777 = vsel %vm2587, %v6774, %v6776
    %v6778 = vrot.slane %v6136, 1
    %v6779 = vsel %vm2587, %v6776, %v6778
    %v6780 = vrot.slane %v6137, 1
    %v6781 = vsel %vm2587, %v6778, %v6780
    %v6782 = vrot.slane %v6138, 1
    %v6783 = vsel %vm2587, %v6780, %v6782
    %v6784 = vrot.slane %v6139, 1
    %v6785 = vsel %vm2587, %v6782, %v6784
    %v6786 = vrot.slane %v6140, 1
    %v6787 = vsel %vm2587, %v6784, %v6786
    %v6788 = vrot.slane %v6141, 1
    %v6789 = vsel %vm2587, %v6786, %v6788
    %v6790 = vrot.slane %v6142, 1
    %v6791 = vsel %vm2587, %v6788, %v6790
    %v6792 = vrot.slane %v6143, 1
    %v6793 = vsel %vm2587, %v6790, %v6792
    %v6794 = vrot.slane %v6144, 1
    %v6795 = vsel %vm2587, %v6792, %v6794
    %v6796 = vrot.slane %v6145, 1
    %v6797 = vsel %vm2587, %v6794, %v6796
    %v6798 = vrot.slane %v6146, 1
    %v6799 = vsel %vm2587, %v6796, %v6798
    %v6800 = vrot.slane %v6147, 1
    %v6801 = vsel %vm2587, %v6798, %v6800
    %v6802 = vrot.slane %v6148, 1
    %v6803 = vsel %vm2587, %v6800, %v6802
    %v6804 = vrot.slane %v6149, 1
    %v6805 = vsel %vm2587, %v6802, %v6804
    %v6806 = vrot.slane %v6150, 1
    %v6807 = vsel %vm2587, %v6804, %v6806
    %v6808 = vrot.slane %v6151, 1
    %v6809 = vsel %vm2587, %v6806, %v6808
    %v6810 = vrot.slane %v6152, 1
    %v6811 = vsel %vm2587, %v6808, %v6810
    %v6812 = vrot.slane %v6153, 1
    %v6813 = vsel %vm2587, %v6810, %v6812
    %v6814 = vrot.slane %v6154, 1
    %v6815 = vsel %vm2587, %v6812, %v6814
    %v6816 = vrot.slane %v6155, 1
    %v6817 = vsel %vm2587, %v6814, %v6816
    %v6818 = vrot.slane %v6156, 1
    %v6819 = vsel %vm2587, %v6816, %v6818
    %v6820 = vrot.slane %v6157, 1
    %v6821 = vsel %vm2587, %v6818, %v6820
    %v6822 = vrot.slane %v6158, 1
    %v6823 = vsel %vm2587, %v6820, %v6822
    %v6824 = vrot.slane %v6159, 1
    %v6825 = vsel %vm2587, %v6822, %v6824
    %v6826 = vrot.slane %v6160, 1
    %v6827 = vsel %vm2587, %v6824, %v6826
    %v6828 = vrot.slane %v6161, 1
    %v6829 = vsel %vm2587, %v6826, %v6828
    %v6830 = vrot.slane %v6162, 1
    %v6831 = vsel %vm2587, %v6828, %v6830
    %v6832 = vrot.slane %v6163, 1
    %v6833 = vsel %vm2587, %v6830, %v6832
    %v6834 = vrot.slane %v6164, 1
    %v6835 = vsel %vm2587, %v6832, %v6834
    %v6836 = vrot.slane %v6165, 1
    %v6837 = vsel %vm2587, %v6834, %v6836
    %v6838 = vrot.slane %v6166, 1
    %v6839 = vsel %vm2587, %v6836, %v6838
    %v6840 = vrot.slane %v6167, 1
    %v6841 = vsel %vm2587, %v6838, %v6840
    %v6842 = vrot.slane %v6168, 1
    %v6843 = vsel %vm2587, %v6840, %v6842
    %v6844 = vrot.slane %v6169, 1
    %v6845 = vsel %vm2587, %v6842, %v6844
    %v6846 = vrot.slane %v6170, 1
    %v6847 = vsel %vm2587, %v6844, %v6846
    %v6848 = vrot.slane %v6171, 1
    %v6849 = vsel %vm2587, %v6846, %v6848
    %v6850 = vrot.slane %v6172, 1
    %v6851 = vsel %vm2587, %v6848, %v6850
    %v6852 = vrot.slane %v6173, 1
    %v6853 = vsel %vm2587, %v6850, %v6852
    %v6854 = vrot.slane %v6174, 1
    %v6855 = vsel %vm2587, %v6852, %v6854
    %v6856 = vrot.slane %v6175, 1
    %v6857 = vsel %vm2587, %v6854, %v6856
    %v6858 = vrot.slane %v6176, 1
    %v6859 = vsel %vm2587, %v6856, %v6858
    %v6860 = vrot.slane %v6177, 1
    %v6861 = vsel %vm2587, %v6858, %v6860
    %v6862 = vrot.slane %v6178, 1
    %v6863 = vsel %vm2587, %v6860, %v6862
    %v6864 = vrot.slane %v6179, 1
    %v6865 = vsel %vm2587, %v6862, %v6864
    %v6866 = vrot.slane %v6180, 1
    %v6867 = vsel %vm2587, %v6864, %v6866
    %v6868 = vrot.slane %v6181, 1
    %v6869 = vsel %vm2587, %v6866, %v6868
    %v6870 = vrot.slane %v6182, 1
    %v6871 = vsel %vm2587, %v6868, %v6870
    %v6872 = vrot.slane %v6183, 1
    %v6873 = vsel %vm2587, %v6870, %v6872
    %v6874 = vrot.slane %v6184, 1
    %v6875 = vsel %vm2587, %v6872, %v6874
    %v6876 = vrot.slane %v6185, 1
    %v6877 = vsel %vm2587, %v6874, %v6876
    %v6878 = vrot.slane %v6186, 1
    %v6879 = vsel %vm2587, %v6876, %v6878
    %v6880 = vrot.slane %v6187, 1
    %v6881 = vsel %vm2587, %v6878, %v6880
    %v6882 = vrot.slane %v6188, 1
    %v6883 = vsel %vm2587, %v6880, %v6882
    %v6884 = vrot.slane %v6189, 1
    %v6885 = vsel %vm2587, %v6882, %v6884
    %v6886 = vrot.slane %v6190, 1
    %v6887 = vsel %vm2587, %v6884, %v6886
    %v6888 = vrot.slane %v6191, 1
    %v6889 = vsel %vm2587, %v6886, %v6888
    %v6953 = vsel %vm2587, 0.0, %v6765
    %v6954 = vsel %vm2967, %v6953, 0.0
    %v6955 = vsel %vm2968, %v6767, 0.0
    %v6956 = vsel %vm2969, %v6769, 0.0
    %v6957 = vsel %vm2970, %v6771, 0.0
    %v6958 = vsel %vm2971, %v6773, 0.0
    %v6959 = vsel %vm2972, %v6775, 0.0
    %v6960 = vsel %vm2973, %v6777, 0.0
    %v6961 = vsel %vm2974, %v6779, 0.0
    %v6962 = vsel %vm2975, %v6781, 0.0
    %v6963 = vsel %vm2976, %v6783, 0.0
    %v6964 = vsel %vm2977, %v6785, 0.0
    %v6965 = vsel %vm2978, %v6787, 0.0
    %v6966 = vsel %vm2979, %v6789, 0.0
    %v6967 = vsel %vm2980, %v6791, 0.0
    %v6968 = vsel %vm2981, %v6793, 0.0
    %v6969 = vsel %vm2982, %v6795, 0.0
    %v6970 = vsel %vm2983, %v6797, 0.0
    %v6971 = vsel %vm2984, %v6799, 0.0
    %v6972 = vsel %vm2985, %v6801, 0.0
    %v6973 = vsel %vm2986, %v6803, 0.0
    %v6974 = vsel %vm2987, %v6805, 0.0
    %v6975 = vsel %vm2988, %v6807, 0.0
    %v6976 = vsel %vm2989, %v6809, 0.0
    %v6977 = vsel %vm2990, %v6811, 0.0
    %v6978 = vsel %vm2991, %v6813, 0.0
    %v6979 = vsel %vm2992, %v6815, 0.0
    %v6980 = vsel %vm2993, %v6817, 0.0
    %v6981 = vsel %vm2994, %v6819, 0.0
    %v6982 = vsel %vm2995, %v6821, 0.0
    %v6983 = vsel %vm2996, %v6823, 0.0
    %v6984 = vsel %vm2997, %v6825, 0.0
    %v6985 = vsel %vm2998, %v6827, 0.0
    %v6986 = vsel %vm2999, %v6829, 0.0
    %v6987 = vsel %vm3000, %v6831, 0.0
    %v6988 = vsel %vm3001, %v6833, 0.0
    %v6989 = vsel %vm3002, %v6835, 0.0
    %v6990 = vsel %vm3003, %v6837, 0.0
    %v6991 = vsel %vm3004, %v6839, 0.0
    %v6992 = vsel %vm3005, %v6841, 0.0
    %v6993 = vsel %vm3006, %v6843, 0.0
    %v6994 = vsel %vm3007, %v6845, 0.0
    %v6995 = vsel %vm3008, %v6847, 0.0
    %v6996 = vsel %vm3009, %v6849, 0.0
    %v6997 = vsel %vm3010, %v6851, 0.0
    %v6998 = vsel %vm3011, %v6853, 0.0
    %v6999 = vsel %vm3012, %v6855, 0.0
    %v7000 = vsel %vm3013, %v6857, 0.0
    %v7001 = vsel %vm3014, %v6859, 0.0
    %v7002 = vsel %vm3015, %v6861, 0.0
    %v7003 = vsel %vm3016, %v6863, 0.0
    %v7004 = vsel %vm3017, %v6865, 0.0
    %v7005 = vsel %vm3018, %v6867, 0.0
    %v7006 = vsel %vm3019, %v6869, 0.0
    %v7007 = vsel %vm3020, %v6871, 0.0
    %v7008 = vsel %vm3021, %v6873, 0.0
    %v7009 = vsel %vm3022, %v6875, 0.0
    %v7010 = vsel %vm3023, %v6877, 0.0
    %v7011 = vsel %vm3024, %v6879, 0.0
    %v7012 = vsel %vm3025, %v6881, 0.0
    %v7013 = vsel %vm3026, %v6883, 0.0
    %v7014 = vsel %vm3027, %v6885, 0.0
    %v7015 = vsel %vm3028, %v6887, 0.0
    %v7016 = vsel %vm3029, %v6889, 0.0
    %v7017 = vlaneseq
    %v7018 = vshrl.u32 %v7017, 7
    %v7019 = vsub.s32 2, %v7018
    %v7020 = vrot.slane %v6193, %v7019
    %v7021 = vmul.f32 %v7020, 0.0
    %v7022 = vmul.f32 %v6954, %v7020
    %v7023 = vmul.f32 %v6955, %v7020
    %v7024 = vmul.f32 %v6956, %v7020
    %v7025 = vmul.f32 %v6957, %v7020
    %v7026 = vmul.f32 %v6958, %v7020
    %v7027 = vmul.f32 %v6959, %v7020
    %v7028 = vmul.f32 %v6960, %v7020
    %v7029 = vmul.f32 %v6961, %v7020
    %v7030 = vmul.f32 %v6962, %v7020
    %v7031 = vmul.f32 %v6963, %v7020
    %v7032 = vmul.f32 %v6964, %v7020
    %v7033 = vmul.f32 %v6965, %v7020
    %v7034 = vmul.f32 %v6966, %v7020
    %v7035 = vmul.f32 %v6967, %v7020
    %v7036 = vmul.f32 %v6968, %v7020
    %v7037 = vmul.f32 %v6969, %v7020
    %v7038 = vmul.f32 %v6970, %v7020
    %v7039 = vmul.f32 %v6971, %v7020
    %v7040 = vmul.f32 %v6972, %v7020
    %v7041 = vmul.f32 %v6973, %v7020
    %v7042 = vmul.f32 %v6974, %v7020
    %v7043 = vmul.f32 %v6975, %v7020
    %v7044 = vmul.f32 %v6976, %v7020
    %v7045 = vmul.f32 %v6977, %v7020
    %v7046 = vmul.f32 %v6978, %v7020
    %v7047 = vmul.f32 %v6979, %v7020
    %v7048 = vmul.f32 %v6980, %v7020
    %v7049 = vmul.f32 %v6981, %v7020
    %v7050 = vmul.f32 %v6982, %v7020
    %v7051 = vmul.f32 %v6983, %v7020
    %v7052 = vmul.f32 %v6984, %v7020
    %v7053 = vmul.f32 %v6985, %v7020
    %v7054 = vmul.f32 %v6986, %v7020
    %v7055 = vmul.f32 %v6987, %v7020
    %v7056 = vmul.f32 %v6988, %v7020
    %v7057 = vmul.f32 %v6989, %v7020
    %v7058 = vmul.f32 %v6990, %v7020
    %v7059 = vmul.f32 %v6991, %v7020
    %v7060 = vmul.f32 %v6992, %v7020
    %v7061 = vmul.f32 %v6993, %v7020
    %v7062 = vmul.f32 %v6994, %v7020
    %v7063 = vmul.f32 %v6995, %v7020
    %v7064 = vmul.f32 %v6996, %v7020
    %v7065 = vmul.f32 %v6997, %v7020
    %v7066 = vmul.f32 %v6998, %v7020
    %v7067 = vmul.f32 %v6999, %v7020
    %v7068 = vmul.f32 %v7000, %v7020
    %v7069 = vmul.f32 %v7001, %v7020
    %v7070 = vmul.f32 %v7002, %v7020
    %v7071 = vmul.f32 %v7003, %v7020
    %v7072 = vmul.f32 %v7004, %v7020
    %v7073 = vmul.f32 %v7005, %v7020
    %v7074 = vmul.f32 %v7006, %v7020
    %v7075 = vmul.f32 %v7007, %v7020
    %v7076 = vmul.f32 %v7008, %v7020
    %v7077 = vmul.f32 %v7009, %v7020
    %v7078 = vmul.f32 %v7010, %v7020
    %v7079 = vmul.f32 %v7011, %v7020
    %v7080 = vmul.f32 %v7012, %v7020
    %v7081 = vmul.f32 %v7013, %v7020
    %v7082 = vmul.f32 %v7014, %v7020
    %v7083 = vmul.f32 %v7015, %v7020
    %v7084 = vmul.f32 %v7016, %v7020
    %v7085 = vadd.f32 %v6701, %v7021
    %v7086 = vadd.f32 %v6701, %v7022
    %v7087 = vadd.f32 %v6702, %v7023
    %v7088 = vadd.f32 %v6703, %v7024
    %v7089 = vadd.f32 %v6704, %v7025
    %v7090 = vadd.f32 %v6705, %v7026
    %v7091 = vadd.f32 %v6706, %v7027
    %v7092 = vadd.f32 %v6707, %v7028
    %v7093 = vadd.f32 %v6708, %v7029
    %v7094 = vadd.f32 %v6709, %v7030
    %v7095 = vadd.f32 %v6710, %v7031
    %v7096 = vadd.f32 %v6711, %v7032
    %v7097 = vadd.f32 %v6712, %v7033
    %v7098 = vadd.f32 %v6713, %v7034
    %v7099 = vadd.f32 %v6714, %v7035
    %v7100 = vadd.f32 %v6715, %v7036
    %v7101 = vadd.f32 %v6716, %v7037
    %v7102 = vadd.f32 %v6717, %v7038
    %v7103 = vadd.f32 %v6718, %v7039
    %v7104 = vadd.f32 %v6719, %v7040
    %v7105 = vadd.f32 %v6720, %v7041
    %v7106 = vadd.f32 %v6721, %v7042
    %v7107 = vadd.f32 %v6722, %v7043
    %v7108 = vadd.f32 %v6723, %v7044
    %v7109 = vadd.f32 %v6724, %v7045
    %v7110 = vadd.f32 %v6725, %v7046
    %v7111 = vadd.f32 %v6726, %v7047
    %v7112 = vadd.f32 %v6727, %v7048
    %v7113 = vadd.f32 %v6728, %v7049
    %v7114 = vadd.f32 %v6729, %v7050
    %v7115 = vadd.f32 %v6730, %v7051
    %v7116 = vadd.f32 %v6731, %v7052
    %v7117 = vadd.f32 %v6732, %v7053
    %v7118 = vadd.f32 %v6733, %v7054
    %v7119 = vadd.f32 %v6734, %v7055
    %v7120 = vadd.f32 %v6735, %v7056
    %v7121 = vadd.f32 %v6736, %v7057
    %v7122 = vadd.f32 %v6737, %v7058
    %v7123 = vadd.f32 %v6738, %v7059
    %v7124 = vadd.f32 %v6739, %v7060
    %v7125 = vadd.f32 %v6740, %v7061
    %v7126 = vadd.f32 %v6741, %v7062
    %v7127 = vadd.f32 %v6742, %v7063
    %v7128 = vadd.f32 %v6743, %v7064
    %v7129 = vadd.f32 %v6744, %v7065
    %v7130 = vadd.f32 %v6745, %v7066
    %v7131 = vadd.f32 %v6746, %v7067
    %v7132 = vadd.f32 %v6747, %v7068
    %v7133 = vadd.f32 %v6748, %v7069
    %v7134 = vadd.f32 %v6749, %v7070
    %v7135 = vadd.f32 %v6750, %v7071
    %v7136 = vadd.f32 %v6751, %v7072
    %v7137 = vadd.f32 %v6752, %v7073
    %v7138 = vadd.f32 %v6753, %v7074
    %v7139 = vadd.f32 %v6754, %v7075
    %v7140 = vadd.f32 %v6755, %v7076
    %v7141 = vadd.f32 %v6756, %v7077
    %v7142 = vadd.f32 %v6757, %v7078
    %v7143 = vadd.f32 %v6758, %v7079
    %v7144 = vadd.f32 %v6759, %v7080
    %v7145 = vadd.f32 %v6760, %v7081
    %v7146 = vadd.f32 %v6761, %v7082
    %v7147 = vadd.f32 %v6762, %v7083
    %v7148 = vadd.f32 %v6763, %v7084
    %v7150 = vrot.slane %v6191, 7
    %v7151 = vsel %vm1641, %v6378, %v7150
    %v7152 = vrot.slane %v6192, 7
    %v7153 = vsel %vm1641, %v7150, %v7152
    %v7156 = vsel %vm3296, %v6442, 0.0
    %v7157 = vsel %vm3297, %v6259, 0.0
    %v7158 = vsel %vm3298, %v6261, 0.0
    %v7159 = vsel %vm3299, %v6263, 0.0
    %v7160 = vsel %vm3300, %v6265, 0.0
    %v7161 = vsel %vm3301, %v6267, 0.0
    %v7162 = vsel %vm3302, %v6269, 0.0
    %v7163 = vsel %vm3303, %v6271, 0.0
    %v7164 = vsel %vm3304, %v6273, 0.0
    %v7165 = vsel %vm3305, %v6275, 0.0
    %v7166 = vsel %vm3306, %v6277, 0.0
    %v7167 = vsel %vm3307, %v6279, 0.0
    %v7168 = vsel %vm3308, %v6281, 0.0
    %v7169 = vsel %vm3309, %v6283, 0.0
    %v7170 = vsel %vm3310, %v6285, 0.0
    %v7171 = vsel %vm3311, %v6287, 0.0
    %v7172 = vsel %vm3312, %v6289, 0.0
    %v7173 = vsel %vm3313, %v6291, 0.0
    %v7174 = vsel %vm3314, %v6293, 0.0
    %v7175 = vsel %vm3315, %v6295, 0.0
    %v7176 = vsel %vm3316, %v6297, 0.0
    %v7177 = vsel %vm3317, %v6299, 0.0
    %v7178 = vsel %vm3318, %v6301, 0.0
    %v7179 = vsel %vm3319, %v6303, 0.0
    %v7180 = vsel %vm3320, %v6305, 0.0
    %v7181 = vsel %vm3321, %v6307, 0.0
    %v7182 = vsel %vm3322, %v6309, 0.0
    %v7183 = vsel %vm3323, %v6311, 0.0
    %v7184 = vsel %vm3324, %v6313, 0.0
    %v7185 = vsel %vm3325, %v6315, 0.0
    %v7186 = vsel %vm3326, %v6317, 0.0
    %v7187 = vsel %vm3327, %v6319, 0.0
    %v7188 = vsel %vm3328, %v6321, 0.0
    %v7189 = vsel %vm3329, %v6323, 0.0
    %v7190 = vsel %vm3330, %v6325, 0.0
    %v7191 = vsel %vm3331, %v6327, 0.0
    %v7192 = vsel %vm3332, %v6329, 0.0
    %v7193 = vsel %vm3333, %v6331, 0.0
    %v7194 = vsel %vm3334, %v6333, 0.0
    %v7195 = vsel %vm3335, %v6335, 0.0
    %v7196 = vsel %vm3336, %v6337, 0.0
    %v7197 = vsel %vm3337, %v6339, 0.0
    %v7198 = vsel %vm3338, %v6341, 0.0
    %v7199 = vsel %vm3339, %v6343, 0.0
    %v7200 = vsel %vm3340, %v6345, 0.0
    %v7201 = vsel %vm3341, %v6347, 0.0
    %v7202 = vsel %vm3342, %v6349, 0.0
    %v7203 = vsel %vm3343, %v6351, 0.0
    %v7204 = vsel %vm3344, %v6353, 0.0
    %v7205 = vsel %vm3345, %v6355, 0.0
    %v7206 = vsel %vm3346, %v6357, 0.0
    %v7207 = vsel %vm3347, %v6359, 0.0
    %v7208 = vsel %vm3348, %v6361, 0.0
    %v7209 = vsel %vm3349, %v6363, 0.0
    %v7210 = vsel %vm3350, %v6365, 0.0
    %v7211 = vsel %vm3351, %v6367, 0.0
    %v7212 = vsel %vm3352, %v6369, 0.0
    %v7213 = vsel %vm3353, %v6371, 0.0
    %v7214 = vsel %vm3354, %v6373, 0.0
    %v7215 = vsel %vm3355, %v6375, 0.0
    %v7216 = vsel %vm3356, %v6377, 0.0
    %v7217 = vsel %vm3357, %v6379, 0.0
    %v7218 = vsel %vm3358, %v7151, 0.0
    %v7219 = vsel %vm3359, %v7153, 0.0
    %v7220 = vlaneseq
    %v7221 = vshrl.u32 %v7220, 7
    %v7222 = vsub.s32 3, %v7221
    %v7223 = vrot.slane %v6193, %v7222
    %v7224 = vmul.f32 %v7156, %v7223
    %v7225 = vmul.f32 %v7157, %v7223
    %v7226 = vmul.f32 %v7158, %v7223
    %v7227 = vmul.f32 %v7159, %v7223
    %v7228 = vmul.f32 %v7160, %v7223
    %v7229 = vmul.f32 %v7161, %v7223
    %v7230 = vmul.f32 %v7162, %v7223
    %v7231 = vmul.f32 %v7163, %v7223
    %v7232 = vmul.f32 %v7164, %v7223
    %v7233 = vmul.f32 %v7165, %v7223
    %v7234 = vmul.f32 %v7166, %v7223
    %v7235 = vmul.f32 %v7167, %v7223
    %v7236 = vmul.f32 %v7168, %v7223
    %v7237 = vmul.f32 %v7169, %v7223
    %v7238 = vmul.f32 %v7170, %v7223
    %v7239 = vmul.f32 %v7171, %v7223
    %v7240 = vmul.f32 %v7172, %v7223
    %v7241 = vmul.f32 %v7173, %v7223
    %v7242 = vmul.f32 %v7174, %v7223
    %v7243 = vmul.f32 %v7175, %v7223
    %v7244 = vmul.f32 %v7176, %v7223
    %v7245 = vmul.f32 %v7177, %v7223
    %v7246 = vmul.f32 %v7178, %v7223
    %v7247 = vmul.f32 %v7179, %v7223
    %v7248 = vmul.f32 %v7180, %v7223
    %v7249 = vmul.f32 %v7181, %v7223
    %v7250 = vmul.f32 %v7182, %v7223
    %v7251 = vmul.f32 %v7183, %v7223
    %v7252 = vmul.f32 %v7184, %v7223
    %v7253 = vmul.f32 %v7185, %v7223
    %v7254 = vmul.f32 %v7186, %v7223
    %v7255 = vmul.f32 %v7187, %v7223
    %v7256 = vmul.f32 %v7188, %v7223
    %v7257 = vmul.f32 %v7189, %v7223
    %v7258 = vmul.f32 %v7190, %v7223
    %v7259 = vmul.f32 %v7191, %v7223
    %v7260 = vmul.f32 %v7192, %v7223
    %v7261 = vmul.f32 %v7193, %v7223
    %v7262 = vmul.f32 %v7194, %v7223
    %v7263 = vmul.f32 %v7195, %v7223
    %v7264 = vmul.f32 %v7196, %v7223
    %v7265 = vmul.f32 %v7197, %v7223
    %v7266 = vmul.f32 %v7198, %v7223
    %v7267 = vmul.f32 %v7199, %v7223
    %v7268 = vmul.f32 %v7200, %v7223
    %v7269 = vmul.f32 %v7201, %v7223
    %v7270 = vmul.f32 %v7202, %v7223
    %v7271 = vmul.f32 %v7203, %v7223
    %v7272 = vmul.f32 %v7204, %v7223
    %v7273 = vmul.f32 %v7205, %v7223
    %v7274 = vmul.f32 %v7206, %v7223
    %v7275 = vmul.f32 %v7207, %v7223
    %v7276 = vmul.f32 %v7208, %v7223
    %v7277 = vmul.f32 %v7209, %v7223
    %v7278 = vmul.f32 %v7210, %v7223
    %v7279 = vmul.f32 %v7211, %v7223
    %v7280 = vmul.f32 %v7212, %v7223
    %v7281 = vmul.f32 %v7213, %v7223
    %v7282 = vmul.f32 %v7214, %v7223
    %v7283 = vmul.f32 %v7215, %v7223
    %v7284 = vmul.f32 %v7216, %v7223
    %v7285 = vmul.f32 %v7217, %v7223
    %v7286 = vmul.f32 %v7218, %v7223
    %v7287 = vmul.f32 %v7219, %v7223
    %v7288 = vadd.f32 %v7085, %v7224
    %v7289 = vadd.f32 %v7086, %v7225
    %v7290 = vadd.f32 %v7087, %v7226
    %v7291 = vadd.f32 %v7088, %v7227
    %v7292 = vadd.f32 %v7089, %v7228
    %v7293 = vadd.f32 %v7090, %v7229
    %v7294 = vadd.f32 %v7091, %v7230
    %v7295 = vadd.f32 %v7092, %v7231
    %v7296 = vadd.f32 %v7093, %v7232
    %v7297 = vadd.f32 %v7094, %v7233
    %v7298 = vadd.f32 %v7095, %v7234
    %v7299 = vadd.f32 %v7096, %v7235
    %v7300 = vadd.f32 %v7097, %v7236
    %v7301 = vadd.f32 %v7098, %v7237
    %v7302 = vadd.f32 %v7099, %v7238
    %v7303 = vadd.f32 %v7100, %v7239
    %v7304 = vadd.f32 %v7101, %v7240
    %v7305 = vadd.f32 %v7102, %v7241
    %v7306 = vadd.f32 %v7103, %v7242
    %v7307 = vadd.f32 %v7104, %v7243
    %v7308 = vadd.f32 %v7105, %v7244
    %v7309 = vadd.f32 %v7106, %v7245
    %v7310 = vadd.f32 %v7107, %v7246
    %v7311 = vadd.f32 %v7108, %v7247
    %v7312 = vadd.f32 %v7109, %v7248
    %v7313 = vadd.f32 %v7110, %v7249
    %v7314 = vadd.f32 %v7111, %v7250
    %v7315 = vadd.f32 %v7112, %v7251
    %v7316 = vadd.f32 %v7113, %v7252
    %v7317 = vadd.f32 %v7114, %v7253
    %v7318 = vadd.f32 %v7115, %v7254
    %v7319 = vadd.f32 %v7116, %v7255
    %v7320 = vadd.f32 %v7117, %v7256
    %v7321 = vadd.f32 %v7118, %v7257
    %v7322 = vadd.f32 %v7119, %v7258
    %v7323 = vadd.f32 %v7120, %v7259
    %v7324 = vadd.f32 %v7121, %v7260
    %v7325 = vadd.f32 %v7122, %v7261
    %v7326 = vadd.f32 %v7123, %v7262
    %v7327 = vadd.f32 %v7124, %v7263
    %v7328 = vadd.f32 %v7125, %v7264
    %v7329 = vadd.f32 %v7126, %v7265
    %v7330 = vadd.f32 %v7127, %v7266
    %v7331 = vadd.f32 %v7128, %v7267
    %v7332 = vadd.f32 %v7129, %v7268
    %v7333 = vadd.f32 %v7130, %v7269
    %v7334 = vadd.f32 %v7131, %v7270
    %v7335 = vadd.f32 %v7132, %v7271
    %v7336 = vadd.f32 %v7133, %v7272
    %v7337 = vadd.f32 %v7134, %v7273
    %v7338 = vadd.f32 %v7135, %v7274
    %v7339 = vadd.f32 %v7136, %v7275
    %v7340 = vadd.f32 %v7137, %v7276
    %v7341 = vadd.f32 %v7138, %v7277
    %v7342 = vadd.f32 %v7139, %v7278
    %v7343 = vadd.f32 %v7140, %v7279
    %v7344 = vadd.f32 %v7141, %v7280
    %v7345 = vadd.f32 %v7142, %v7281
    %v7346 = vadd.f32 %v7143, %v7282
    %v7347 = vadd.f32 %v7144, %v7283
    %v7348 = vadd.f32 %v7145, %v7284
    %v7349 = vadd.f32 %v7146, %v7285
    %v7350 = vadd.f32 %v7147, %v7286
    %v7351 = vadd.f32 %v7148, %v7287
    %v7352 = vlaneseq
    %v7353 = vshrl.u32 %v7352, 7
    %v7354 = vsub.s32 4, %v7353
    %v7355 = vrot.slane %v6193, %v7354
    %v7356 = vmul.f32 %v6129, %v7355
    %v7357 = vmul.f32 %v6130, %v7355
    %v7358 = vmul.f32 %v6131, %v7355
    %v7359 = vmul.f32 %v6132, %v7355
    %v7360 = vmul.f32 %v6133, %v7355
    %v7361 = vmul.f32 %v6134, %v7355
    %v7362 = vmul.f32 %v6135, %v7355
    %v7363 = vmul.f32 %v6136, %v7355
    %v7364 = vmul.f32 %v6137, %v7355
    %v7365 = vmul.f32 %v6138, %v7355
    %v7366 = vmul.f32 %v6139, %v7355
    %v7367 = vmul.f32 %v6140, %v7355
    %v7368 = vmul.f32 %v6141, %v7355
    %v7369 = vmul.f32 %v6142, %v7355
    %v7370 = vmul.f32 %v6143, %v7355
    %v7371 = vmul.f32 %v6144, %v7355
    %v7372 = vmul.f32 %v6145, %v7355
    %v7373 = vmul.f32 %v6146, %v7355
    %v7374 = vmul.f32 %v6147, %v7355
    %v7375 = vmul.f32 %v6148, %v7355
    %v7376 = vmul.f32 %v6149, %v7355
    %v7377 = vmul.f32 %v6150, %v7355
    %v7378 = vmul.f32 %v6151, %v7355
    %v7379 = vmul.f32 %v6152, %v7355
    %v7380 = vmul.f32 %v6153, %v7355
    %v7381 = vmul.f32 %v6154, %v7355
    %v7382 = vmul.f32 %v6155, %v7355
    %v7383 = vmul.f32 %v6156, %v7355
    %v7384 = vmul.f32 %v6157, %v7355
    %v7385 = vmul.f32 %v6158, %v7355
    %v7386 = vmul.f32 %v6159, %v7355
    %v7387 = vmul.f32 %v6160, %v7355
    %v7388 = vmul.f32 %v6161, %v7355
    %v7389 = vmul.f32 %v6162, %v7355
    %v7390 = vmul.f32 %v6163, %v7355
    %v7391 = vmul.f32 %v6164, %v7355
    %v7392 = vmul.f32 %v6165, %v7355
    %v7393 = vmul.f32 %v6166, %v7355
    %v7394 = vmul.f32 %v6167, %v7355
    %v7395 = vmul.f32 %v6168, %v7355
    %v7396 = vmul.f32 %v6169, %v7355
    %v7397 = vmul.f32 %v6170, %v7355
    %v7398 = vmul.f32 %v6171, %v7355
    %v7399 = vmul.f32 %v6172, %v7355
    %v7400 = vmul.f32 %v6173, %v7355
    %v7401 = vmul.f32 %v6174, %v7355
    %v7402 = vmul.f32 %v6175, %v7355
    %v7403 = vmul.f32 %v6176, %v7355
    %v7404 = vmul.f32 %v6177, %v7355
    %v7405 = vmul.f32 %v6178, %v7355
    %v7406 = vmul.f32 %v6179, %v7355
    %v7407 = vmul.f32 %v6180, %v7355
    %v7408 = vmul.f32 %v6181, %v7355
    %v7409 = vmul.f32 %v6182, %v7355
    %v7410 = vmul.f32 %v6183, %v7355
    %v7411 = vmul.f32 %v6184, %v7355
    %v7412 = vmul.f32 %v6185, %v7355
    %v7413 = vmul.f32 %v6186, %v7355
    %v7414 = vmul.f32 %v6187, %v7355
    %v7415 = vmul.f32 %v6188, %v7355
    %v7416 = vmul.f32 %v6189, %v7355
    %v7417 = vmul.f32 %v6190, %v7355
    %v7418 = vmul.f32 %v6191, %v7355
    %v7419 = vmul.f32 %v6192, %v7355
    %v7420 = vadd.f32 %v7288, %v7356
    %v7421 = vadd.f32 %v7289, %v7357
    %v7422 = vadd.f32 %v7290, %v7358
    %v7423 = vadd.f32 %v7291, %v7359
    %v7424 = vadd.f32 %v7292, %v7360
    %v7425 = vadd.f32 %v7293, %v7361
    %v7426 = vadd.f32 %v7294, %v7362
    %v7427 = vadd.f32 %v7295, %v7363
    %v7428 = vadd.f32 %v7296, %v7364
    %v7429 = vadd.f32 %v7297, %v7365
    %v7430 = vadd.f32 %v7298, %v7366
    %v7431 = vadd.f32 %v7299, %v7367
    %v7432 = vadd.f32 %v7300, %v7368
    %v7433 = vadd.f32 %v7301, %v7369
    %v7434 = vadd.f32 %v7302, %v7370
    %v7435 = vadd.f32 %v7303, %v7371
    %v7436 = vadd.f32 %v7304, %v7372
    %v7437 = vadd.f32 %v7305, %v7373
    %v7438 = vadd.f32 %v7306, %v7374
    %v7439 = vadd.f32 %v7307, %v7375
    %v7440 = vadd.f32 %v7308, %v7376
    %v7441 = vadd.f32 %v7309, %v7377
    %v7442 = vadd.f32 %v7310, %v7378
    %v7443 = vadd.f32 %v7311, %v7379
    %v7444 = vadd.f32 %v7312, %v7380
    %v7445 = vadd.f32 %v7313, %v7381
    %v7446 = vadd.f32 %v7314, %v7382
    %v7447 = vadd.f32 %v7315, %v7383
    %v7448 = vadd.f32 %v7316, %v7384
    %v7449 = vadd.f32 %v7317, %v7385
    %v7450 = vadd.f32 %v7318, %v7386
    %v7451 = vadd.f32 %v7319, %v7387
    %v7452 = vadd.f32 %v7320, %v7388
    %v7453 = vadd.f32 %v7321, %v7389
    %v7454 = vadd.f32 %v7322, %v7390
    %v7455 = vadd.f32 %v7323, %v7391
    %v7456 = vadd.f32 %v7324, %v7392
    %v7457 = vadd.f32 %v7325, %v7393
    %v7458 = vadd.f32 %v7326, %v7394
    %v7459 = vadd.f32 %v7327, %v7395
    %v7460 = vadd.f32 %v7328, %v7396
    %v7461 = vadd.f32 %v7329, %v7397
    %v7462 = vadd.f32 %v7330, %v7398
    %v7463 = vadd.f32 %v7331, %v7399
    %v7464 = vadd.f32 %v7332, %v7400
    %v7465 = vadd.f32 %v7333, %v7401
    %v7466 = vadd.f32 %v7334, %v7402
    %v7467 = vadd.f32 %v7335, %v7403
    %v7468 = vadd.f32 %v7336, %v7404
    %v7469 = vadd.f32 %v7337, %v7405
    %v7470 = vadd.f32 %v7338, %v7406
    %v7471 = vadd.f32 %v7339, %v7407
    %v7472 = vadd.f32 %v7340, %v7408
    %v7473 = vadd.f32 %v7341, %v7409
    %v7474 = vadd.f32 %v7342, %v7410
    %v7475 = vadd.f32 %v7343, %v7411
    %v7476 = vadd.f32 %v7344, %v7412
    %v7477 = vadd.f32 %v7345, %v7413
    %v7478 = vadd.f32 %v7346, %v7414
    %v7479 = vadd.f32 %v7347, %v7415
    %v7480 = vadd.f32 %v7348, %v7416
    %v7481 = vadd.f32 %v7349, %v7417
    %v7482 = vadd.f32 %v7350, %v7418
    %v7483 = vadd.f32 %v7351, %v7419
    %v7484 = vrot.slane %v6192, 1
    %v7485 = vsel %vm2587, %v6888, %v7484
    %v7488 = vsel %vm2587, %v7484, 0.0
    %v7489 = vsel %vm3757, %v6767, 0.0
    %v7490 = vsel %vm3758, %v6769, 0.0
    %v7491 = vsel %vm3759, %v6771, 0.0
    %v7492 = vsel %vm3760, %v6773, 0.0
    %v7493 = vsel %vm3761, %v6775, 0.0
    %v7494 = vsel %vm3762, %v6777, 0.0
    %v7495 = vsel %vm3763, %v6779, 0.0
    %v7496 = vsel %vm3764, %v6781, 0.0
    %v7497 = vsel %vm3765, %v6783, 0.0
    %v7498 = vsel %vm3766, %v6785, 0.0
    %v7499 = vsel %vm3767, %v6787, 0.0
    %v7500 = vsel %vm3768, %v6789, 0.0
    %v7501 = vsel %vm3769, %v6791, 0.0
    %v7502 = vsel %vm3770, %v6793, 0.0
    %v7503 = vsel %vm3771, %v6795, 0.0
    %v7504 = vsel %vm3772, %v6797, 0.0
    %v7505 = vsel %vm3773, %v6799, 0.0
    %v7506 = vsel %vm3774, %v6801, 0.0
    %v7507 = vsel %vm3775, %v6803, 0.0
    %v7508 = vsel %vm3776, %v6805, 0.0
    %v7509 = vsel %vm3777, %v6807, 0.0
    %v7510 = vsel %vm3778, %v6809, 0.0
    %v7511 = vsel %vm3779, %v6811, 0.0
    %v7512 = vsel %vm3780, %v6813, 0.0
    %v7513 = vsel %vm3781, %v6815, 0.0
    %v7514 = vsel %vm3782, %v6817, 0.0
    %v7515 = vsel %vm3783, %v6819, 0.0
    %v7516 = vsel %vm3784, %v6821, 0.0
    %v7517 = vsel %vm3785, %v6823, 0.0
    %v7518 = vsel %vm3786, %v6825, 0.0
    %v7519 = vsel %vm3787, %v6827, 0.0
    %v7520 = vsel %vm3788, %v6829, 0.0
    %v7521 = vsel %vm3789, %v6831, 0.0
    %v7522 = vsel %vm3790, %v6833, 0.0
    %v7523 = vsel %vm3791, %v6835, 0.0
    %v7524 = vsel %vm3792, %v6837, 0.0
    %v7525 = vsel %vm3793, %v6839, 0.0
    %v7526 = vsel %vm3794, %v6841, 0.0
    %v7527 = vsel %vm3795, %v6843, 0.0
    %v7528 = vsel %vm3796, %v6845, 0.0
    %v7529 = vsel %vm3797, %v6847, 0.0
    %v7530 = vsel %vm3798, %v6849, 0.0
    %v7531 = vsel %vm3799, %v6851, 0.0
    %v7532 = vsel %vm3800, %v6853, 0.0
    %v7533 = vsel %vm3801, %v6855, 0.0
    %v7534 = vsel %vm3802, %v6857, 0.0
    %v7535 = vsel %vm3803, %v6859, 0.0
    %v7536 = vsel %vm3804, %v6861, 0.0
    %v7537 = vsel %vm3805, %v6863, 0.0
    %v7538 = vsel %vm3806, %v6865, 0.0
    %v7539 = vsel %vm3807, %v6867, 0.0
    %v7540 = vsel %vm3808, %v6869, 0.0
    %v7541 = vsel %vm3809, %v6871, 0.0
    %v7542 = vsel %vm3810, %v6873, 0.0
    %v7543 = vsel %vm3811, %v6875, 0.0
    %v7544 = vsel %vm3812, %v6877, 0.0
    %v7545 = vsel %vm3813, %v6879, 0.0
    %v7546 = vsel %vm3814, %v6881, 0.0
    %v7547 = vsel %vm3815, %v6883, 0.0
    %v7548 = vsel %vm3816, %v6885, 0.0
    %v7549 = vsel %vm3817, %v6887, 0.0
    %v7550 = vsel %vm3818, %v6889, 0.0
    %v7551 = vsel %vm3819, %v7485, 0.0
    %v7552 = vsel %vm3820, %v7488, 0.0
    %v7553 = vlaneseq
    %v7554 = vshrl.u32 %v7553, 7
    %v7555 = vsub.s32 5, %v7554
    %v7556 = vrot.slane %v6193, %v7555
    %v7557 = vmul.f32 %v7489, %v7556
    %v7558 = vmul.f32 %v7490, %v7556
    %v7559 = vmul.f32 %v7491, %v7556
    %v7560 = vmul.f32 %v7492, %v7556
    %v7561 = vmul.f32 %v7493, %v7556
    %v7562 = vmul.f32 %v7494, %v7556
    %v7563 = vmul.f32 %v7495, %v7556
    %v7564 = vmul.f32 %v7496, %v7556
    %v7565 = vmul.f32 %v7497, %v7556
    %v7566 = vmul.f32 %v7498, %v7556
    %v7567 = vmul.f32 %v7499, %v7556
    %v7568 = vmul.f32 %v7500, %v7556
    %v7569 = vmul.f32 %v7501, %v7556
    %v7570 = vmul.f32 %v7502, %v7556
    %v7571 = vmul.f32 %v7503, %v7556
    %v7572 = vmul.f32 %v7504, %v7556
    %v7573 = vmul.f32 %v7505, %v7556
    %v7574 = vmul.f32 %v7506, %v7556
    %v7575 = vmul.f32 %v7507, %v7556
    %v7576 = vmul.f32 %v7508, %v7556
    %v7577 = vmul.f32 %v7509, %v7556
    %v7578 = vmul.f32 %v7510, %v7556
    %v7579 = vmul.f32 %v7511, %v7556
    %v7580 = vmul.f32 %v7512, %v7556
    %v7581 = vmul.f32 %v7513, %v7556
    %v7582 = vmul.f32 %v7514, %v7556
    %v7583 = vmul.f32 %v7515, %v7556
    %v7584 = vmul.f32 %v7516, %v7556
    %v7585 = vmul.f32 %v7517, %v7556
    %v7586 = vmul.f32 %v7518, %v7556
    %v7587 = vmul.f32 %v7519, %v7556
    %v7588 = vmul.f32 %v7520, %v7556
    %v7589 = vmul.f32 %v7521, %v7556
    %v7590 = vmul.f32 %v7522, %v7556
    %v7591 = vmul.f32 %v7523, %v7556
    %v7592 = vmul.f32 %v7524, %v7556
    %v7593 = vmul.f32 %v7525, %v7556
    %v7594 = vmul.f32 %v7526, %v7556
    %v7595 = vmul.f32 %v7527, %v7556
    %v7596 = vmul.f32 %v7528, %v7556
    %v7597 = vmul.f32 %v7529, %v7556
    %v7598 = vmul.f32 %v7530, %v7556
    %v7599 = vmul.f32 %v7531, %v7556
    %v7600 = vmul.f32 %v7532, %v7556
    %v7601 = vmul.f32 %v7533, %v7556
    %v7602 = vmul.f32 %v7534, %v7556
    %v7603 = vmul.f32 %v7535, %v7556
    %v7604 = vmul.f32 %v7536, %v7556
    %v7605 = vmul.f32 %v7537, %v7556
    %v7606 = vmul.f32 %v7538, %v7556
    %v7607 = vmul.f32 %v7539, %v7556
    %v7608 = vmul.f32 %v7540, %v7556
    %v7609 = vmul.f32 %v7541, %v7556
    %v7610 = vmul.f32 %v7542, %v7556
    %v7611 = vmul.f32 %v7543, %v7556
    %v7612 = vmul.f32 %v7544, %v7556
    %v7613 = vmul.f32 %v7545, %v7556
    %v7614 = vmul.f32 %v7546, %v7556
    %v7615 = vmul.f32 %v7547, %v7556
    %v7616 = vmul.f32 %v7548, %v7556
    %v7617 = vmul.f32 %v7549, %v7556
    %v7618 = vmul.f32 %v7550, %v7556
    %v7619 = vmul.f32 %v7551, %v7556
    %v7620 = vmul.f32 %v7552, %v7556
    %v7621 = vadd.f32 %v7420, %v7557
    %v7622 = vadd.f32 %v7421, %v7558
    %v7623 = vadd.f32 %v7422, %v7559
    %v7624 = vadd.f32 %v7423, %v7560
    %v7625 = vadd.f32 %v7424, %v7561
    %v7626 = vadd.f32 %v7425, %v7562
    %v7627 = vadd.f32 %v7426, %v7563
    %v7628 = vadd.f32 %v7427, %v7564
    %v7629 = vadd.f32 %v7428, %v7565
    %v7630 = vadd.f32 %v7429, %v7566
    %v7631 = vadd.f32 %v7430, %v7567
    %v7632 = vadd.f32 %v7431, %v7568
    %v7633 = vadd.f32 %v7432, %v7569
    %v7634 = vadd.f32 %v7433, %v7570
    %v7635 = vadd.f32 %v7434, %v7571
    %v7636 = vadd.f32 %v7435, %v7572
    %v7637 = vadd.f32 %v7436, %v7573
    %v7638 = vadd.f32 %v7437, %v7574
    %v7639 = vadd.f32 %v7438, %v7575
    %v7640 = vadd.f32 %v7439, %v7576
    %v7641 = vadd.f32 %v7440, %v7577
    %v7642 = vadd.f32 %v7441, %v7578
    %v7643 = vadd.f32 %v7442, %v7579
    %v7644 = vadd.f32 %v7443, %v7580
    %v7645 = vadd.f32 %v7444, %v7581
    %v7646 = vadd.f32 %v7445, %v7582
    %v7647 = vadd.f32 %v7446, %v7583
    %v7648 = vadd.f32 %v7447, %v7584
    %v7649 = vadd.f32 %v7448, %v7585
    %v7650 = vadd.f32 %v7449, %v7586
    %v7651 = vadd.f32 %v7450, %v7587
    %v7652 = vadd.f32 %v7451, %v7588
    %v7653 = vadd.f32 %v7452, %v7589
    %v7654 = vadd.f32 %v7453, %v7590
    %v7655 = vadd.f32 %v7454, %v7591
    %v7656 = vadd.f32 %v7455, %v7592
    %v7657 = vadd.f32 %v7456, %v7593
    %v7658 = vadd.f32 %v7457, %v7594
    %v7659 = vadd.f32 %v7458, %v7595
    %v7660 = vadd.f32 %v7459, %v7596
    %v7661 = vadd.f32 %v7460, %v7597
    %v7662 = vadd.f32 %v7461, %v7598
    %v7663 = vadd.f32 %v7462, %v7599
    %v7664 = vadd.f32 %v7463, %v7600
    %v7665 = vadd.f32 %v7464, %v7601
    %v7666 = vadd.f32 %v7465, %v7602
    %v7667 = vadd.f32 %v7466, %v7603
    %v7668 = vadd.f32 %v7467, %v7604
    %v7669 = vadd.f32 %v7468, %v7605
    %v7670 = vadd.f32 %v7469, %v7606
    %v7671 = vadd.f32 %v7470, %v7607
    %v7672 = vadd.f32 %v7471, %v7608
    %v7673 = vadd.f32 %v7472, %v7609
    %v7674 = vadd.f32 %v7473, %v7610
    %v7675 = vadd.f32 %v7474, %v7611
    %v7676 = vadd.f32 %v7475, %v7612
    %v7677 = vadd.f32 %v7476, %v7613
    %v7678 = vadd.f32 %v7477, %v7614
    %v7679 = vadd.f32 %v7478, %v7615
    %v7680 = vadd.f32 %v7479, %v7616
    %v7681 = vadd.f32 %v7480, %v7617
    %v7682 = vadd.f32 %v7481, %v7618
    %v7683 = vadd.f32 %v7482, %v7619
    %v7684 = vadd.f32 %v7483, %v7620
    %v7686 = vsel %vm1641, %v7152, 0.0
    %v7687 = vsel %vm4208, %v6261, 0.0
    %v7688 = vsel %vm4209, %v6263, 0.0
    %v7689 = vsel %vm4210, %v6265, 0.0
    %v7690 = vsel %vm4211, %v6267, 0.0
    %v7691 = vsel %vm4212, %v6269, 0.0
    %v7692 = vsel %vm4213, %v6271, 0.0
    %v7693 = vsel %vm4214, %v6273, 0.0
    %v7694 = vsel %vm4215, %v6275, 0.0
    %v7695 = vsel %vm4216, %v6277, 0.0
    %v7696 = vsel %vm4217, %v6279, 0.0
    %v7697 = vsel %vm4218, %v6281, 0.0
    %v7698 = vsel %vm4219, %v6283, 0.0
    %v7699 = vsel %vm4220, %v6285, 0.0
    %v7700 = vsel %vm4221, %v6287, 0.0
    %v7701 = vsel %vm4222, %v6289, 0.0
    %v7702 = vsel %vm4223, %v6291, 0.0
    %v7703 = vsel %vm4224, %v6293, 0.0
    %v7704 = vsel %vm4225, %v6295, 0.0
    %v7705 = vsel %vm4226, %v6297, 0.0
    %v7706 = vsel %vm4227, %v6299, 0.0
    %v7707 = vsel %vm4228, %v6301, 0.0
    %v7708 = vsel %vm4229, %v6303, 0.0
    %v7709 = vsel %vm4230, %v6305, 0.0
    %v7710 = vsel %vm4231, %v6307, 0.0
    %v7711 = vsel %vm4232, %v6309, 0.0
    %v7712 = vsel %vm4233, %v6311, 0.0
    %v7713 = vsel %vm4234, %v6313, 0.0
    %v7714 = vsel %vm4235, %v6315, 0.0
    %v7715 = vsel %vm4236, %v6317, 0.0
    %v7716 = vsel %vm4237, %v6319, 0.0
    %v7717 = vsel %vm4238, %v6321, 0.0
    %v7718 = vsel %vm4239, %v6323, 0.0
    %v7719 = vsel %vm4240, %v6325, 0.0
    %v7720 = vsel %vm4241, %v6327, 0.0
    %v7721 = vsel %vm4242, %v6329, 0.0
    %v7722 = vsel %vm4243, %v6331, 0.0
    %v7723 = vsel %vm4244, %v6333, 0.0
    %v7724 = vsel %vm4245, %v6335, 0.0
    %v7725 = vsel %vm4246, %v6337, 0.0
    %v7726 = vsel %vm4247, %v6339, 0.0
    %v7727 = vsel %vm4248, %v6341, 0.0
    %v7728 = vsel %vm4249, %v6343, 0.0
    %v7729 = vsel %vm4250, %v6345, 0.0
    %v7730 = vsel %vm4251, %v6347, 0.0
    %v7731 = vsel %vm4252, %v6349, 0.0
    %v7732 = vsel %vm4253, %v6351, 0.0
    %v7733 = vsel %vm4254, %v6353, 0.0
    %v7734 = vsel %vm4255, %v6355, 0.0
    %v7735 = vsel %vm4256, %v6357, 0.0
    %v7736 = vsel %vm4257, %v6359, 0.0
    %v7737 = vsel %vm4258, %v6361, 0.0
    %v7738 = vsel %vm4259, %v6363, 0.0
    %v7739 = vsel %vm4260, %v6365, 0.0
    %v7740 = vsel %vm4261, %v6367, 0.0
    %v7741 = vsel %vm4262, %v6369, 0.0
    %v7742 = vsel %vm4263, %v6371, 0.0
    %v7743 = vsel %vm4264, %v6373, 0.0
    %v7744 = vsel %vm4265, %v6375, 0.0
    %v7745 = vsel %vm4266, %v6377, 0.0
    %v7746 = vsel %vm4267, %v6379, 0.0
    %v7747 = vsel %vm4268, %v7151, 0.0
    %v7748 = vsel %vm4269, %v7153, 0.0
    %v7749 = vsel %vm4270, %v7686, 0.0
    %v7750 = vlaneseq
    %v7751 = vshrl.u32 %v7750, 7
    %v7752 = vsub.s32 6, %v7751
    %v7753 = vrot.slane %v6193, %v7752
    %v7754 = vmul.f32 %v7687, %v7753
    %v7755 = vmul.f32 %v7688, %v7753
    %v7756 = vmul.f32 %v7689, %v7753
    %v7757 = vmul.f32 %v7690, %v7753
    %v7758 = vmul.f32 %v7691, %v7753
    %v7759 = vmul.f32 %v7692, %v7753
    %v7760 = vmul.f32 %v7693, %v7753
    %v7761 = vmul.f32 %v7694, %v7753
    %v7762 = vmul.f32 %v7695, %v7753
    %v7763 = vmul.f32 %v7696, %v7753
    %v7764 = vmul.f32 %v7697, %v7753
    %v7765 = vmul.f32 %v7698, %v7753
    %v7766 = vmul.f32 %v7699, %v7753
    %v7767 = vmul.f32 %v7700, %v7753
    %v7768 = vmul.f32 %v7701, %v7753
    %v7769 = vmul.f32 %v7702, %v7753
    %v7770 = vmul.f32 %v7703, %v7753
    %v7771 = vmul.f32 %v7704, %v7753
    %v7772 = vmul.f32 %v7705, %v7753
    %v7773 = vmul.f32 %v7706, %v7753
    %v7774 = vmul.f32 %v7707, %v7753
    %v7775 = vmul.f32 %v7708, %v7753
    %v7776 = vmul.f32 %v7709, %v7753
    %v7777 = vmul.f32 %v7710, %v7753
    %v7778 = vmul.f32 %v7711, %v7753
    %v7779 = vmul.f32 %v7712, %v7753
    %v7780 = vmul.f32 %v7713, %v7753
    %v7781 = vmul.f32 %v7714, %v7753
    %v7782 = vmul.f32 %v7715, %v7753
    %v7783 = vmul.f32 %v7716, %v7753
    %v7784 = vmul.f32 %v7717, %v7753
    %v7785 = vmul.f32 %v7718, %v7753
    %v7786 = vmul.f32 %v7719, %v7753
    %v7787 = vmul.f32 %v7720, %v7753
    %v7788 = vmul.f32 %v7721, %v7753
    %v7789 = vmul.f32 %v7722, %v7753
    %v7790 = vmul.f32 %v7723, %v7753
    %v7791 = vmul.f32 %v7724, %v7753
    %v7792 = vmul.f32 %v7725, %v7753
    %v7793 = vmul.f32 %v7726, %v7753
    %v7794 = vmul.f32 %v7727, %v7753
    %v7795 = vmul.f32 %v7728, %v7753
    %v7796 = vmul.f32 %v7729, %v7753
    %v7797 = vmul.f32 %v7730, %v7753
    %v7798 = vmul.f32 %v7731, %v7753
    %v7799 = vmul.f32 %v7732, %v7753
    %v7800 = vmul.f32 %v7733, %v7753
    %v7801 = vmul.f32 %v7734, %v7753
    %v7802 = vmul.f32 %v7735, %v7753
    %v7803 = vmul.f32 %v7736, %v7753
    %v7804 = vmul.f32 %v7737, %v7753
    %v7805 = vmul.f32 %v7738, %v7753
    %v7806 = vmul.f32 %v7739, %v7753
    %v7807 = vmul.f32 %v7740, %v7753
    %v7808 = vmul.f32 %v7741, %v7753
    %v7809 = vmul.f32 %v7742, %v7753
    %v7810 = vmul.f32 %v7743, %v7753
    %v7811 = vmul.f32 %v7744, %v7753
    %v7812 = vmul.f32 %v7745, %v7753
    %v7813 = vmul.f32 %v7746, %v7753
    %v7814 = vmul.f32 %v7747, %v7753
    %v7815 = vmul.f32 %v7748, %v7753
    %v7816 = vmul.f32 %v7749, %v7753
    %v7817 = vmul.f32 %v7753, 0.0
    %v7818 = vadd.f32 %v7621, %v7754
    %v7819 = vadd.f32 %v7622, %v7755
    %v7820 = vadd.f32 %v7623, %v7756
    %v7821 = vadd.f32 %v7624, %v7757
    %v7822 = vadd.f32 %v7625, %v7758
    %v7823 = vadd.f32 %v7626, %v7759
    %v7824 = vadd.f32 %v7627, %v7760
    %v7825 = vadd.f32 %v7628, %v7761
    %v7826 = vadd.f32 %v7629, %v7762
    %v7827 = vadd.f32 %v7630, %v7763
    %v7828 = vadd.f32 %v7631, %v7764
    %v7829 = vadd.f32 %v7632, %v7765
    %v7830 = vadd.f32 %v7633, %v7766
    %v7831 = vadd.f32 %v7634, %v7767
    %v7832 = vadd.f32 %v7635, %v7768
    %v7833 = vadd.f32 %v7636, %v7769
    %v7834 = vadd.f32 %v7637, %v7770
    %v7835 = vadd.f32 %v7638, %v7771
    %v7836 = vadd.f32 %v7639, %v7772
    %v7837 = vadd.f32 %v7640, %v7773
    %v7838 = vadd.f32 %v7641, %v7774
    %v7839 = vadd.f32 %v7642, %v7775
    %v7840 = vadd.f32 %v7643, %v7776
    %v7841 = vadd.f32 %v7644, %v7777
    %v7842 = vadd.f32 %v7645, %v7778
    %v7843 = vadd.f32 %v7646, %v7779
    %v7844 = vadd.f32 %v7647, %v7780
    %v7845 = vadd.f32 %v7648, %v7781
    %v7846 = vadd.f32 %v7649, %v7782
    %v7847 = vadd.f32 %v7650, %v7783
    %v7848 = vadd.f32 %v7651, %v7784
    %v7849 = vadd.f32 %v7652, %v7785
    %v7850 = vadd.f32 %v7653, %v7786
    %v7851 = vadd.f32 %v7654, %v7787
    %v7852 = vadd.f32 %v7655, %v7788
    %v7853 = vadd.f32 %v7656, %v7789
    %v7854 = vadd.f32 %v7657, %v7790
    %v7855 = vadd.f32 %v7658, %v7791
    %v7856 = vadd.f32 %v7659, %v7792
    %v7857 = vadd.f32 %v7660, %v7793
    %v7858 = vadd.f32 %v7661, %v7794
    %v7859 = vadd.f32 %v7662, %v7795
    %v7860 = vadd.f32 %v7663, %v7796
    %v7861 = vadd.f32 %v7664, %v7797
    %v7862 = vadd.f32 %v7665, %v7798
    %v7863 = vadd.f32 %v7666, %v7799
    %v7864 = vadd.f32 %v7667, %v7800
    %v7865 = vadd.f32 %v7668, %v7801
    %v7866 = vadd.f32 %v7669, %v7802
    %v7867 = vadd.f32 %v7670, %v7803
    %v7868 = vadd.f32 %v7671, %v7804
    %v7869 = vadd.f32 %v7672, %v7805
    %v7870 = vadd.f32 %v7673, %v7806
    %v7871 = vadd.f32 %v7674, %v7807
    %v7872 = vadd.f32 %v7675, %v7808
    %v7873 = vadd.f32 %v7676, %v7809
    %v7874 = vadd.f32 %v7677, %v7810
    %v7875 = vadd.f32 %v7678, %v7811
    %v7876 = vadd.f32 %v7679, %v7812
    %v7877 = vadd.f32 %v7680, %v7813
    %v7878 = vadd.f32 %v7681, %v7814
    %v7879 = vadd.f32 %v7682, %v7815
    %v7880 = vadd.f32 %v7683, %v7816
    %v7881 = vadd.f32 %v7684, %v7817
    %v7882 = vsel %vm4528, %v6131, 0.0
    %v7883 = vsel %vm4529, %v6132, 0.0
    %v7884 = vsel %vm4530, %v6133, 0.0
    %v7885 = vsel %vm4531, %v6134, 0.0
    %v7886 = vsel %vm4532, %v6135, 0.0
    %v7887 = vsel %vm4533, %v6136, 0.0
    %v7888 = vsel %vm4534, %v6137, 0.0
    %v7889 = vsel %vm4535, %v6138, 0.0
    %v7890 = vsel %vm4536, %v6139, 0.0
    %v7891 = vsel %vm4537, %v6140, 0.0
    %v7892 = vsel %vm4538, %v6141, 0.0
    %v7893 = vsel %vm4539, %v6142, 0.0
    %v7894 = vsel %vm4540, %v6143, 0.0
    %v7895 = vsel %vm4541, %v6144, 0.0
    %v7896 = vsel %vm4542, %v6145, 0.0
    %v7897 = vsel %vm4543, %v6146, 0.0
    %v7898 = vsel %vm4544, %v6147, 0.0
    %v7899 = vsel %vm4545, %v6148, 0.0
    %v7900 = vsel %vm4546, %v6149, 0.0
    %v7901 = vsel %vm4547, %v6150, 0.0
    %v7902 = vsel %vm4548, %v6151, 0.0
    %v7903 = vsel %vm4549, %v6152, 0.0
    %v7904 = vsel %vm4550, %v6153, 0.0
    %v7905 = vsel %vm4551, %v6154, 0.0
    %v7906 = vsel %vm4552, %v6155, 0.0
    %v7907 = vsel %vm4553, %v6156, 0.0
    %v7908 = vsel %vm4554, %v6157, 0.0
    %v7909 = vsel %vm4555, %v6158, 0.0
    %v7910 = vsel %vm4556, %v6159, 0.0
    %v7911 = vsel %vm4557, %v6160, 0.0
    %v7912 = vsel %vm4558, %v6161, 0.0
    %v7913 = vsel %vm4559, %v6162, 0.0
    %v7914 = vsel %vm4560, %v6163, 0.0
    %v7915 = vsel %vm4561, %v6164, 0.0
    %v7916 = vsel %vm4562, %v6165, 0.0
    %v7917 = vsel %vm4563, %v6166, 0.0
    %v7918 = vsel %vm4564, %v6167, 0.0
    %v7919 = vsel %vm4565, %v6168, 0.0
    %v7920 = vsel %vm4566, %v6169, 0.0
    %v7921 = vsel %vm4567, %v6170, 0.0
    %v7922 = vsel %vm4568, %v6171, 0.0
    %v7923 = vsel %vm4569, %v6172, 0.0
    %v7924 = vsel %vm4570, %v6173, 0.0
    %v7925 = vsel %vm4571, %v6174, 0.0
    %v7926 = vsel %vm4572, %v6175, 0.0
    %v7927 = vsel %vm4573, %v6176, 0.0
    %v7928 = vsel %vm4574, %v6177, 0.0
    %v7929 = vsel %vm4575, %v6178, 0.0
    %v7930 = vsel %vm4576, %v6179, 0.0
    %v7931 = vsel %vm4577, %v6180, 0.0
    %v7932 = vsel %vm4578, %v6181, 0.0
    %v7933 = vsel %vm4579, %v6182, 0.0
    %v7934 = vsel %vm4580, %v6183, 0.0
    %v7935 = vsel %vm4581, %v6184, 0.0
    %v7936 = vsel %vm4582, %v6185, 0.0
    %v7937 = vsel %vm4583, %v6186, 0.0
    %v7938 = vsel %vm4584, %v6187, 0.0
    %v7939 = vsel %vm4585, %v6188, 0.0
    %v7940 = vsel %vm4586, %v6189, 0.0
    %v7941 = vsel %vm4587, %v6190, 0.0
    %v7942 = vsel %vm4588, %v6191, 0.0
    %v7943 = vsel %vm4589, %v6192, 0.0
    %v7944 = vlaneseq
    %v7945 = vshrl.u32 %v7944, 7
    %v7946 = vsub.s32 7, %v7945
    %v7947 = vrot.slane %v6193, %v7946
    %v7948 = vmul.f32 %v7882, %v7947
    %v7949 = vmul.f32 %v7883, %v7947
    %v7950 = vmul.f32 %v7884, %v7947
    %v7951 = vmul.f32 %v7885, %v7947
    %v7952 = vmul.f32 %v7886, %v7947
    %v7953 = vmul.f32 %v7887, %v7947
    %v7954 = vmul.f32 %v7888, %v7947
    %v7955 = vmul.f32 %v7889, %v7947
    %v7956 = vmul.f32 %v7890, %v7947
    %v7957 = vmul.f32 %v7891, %v7947
    %v7958 = vmul.f32 %v7892, %v7947
    %v7959 = vmul.f32 %v7893, %v7947
    %v7960 = vmul.f32 %v7894, %v7947
    %v7961 = vmul.f32 %v7895, %v7947
    %v7962 = vmul.f32 %v7896, %v7947
    %v7963 = vmul.f32 %v7897, %v7947
    %v7964 = vmul.f32 %v7898, %v7947
    %v7965 = vmul.f32 %v7899, %v7947
    %v7966 = vmul.f32 %v7900, %v7947
    %v7967 = vmul.f32 %v7901, %v7947
    %v7968 = vmul.f32 %v7902, %v7947
    %v7969 = vmul.f32 %v7903, %v7947
    %v7970 = vmul.f32 %v7904, %v7947
    %v7971 = vmul.f32 %v7905, %v7947
    %v7972 = vmul.f32 %v7906, %v7947
    %v7973 = vmul.f32 %v7907, %v7947
    %v7974 = vmul.f32 %v7908, %v7947
    %v7975 = vmul.f32 %v7909, %v7947
    %v7976 = vmul.f32 %v7910, %v7947
    %v7977 = vmul.f32 %v7911, %v7947
    %v7978 = vmul.f32 %v7912, %v7947
    %v7979 = vmul.f32 %v7913, %v7947
    %v7980 = vmul.f32 %v7914, %v7947
    %v7981 = vmul.f32 %v7915, %v7947
    %v7982 = vmul.f32 %v7916, %v7947
    %v7983 = vmul.f32 %v7917, %v7947
    %v7984 = vmul.f32 %v7918, %v7947
    %v7985 = vmul.f32 %v7919, %v7947
    %v7986 = vmul.f32 %v7920, %v7947
    %v7987 = vmul.f32 %v7921, %v7947
    %v7988 = vmul.f32 %v7922, %v7947
    %v7989 = vmul.f32 %v7923, %v7947
    %v7990 = vmul.f32 %v7924, %v7947
    %v7991 = vmul.f32 %v7925, %v7947
    %v7992 = vmul.f32 %v7926, %v7947
    %v7993 = vmul.f32 %v7927, %v7947
    %v7994 = vmul.f32 %v7928, %v7947
    %v7995 = vmul.f32 %v7929, %v7947
    %v7996 = vmul.f32 %v7930, %v7947
    %v7997 = vmul.f32 %v7931, %v7947
    %v7998 = vmul.f32 %v7932, %v7947
    %v7999 = vmul.f32 %v7933, %v7947
    %v8000 = vmul.f32 %v7934, %v7947
    %v8001 = vmul.f32 %v7935, %v7947
    %v8002 = vmul.f32 %v7936, %v7947
    %v8003 = vmul.f32 %v7937, %v7947
    %v8004 = vmul.f32 %v7938, %v7947
    %v8005 = vmul.f32 %v7939, %v7947
    %v8006 = vmul.f32 %v7940, %v7947
    %v8007 = vmul.f32 %v7941, %v7947
    %v8008 = vmul.f32 %v7942, %v7947
    %v8009 = vmul.f32 %v7943, %v7947
    %v8010 = vmul.f32 %v7947, 0.0
    %v8011 = vadd.f32 %v7818, %v7948
    %v8012 = vadd.f32 %v7819, %v7949
    %v8013 = vadd.f32 %v7820, %v7950
    %v8014 = vadd.f32 %v7821, %v7951
    %v8015 = vadd.f32 %v7822, %v7952
    %v8016 = vadd.f32 %v7823, %v7953
    %v8017 = vadd.f32 %v7824, %v7954
    %v8018 = vadd.f32 %v7825, %v7955
    %v8019 = vadd.f32 %v7826, %v7956
    %v8020 = vadd.f32 %v7827, %v7957
    %v8021 = vadd.f32 %v7828, %v7958
    %v8022 = vadd.f32 %v7829, %v7959
    %v8023 = vadd.f32 %v7830, %v7960
    %v8024 = vadd.f32 %v7831, %v7961
    %v8025 = vadd.f32 %v7832, %v7962
    %v8026 = vadd.f32 %v7833, %v7963
    %v8027 = vadd.f32 %v7834, %v7964
    %v8028 = vadd.f32 %v7835, %v7965
    %v8029 = vadd.f32 %v7836, %v7966
    %v8030 = vadd.f32 %v7837, %v7967
    %v8031 = vadd.f32 %v7838, %v7968
    %v8032 = vadd.f32 %v7839, %v7969
    %v8033 = vadd.f32 %v7840, %v7970
    %v8034 = vadd.f32 %v7841, %v7971
    %v8035 = vadd.f32 %v7842, %v7972
    %v8036 = vadd.f32 %v7843, %v7973
    %v8037 = vadd.f32 %v7844, %v7974
    %v8038 = vadd.f32 %v7845, %v7975
    %v8039 = vadd.f32 %v7846, %v7976
    %v8040 = vadd.f32 %v7847, %v7977
    %v8041 = vadd.f32 %v7848, %v7978
    %v8042 = vadd.f32 %v7849, %v7979
    %v8043 = vadd.f32 %v7850, %v7980
    %v8044 = vadd.f32 %v7851, %v7981
    %v8045 = vadd.f32 %v7852, %v7982
    %v8046 = vadd.f32 %v7853, %v7983
    %v8047 = vadd.f32 %v7854, %v7984
    %v8048 = vadd.f32 %v7855, %v7985
    %v8049 = vadd.f32 %v7856, %v7986
    %v8050 = vadd.f32 %v7857, %v7987
    %v8051 = vadd.f32 %v7858, %v7988
    %v8052 = vadd.f32 %v7859, %v7989
    %v8053 = vadd.f32 %v7860, %v7990
    %v8054 = vadd.f32 %v7861, %v7991
    %v8055 = vadd.f32 %v7862, %v7992
    %v8056 = vadd.f32 %v7863, %v7993
    %v8057 = vadd.f32 %v7864, %v7994
    %v8058 = vadd.f32 %v7865, %v7995
    %v8059 = vadd.f32 %v7866, %v7996
    %v8060 = vadd.f32 %v7867, %v7997
    %v8061 = vadd.f32 %v7868, %v7998
    %v8062 = vadd.f32 %v7869, %v7999
    %v8063 = vadd.f32 %v7870, %v8000
    %v8064 = vadd.f32 %v7871, %v8001
    %v8065 = vadd.f32 %v7872, %v8002
    %v8066 = vadd.f32 %v7873, %v8003
    %v8067 = vadd.f32 %v7874, %v8004
    %v8068 = vadd.f32 %v7875, %v8005
    %v8069 = vadd.f32 %v7876, %v8006
    %v8070 = vadd.f32 %v7877, %v8007
    %v8071 = vadd.f32 %v7878, %v8008
    %v8072 = vadd.f32 %v7879, %v8009
    %v8073 = vadd.f32 %v7880, %v8010
    %v8074 = vadd.f32 %v7881, %v8010
    %v8075 = vsel %vm4907, %v6771, 0.0
    %v8076 = vsel %vm4908, %v6773, 0.0
    %v8077 = vsel %vm4909, %v6775, 0.0
    %v8078 = vsel %vm4910, %v6777, 0.0
    %v8079 = vsel %vm4911, %v6779, 0.0
    %v8080 = vsel %vm4912, %v6781, 0.0
    %v8081 = vsel %vm4913, %v6783, 0.0
    %v8082 = vsel %vm4914, %v6785, 0.0
    %v8083 = vsel %vm4915, %v6787, 0.0
    %v8084 = vsel %vm4916, %v6789, 0.0
    %v8085 = vsel %vm4917, %v6791, 0.0
    %v8086 = vsel %vm4918, %v6793, 0.0
    %v8087 = vsel %vm4919, %v6795, 0.0
    %v8088 = vsel %vm4920, %v6797, 0.0
    %v8089 = vsel %vm4921, %v6799, 0.0
    %v8090 = vsel %vm4922, %v6801, 0.0
    %v8091 = vsel %vm4923, %v6803, 0.0
    %v8092 = vsel %vm4924, %v6805, 0.0
    %v8093 = vsel %vm4925, %v6807, 0.0
    %v8094 = vsel %vm4926, %v6809, 0.0
    %v8095 = vsel %vm4927, %v6811, 0.0
    %v8096 = vsel %vm4928, %v6813, 0.0
    %v8097 = vsel %vm4929, %v6815, 0.0
    %v8098 = vsel %vm4930, %v6817, 0.0
    %v8099 = vsel %vm4931, %v6819, 0.0
    %v8100 = vsel %vm4932, %v6821, 0.0
    %v8101 = vsel %vm4933, %v6823, 0.0
    %v8102 = vsel %vm4934, %v6825, 0.0
    %v8103 = vsel %vm4935, %v6827, 0.0
    %v8104 = vsel %vm4936, %v6829, 0.0
    %v8105 = vsel %vm4937, %v6831, 0.0
    %v8106 = vsel %vm4938, %v6833, 0.0
    %v8107 = vsel %vm4939, %v6835, 0.0
    %v8108 = vsel %vm4940, %v6837, 0.0
    %v8109 = vsel %vm4941, %v6839, 0.0
    %v8110 = vsel %vm4942, %v6841, 0.0
    %v8111 = vsel %vm4943, %v6843, 0.0
    %v8112 = vsel %vm4944, %v6845, 0.0
    %v8113 = vsel %vm4945, %v6847, 0.0
    %v8114 = vsel %vm4946, %v6849, 0.0
    %v8115 = vsel %vm4947, %v6851, 0.0
    %v8116 = vsel %vm4948, %v6853, 0.0
    %v8117 = vsel %vm4949, %v6855, 0.0
    %v8118 = vsel %vm4950, %v6857, 0.0
    %v8119 = vsel %vm4951, %v6859, 0.0
    %v8120 = vsel %vm4952, %v6861, 0.0
    %v8121 = vsel %vm4953, %v6863, 0.0
    %v8122 = vsel %vm4954, %v6865, 0.0
    %v8123 = vsel %vm4955, %v6867, 0.0
    %v8124 = vsel %vm4956, %v6869, 0.0
    %v8125 = vsel %vm4957, %v6871, 0.0
    %v8126 = vsel %vm4958, %v6873, 0.0
    %v8127 = vsel %vm4959, %v6875, 0.0
    %v8128 = vsel %vm4960, %v6877, 0.0
    %v8129 = vsel %vm4961, %v6879, 0.0
    %v8130 = vsel %vm4962, %v6881, 0.0
    %v8131 = vsel %vm4963, %v6883, 0.0
    %v8132 = vsel %vm4964, %v6885, 0.0
    %v8133 = vsel %vm4965, %v6887, 0.0
    %v8134 = vsel %vm4966, %v6889, 0.0
    %v8135 = vsel %vm4967, %v7485, 0.0
    %v8136 = vsel %vm4968, %v7488, 0.0
    %v8137 = vlaneseq
    %v8138 = vshrl.u32 %v8137, 7
    %v8139 = vsub.s32 0, %v8138
    %v8140 = vrot.slane %v6194, %v8139
    %v8141 = vmul.f32 %v8075, %v8140
    %v8142 = vmul.f32 %v8076, %v8140
    %v8143 = vmul.f32 %v8077, %v8140
    %v8144 = vmul.f32 %v8078, %v8140
    %v8145 = vmul.f32 %v8079, %v8140
    %v8146 = vmul.f32 %v8080, %v8140
    %v8147 = vmul.f32 %v8081, %v8140
    %v8148 = vmul.f32 %v8082, %v8140
    %v8149 = vmul.f32 %v8083, %v8140
    %v8150 = vmul.f32 %v8084, %v8140
    %v8151 = vmul.f32 %v8085, %v8140
    %v8152 = vmul.f32 %v8086, %v8140
    %v8153 = vmul.f32 %v8087, %v8140
    %v8154 = vmul.f32 %v8088, %v8140
    %v8155 = vmul.f32 %v8089, %v8140
    %v8156 = vmul.f32 %v8090, %v8140
    %v8157 = vmul.f32 %v8091, %v8140
    %v8158 = vmul.f32 %v8092, %v8140
    %v8159 = vmul.f32 %v8093, %v8140
    %v8160 = vmul.f32 %v8094, %v8140
    %v8161 = vmul.f32 %v8095, %v8140
    %v8162 = vmul.f32 %v8096, %v8140
    %v8163 = vmul.f32 %v8097, %v8140
    %v8164 = vmul.f32 %v8098, %v8140
    %v8165 = vmul.f32 %v8099, %v8140
    %v8166 = vmul.f32 %v8100, %v8140
    %v8167 = vmul.f32 %v8101, %v8140
    %v8168 = vmul.f32 %v8102, %v8140
    %v8169 = vmul.f32 %v8103, %v8140
    %v8170 = vmul.f32 %v8104, %v8140
    %v8171 = vmul.f32 %v8105, %v8140
    %v8172 = vmul.f32 %v8106, %v8140
    %v8173 = vmul.f32 %v8107, %v8140
    %v8174 = vmul.f32 %v8108, %v8140
    %v8175 = vmul.f32 %v8109, %v8140
    %v8176 = vmul.f32 %v8110, %v8140
    %v8177 = vmul.f32 %v8111, %v8140
    %v8178 = vmul.f32 %v8112, %v8140
    %v8179 = vmul.f32 %v8113, %v8140
    %v8180 = vmul.f32 %v8114, %v8140
    %v8181 = vmul.f32 %v8115, %v8140
    %v8182 = vmul.f32 %v8116, %v8140
    %v8183 = vmul.f32 %v8117, %v8140
    %v8184 = vmul.f32 %v8118, %v8140
    %v8185 = vmul.f32 %v8119, %v8140
    %v8186 = vmul.f32 %v8120, %v8140
    %v8187 = vmul.f32 %v8121, %v8140
    %v8188 = vmul.f32 %v8122, %v8140
    %v8189 = vmul.f32 %v8123, %v8140
    %v8190 = vmul.f32 %v8124, %v8140
    %v8191 = vmul.f32 %v8125, %v8140
    %v8192 = vmul.f32 %v8126, %v8140
    %v8193 = vmul.f32 %v8127, %v8140
    %v8194 = vmul.f32 %v8128, %v8140
    %v8195 = vmul.f32 %v8129, %v8140
    %v8196 = vmul.f32 %v8130, %v8140
    %v8197 = vmul.f32 %v8131, %v8140
    %v8198 = vmul.f32 %v8132, %v8140
    %v8199 = vmul.f32 %v8133, %v8140
    %v8200 = vmul.f32 %v8134, %v8140
    %v8201 = vmul.f32 %v8135, %v8140
    %v8202 = vmul.f32 %v8136, %v8140
    %v8203 = vmul.f32 %v8140, 0.0
    %v8204 = vadd.f32 %v8011, %v8141
    %v8205 = vadd.f32 %v8012, %v8142
    %v8206 = vadd.f32 %v8013, %v8143
    %v8207 = vadd.f32 %v8014, %v8144
    %v8208 = vadd.f32 %v8015, %v8145
    %v8209 = vadd.f32 %v8016, %v8146
    %v8210 = vadd.f32 %v8017, %v8147
    %v8211 = vadd.f32 %v8018, %v8148
    %v8212 = vadd.f32 %v8019, %v8149
    %v8213 = vadd.f32 %v8020, %v8150
    %v8214 = vadd.f32 %v8021, %v8151
    %v8215 = vadd.f32 %v8022, %v8152
    %v8216 = vadd.f32 %v8023, %v8153
    %v8217 = vadd.f32 %v8024, %v8154
    %v8218 = vadd.f32 %v8025, %v8155
    %v8219 = vadd.f32 %v8026, %v8156
    %v8220 = vadd.f32 %v8027, %v8157
    %v8221 = vadd.f32 %v8028, %v8158
    %v8222 = vadd.f32 %v8029, %v8159
    %v8223 = vadd.f32 %v8030, %v8160
    %v8224 = vadd.f32 %v8031, %v8161
    %v8225 = vadd.f32 %v8032, %v8162
    %v8226 = vadd.f32 %v8033, %v8163
    %v8227 = vadd.f32 %v8034, %v8164
    %v8228 = vadd.f32 %v8035, %v8165
    %v8229 = vadd.f32 %v8036, %v8166
    %v8230 = vadd.f32 %v8037, %v8167
    %v8231 = vadd.f32 %v8038, %v8168
    %v8232 = vadd.f32 %v8039, %v8169
    %v8233 = vadd.f32 %v8040, %v8170
    %v8234 = vadd.f32 %v8041, %v8171
    %v8235 = vadd.f32 %v8042, %v8172
    %v8236 = vadd.f32 %v8043, %v8173
    %v8237 = vadd.f32 %v8044, %v8174
    %v8238 = vadd.f32 %v8045, %v8175
    %v8239 = vadd.f32 %v8046, %v8176
    %v8240 = vadd.f32 %v8047, %v8177
    %v8241 = vadd.f32 %v8048, %v8178
    %v8242 = vadd.f32 %v8049, %v8179
    %v8243 = vadd.f32 %v8050, %v8180
    %v8244 = vadd.f32 %v8051, %v8181
    %v8245 = vadd.f32 %v8052, %v8182
    %v8246 = vadd.f32 %v8053, %v8183
    %v8247 = vadd.f32 %v8054, %v8184
    %v8248 = vadd.f32 %v8055, %v8185
    %v8249 = vadd.f32 %v8056, %v8186
    %v8250 = vadd.f32 %v8057, %v8187
    %v8251 = vadd.f32 %v8058, %v8188
    %v8252 = vadd.f32 %v8059, %v8189
    %v8253 = vadd.f32 %v8060, %v8190
    %v8254 = vadd.f32 %v8061, %v8191
    %v8255 = vadd.f32 %v8062, %v8192
    %v8256 = vadd.f32 %v8063, %v8193
    %v8257 = vadd.f32 %v8064, %v8194
    %v8258 = vadd.f32 %v8065, %v8195
    %v8259 = vadd.f32 %v8066, %v8196
    %v8260 = vadd.f32 %v8067, %v8197
    %v8261 = vadd.f32 %v8068, %v8198
    %v8262 = vadd.f32 %v8069, %v8199
    %v8263 = vadd.f32 %v8070, %v8200
    %v8264 = vadd.f32 %v8071, %v8201
    %v8265 = vadd.f32 %v8072, %v8202
    %v8266 = vadd.f32 %v8073, %v8203
    %v8267 = vadd.f32 %v8074, %v8203
    %v8268 = vld [vmem:[%s12] sm:$0xff]
    %v8269 = vld [vmem:[%s12 + $0x8] sm:$0xff]
    %v8270 = vld [vmem:[%s12 + $0x10] sm:$0xff]
    %v8271 = vld [vmem:[%s12 + $0x18] sm:$0xff]
    %v8272 = vld [vmem:[%s12 + $0x20] sm:$0xff]
    %v8273 = vld [vmem:[%s12 + $0x28] sm:$0xff]
    %v8274 = vld [vmem:[%s12 + $0x30] sm:$0xff]
    %v8275 = vld [vmem:[%s12 + $0x38] sm:$0xff]
    %v8276 = vld [vmem:[%s12 + $0x40] sm:$0xff]
    %v8277 = vld [vmem:[%s12 + $0x48] sm:$0xff]
    %v8278 = vld [vmem:[%s12 + $0x50] sm:$0xff]
    %v8279 = vld [vmem:[%s12 + $0x58] sm:$0xff]
    %v8280 = vld [vmem:[%s12 + $0x60] sm:$0xff]
    %v8281 = vld [vmem:[%s12 + $0x68] sm:$0xff]
    %v8282 = vld [vmem:[%s12 + $0x70] sm:$0xff]
    %v8283 = vld [vmem:[%s12 + $0x78] sm:$0xff]
    %v8284 = vld [vmem:[%s12 + $0x80] sm:$0xff]
    %v8285 = vld [vmem:[%s12 + $0x88] sm:$0xff]
    %v8286 = vld [vmem:[%s12 + $0x90] sm:$0xff]
    %v8287 = vld [vmem:[%s12 + $0x98] sm:$0xff]
    %v8288 = vld [vmem:[%s12 + $0xa0] sm:$0xff]
    %v8289 = vld [vmem:[%s12 + $0xa8] sm:$0xff]
    %v8290 = vld [vmem:[%s12 + $0xb0] sm:$0xff]
    %v8291 = vld [vmem:[%s12 + $0xb8] sm:$0xff]
    %v8292 = vld [vmem:[%s12 + $0xc0] sm:$0xff]
    %v8293 = vld [vmem:[%s12 + $0xc8] sm:$0xff]
    %v8294 = vld [vmem:[%s12 + $0xd0] sm:$0xff]
    %v8295 = vld [vmem:[%s12 + $0xd8] sm:$0xff]
    %v8296 = vld [vmem:[%s12 + $0xe0] sm:$0xff]
    %v8297 = vld [vmem:[%s12 + $0xe8] sm:$0xff]
    %v8298 = vld [vmem:[%s12 + $0xf0] sm:$0xff]
    %v8299 = vld [vmem:[%s12 + $0xf8] sm:$0xff]
    %v8300 = vpack.c.bf16 %v8205, %v8204
    %v8301 = vpack.c.bf16 %v8207, %v8206
    %v8302 = vpack.c.bf16 %v8209, %v8208
    %v8303 = vpack.c.bf16 %v8211, %v8210
    %v8304 = vpack.c.bf16 %v8213, %v8212
    %v8305 = vpack.c.bf16 %v8215, %v8214
    %v8306 = vpack.c.bf16 %v8217, %v8216
    %v8307 = vpack.c.bf16 %v8219, %v8218
    %v8308 = vpack.c.bf16 %v8221, %v8220
    %v8309 = vpack.c.bf16 %v8223, %v8222
    %v8310 = vpack.c.bf16 %v8225, %v8224
    %v8311 = vpack.c.bf16 %v8227, %v8226
    %v8312 = vpack.c.bf16 %v8229, %v8228
    %v8313 = vpack.c.bf16 %v8231, %v8230
    %v8314 = vpack.c.bf16 %v8233, %v8232
    %v8315 = vpack.c.bf16 %v8235, %v8234
    %v8316 = vpack.c.bf16 %v8237, %v8236
    %v8317 = vpack.c.bf16 %v8239, %v8238
    %v8318 = vpack.c.bf16 %v8241, %v8240
    %v8319 = vpack.c.bf16 %v8243, %v8242
    %v8320 = vpack.c.bf16 %v8245, %v8244
    %v8321 = vpack.c.bf16 %v8247, %v8246
    %v8322 = vpack.c.bf16 %v8249, %v8248
    %v8323 = vpack.c.bf16 %v8251, %v8250
    %v8324 = vpack.c.bf16 %v8253, %v8252
    %v8325 = vpack.c.bf16 %v8255, %v8254
    %v8326 = vpack.c.bf16 %v8257, %v8256
    %v8327 = vpack.c.bf16 %v8259, %v8258
    %v8328 = vpack.c.bf16 %v8261, %v8260
    %v8329 = vpack.c.bf16 %v8263, %v8262
    %v8330 = vpack.c.bf16 %v8265, %v8264
    %v8331 = vpack.c.bf16 %v8267, %v8266
    %v8364 = vunpack.c.l.b16 %v8268
    %v8365 = vunpack.c.h.b16 %v8268
    %v8366 = vunpack.c.l.b16 %v8269
    %v8367 = vunpack.c.h.b16 %v8269
    %v8368 = vunpack.c.l.b16 %v8270
    %v8369 = vunpack.c.h.b16 %v8270
    %v8370 = vunpack.c.l.b16 %v8271
    %v8371 = vunpack.c.h.b16 %v8271
    %v8372 = vunpack.c.l.b16 %v8272
    %v8373 = vunpack.c.h.b16 %v8272
    %v8374 = vunpack.c.l.b16 %v8273
    %v8375 = vunpack.c.h.b16 %v8273
    %v8376 = vunpack.c.l.b16 %v8274
    %v8377 = vunpack.c.h.b16 %v8274
    %v8378 = vunpack.c.l.b16 %v8275
    %v8379 = vunpack.c.h.b16 %v8275
    %v8380 = vunpack.c.l.b16 %v8276
    %v8381 = vunpack.c.h.b16 %v8276
    %v8382 = vunpack.c.l.b16 %v8277
    %v8383 = vunpack.c.h.b16 %v8277
    %v8384 = vunpack.c.l.b16 %v8278
    %v8385 = vunpack.c.h.b16 %v8278
    %v8386 = vunpack.c.l.b16 %v8279
    %v8387 = vunpack.c.h.b16 %v8279
    %v8388 = vunpack.c.l.b16 %v8280
    %v8389 = vunpack.c.h.b16 %v8280
    %v8390 = vunpack.c.l.b16 %v8281
    %v8391 = vunpack.c.h.b16 %v8281
    %v8392 = vunpack.c.l.b16 %v8282
    %v8393 = vunpack.c.h.b16 %v8282
    %v8394 = vunpack.c.l.b16 %v8283
    %v8395 = vunpack.c.h.b16 %v8283
    %v8396 = vunpack.c.l.b16 %v8284
    %v8397 = vunpack.c.h.b16 %v8284
    %v8398 = vunpack.c.l.b16 %v8285
    %v8399 = vunpack.c.h.b16 %v8285
    %v8400 = vunpack.c.l.b16 %v8286
    %v8401 = vunpack.c.h.b16 %v8286
    %v8402 = vunpack.c.l.b16 %v8287
    %v8403 = vunpack.c.h.b16 %v8287
    %v8404 = vunpack.c.l.b16 %v8288
    %v8405 = vunpack.c.h.b16 %v8288
    %v8406 = vunpack.c.l.b16 %v8289
    %v8407 = vunpack.c.h.b16 %v8289
    %v8408 = vunpack.c.l.b16 %v8290
    %v8409 = vunpack.c.h.b16 %v8290
    %v8410 = vunpack.c.l.b16 %v8291
    %v8411 = vunpack.c.h.b16 %v8291
    %v8412 = vunpack.c.l.b16 %v8292
    %v8413 = vunpack.c.h.b16 %v8292
    %v8414 = vunpack.c.l.b16 %v8293
    %v8415 = vunpack.c.h.b16 %v8293
    %v8416 = vunpack.c.l.b16 %v8294
    %v8417 = vunpack.c.h.b16 %v8294
    %v8418 = vunpack.c.l.b16 %v8295
    %v8419 = vunpack.c.h.b16 %v8295
    %v8420 = vunpack.c.l.b16 %v8296
    %v8421 = vunpack.c.h.b16 %v8296
    %v8422 = vunpack.c.l.b16 %v8297
    %v8423 = vunpack.c.h.b16 %v8297
    %v8424 = vunpack.c.l.b16 %v8298
    %v8425 = vunpack.c.h.b16 %v8298
    %v8426 = vunpack.c.l.b16 %v8299
    %v8427 = vunpack.c.h.b16 %v8299
    %v8428 = vpack.c.b16 %v8368, %v8364
    %v8429 = vpack.c.b16 %v8369, %v8365
    %v8430 = vpack.c.b16 %v8370, %v8366
    %v8431 = vpack.c.b16 %v8371, %v8367
    %v8432 = vpack.c.b16 %v8376, %v8372
    %v8433 = vpack.c.b16 %v8377, %v8373
    %v8434 = vpack.c.b16 %v8378, %v8374
    %v8435 = vpack.c.b16 %v8379, %v8375
    %v8436 = vpack.c.b16 %v8384, %v8380
    %v8437 = vpack.c.b16 %v8385, %v8381
    %v8438 = vpack.c.b16 %v8386, %v8382
    %v8439 = vpack.c.b16 %v8387, %v8383
    %v8440 = vpack.c.b16 %v8392, %v8388
    %v8441 = vpack.c.b16 %v8393, %v8389
    %v8442 = vpack.c.b16 %v8394, %v8390
    %v8443 = vpack.c.b16 %v8395, %v8391
    %v8444 = vpack.c.b16 %v8400, %v8396
    %v8445 = vpack.c.b16 %v8401, %v8397
    %v8446 = vpack.c.b16 %v8402, %v8398
    %v8447 = vpack.c.b16 %v8403, %v8399
    %v8448 = vpack.c.b16 %v8408, %v8404
    %v8449 = vpack.c.b16 %v8409, %v8405
    %v8450 = vpack.c.b16 %v8410, %v8406
    %v8451 = vpack.c.b16 %v8411, %v8407
    %v8452 = vpack.c.b16 %v8416, %v8412
    %v8453 = vpack.c.b16 %v8417, %v8413
    %v8454 = vpack.c.b16 %v8418, %v8414
    %v8455 = vpack.c.b16 %v8419, %v8415
    %v8456 = vpack.c.b16 %v8424, %v8420
    %v8457 = vpack.c.b16 %v8425, %v8421
    %v8458 = vpack.c.b16 %v8426, %v8422
    %v8459 = vpack.c.b16 %v8427, %v8423
    %8492 = vmatprep.subr.bf16.mxu0 0
    %8493 = vmatpush1.bf16.msra.mxu0 %v8300
    %8494 = vmatprep.subr.bf16.mxu0 0
    %8495 = vmatpush1.bf16.msra.mxu0 %v8301
    %8496 = vmatprep.subr.bf16.mxu0 0
    %8497 = vmatpush1.bf16.msra.mxu0 %v8302
    %8498 = vmatprep.subr.bf16.mxu0 0
    %8499 = vmatpush1.bf16.msra.mxu0 %v8303
    %8500 = vmatprep.subr.bf16.mxu0 0
    %8501 = vmatpush1.bf16.msra.mxu0 %v8304
    %8502 = vmatprep.subr.bf16.mxu0 0
    %8503 = vmatpush1.bf16.msra.mxu0 %v8305
    %8504 = vmatprep.subr.bf16.mxu0 0
    %8505 = vmatpush1.bf16.msra.mxu0 %v8306
    %8506 = vmatprep.subr.bf16.mxu0 0
    %8507 = vmatpush1.bf16.msra.mxu0 %v8307
    %8508 = vmatprep.subr.bf16.mxu0 0
    %8509 = vmatpush1.bf16.msra.mxu0 %v8308
    %8510 = vmatprep.subr.bf16.mxu0 0
    %8511 = vmatpush1.bf16.msra.mxu0 %v8309
    %8512 = vmatprep.subr.bf16.mxu0 0
    %8513 = vmatpush1.bf16.msra.mxu0 %v8310
    %8514 = vmatprep.subr.bf16.mxu0 0
    %8515 = vmatpush1.bf16.msra.mxu0 %v8311
    %8516 = vmatprep.subr.bf16.mxu0 0
    %8517 = vmatpush1.bf16.msra.mxu0 %v8312
    %8518 = vmatprep.subr.bf16.mxu0 0
    %8519 = vmatpush1.bf16.msra.mxu0 %v8313
    %8520 = vmatprep.subr.bf16.mxu0 0
    %8521 = vmatpush1.bf16.msra.mxu0 %v8314
    %8522 = vmatprep.subr.bf16.mxu0 0
    %8523 = vmatpush1.bf16.msra.mxu0 %v8315
    %8524 = vmatprep.mubr.bf16.mxu0 %v8429
    %8525 = vmatmul.mubr.bf16.gmra.mrb[0].mxu0 %v8428
    %v8526 = vpop.f32.mrb[0].mxu0
    %v8527 = vadd.f32 0.0, %v8526
    %v8528 = vpop.f32.mrb[0].mxu0
    %v8529 = vpop.f32.mrb[0].mxu0
    %v8530 = vadd.f32 0.0, %v8529
    %v8531 = vpop.f32.mrb[0].mxu0
    %8532 = vmatprep.mubr.bf16.mxu0 %v8433
    %8533 = vmatmul.mubr.bf16.gmra.mrb[0].mxu0 %v8432
    %v8534 = vpop.f32.mrb[0].mxu0
    %v8535 = vadd.f32 0.0, %v8534
    %v8536 = vpop.f32.mrb[0].mxu0
    %v8537 = vpop.f32.mrb[0].mxu0
    %v8538 = vadd.f32 0.0, %v8537
    %v8539 = vpop.f32.mrb[0].mxu0
    %8540 = vmatprep.mubr.bf16.mxu0 %v8437
    %8541 = vmatmul.mubr.bf16.gmra.mrb[0].mxu0 %v8436
    %v8542 = vpop.f32.mrb[0].mxu0
    %v8543 = vadd.f32 0.0, %v8542
    %v8544 = vpop.f32.mrb[0].mxu0
    %v8545 = vpop.f32.mrb[0].mxu0
    %v8546 = vadd.f32 0.0, %v8545
    %v8547 = vpop.f32.mrb[0].mxu0
    %8548 = vmatprep.mubr.bf16.mxu0 %v8441
    %8549 = vmatmul.mubr.bf16.gmra.mrb[0].mxu0 %v8440
    %v8550 = vpop.f32.mrb[0].mxu0
    %v8551 = vadd.f32 0.0, %v8550
    %v8552 = vpop.f32.mrb[0].mxu0
    %v8553 = vpop.f32.mrb[0].mxu0
    %v8554 = vadd.f32 0.0, %v8553
    %v8555 = vpop.f32.mrb[0].mxu0
    %8556 = vmatprep.mubr.bf16.mxu0 %v8445
    %8557 = vmatmul.mubr.bf16.gmra.mrb[0].mxu0 %v8444
    %v8558 = vpop.f32.mrb[0].mxu0
    %v8559 = vadd.f32 0.0, %v8558
    %v8560 = vpop.f32.mrb[0].mxu0
    %v8561 = vpop.f32.mrb[0].mxu0
    %v8562 = vadd.f32 0.0, %v8561
    %v8563 = vpop.f32.mrb[0].mxu0
    %8564 = vmatprep.mubr.bf16.mxu0 %v8449
    %8565 = vmatmul.mubr.bf16.gmra.mrb[0].mxu0 %v8448
    %v8566 = vpop.f32.mrb[0].mxu0
    %v8567 = vadd.f32 0.0, %v8566
    %v8568 = vpop.f32.mrb[0].mxu0
    %v8569 = vpop.f32.mrb[0].mxu0
    %v8570 = vadd.f32 0.0, %v8569
    %v8571 = vpop.f32.mrb[0].mxu0
    %8572 = vmatprep.mubr.bf16.mxu0 %v8453
    %8573 = vmatmul.mubr.bf16.gmra.mrb[0].mxu0 %v8452
    %v8574 = vpop.f32.mrb[0].mxu0
    %v8575 = vadd.f32 0.0, %v8574
    %v8576 = vpop.f32.mrb[0].mxu0
    %v8577 = vpop.f32.mrb[0].mxu0
    %v8578 = vadd.f32 0.0, %v8577
    %v8579 = vpop.f32.mrb[0].mxu0
    %8580 = vmatprep.mubr.bf16.mxu0 %v8457
    %8581 = vmatmul.mubr.bf16.gmra.mrb[0].mxu0 %v8456
    %v8582 = vpop.f32.mrb[0].mxu0
    %v8583 = vadd.f32 0.0, %v8582
    %v8584 = vpop.f32.mrb[0].mxu0
    %v8585 = vpop.f32.mrb[0].mxu0
    %v8586 = vadd.f32 0.0, %v8585
    %v8587 = vpop.f32.mrb[0].mxu0
    %8588 = vdwg.mxu0
    %8589 = vmatprep.subr.bf16.mxu0 0
    %8590 = vmatpush1.bf16.msra.mxu0 %v8316
    %8591 = vmatprep.subr.bf16.mxu0 0
    %8592 = vmatpush1.bf16.msra.mxu0 %v8317
    %8593 = vmatprep.subr.bf16.mxu0 0
    %8594 = vmatpush1.bf16.msra.mxu0 %v8318
    %8595 = vmatprep.subr.bf16.mxu0 0
    %8596 = vmatpush1.bf16.msra.mxu0 %v8319
    %8597 = vmatprep.subr.bf16.mxu0 0
    %8598 = vmatpush1.bf16.msra.mxu0 %v8320
    %8599 = vmatprep.subr.bf16.mxu0 0
    %8600 = vmatpush1.bf16.msra.mxu0 %v8321
    %8601 = vmatprep.subr.bf16.mxu0 0
    %8602 = vmatpush1.bf16.msra.mxu0 %v8322
    %8603 = vmatprep.subr.bf16.mxu0 0
    %8604 = vmatpush1.bf16.msra.mxu0 %v8323
    %8605 = vmatprep.subr.bf16.mxu0 0
    %8606 = vmatpush1.bf16.msra.mxu0 %v8324
    %8607 = vmatprep.subr.bf16.mxu0 0
    %8608 = vmatpush1.bf16.msra.mxu0 %v8325
    %8609 = vmatprep.subr.bf16.mxu0 0
    %8610 = vmatpush1.bf16.msra.mxu0 %v8326
    %8611 = vmatprep.subr.bf16.mxu0 0
    %8612 = vmatpush1.bf16.msra.mxu0 %v8327
    %8613 = vmatprep.subr.bf16.mxu0 0
    %8614 = vmatpush1.bf16.msra.mxu0 %v8328
    %8615 = vmatprep.subr.bf16.mxu0 0
    %8616 = vmatpush1.bf16.msra.mxu0 %v8329
    %8617 = vmatprep.subr.bf16.mxu0 0
    %8618 = vmatpush1.bf16.msra.mxu0 %v8330
    %8619 = vmatprep.subr.bf16.mxu0 0
    %8620 = vmatpush1.bf16.msra.mxu0 %v8331
    %8621 = vmatprep.mubr.bf16.mxu0 %v8431
    %8622 = vmatmul.mubr.bf16.gmra.mrb[0].mxu0 %v8430
    %v8623 = vpop.f32.mrb[0].mxu0
    %v8624 = vadd.f32 %v8527, %v8623
    %v8625 = vpop.f32.mrb[0].mxu0
    %v8626 = vpop.f32.mrb[0].mxu0
    %v8627 = vadd.f32 %v8530, %v8626
    %v8628 = vpop.f32.mrb[0].mxu0
    %8629 = vmatprep.mubr.bf16.mxu0 %v8435
    %8630 = vmatmul.mubr.bf16.gmra.mrb[0].mxu0 %v8434
    %v8631 = vpop.f32.mrb[0].mxu0
    %v8632 = vadd.f32 %v8535, %v8631
    %v8633 = vpop.f32.mrb[0].mxu0
    %v8634 = vpop.f32.mrb[0].mxu0
    %v8635 = vadd.f32 %v8538, %v8634
    %v8636 = vpop.f32.mrb[0].mxu0
    %8637 = vmatprep.mubr.bf16.mxu0 %v8439
    %8638 = vmatmul.mubr.bf16.gmra.mrb[0].mxu0 %v8438
    %v8639 = vpop.f32.mrb[0].mxu0
    %v8640 = vadd.f32 %v8543, %v8639
    %v8641 = vpop.f32.mrb[0].mxu0
    %v8642 = vpop.f32.mrb[0].mxu0
    %v8643 = vadd.f32 %v8546, %v8642
    %v8644 = vpop.f32.mrb[0].mxu0
    %8645 = vmatprep.mubr.bf16.mxu0 %v8443
    %8646 = vmatmul.mubr.bf16.gmra.mrb[0].mxu0 %v8442
    %v8647 = vpop.f32.mrb[0].mxu0
    %v8648 = vadd.f32 %v8551, %v8647
    %v8649 = vpop.f32.mrb[0].mxu0
    %v8650 = vpop.f32.mrb[0].mxu0
    %v8651 = vadd.f32 %v8554, %v8650
    %v8652 = vpop.f32.mrb[0].mxu0
    %8653 = vmatprep.mubr.bf16.mxu0 %v8447
    %8654 = vmatmul.mubr.bf16.gmra.mrb[0].mxu0 %v8446
    %v8655 = vpop.f32.mrb[0].mxu0
    %v8656 = vadd.f32 %v8559, %v8655
    %v8657 = vpop.f32.mrb[0].mxu0
    %v8658 = vpop.f32.mrb[0].mxu0
    %v8659 = vadd.f32 %v8562, %v8658
    %v8660 = vpop.f32.mrb[0].mxu0
    %8661 = vmatprep.mubr.bf16.mxu0 %v8451
    %8662 = vmatmul.mubr.bf16.gmra.mrb[0].mxu0 %v8450
    %v8663 = vpop.f32.mrb[0].mxu0
    %v8664 = vadd.f32 %v8567, %v8663
    %v8665 = vpop.f32.mrb[0].mxu0
    %v8666 = vpop.f32.mrb[0].mxu0
    %v8667 = vadd.f32 %v8570, %v8666
    %v8668 = vpop.f32.mrb[0].mxu0
    %8669 = vmatprep.mubr.bf16.mxu0 %v8455
    %8670 = vmatmul.mubr.bf16.gmra.mrb[0].mxu0 %v8454
    %v8671 = vpop.f32.mrb[0].mxu0
    %v8672 = vadd.f32 %v8575, %v8671
    %v8673 = vpop.f32.mrb[0].mxu0
    %v8674 = vpop.f32.mrb[0].mxu0
    %v8675 = vadd.f32 %v8578, %v8674
    %v8676 = vpop.f32.mrb[0].mxu0
    %8677 = vmatprep.mubr.bf16.mxu0 %v8459
    %8678 = vmatmul.mubr.bf16.gmra.mrb[0].mxu0 %v8458
    %v8679 = vpop.f32.mrb[0].mxu0
    %v8680 = vadd.f32 %v8583, %v8679
    %v8681 = vpop.f32.mrb[0].mxu0
    %v8682 = vpop.f32.mrb[0].mxu0
    %v8683 = vadd.f32 %v8586, %v8682
    %v8684 = vpop.f32.mrb[0].mxu0
    %8685 = vdwg.mxu0
    %v8686 = vpack.c.bf16 %v8627, %v8624
    %v8687 = vpack.c.bf16 %v8635, %v8632
    %v8688 = vpack.c.bf16 %v8643, %v8640
    %v8689 = vpack.c.bf16 %v8651, %v8648
    %v8690 = vpack.c.bf16 %v8659, %v8656
    %v8691 = vpack.c.bf16 %v8667, %v8664
    %v8692 = vpack.c.bf16 %v8675, %v8672
    %v8693 = vpack.c.bf16 %v8683, %v8680
    %v8694 = vld [vmem:[%s9] sm:$0xf]
    %v8695 = vld [vmem:[%s9 + $0x4] sm:$0xf]
    %v8696 = vld [vmem:[%s9 + $0x8] sm:$0xf]
    %v8697 = vld [vmem:[%s9 + $0xc] sm:$0xf]
    %v8702 = vunpack.c.l.b16 %v8694
    %v8703 = vunpack.c.l.b16 %v8695
    %v8704 = vunpack.c.l.b16 %v8696
    %v8705 = vunpack.c.l.b16 %v8697
    %v8706 = vpack.c.b16 %v8703, %v8702
    %v8707 = vpack.c.b16 %v8705, %v8704
    %v8711 = vsel %vm5589, %v8686, 0
    %v8714 = vsel %vm5589, %v8687, 0
    %v8717 = vsel %vm5589, %v8688, 0
    %v8720 = vsel %vm5589, %v8689, 0
    %v8723 = vsel %vm5589, %v8690, 0
    %v8726 = vsel %vm5589, %v8691, 0
    %v8729 = vsel %vm5589, %v8692, 0
    %v8732 = vsel %vm5589, %v8693, 0
    %8734 = vmatprep.subr.bf16.mxu0 0
    %8735 = vmatpush1.bf16.msra.mxu0 %v8706
    %8736 = vmatprep.subr.bf16.mxu0 0
    %8737 = vmatpush1.bf16.msra.mxu0 %v8707
    %8738 = vmatprep.subr.bf16.mxu0 0
    %8739 = vmatpush1.bf16.msra.mxu0 0
    %8740 = vmatprep.subr.bf16.mxu0 0
    %8741 = vmatpush1.bf16.msra.mxu0 0
    %8742 = vmatprep.subr.bf16.mxu0 0
    %8743 = vmatpush1.bf16.msra.mxu0 0
    %8744 = vmatprep.subr.bf16.mxu0 0
    %8745 = vmatpush1.bf16.msra.mxu0 0
    %8746 = vmatprep.subr.bf16.mxu0 0
    %8747 = vmatpush1.bf16.msra.mxu0 0
    %8748 = vmatprep.subr.bf16.mxu0 0
    %8749 = vmatpush1.bf16.msra.mxu0 0
    %8750 = vmatprep.subr.bf16.mxu0 0
    %8751 = vmatpush1.bf16.msra.mxu0 0
    %8752 = vmatprep.subr.bf16.mxu0 0
    %8753 = vmatpush1.bf16.msra.mxu0 0
    %8754 = vmatprep.subr.bf16.mxu0 0
    %8755 = vmatpush1.bf16.msra.mxu0 0
    %8756 = vmatprep.subr.bf16.mxu0 0
    %8757 = vmatpush1.bf16.msra.mxu0 0
    %8758 = vmatprep.subr.bf16.mxu0 0
    %8759 = vmatpush1.bf16.msra.mxu0 0
    %8760 = vmatprep.subr.bf16.mxu0 0
    %8761 = vmatpush1.bf16.msra.mxu0 0
    %8762 = vmatprep.subr.bf16.mxu0 0
    %8763 = vmatpush1.bf16.msra.mxu0 0
    %8764 = vmatprep.subr.bf16.mxu0 0
    %8765 = vmatpush1.bf16.msra.mxu0 0
    %8766 = vmatprep.mubr.bf16.mxu0 0
    %8767 = vmatmul.mubr.bf16.gmra.mrb[0].mxu0 %v8711
    %v8768 = vpop.f32.mrb[0].mxu0
    %v8769 = vadd.f32 0.0, %v8768
    %v8770 = vpop.f32.mrb[0].mxu0
    %v8771 = vpop.f32.mrb[0].mxu0
    %v8772 = vadd.f32 0.0, %v8771
    %v8773 = vpop.f32.mrb[0].mxu0
    %8774 = vmatprep.mubr.bf16.mxu0 0
    %8775 = vmatmul.mubr.bf16.gmra.mrb[0].mxu0 %v8714
    %v8776 = vpop.f32.mrb[0].mxu0
    %v8777 = vadd.f32 0.0, %v8776
    %v8778 = vpop.f32.mrb[0].mxu0
    %v8779 = vpop.f32.mrb[0].mxu0
    %v8780 = vadd.f32 0.0, %v8779
    %v8781 = vpop.f32.mrb[0].mxu0
    %8782 = vmatprep.mubr.bf16.mxu0 0
    %8783 = vmatmul.mubr.bf16.gmra.mrb[0].mxu0 %v8717
    %v8784 = vpop.f32.mrb[0].mxu0
    %v8785 = vadd.f32 0.0, %v8784
    %v8786 = vpop.f32.mrb[0].mxu0
    %v8787 = vpop.f32.mrb[0].mxu0
    %v8788 = vadd.f32 0.0, %v8787
    %v8789 = vpop.f32.mrb[0].mxu0
    %8790 = vmatprep.mubr.bf16.mxu0 0
    %8791 = vmatmul.mubr.bf16.gmra.mrb[0].mxu0 %v8720
    %v8792 = vpop.f32.mrb[0].mxu0
    %v8793 = vadd.f32 0.0, %v8792
    %v8794 = vpop.f32.mrb[0].mxu0
    %v8795 = vpop.f32.mrb[0].mxu0
    %v8796 = vadd.f32 0.0, %v8795
    %v8797 = vpop.f32.mrb[0].mxu0
    %8798 = vmatprep.mubr.bf16.mxu0 0
    %8799 = vmatmul.mubr.bf16.gmra.mrb[0].mxu0 %v8723
    %v8800 = vpop.f32.mrb[0].mxu0
    %v8801 = vadd.f32 0.0, %v8800
    %v8802 = vpop.f32.mrb[0].mxu0
    %v8803 = vpop.f32.mrb[0].mxu0
    %v8804 = vadd.f32 0.0, %v8803
    %v8805 = vpop.f32.mrb[0].mxu0
    %8806 = vmatprep.mubr.bf16.mxu0 0
    %8807 = vmatmul.mubr.bf16.gmra.mrb[0].mxu0 %v8726
    %v8808 = vpop.f32.mrb[0].mxu0
    %v8809 = vadd.f32 0.0, %v8808
    %v8810 = vpop.f32.mrb[0].mxu0
    %v8811 = vpop.f32.mrb[0].mxu0
    %v8812 = vadd.f32 0.0, %v8811
    %v8813 = vpop.f32.mrb[0].mxu0
    %8814 = vmatprep.mubr.bf16.mxu0 0
    %8815 = vmatmul.mubr.bf16.gmra.mrb[0].mxu0 %v8729
    %v8816 = vpop.f32.mrb[0].mxu0
    %v8817 = vadd.f32 0.0, %v8816
    %v8818 = vpop.f32.mrb[0].mxu0
    %v8819 = vpop.f32.mrb[0].mxu0
    %v8820 = vadd.f32 0.0, %v8819
    %v8821 = vpop.f32.mrb[0].mxu0
    %8822 = vmatprep.mubr.bf16.mxu0 0
    %8823 = vmatmul.mubr.bf16.gmra.mrb[0].mxu0 %v8732
    %v8824 = vpop.f32.mrb[0].mxu0
    %v8825 = vadd.f32 0.0, %v8824
    %v8826 = vpop.f32.mrb[0].mxu0
    %v8827 = vpop.f32.mrb[0].mxu0
    %v8828 = vadd.f32 0.0, %v8827
    %v8829 = vpop.f32.mrb[0].mxu0
    %8830 = vdwg.mxu0
    %v8831 = vld [vmem:[%s10] sm:$0x1]
    %v8832 = vld [vmem:[%s11] sm:$0x1]
    %vm8833 = vcmask 523264
    %v8834 = vsel %vm8833, %v8769, 0.0
    %v8835 = vsel %vm8833, %v8772, 0.0
    %v8836 = vadd.f32 %v8834, %v8835
    %v8837 = vsel %vm8833, %v8777, 0.0
    %v8838 = vadd.f32 %v8836, %v8837
    %v8839 = vsel %vm8833, %v8780, 0.0
    %v8840 = vadd.f32 %v8838, %v8839
    %v8841 = vsel %vm8833, %v8785, 0.0
    %v8842 = vadd.f32 %v8840, %v8841
    %v8843 = vsel %vm8833, %v8788, 0.0
    %v8844 = vadd.f32 %v8842, %v8843
    %v8845 = vsel %vm8833, %v8793, 0.0
    %v8846 = vadd.f32 %v8844, %v8845
    %v8847 = vsel %vm8833, %v8796, 0.0
    %v8848 = vadd.f32 %v8846, %v8847
    %v8849 = vsel %vm8833, %v8801, 0.0
    %v8850 = vadd.f32 %v8848, %v8849
    %v8851 = vsel %vm8833, %v8804, 0.0
    %v8852 = vadd.f32 %v8850, %v8851
    %v8853 = vsel %vm8833, %v8809, 0.0
    %v8854 = vadd.f32 %v8852, %v8853
    %v8855 = vsel %vm8833, %v8812, 0.0
    %v8856 = vadd.f32 %v8854, %v8855
    %v8857 = vsel %vm8833, %v8817, 0.0
    %v8858 = vadd.f32 %v8856, %v8857
    %v8859 = vsel %vm8833, %v8820, 0.0
    %v8860 = vadd.f32 %v8858, %v8859
    %v8861 = vsel %vm8833, %v8825, 0.0
    %v8862 = vadd.f32 %v8860, %v8861
    %v8863 = vsel %vm8833, %v8828, 0.0
    %v8864 = vadd.f32 %v8862, %v8863
    %v8865 = vrot.slane %v8864, 4
    %v8866 = vadd.f32 %v8864, %v8865
    %v8867 = vrot.slane %v8866, 2
    %v8868 = vadd.f32 %v8866, %v8867
    %v8869 = vrot.slane %v8868, 1
    %v8870 = vadd.f32 %v8868, %v8869
    %v8871 = vmul.f32 %v8870, 0.0078125
    %v8872 = vsub.f32 %v8769, %v8871
    %v8873 = vsub.f32 %v8772, %v8871
    %v8874 = vsub.f32 %v8777, %v8871
    %v8875 = vsub.f32 %v8780, %v8871
    %v8876 = vsub.f32 %v8785, %v8871
    %v8877 = vsub.f32 %v8788, %v8871
    %v8878 = vsub.f32 %v8793, %v8871
    %v8879 = vsub.f32 %v8796, %v8871
    %v8880 = vsub.f32 %v8801, %v8871
    %v8881 = vsub.f32 %v8804, %v8871
    %v8882 = vsub.f32 %v8809, %v8871
    %v8883 = vsub.f32 %v8812, %v8871
    %v8884 = vsub.f32 %v8817, %v8871
    %v8885 = vsub.f32 %v8820, %v8871
    %v8886 = vsub.f32 %v8825, %v8871
    %v8887 = vsub.f32 %v8828, %v8871
    %v8888 = vmul.f32 %v8872, %v8872
    %v8889 = vmul.f32 %v8873, %v8873
    %v8890 = vmul.f32 %v8874, %v8874
    %v8891 = vmul.f32 %v8875, %v8875
    %v8892 = vmul.f32 %v8876, %v8876
    %v8893 = vmul.f32 %v8877, %v8877
    %v8894 = vmul.f32 %v8878, %v8878
    %v8895 = vmul.f32 %v8879, %v8879
    %v8896 = vmul.f32 %v8880, %v8880
    %v8897 = vmul.f32 %v8881, %v8881
    %v8898 = vmul.f32 %v8882, %v8882
    %v8899 = vmul.f32 %v8883, %v8883
    %v8900 = vmul.f32 %v8884, %v8884
    %v8901 = vmul.f32 %v8885, %v8885
    %v8902 = vmul.f32 %v8886, %v8886
    %v8903 = vmul.f32 %v8887, %v8887
    %v8904 = vsel %vm8833, %v8888, 0.0
    %v8905 = vsel %vm8833, %v8889, 0.0
    %v8906 = vadd.f32 %v8904, %v8905
    %v8907 = vsel %vm8833, %v8890, 0.0
    %v8908 = vadd.f32 %v8906, %v8907
    %v8909 = vsel %vm8833, %v8891, 0.0
    %v8910 = vadd.f32 %v8908, %v8909
    %v8911 = vsel %vm8833, %v8892, 0.0
    %v8912 = vadd.f32 %v8910, %v8911
    %v8913 = vsel %vm8833, %v8893, 0.0
    %v8914 = vadd.f32 %v8912, %v8913
    %v8915 = vsel %vm8833, %v8894, 0.0
    %v8916 = vadd.f32 %v8914, %v8915
    %v8917 = vsel %vm8833, %v8895, 0.0
    %v8918 = vadd.f32 %v8916, %v8917
    %v8919 = vsel %vm8833, %v8896, 0.0
    %v8920 = vadd.f32 %v8918, %v8919
    %v8921 = vsel %vm8833, %v8897, 0.0
    %v8922 = vadd.f32 %v8920, %v8921
    %v8923 = vsel %vm8833, %v8898, 0.0
    %v8924 = vadd.f32 %v8922, %v8923
    %v8925 = vsel %vm8833, %v8899, 0.0
    %v8926 = vadd.f32 %v8924, %v8925
    %v8927 = vsel %vm8833, %v8900, 0.0
    %v8928 = vadd.f32 %v8926, %v8927
    %v8929 = vsel %vm8833, %v8901, 0.0
    %v8930 = vadd.f32 %v8928, %v8929
    %v8931 = vsel %vm8833, %v8902, 0.0
    %v8932 = vadd.f32 %v8930, %v8931
    %v8933 = vsel %vm8833, %v8903, 0.0
    %v8934 = vadd.f32 %v8932, %v8933
    %v8935 = vrot.slane %v8934, 4
    %v8936 = vadd.f32 %v8934, %v8935
    %v8937 = vrot.slane %v8936, 2
    %v8938 = vadd.f32 %v8936, %v8937
    %v8939 = vrot.slane %v8938, 1
    %v8940 = vadd.f32 %v8938, %v8939
    %v8941 = vmul.f32 %v8940, 0.0078125
    %v8942 = vadd.f32 %v8941, 1e-05
    %v8943 = vrsqrt.pop %v8942
    %v8944 = vmul.f32 %v8831, %v8943
    %v8946 = vlaneseq
    %v8947 = vshrl.u32 %v8946, 7
    %v8948 = vsub.s32 0, %v8947
    %v8949 = vrot.slane %v8944, %v8948
    %v8951 = vmul.f32 %v8872, %v8949
    %v8952 = vmul.f32 %v8873, %v8949
    %v8953 = vmul.f32 %v8874, %v8949
    %v8954 = vmul.f32 %v8875, %v8949
    %v8955 = vmul.f32 %v8876, %v8949
    %v8956 = vmul.f32 %v8877, %v8949
    %v8957 = vmul.f32 %v8878, %v8949
    %v8958 = vmul.f32 %v8879, %v8949
    %v8959 = vmul.f32 %v8880, %v8949
    %v8960 = vmul.f32 %v8881, %v8949
    %v8961 = vmul.f32 %v8882, %v8949
    %v8962 = vmul.f32 %v8883, %v8949
    %v8963 = vmul.f32 %v8884, %v8949
    %v8964 = vmul.f32 %v8885, %v8949
    %v8965 = vmul.f32 %v8886, %v8949
    %v8966 = vmul.f32 %v8887, %v8949
    %v8968 = vlaneseq
    %v8969 = vshrl.u32 %v8968, 7
    %v8970 = vsub.s32 0, %v8969
    %v8971 = vrot.slane %v8832, %v8970
    %v8973 = vadd.f32 %v8951, %v8971
    %v8974 = vadd.f32 %v8952, %v8971
    %v8975 = vadd.f32 %v8953, %v8971
    %v8976 = vadd.f32 %v8954, %v8971
    %v8977 = vadd.f32 %v8955, %v8971
    %v8978 = vadd.f32 %v8956, %v8971
    %v8979 = vadd.f32 %v8957, %v8971
    %v8980 = vadd.f32 %v8958, %v8971
    %v8981 = vadd.f32 %v8959, %v8971
    %v8982 = vadd.f32 %v8960, %v8971
    %v8983 = vadd.f32 %v8961, %v8971
    %v8984 = vadd.f32 %v8962, %v8971
    %v8985 = vadd.f32 %v8963, %v8971
    %v8986 = vadd.f32 %v8964, %v8971
    %v8987 = vadd.f32 %v8965, %v8971
    %v8988 = vadd.f32 %v8966, %v8971
    %v8989 = vmax.f32 %v8973, 0.0
    %v8990 = vmax.f32 %v8974, 0.0
    %v8991 = vmax.f32 %v8975, 0.0
    %v8992 = vmax.f32 %v8976, 0.0
    %v8993 = vmax.f32 %v8977, 0.0
    %v8994 = vmax.f32 %v8978, 0.0
    %v8995 = vmax.f32 %v8979, 0.0
    %v8996 = vmax.f32 %v8980, 0.0
    %v8997 = vmax.f32 %v8981, 0.0
    %v8998 = vmax.f32 %v8982, 0.0
    %v8999 = vmax.f32 %v8983, 0.0
    %v9000 = vmax.f32 %v8984, 0.0
    %v9001 = vmax.f32 %v8985, 0.0
    %v9002 = vmax.f32 %v8986, 0.0
    %v9003 = vmax.f32 %v8987, 0.0
    %v9004 = vmax.f32 %v8988, 0.0
    %v9005 = vshra.s32 %v1321, 3
    %v9006 = vshra.s32 %v1322, 3
    %v9007 = vshra.s32 %v1323, 3
    %v9008 = vshra.s32 %v1324, 3
    %v9009 = vshra.s32 %v1325, 3
    %v9010 = vshra.s32 %v1326, 3
    %v9011 = vshra.s32 %v1327, 3
    %v9012 = vshra.s32 %v1328, 3
    %v9013 = vshra.s32 %v1329, 3
    %v9014 = vshra.s32 %v1330, 3
    %v9015 = vshra.s32 %v1331, 3
    %v9016 = vshra.s32 %v1332, 3
    %v9017 = vshra.s32 %v1333, 3
    %v9018 = vshra.s32 %v1334, 3
    %v9019 = vshra.s32 %v1335, 3
    %v9020 = vshra.s32 %v1336, 3
    %v9021 = vand.u32 %v9005, 7
    %v9022 = vand.u32 %v9006, 7
    %v9023 = vand.u32 %v9007, 7
    %v9024 = vand.u32 %v9008, 7
    %v9025 = vand.u32 %v9009, 7
    %v9026 = vand.u32 %v9010, 7
    %v9027 = vand.u32 %v9011, 7
    %v9028 = vand.u32 %v9012, 7
    %v9029 = vand.u32 %v9013, 7
    %v9030 = vand.u32 %v9014, 7
    %v9031 = vand.u32 %v9015, 7
    %v9032 = vand.u32 %v9016, 7
    %v9033 = vand.u32 %v9017, 7
    %v9034 = vand.u32 %v9018, 7
    %v9035 = vand.u32 %v9019, 7
    %v9036 = vand.u32 %v9020, 7
    %v9037 = vand.u32 %v1321, 7
    %v9038 = vand.u32 %v1322, 7
    %v9039 = vand.u32 %v1323, 7
    %v9040 = vand.u32 %v1324, 7
    %v9041 = vand.u32 %v1325, 7
    %v9042 = vand.u32 %v1326, 7
    %v9043 = vand.u32 %v1327, 7
    %v9044 = vand.u32 %v1328, 7
    %v9045 = vand.u32 %v1329, 7
    %v9046 = vand.u32 %v1330, 7
    %v9047 = vand.u32 %v1331, 7
    %v9048 = vand.u32 %v1332, 7
    %v9049 = vand.u32 %v1333, 7
    %v9050 = vand.u32 %v1334, 7
    %v9051 = vand.u32 %v1335, 7
    %v9052 = vand.u32 %v1336, 7
    %v9053 = vld [vmem:[%s13] sm:$0xff]
    %v9054 = vld [vmem:[%s13 + $0x8] sm:$0x1]
    %v9070 = vrot.slane %v8989, 7
    %v9071 = vrot.slane %v8990, 7
    %v9072 = vsel %vm1641, %v9070, %v9071
    %v9073 = vrot.slane %v8991, 7
    %v9074 = vsel %vm1641, %v9071, %v9073
    %v9075 = vrot.slane %v8992, 7
    %v9076 = vsel %vm1641, %v9073, %v9075
    %v9077 = vrot.slane %v8993, 7
    %v9078 = vsel %vm1641, %v9075, %v9077
    %v9079 = vrot.slane %v8994, 7
    %v9080 = vsel %vm1641, %v9077, %v9079
    %v9081 = vrot.slane %v8995, 7
    %v9082 = vsel %vm1641, %v9079, %v9081
    %v9083 = vrot.slane %v8996, 7
    %v9084 = vsel %vm1641, %v9081, %v9083
    %v9085 = vrot.slane %v8997, 7
    %v9086 = vsel %vm1641, %v9083, %v9085
    %v9087 = vrot.slane %v8998, 7
    %v9088 = vsel %vm1641, %v9085, %v9087
    %v9089 = vrot.slane %v8999, 7
    %v9090 = vsel %vm1641, %v9087, %v9089
    %v9091 = vrot.slane %v9000, 7
    %v9092 = vsel %vm1641, %v9089, %v9091
    %v9093 = vrot.slane %v9001, 7
    %v9094 = vsel %vm1641, %v9091, %v9093
    %v9095 = vrot.slane %v9002, 7
    %v9096 = vsel %vm1641, %v9093, %v9095
    %v9097 = vrot.slane %v9003, 7
    %v9098 = vsel %vm1641, %v9095, %v9097
    %v9114 = vsel %vm1641, 0.0, %v9070
    %vm9115 = vcmp.ge.s32.totalorder %v9021, 1
    %vm9116 = vcmp.ge.s32.totalorder %v9022, 1
    %vm9117 = vcmp.ge.s32.totalorder %v9023, 1
    %vm9118 = vcmp.ge.s32.totalorder %v9024, 1
    %vm9119 = vcmp.ge.s32.totalorder %v9025, 1
    %vm9120 = vcmp.ge.s32.totalorder %v9026, 1
    %vm9121 = vcmp.ge.s32.totalorder %v9027, 1
    %vm9122 = vcmp.ge.s32.totalorder %v9028, 1
    %vm9123 = vcmp.ge.s32.totalorder %v9029, 1
    %vm9124 = vcmp.ge.s32.totalorder %v9030, 1
    %vm9125 = vcmp.ge.s32.totalorder %v9031, 1
    %vm9126 = vcmp.ge.s32.totalorder %v9032, 1
    %vm9127 = vcmp.ge.s32.totalorder %v9033, 1
    %vm9128 = vcmp.ge.s32.totalorder %v9034, 1
    %vm9129 = vcmp.ge.s32.totalorder %v9035, 1
    %vm9130 = vcmp.ge.s32.totalorder %v9036, 1
    %vm9131 = vcmp.ge.s32.totalorder %v9037, 1
    %vm9132 = vcmp.ge.s32.totalorder %v9038, 1
    %vm9133 = vcmp.ge.s32.totalorder %v9039, 1
    %vm9134 = vcmp.ge.s32.totalorder %v9040, 1
    %vm9135 = vcmp.ge.s32.totalorder %v9041, 1
    %vm9136 = vcmp.ge.s32.totalorder %v9042, 1
    %vm9137 = vcmp.ge.s32.totalorder %v9043, 1
    %vm9138 = vcmp.ge.s32.totalorder %v9044, 1
    %vm9139 = vcmp.ge.s32.totalorder %v9045, 1
    %vm9140 = vcmp.ge.s32.totalorder %v9046, 1
    %vm9141 = vcmp.ge.s32.totalorder %v9047, 1
    %vm9142 = vcmp.ge.s32.totalorder %v9048, 1
    %vm9143 = vcmp.ge.s32.totalorder %v9049, 1
    %vm9144 = vcmp.ge.s32.totalorder %v9050, 1
    %vm9145 = vcmp.ge.s32.totalorder %v9051, 1
    %vm9146 = vcmp.ge.s32.totalorder %v9052, 1
    %vm9147 = vmand %vm9116, %vm9132
    %vm9148 = vmand %vm9117, %vm9133
    %vm9149 = vmand %vm9118, %vm9134
    %vm9150 = vmand %vm9119, %vm9135
    %vm9151 = vmand %vm9120, %vm9136
    %vm9152 = vmand %vm9121, %vm9137
    %vm9153 = vmand %vm9122, %vm9138
    %vm9154 = vmand %vm9123, %vm9139
    %vm9155 = vmand %vm9124, %vm9140
    %vm9156 = vmand %vm9125, %vm9141
    %vm9157 = vmand %vm9126, %vm9142
    %vm9158 = vmand %vm9127, %vm9143
    %vm9159 = vmand %vm9128, %vm9144
    %vm9160 = vmand %vm9129, %vm9145
    %vm9161 = vmand %vm9130, %vm9146
    %v9162 = vsel %vm9147, 1, 0
    %v9163 = vsel %vm9148, 1, 0
    %v9164 = vsel %vm9149, 1, 0
    %v9165 = vsel %vm9150, 1, 0
    %v9166 = vsel %vm9151, 1, 0
    %v9167 = vsel %vm9152, 1, 0
    %v9168 = vsel %vm9153, 1, 0
    %v9169 = vsel %vm9154, 1, 0
    %v9170 = vsel %vm9155, 1, 0
    %v9171 = vsel %vm9156, 1, 0
    %v9172 = vsel %vm9157, 1, 0
    %v9173 = vsel %vm9158, 1, 0
    %v9174 = vsel %vm9159, 1, 0
    %v9175 = vsel %vm9160, 1, 0
    %v9176 = vsel %vm9161, 1, 0
    %vm9177 = vcmp.eq.s32.totalorder %v9162, 1
    %vm9178 = vcmp.eq.s32.totalorder %v9163, 1
    %vm9179 = vcmp.eq.s32.totalorder %v9164, 1
    %vm9180 = vcmp.eq.s32.totalorder %v9165, 1
    %vm9181 = vcmp.eq.s32.totalorder %v9166, 1
    %vm9182 = vcmp.eq.s32.totalorder %v9167, 1
    %vm9183 = vcmp.eq.s32.totalorder %v9168, 1
    %vm9184 = vcmp.eq.s32.totalorder %v9169, 1
    %vm9185 = vcmp.eq.s32.totalorder %v9170, 1
    %vm9186 = vcmp.eq.s32.totalorder %v9171, 1
    %vm9187 = vcmp.eq.s32.totalorder %v9172, 1
    %vm9188 = vcmp.eq.s32.totalorder %v9173, 1
    %vm9189 = vcmp.eq.s32.totalorder %v9174, 1
    %vm9190 = vcmp.eq.s32.totalorder %v9175, 1
    %vm9191 = vcmp.eq.s32.totalorder %v9176, 1
    %v9192 = vsel %vm9177, %v9114, 0.0
    %v9193 = vsel %vm9178, %v9072, 0.0
    %v9194 = vsel %vm9179, %v9074, 0.0
    %v9195 = vsel %vm9180, %v9076, 0.0
    %v9196 = vsel %vm9181, %v9078, 0.0
    %v9197 = vsel %vm9182, %v9080, 0.0
    %v9198 = vsel %vm9183, %v9082, 0.0
    %v9199 = vsel %vm9184, %v9084, 0.0
    %v9200 = vsel %vm9185, %v9086, 0.0
    %v9201 = vsel %vm9186, %v9088, 0.0
    %v9202 = vsel %vm9187, %v9090, 0.0
    %v9203 = vsel %vm9188, %v9092, 0.0
    %v9204 = vsel %vm9189, %v9094, 0.0
    %v9205 = vsel %vm9190, %v9096, 0.0
    %v9206 = vsel %vm9191, %v9098, 0.0
    %v9207 = vlaneseq
    %v9208 = vshrl.u32 %v9207, 7
    %v9209 = vsub.s32 0, %v9208
    %v9210 = vrot.slane %v9053, %v9209
    %v9211 = vmul.f32 %v9210, 0.0
    %v9212 = vmul.f32 %v9192, %v9210
    %v9213 = vmul.f32 %v9193, %v9210
    %v9214 = vmul.f32 %v9194, %v9210
    %v9215 = vmul.f32 %v9195, %v9210
    %v9216 = vmul.f32 %v9196, %v9210
    %v9217 = vmul.f32 %v9197, %v9210
    %v9218 = vmul.f32 %v9198, %v9210
    %v9219 = vmul.f32 %v9199, %v9210
    %v9220 = vmul.f32 %v9200, %v9210
    %v9221 = vmul.f32 %v9201, %v9210
    %v9222 = vmul.f32 %v9202, %v9210
    %v9223 = vmul.f32 %v9203, %v9210
    %v9224 = vmul.f32 %v9204, %v9210
    %v9225 = vmul.f32 %v9205, %v9210
    %v9226 = vmul.f32 %v9206, %v9210
    %v9227 = vsel %vm9116, 1, 0
    %v9228 = vsel %vm9117, 1, 0
    %v9229 = vsel %vm9118, 1, 0
    %v9230 = vsel %vm9119, 1, 0
    %v9231 = vsel %vm9120, 1, 0
    %v9232 = vsel %vm9121, 1, 0
    %v9233 = vsel %vm9122, 1, 0
    %v9234 = vsel %vm9123, 1, 0
    %v9235 = vsel %vm9124, 1, 0
    %v9236 = vsel %vm9125, 1, 0
    %v9237 = vsel %vm9126, 1, 0
    %v9238 = vsel %vm9127, 1, 0
    %v9239 = vsel %vm9128, 1, 0
    %v9240 = vsel %vm9129, 1, 0
    %v9241 = vsel %vm9130, 1, 0
    %vm9242 = vcmp.eq.s32.totalorder %v9227, 1
    %vm9243 = vcmp.eq.s32.totalorder %v9228, 1
    %vm9244 = vcmp.eq.s32.totalorder %v9229, 1
    %vm9245 = vcmp.eq.s32.totalorder %v9230, 1
    %vm9246 = vcmp.eq.s32.totalorder %v9231, 1
    %vm9247 = vcmp.eq.s32.totalorder %v9232, 1
    %vm9248 = vcmp.eq.s32.totalorder %v9233, 1
    %vm9249 = vcmp.eq.s32.totalorder %v9234, 1
    %vm9250 = vcmp.eq.s32.totalorder %v9235, 1
    %vm9251 = vcmp.eq.s32.totalorder %v9236, 1
    %vm9252 = vcmp.eq.s32.totalorder %v9237, 1
    %vm9253 = vcmp.eq.s32.totalorder %v9238, 1
    %vm9254 = vcmp.eq.s32.totalorder %v9239, 1
    %vm9255 = vcmp.eq.s32.totalorder %v9240, 1
    %vm9256 = vcmp.eq.s32.totalorder %v9241, 1
    %v9257 = vsel %vm9242, %v8989, 0.0
    %v9258 = vsel %vm9243, %v8990, 0.0
    %v9259 = vsel %vm9244, %v8991, 0.0
    %v9260 = vsel %vm9245, %v8992, 0.0
    %v9261 = vsel %vm9246, %v8993, 0.0
    %v9262 = vsel %vm9247, %v8994, 0.0
    %v9263 = vsel %vm9248, %v8995, 0.0
    %v9264 = vsel %vm9249, %v8996, 0.0
    %v9265 = vsel %vm9250, %v8997, 0.0
    %v9266 = vsel %vm9251, %v8998, 0.0
    %v9267 = vsel %vm9252, %v8999, 0.0
    %v9268 = vsel %vm9253, %v9000, 0.0
    %v9269 = vsel %vm9254, %v9001, 0.0
    %v9270 = vsel %vm9255, %v9002, 0.0
    %v9271 = vsel %vm9256, %v9003, 0.0
    %v9272 = vlaneseq
    %v9273 = vshrl.u32 %v9272, 7
    %v9274 = vsub.s32 1, %v9273
    %v9275 = vrot.slane %v9053, %v9274
    %v9276 = vmul.f32 %v9275, 0.0
    %v9277 = vmul.f32 %v9257, %v9275
    %v9278 = vmul.f32 %v9258, %v9275
    %v9279 = vmul.f32 %v9259, %v9275
    %v9280 = vmul.f32 %v9260, %v9275
    %v9281 = vmul.f32 %v9261, %v9275
    %v9282 = vmul.f32 %v9262, %v9275
    %v9283 = vmul.f32 %v9263, %v9275
    %v9284 = vmul.f32 %v9264, %v9275
    %v9285 = vmul.f32 %v9265, %v9275
    %v9286 = vmul.f32 %v9266, %v9275
    %v9287 = vmul.f32 %v9267, %v9275
    %v9288 = vmul.f32 %v9268, %v9275
    %v9289 = vmul.f32 %v9269, %v9275
    %v9290 = vmul.f32 %v9270, %v9275
    %v9291 = vmul.f32 %v9271, %v9275
    %v9292 = vadd.f32 %v9211, %v9276
    %v9293 = vadd.f32 %v9212, %v9277
    %v9294 = vadd.f32 %v9213, %v9278
    %v9295 = vadd.f32 %v9214, %v9279
    %v9296 = vadd.f32 %v9215, %v9280
    %v9297 = vadd.f32 %v9216, %v9281
    %v9298 = vadd.f32 %v9217, %v9282
    %v9299 = vadd.f32 %v9218, %v9283
    %v9300 = vadd.f32 %v9219, %v9284
    %v9301 = vadd.f32 %v9220, %v9285
    %v9302 = vadd.f32 %v9221, %v9286
    %v9303 = vadd.f32 %v9222, %v9287
    %v9304 = vadd.f32 %v9223, %v9288
    %v9305 = vadd.f32 %v9224, %v9289
    %v9306 = vadd.f32 %v9225, %v9290
    %v9307 = vadd.f32 %v9226, %v9291
    %v9309 = vrot.slane %v8989, 1
    %v9310 = vrot.slane %v8990, 1
    %v9311 = vsel %vm2587, %v9309, %v9310
    %v9312 = vrot.slane %v8991, 1
    %v9313 = vsel %vm2587, %v9310, %v9312
    %v9314 = vrot.slane %v8992, 1
    %v9315 = vsel %vm2587, %v9312, %v9314
    %v9316 = vrot.slane %v8993, 1
    %v9317 = vsel %vm2587, %v9314, %v9316
    %v9318 = vrot.slane %v8994, 1
    %v9319 = vsel %vm2587, %v9316, %v9318
    %v9320 = vrot.slane %v8995, 1
    %v9321 = vsel %vm2587, %v9318, %v9320
    %v9322 = vrot.slane %v8996, 1
    %v9323 = vsel %vm2587, %v9320, %v9322
    %v9324 = vrot.slane %v8997, 1
    %v9325 = vsel %vm2587, %v9322, %v9324
    %v9326 = vrot.slane %v8998, 1
    %v9327 = vsel %vm2587, %v9324, %v9326
    %v9328 = vrot.slane %v8999, 1
    %v9329 = vsel %vm2587, %v9326, %v9328
    %v9330 = vrot.slane %v9000, 1
    %v9331 = vsel %vm2587, %v9328, %v9330
    %v9332 = vrot.slane %v9001, 1
    %v9333 = vsel %vm2587, %v9330, %v9332
    %v9334 = vrot.slane %v9002, 1
    %v9335 = vsel %vm2587, %v9332, %v9334
    %v9336 = vrot.slane %v9003, 1
    %v9337 = vsel %vm2587, %v9334, %v9336
    %v9338 = vrot.slane %v9004, 1
    %v9339 = vsel %vm2587, %v9336, %v9338
    %v9356 = vsel %vm2587, 0.0, %v9309
    %vm9357 = vcmp.lt.s32.totalorder %v9037, 7
    %vm9358 = vcmp.lt.s32.totalorder %v9038, 7
    %vm9359 = vcmp.lt.s32.totalorder %v9039, 7
    %vm9360 = vcmp.lt.s32.totalorder %v9040, 7
    %vm9361 = vcmp.lt.s32.totalorder %v9041, 7
    %vm9362 = vcmp.lt.s32.totalorder %v9042, 7
    %vm9363 = vcmp.lt.s32.totalorder %v9043, 7
    %vm9364 = vcmp.lt.s32.totalorder %v9044, 7
    %vm9365 = vcmp.lt.s32.totalorder %v9045, 7
    %vm9366 = vcmp.lt.s32.totalorder %v9046, 7
    %vm9367 = vcmp.lt.s32.totalorder %v9047, 7
    %vm9368 = vcmp.lt.s32.totalorder %v9048, 7
    %vm9369 = vcmp.lt.s32.totalorder %v9049, 7
    %vm9370 = vcmp.lt.s32.totalorder %v9050, 7
    %vm9371 = vcmp.lt.s32.totalorder %v9051, 7
    %vm9372 = vcmp.lt.s32.totalorder %v9052, 7
    %vm9373 = vmand %vm9115, %vm9357
    %vm9374 = vmand %vm9116, %vm9358
    %vm9375 = vmand %vm9117, %vm9359
    %vm9376 = vmand %vm9118, %vm9360
    %vm9377 = vmand %vm9119, %vm9361
    %vm9378 = vmand %vm9120, %vm9362
    %vm9379 = vmand %vm9121, %vm9363
    %vm9380 = vmand %vm9122, %vm9364
    %vm9381 = vmand %vm9123, %vm9365
    %vm9382 = vmand %vm9124, %vm9366
    %vm9383 = vmand %vm9125, %vm9367
    %vm9384 = vmand %vm9126, %vm9368
    %vm9385 = vmand %vm9127, %vm9369
    %vm9386 = vmand %vm9128, %vm9370
    %vm9387 = vmand %vm9129, %vm9371
    %vm9388 = vmand %vm9130, %vm9372
    %v9389 = vsel %vm9373, 1, 0
    %v9390 = vsel %vm9374, 1, 0
    %v9391 = vsel %vm9375, 1, 0
    %v9392 = vsel %vm9376, 1, 0
    %v9393 = vsel %vm9377, 1, 0
    %v9394 = vsel %vm9378, 1, 0
    %v9395 = vsel %vm9379, 1, 0
    %v9396 = vsel %vm9380, 1, 0
    %v9397 = vsel %vm9381, 1, 0
    %v9398 = vsel %vm9382, 1, 0
    %v9399 = vsel %vm9383, 1, 0
    %v9400 = vsel %vm9384, 1, 0
    %v9401 = vsel %vm9385, 1, 0
    %v9402 = vsel %vm9386, 1, 0
    %v9403 = vsel %vm9387, 1, 0
    %v9404 = vsel %vm9388, 1, 0
    %vm9405 = vcmp.eq.s32.totalorder %v9389, 1
    %vm9406 = vcmp.eq.s32.totalorder %v9390, 1
    %vm9407 = vcmp.eq.s32.totalorder %v9391, 1
    %vm9408 = vcmp.eq.s32.totalorder %v9392, 1
    %vm9409 = vcmp.eq.s32.totalorder %v9393, 1
    %vm9410 = vcmp.eq.s32.totalorder %v9394, 1
    %vm9411 = vcmp.eq.s32.totalorder %v9395, 1
    %vm9412 = vcmp.eq.s32.totalorder %v9396, 1
    %vm9413 = vcmp.eq.s32.totalorder %v9397, 1
    %vm9414 = vcmp.eq.s32.totalorder %v9398, 1
    %vm9415 = vcmp.eq.s32.totalorder %v9399, 1
    %vm9416 = vcmp.eq.s32.totalorder %v9400, 1
    %vm9417 = vcmp.eq.s32.totalorder %v9401, 1
    %vm9418 = vcmp.eq.s32.totalorder %v9402, 1
    %vm9419 = vcmp.eq.s32.totalorder %v9403, 1
    %vm9420 = vcmp.eq.s32.totalorder %v9404, 1
    %v9421 = vsel %vm9405, %v9356, 0.0
    %v9422 = vsel %vm9406, %v9311, 0.0
    %v9423 = vsel %vm9407, %v9313, 0.0
    %v9424 = vsel %vm9408, %v9315, 0.0
    %v9425 = vsel %vm9409, %v9317, 0.0
    %v9426 = vsel %vm9410, %v9319, 0.0
    %v9427 = vsel %vm9411, %v9321, 0.0
    %v9428 = vsel %vm9412, %v9323, 0.0
    %v9429 = vsel %vm9413, %v9325, 0.0
    %v9430 = vsel %vm9414, %v9327, 0.0
    %v9431 = vsel %vm9415, %v9329, 0.0
    %v9432 = vsel %vm9416, %v9331, 0.0
    %v9433 = vsel %vm9417, %v9333, 0.0
    %v9434 = vsel %vm9418, %v9335, 0.0
    %v9435 = vsel %vm9419, %v9337, 0.0
    %v9436 = vsel %vm9420, %v9339, 0.0
    %v9437 = vlaneseq
    %v9438 = vshrl.u32 %v9437, 7
    %v9439 = vsub.s32 2, %v9438
    %v9440 = vrot.slane %v9053, %v9439
    %v9441 = vmul.f32 %v9421, %v9440
    %v9442 = vmul.f32 %v9422, %v9440
    %v9443 = vmul.f32 %v9423, %v9440
    %v9444 = vmul.f32 %v9424, %v9440
    %v9445 = vmul.f32 %v9425, %v9440
    %v9446 = vmul.f32 %v9426, %v9440
    %v9447 = vmul.f32 %v9427, %v9440
    %v9448 = vmul.f32 %v9428, %v9440
    %v9449 = vmul.f32 %v9429, %v9440
    %v9450 = vmul.f32 %v9430, %v9440
    %v9451 = vmul.f32 %v9431, %v9440
    %v9452 = vmul.f32 %v9432, %v9440
    %v9453 = vmul.f32 %v9433, %v9440
    %v9454 = vmul.f32 %v9434, %v9440
    %v9455 = vmul.f32 %v9435, %v9440
    %v9456 = vmul.f32 %v9436, %v9440
    %v9457 = vadd.f32 %v9292, %v9441
    %v9458 = vadd.f32 %v9293, %v9442
    %v9459 = vadd.f32 %v9294, %v9443
    %v9460 = vadd.f32 %v9295, %v9444
    %v9461 = vadd.f32 %v9296, %v9445
    %v9462 = vadd.f32 %v9297, %v9446
    %v9463 = vadd.f32 %v9298, %v9447
    %v9464 = vadd.f32 %v9299, %v9448
    %v9465 = vadd.f32 %v9300, %v9449
    %v9466 = vadd.f32 %v9301, %v9450
    %v9467 = vadd.f32 %v9302, %v9451
    %v9468 = vadd.f32 %v9303, %v9452
    %v9469 = vadd.f32 %v9304, %v9453
    %v9470 = vadd.f32 %v9305, %v9454
    %v9471 = vadd.f32 %v9306, %v9455
    %v9472 = vadd.f32 %v9307, %v9456
    %v9473 = vrot.slane %v9004, 7
    %v9474 = vsel %vm1641, %v9097, %v9473
    %v9476 = vsel %vm9131, 1, 0
    %v9477 = vsel %vm9132, 1, 0
    %v9478 = vsel %vm9133, 1, 0
    %v9479 = vsel %vm9134, 1, 0
    %v9480 = vsel %vm9135, 1, 0
    %v9481 = vsel %vm9136, 1, 0
    %v9482 = vsel %vm9137, 1, 0
    %v9483 = vsel %vm9138, 1, 0
    %v9484 = vsel %vm9139, 1, 0
    %v9485 = vsel %vm9140, 1, 0
    %v9486 = vsel %vm9141, 1, 0
    %v9487 = vsel %vm9142, 1, 0
    %v9488 = vsel %vm9143, 1, 0
    %v9489 = vsel %vm9144, 1, 0
    %v9490 = vsel %vm9145, 1, 0
    %v9491 = vsel %vm9146, 1, 0
    %vm9492 = vcmp.eq.s32.totalorder %v9476, 1
    %vm9493 = vcmp.eq.s32.totalorder %v9477, 1
    %vm9494 = vcmp.eq.s32.totalorder %v9478, 1
    %vm9495 = vcmp.eq.s32.totalorder %v9479, 1
    %vm9496 = vcmp.eq.s32.totalorder %v9480, 1
    %vm9497 = vcmp.eq.s32.totalorder %v9481, 1
    %vm9498 = vcmp.eq.s32.totalorder %v9482, 1
    %vm9499 = vcmp.eq.s32.totalorder %v9483, 1
    %vm9500 = vcmp.eq.s32.totalorder %v9484, 1
    %vm9501 = vcmp.eq.s32.totalorder %v9485, 1
    %vm9502 = vcmp.eq.s32.totalorder %v9486, 1
    %vm9503 = vcmp.eq.s32.totalorder %v9487, 1
    %vm9504 = vcmp.eq.s32.totalorder %v9488, 1
    %vm9505 = vcmp.eq.s32.totalorder %v9489, 1
    %vm9506 = vcmp.eq.s32.totalorder %v9490, 1
    %vm9507 = vcmp.eq.s32.totalorder %v9491, 1
    %v9508 = vsel %vm9492, %v9114, 0.0
    %v9509 = vsel %vm9493, %v9072, 0.0
    %v9510 = vsel %vm9494, %v9074, 0.0
    %v9511 = vsel %vm9495, %v9076, 0.0
    %v9512 = vsel %vm9496, %v9078, 0.0
    %v9513 = vsel %vm9497, %v9080, 0.0
    %v9514 = vsel %vm9498, %v9082, 0.0
    %v9515 = vsel %vm9499, %v9084, 0.0
    %v9516 = vsel %vm9500, %v9086, 0.0
    %v9517 = vsel %vm9501, %v9088, 0.0
    %v9518 = vsel %vm9502, %v9090, 0.0
    %v9519 = vsel %vm9503, %v9092, 0.0
    %v9520 = vsel %vm9504, %v9094, 0.0
    %v9521 = vsel %vm9505, %v9096, 0.0
    %v9522 = vsel %vm9506, %v9098, 0.0
    %v9523 = vsel %vm9507, %v9474, 0.0
    %v9524 = vlaneseq
    %v9525 = vshrl.u32 %v9524, 7
    %v9526 = vsub.s32 3, %v9525
    %v9527 = vrot.slane %v9053, %v9526
    %v9528 = vmul.f32 %v9508, %v9527
    %v9529 = vmul.f32 %v9509, %v9527
    %v9530 = vmul.f32 %v9510, %v9527
    %v9531 = vmul.f32 %v9511, %v9527
    %v9532 = vmul.f32 %v9512, %v9527
    %v9533 = vmul.f32 %v9513, %v9527
    %v9534 = vmul.f32 %v9514, %v9527
    %v9535 = vmul.f32 %v9515, %v9527
    %v9536 = vmul.f32 %v9516, %v9527
    %v9537 = vmul.f32 %v9517, %v9527
    %v9538 = vmul.f32 %v9518, %v9527
    %v9539 = vmul.f32 %v9519, %v9527
    %v9540 = vmul.f32 %v9520, %v9527
    %v9541 = vmul.f32 %v9521, %v9527
    %v9542 = vmul.f32 %v9522, %v9527
    %v9543 = vmul.f32 %v9523, %v9527
    %v9544 = vadd.f32 %v9457, %v9528
    %v9545 = vadd.f32 %v9458, %v9529
    %v9546 = vadd.f32 %v9459, %v9530
    %v9547 = vadd.f32 %v9460, %v9531
    %v9548 = vadd.f32 %v9461, %v9532
    %v9549 = vadd.f32 %v9462, %v9533
    %v9550 = vadd.f32 %v9463, %v9534
    %v9551 = vadd.f32 %v9464, %v9535
    %v9552 = vadd.f32 %v9465, %v9536
    %v9553 = vadd.f32 %v9466, %v9537
    %v9554 = vadd.f32 %v9467, %v9538
    %v9555 = vadd.f32 %v9468, %v9539
    %v9556 = vadd.f32 %v9469, %v9540
    %v9557 = vadd.f32 %v9470, %v9541
    %v9558 = vadd.f32 %v9471, %v9542
    %v9559 = vadd.f32 %v9472, %v9543
    %v9560 = vlaneseq
    %v9561 = vshrl.u32 %v9560, 7
    %v9562 = vsub.s32 4, %v9561
    %v9563 = vrot.slane %v9053, %v9562
    %v9564 = vmul.f32 %v8989, %v9563
    %v9565 = vmul.f32 %v8990, %v9563
    %v9566 = vmul.f32 %v8991, %v9563
    %v9567 = vmul.f32 %v8992, %v9563
    %v9568 = vmul.f32 %v8993, %v9563
    %v9569 = vmul.f32 %v8994, %v9563
    %v9570 = vmul.f32 %v8995, %v9563
    %v9571 = vmul.f32 %v8996, %v9563
    %v9572 = vmul.f32 %v8997, %v9563
    %v9573 = vmul.f32 %v8998, %v9563
    %v9574 = vmul.f32 %v8999, %v9563
    %v9575 = vmul.f32 %v9000, %v9563
    %v9576 = vmul.f32 %v9001, %v9563
    %v9577 = vmul.f32 %v9002, %v9563
    %v9578 = vmul.f32 %v9003, %v9563
    %v9579 = vmul.f32 %v9004, %v9563
    %v9580 = vadd.f32 %v9544, %v9564
    %v9581 = vadd.f32 %v9545, %v9565
    %v9582 = vadd.f32 %v9546, %v9566
    %v9583 = vadd.f32 %v9547, %v9567
    %v9584 = vadd.f32 %v9548, %v9568
    %v9585 = vadd.f32 %v9549, %v9569
    %v9586 = vadd.f32 %v9550, %v9570
    %v9587 = vadd.f32 %v9551, %v9571
    %v9588 = vadd.f32 %v9552, %v9572
    %v9589 = vadd.f32 %v9553, %v9573
    %v9590 = vadd.f32 %v9554, %v9574
    %v9591 = vadd.f32 %v9555, %v9575
    %v9592 = vadd.f32 %v9556, %v9576
    %v9593 = vadd.f32 %v9557, %v9577
    %v9594 = vadd.f32 %v9558, %v9578
    %v9595 = vadd.f32 %v9559, %v9579
    %v9597 = vsel %vm2587, %v9338, 0.0
    %v9598 = vsel %vm9357, 1, 0
    %v9599 = vsel %vm9358, 1, 0
    %v9600 = vsel %vm9359, 1, 0
    %v9601 = vsel %vm9360, 1, 0
    %v9602 = vsel %vm9361, 1, 0
    %v9603 = vsel %vm9362, 1, 0
    %v9604 = vsel %vm9363, 1, 0
    %v9605 = vsel %vm9364, 1, 0
    %v9606 = vsel %vm9365, 1, 0
    %v9607 = vsel %vm9366, 1, 0
    %v9608 = vsel %vm9367, 1, 0
    %v9609 = vsel %vm9368, 1, 0
    %v9610 = vsel %vm9369, 1, 0
    %v9611 = vsel %vm9370, 1, 0
    %v9612 = vsel %vm9371, 1, 0
    %v9613 = vsel %vm9372, 1, 0
    %vm9614 = vcmp.eq.s32.totalorder %v9598, 1
    %vm9615 = vcmp.eq.s32.totalorder %v9599, 1
    %vm9616 = vcmp.eq.s32.totalorder %v9600, 1
    %vm9617 = vcmp.eq.s32.totalorder %v9601, 1
    %vm9618 = vcmp.eq.s32.totalorder %v9602, 1
    %vm9619 = vcmp.eq.s32.totalorder %v9603, 1
    %vm9620 = vcmp.eq.s32.totalorder %v9604, 1
    %vm9621 = vcmp.eq.s32.totalorder %v9605, 1
    %vm9622 = vcmp.eq.s32.totalorder %v9606, 1
    %vm9623 = vcmp.eq.s32.totalorder %v9607, 1
    %vm9624 = vcmp.eq.s32.totalorder %v9608, 1
    %vm9625 = vcmp.eq.s32.totalorder %v9609, 1
    %vm9626 = vcmp.eq.s32.totalorder %v9610, 1
    %vm9627 = vcmp.eq.s32.totalorder %v9611, 1
    %vm9628 = vcmp.eq.s32.totalorder %v9612, 1
    %vm9629 = vcmp.eq.s32.totalorder %v9613, 1
    %v9630 = vsel %vm9614, %v9311, 0.0
    %v9631 = vsel %vm9615, %v9313, 0.0
    %v9632 = vsel %vm9616, %v9315, 0.0
    %v9633 = vsel %vm9617, %v9317, 0.0
    %v9634 = vsel %vm9618, %v9319, 0.0
    %v9635 = vsel %vm9619, %v9321, 0.0
    %v9636 = vsel %vm9620, %v9323, 0.0
    %v9637 = vsel %vm9621, %v9325, 0.0
    %v9638 = vsel %vm9622, %v9327, 0.0
    %v9639 = vsel %vm9623, %v9329, 0.0
    %v9640 = vsel %vm9624, %v9331, 0.0
    %v9641 = vsel %vm9625, %v9333, 0.0
    %v9642 = vsel %vm9626, %v9335, 0.0
    %v9643 = vsel %vm9627, %v9337, 0.0
    %v9644 = vsel %vm9628, %v9339, 0.0
    %v9645 = vsel %vm9629, %v9597, 0.0
    %v9646 = vlaneseq
    %v9647 = vshrl.u32 %v9646, 7
    %v9648 = vsub.s32 5, %v9647
    %v9649 = vrot.slane %v9053, %v9648
    %v9650 = vmul.f32 %v9630, %v9649
    %v9651 = vmul.f32 %v9631, %v9649
    %v9652 = vmul.f32 %v9632, %v9649
    %v9653 = vmul.f32 %v9633, %v9649
    %v9654 = vmul.f32 %v9634, %v9649
    %v9655 = vmul.f32 %v9635, %v9649
    %v9656 = vmul.f32 %v9636, %v9649
    %v9657 = vmul.f32 %v9637, %v9649
    %v9658 = vmul.f32 %v9638, %v9649
    %v9659 = vmul.f32 %v9639, %v9649
    %v9660 = vmul.f32 %v9640, %v9649
    %v9661 = vmul.f32 %v9641, %v9649
    %v9662 = vmul.f32 %v9642, %v9649
    %v9663 = vmul.f32 %v9643, %v9649
    %v9664 = vmul.f32 %v9644, %v9649
    %v9665 = vmul.f32 %v9645, %v9649
    %v9666 = vadd.f32 %v9580, %v9650
    %v9667 = vadd.f32 %v9581, %v9651
    %v9668 = vadd.f32 %v9582, %v9652
    %v9669 = vadd.f32 %v9583, %v9653
    %v9670 = vadd.f32 %v9584, %v9654
    %v9671 = vadd.f32 %v9585, %v9655
    %v9672 = vadd.f32 %v9586, %v9656
    %v9673 = vadd.f32 %v9587, %v9657
    %v9674 = vadd.f32 %v9588, %v9658
    %v9675 = vadd.f32 %v9589, %v9659
    %v9676 = vadd.f32 %v9590, %v9660
    %v9677 = vadd.f32 %v9591, %v9661
    %v9678 = vadd.f32 %v9592, %v9662
    %v9679 = vadd.f32 %v9593, %v9663
    %v9680 = vadd.f32 %v9594, %v9664
    %v9681 = vadd.f32 %v9595, %v9665
    %v9683 = vsel %vm1641, %v9473, 0.0
    %vm9684 = vcmp.lt.s32.totalorder %v9021, 7
    %vm9685 = vcmp.lt.s32.totalorder %v9022, 7
    %vm9686 = vcmp.lt.s32.totalorder %v9023, 7
    %vm9687 = vcmp.lt.s32.totalorder %v9024, 7
    %vm9688 = vcmp.lt.s32.totalorder %v9025, 7
    %vm9689 = vcmp.lt.s32.totalorder %v9026, 7
    %vm9690 = vcmp.lt.s32.totalorder %v9027, 7
    %vm9691 = vcmp.lt.s32.totalorder %v9028, 7
    %vm9692 = vcmp.lt.s32.totalorder %v9029, 7
    %vm9693 = vcmp.lt.s32.totalorder %v9030, 7
    %vm9694 = vcmp.lt.s32.totalorder %v9031, 7
    %vm9695 = vcmp.lt.s32.totalorder %v9032, 7
    %vm9696 = vcmp.lt.s32.totalorder %v9033, 7
    %vm9697 = vcmp.lt.s32.totalorder %v9034, 7
    %vm9698 = vcmp.lt.s32.totalorder %v9035, 7
    %vm9699 = vcmp.lt.s32.totalorder %v9036, 7
    %vm9700 = vmand %vm9684, %vm9131
    %vm9701 = vmand %vm9685, %vm9132
    %vm9702 = vmand %vm9686, %vm9133
    %vm9703 = vmand %vm9687, %vm9134
    %vm9704 = vmand %vm9688, %vm9135
    %vm9705 = vmand %vm9689, %vm9136
    %vm9706 = vmand %vm9690, %vm9137
    %vm9707 = vmand %vm9691, %vm9138
    %vm9708 = vmand %vm9692, %vm9139
    %vm9709 = vmand %vm9693, %vm9140
    %vm9710 = vmand %vm9694, %vm9141
    %vm9711 = vmand %vm9695, %vm9142
    %vm9712 = vmand %vm9696, %vm9143
    %vm9713 = vmand %vm9697, %vm9144
    %vm9714 = vmand %vm9698, %vm9145
    %vm9715 = vmand %vm9699, %vm9146
    %v9716 = vsel %vm9700, 1, 0
    %v9717 = vsel %vm9701, 1, 0
    %v9718 = vsel %vm9702, 1, 0
    %v9719 = vsel %vm9703, 1, 0
    %v9720 = vsel %vm9704, 1, 0
    %v9721 = vsel %vm9705, 1, 0
    %v9722 = vsel %vm9706, 1, 0
    %v9723 = vsel %vm9707, 1, 0
    %v9724 = vsel %vm9708, 1, 0
    %v9725 = vsel %vm9709, 1, 0
    %v9726 = vsel %vm9710, 1, 0
    %v9727 = vsel %vm9711, 1, 0
    %v9728 = vsel %vm9712, 1, 0
    %v9729 = vsel %vm9713, 1, 0
    %v9730 = vsel %vm9714, 1, 0
    %v9731 = vsel %vm9715, 1, 0
    %vm9732 = vcmp.eq.s32.totalorder %v9716, 1
    %vm9733 = vcmp.eq.s32.totalorder %v9717, 1
    %vm9734 = vcmp.eq.s32.totalorder %v9718, 1
    %vm9735 = vcmp.eq.s32.totalorder %v9719, 1
    %vm9736 = vcmp.eq.s32.totalorder %v9720, 1
    %vm9737 = vcmp.eq.s32.totalorder %v9721, 1
    %vm9738 = vcmp.eq.s32.totalorder %v9722, 1
    %vm9739 = vcmp.eq.s32.totalorder %v9723, 1
    %vm9740 = vcmp.eq.s32.totalorder %v9724, 1
    %vm9741 = vcmp.eq.s32.totalorder %v9725, 1
    %vm9742 = vcmp.eq.s32.totalorder %v9726, 1
    %vm9743 = vcmp.eq.s32.totalorder %v9727, 1
    %vm9744 = vcmp.eq.s32.totalorder %v9728, 1
    %vm9745 = vcmp.eq.s32.totalorder %v9729, 1
    %vm9746 = vcmp.eq.s32.totalorder %v9730, 1
    %vm9747 = vcmp.eq.s32.totalorder %v9731, 1
    %v9748 = vsel %vm9732, %v9072, 0.0
    %v9749 = vsel %vm9733, %v9074, 0.0
    %v9750 = vsel %vm9734, %v9076, 0.0
    %v9751 = vsel %vm9735, %v9078, 0.0
    %v9752 = vsel %vm9736, %v9080, 0.0
    %v9753 = vsel %vm9737, %v9082, 0.0
    %v9754 = vsel %vm9738, %v9084, 0.0
    %v9755 = vsel %vm9739, %v9086, 0.0
    %v9756 = vsel %vm9740, %v9088, 0.0
    %v9757 = vsel %vm9741, %v9090, 0.0
    %v9758 = vsel %vm9742, %v9092, 0.0
    %v9759 = vsel %vm9743, %v9094, 0.0
    %v9760 = vsel %vm9744, %v9096, 0.0
    %v9761 = vsel %vm9745, %v9098, 0.0
    %v9762 = vsel %vm9746, %v9474, 0.0
    %v9763 = vsel %vm9747, %v9683, 0.0
    %v9764 = vlaneseq
    %v9765 = vshrl.u32 %v9764, 7
    %v9766 = vsub.s32 6, %v9765
    %v9767 = vrot.slane %v9053, %v9766
    %v9768 = vmul.f32 %v9748, %v9767
    %v9769 = vmul.f32 %v9749, %v9767
    %v9770 = vmul.f32 %v9750, %v9767
    %v9771 = vmul.f32 %v9751, %v9767
    %v9772 = vmul.f32 %v9752, %v9767
    %v9773 = vmul.f32 %v9753, %v9767
    %v9774 = vmul.f32 %v9754, %v9767
    %v9775 = vmul.f32 %v9755, %v9767
    %v9776 = vmul.f32 %v9756, %v9767
    %v9777 = vmul.f32 %v9757, %v9767
    %v9778 = vmul.f32 %v9758, %v9767
    %v9779 = vmul.f32 %v9759, %v9767
    %v9780 = vmul.f32 %v9760, %v9767
    %v9781 = vmul.f32 %v9761, %v9767
    %v9782 = vmul.f32 %v9762, %v9767
    %v9783 = vmul.f32 %v9763, %v9767
    %v9784 = vadd.f32 %v9666, %v9768
    %v9785 = vadd.f32 %v9667, %v9769
    %v9786 = vadd.f32 %v9668, %v9770
    %v9787 = vadd.f32 %v9669, %v9771
    %v9788 = vadd.f32 %v9670, %v9772
    %v9789 = vadd.f32 %v9671, %v9773
    %v9790 = vadd.f32 %v9672, %v9774
    %v9791 = vadd.f32 %v9673, %v9775
    %v9792 = vadd.f32 %v9674, %v9776
    %v9793 = vadd.f32 %v9675, %v9777
    %v9794 = vadd.f32 %v9676, %v9778
    %v9795 = vadd.f32 %v9677, %v9779
    %v9796 = vadd.f32 %v9678, %v9780
    %v9797 = vadd.f32 %v9679, %v9781
    %v9798 = vadd.f32 %v9680, %v9782
    %v9799 = vadd.f32 %v9681, %v9783
    %v9800 = vsel %vm9684, 1, 0
    %v9801 = vsel %vm9685, 1, 0
    %v9802 = vsel %vm9686, 1, 0
    %v9803 = vsel %vm9687, 1, 0
    %v9804 = vsel %vm9688, 1, 0
    %v9805 = vsel %vm9689, 1, 0
    %v9806 = vsel %vm9690, 1, 0
    %v9807 = vsel %vm9691, 1, 0
    %v9808 = vsel %vm9692, 1, 0
    %v9809 = vsel %vm9693, 1, 0
    %v9810 = vsel %vm9694, 1, 0
    %v9811 = vsel %vm9695, 1, 0
    %v9812 = vsel %vm9696, 1, 0
    %v9813 = vsel %vm9697, 1, 0
    %v9814 = vsel %vm9698, 1, 0
    %vm9815 = vcmp.eq.s32.totalorder %v9800, 1
    %vm9816 = vcmp.eq.s32.totalorder %v9801, 1
    %vm9817 = vcmp.eq.s32.totalorder %v9802, 1
    %vm9818 = vcmp.eq.s32.totalorder %v9803, 1
    %vm9819 = vcmp.eq.s32.totalorder %v9804, 1
    %vm9820 = vcmp.eq.s32.totalorder %v9805, 1
    %vm9821 = vcmp.eq.s32.totalorder %v9806, 1
    %vm9822 = vcmp.eq.s32.totalorder %v9807, 1
    %vm9823 = vcmp.eq.s32.totalorder %v9808, 1
    %vm9824 = vcmp.eq.s32.totalorder %v9809, 1
    %vm9825 = vcmp.eq.s32.totalorder %v9810, 1
    %vm9826 = vcmp.eq.s32.totalorder %v9811, 1
    %vm9827 = vcmp.eq.s32.totalorder %v9812, 1
    %vm9828 = vcmp.eq.s32.totalorder %v9813, 1
    %vm9829 = vcmp.eq.s32.totalorder %v9814, 1
    %v9830 = vsel %vm9815, %v8990, 0.0
    %v9831 = vsel %vm9816, %v8991, 0.0
    %v9832 = vsel %vm9817, %v8992, 0.0
    %v9833 = vsel %vm9818, %v8993, 0.0
    %v9834 = vsel %vm9819, %v8994, 0.0
    %v9835 = vsel %vm9820, %v8995, 0.0
    %v9836 = vsel %vm9821, %v8996, 0.0
    %v9837 = vsel %vm9822, %v8997, 0.0
    %v9838 = vsel %vm9823, %v8998, 0.0
    %v9839 = vsel %vm9824, %v8999, 0.0
    %v9840 = vsel %vm9825, %v9000, 0.0
    %v9841 = vsel %vm9826, %v9001, 0.0
    %v9842 = vsel %vm9827, %v9002, 0.0
    %v9843 = vsel %vm9828, %v9003, 0.0
    %v9844 = vsel %vm9829, %v9004, 0.0
    %v9845 = vlaneseq
    %v9846 = vshrl.u32 %v9845, 7
    %v9847 = vsub.s32 7, %v9846
    %v9848 = vrot.slane %v9053, %v9847
    %v9849 = vmul.f32 %v9830, %v9848
    %v9850 = vmul.f32 %v9831, %v9848
    %v9851 = vmul.f32 %v9832, %v9848
    %v9852 = vmul.f32 %v9833, %v9848
    %v9853 = vmul.f32 %v9834, %v9848
    %v9854 = vmul.f32 %v9835, %v9848
    %v9855 = vmul.f32 %v9836, %v9848
    %v9856 = vmul.f32 %v9837, %v9848
    %v9857 = vmul.f32 %v9838, %v9848
    %v9858 = vmul.f32 %v9839, %v9848
    %v9859 = vmul.f32 %v9840, %v9848
    %v9860 = vmul.f32 %v9841, %v9848
    %v9861 = vmul.f32 %v9842, %v9848
    %v9862 = vmul.f32 %v9843, %v9848
    %v9863 = vmul.f32 %v9844, %v9848
    %v9864 = vmul.f32 %v9848, 0.0
    %v9865 = vadd.f32 %v9784, %v9849
    %v9866 = vadd.f32 %v9785, %v9850
    %v9867 = vadd.f32 %v9786, %v9851
    %v9868 = vadd.f32 %v9787, %v9852
    %v9869 = vadd.f32 %v9788, %v9853
    %v9870 = vadd.f32 %v9789, %v9854
    %v9871 = vadd.f32 %v9790, %v9855
    %v9872 = vadd.f32 %v9791, %v9856
    %v9873 = vadd.f32 %v9792, %v9857
    %v9874 = vadd.f32 %v9793, %v9858
    %v9875 = vadd.f32 %v9794, %v9859
    %v9876 = vadd.f32 %v9795, %v9860
    %v9877 = vadd.f32 %v9796, %v9861
    %v9878 = vadd.f32 %v9797, %v9862
    %v9879 = vadd.f32 %v9798, %v9863
    %v9880 = vadd.f32 %v9799, %v9864
    %vm9881 = vmand %vm9684, %vm9357
    %vm9882 = vmand %vm9685, %vm9358
    %vm9883 = vmand %vm9686, %vm9359
    %vm9884 = vmand %vm9687, %vm9360
    %vm9885 = vmand %vm9688, %vm9361
    %vm9886 = vmand %vm9689, %vm9362
    %vm9887 = vmand %vm9690, %vm9363
    %vm9888 = vmand %vm9691, %vm9364
    %vm9889 = vmand %vm9692, %vm9365
    %vm9890 = vmand %vm9693, %vm9366
    %vm9891 = vmand %vm9694, %vm9367
    %vm9892 = vmand %vm9695, %vm9368
    %vm9893 = vmand %vm9696, %vm9369
    %vm9894 = vmand %vm9697, %vm9370
    %vm9895 = vmand %vm9698, %vm9371
    %v9896 = vsel %vm9881, 1, 0
    %v9897 = vsel %vm9882, 1, 0
    %v9898 = vsel %vm9883, 1, 0
    %v9899 = vsel %vm9884, 1, 0
    %v9900 = vsel %vm9885, 1, 0
    %v9901 = vsel %vm9886, 1, 0
    %v9902 = vsel %vm9887, 1, 0
    %v9903 = vsel %vm9888, 1, 0
    %v9904 = vsel %vm9889, 1, 0
    %v9905 = vsel %vm9890, 1, 0
    %v9906 = vsel %vm9891, 1, 0
    %v9907 = vsel %vm9892, 1, 0
    %v9908 = vsel %vm9893, 1, 0
    %v9909 = vsel %vm9894, 1, 0
    %v9910 = vsel %vm9895, 1, 0
    %vm9911 = vcmp.eq.s32.totalorder %v9896, 1
    %vm9912 = vcmp.eq.s32.totalorder %v9897, 1
    %vm9913 = vcmp.eq.s32.totalorder %v9898, 1
    %vm9914 = vcmp.eq.s32.totalorder %v9899, 1
    %vm9915 = vcmp.eq.s32.totalorder %v9900, 1
    %vm9916 = vcmp.eq.s32.totalorder %v9901, 1
    %vm9917 = vcmp.eq.s32.totalorder %v9902, 1
    %vm9918 = vcmp.eq.s32.totalorder %v9903, 1
    %vm9919 = vcmp.eq.s32.totalorder %v9904, 1
    %vm9920 = vcmp.eq.s32.totalorder %v9905, 1
    %vm9921 = vcmp.eq.s32.totalorder %v9906, 1
    %vm9922 = vcmp.eq.s32.totalorder %v9907, 1
    %vm9923 = vcmp.eq.s32.totalorder %v9908, 1
    %vm9924 = vcmp.eq.s32.totalorder %v9909, 1
    %vm9925 = vcmp.eq.s32.totalorder %v9910, 1
    %v9926 = vsel %vm9911, %v9313, 0.0
    %v9927 = vsel %vm9912, %v9315, 0.0
    %v9928 = vsel %vm9913, %v9317, 0.0
    %v9929 = vsel %vm9914, %v9319, 0.0
    %v9930 = vsel %vm9915, %v9321, 0.0
    %v9931 = vsel %vm9916, %v9323, 0.0
    %v9932 = vsel %vm9917, %v9325, 0.0
    %v9933 = vsel %vm9918, %v9327, 0.0
    %v9934 = vsel %vm9919, %v9329, 0.0
    %v9935 = vsel %vm9920, %v9331, 0.0
    %v9936 = vsel %vm9921, %v9333, 0.0
    %v9937 = vsel %vm9922, %v9335, 0.0
    %v9938 = vsel %vm9923, %v9337, 0.0
    %v9939 = vsel %vm9924, %v9339, 0.0
    %v9940 = vsel %vm9925, %v9597, 0.0
    %v9941 = vlaneseq
    %v9942 = vshrl.u32 %v9941, 7
    %v9943 = vsub.s32 0, %v9942
    %v9944 = vrot.slane %v9054, %v9943
    %v9945 = vmul.f32 %v9926, %v9944
    %v9946 = vmul.f32 %v9927, %v9944
    %v9947 = vmul.f32 %v9928, %v9944
    %v9948 = vmul.f32 %v9929, %v9944
    %v9949 = vmul.f32 %v9930, %v9944
    %v9950 = vmul.f32 %v9931, %v9944
    %v9951 = vmul.f32 %v9932, %v9944
    %v9952 = vmul.f32 %v9933, %v9944
    %v9953 = vmul.f32 %v9934, %v9944
    %v9954 = vmul.f32 %v9935, %v9944
    %v9955 = vmul.f32 %v9936, %v9944
    %v9956 = vmul.f32 %v9937, %v9944
    %v9957 = vmul.f32 %v9938, %v9944
    %v9958 = vmul.f32 %v9939, %v9944
    %v9959 = vmul.f32 %v9940, %v9944
    %v9960 = vmul.f32 %v9944, 0.0
    %v9961 = vadd.f32 %v9865, %v9945
    %v9962 = vadd.f32 %v9866, %v9946
    %v9963 = vadd.f32 %v9867, %v9947
    %v9964 = vadd.f32 %v9868, %v9948
    %v9965 = vadd.f32 %v9869, %v9949
    %v9966 = vadd.f32 %v9870, %v9950
    %v9967 = vadd.f32 %v9871, %v9951
    %v9968 = vadd.f32 %v9872, %v9952
    %v9969 = vadd.f32 %v9873, %v9953
    %v9970 = vadd.f32 %v9874, %v9954
    %v9971 = vadd.f32 %v9875, %v9955
    %v9972 = vadd.f32 %v9876, %v9956
    %v9973 = vadd.f32 %v9877, %v9957
    %v9974 = vadd.f32 %v9878, %v9958
    %v9975 = vadd.f32 %v9879, %v9959
    %v9976 = vadd.f32 %v9880, %v9960
    %v9977 = vld [vmem:[%s17] sm:$0xf]
    %v9978 = vld [vmem:[%s17 + $0x4] sm:$0xf]
    %v9979 = vld [vmem:[%s17 + $0x8] sm:$0xf]
    %v9980 = vld [vmem:[%s17 + $0xc] sm:$0xf]
    %v9981 = vpack.c.bf16 %v9962, %v9961
    %v9982 = vpack.c.bf16 %v9964, %v9963
    %v9983 = vpack.c.bf16 %v9966, %v9965
    %v9984 = vpack.c.bf16 %v9968, %v9967
    %v9985 = vpack.c.bf16 %v9970, %v9969
    %v9986 = vpack.c.bf16 %v9972, %v9971
    %v9987 = vpack.c.bf16 %v9974, %v9973
    %v9988 = vpack.c.bf16 %v9976, %v9975
    %v9993 = vunpack.c.l.b16 %v9977
    %v9994 = vunpack.c.l.b16 %v9978
    %v9995 = vunpack.c.l.b16 %v9979
    %v9996 = vunpack.c.l.b16 %v9980
    %v9997 = vpack.c.b16 %v9994, %v9993
    %v9998 = vpack.c.b16 %v9996, %v9995
    %10001 = vmatprep.subr.bf16.mxu0 0
    %10002 = vmatpush1.bf16.msra.mxu0 %v9981
    %10003 = vmatprep.subr.bf16.mxu0 0
    %10004 = vmatpush1.bf16.msra.mxu0 %v9982
    %10005 = vmatprep.subr.bf16.mxu0 0
    %10006 = vmatpush1.bf16.msra.mxu0 %v9983
    %10007 = vmatprep.subr.bf16.mxu0 0
    %10008 = vmatpush1.bf16.msra.mxu0 %v9984
    %10009 = vmatprep.subr.bf16.mxu0 0
    %10010 = vmatpush1.bf16.msra.mxu0 %v9985
    %10011 = vmatprep.subr.bf16.mxu0 0
    %10012 = vmatpush1.bf16.msra.mxu0 %v9986
    %10013 = vmatprep.subr.bf16.mxu0 0
    %10014 = vmatpush1.bf16.msra.mxu0 %v9987
    %10015 = vmatprep.subr.bf16.mxu0 0
    %10016 = vmatpush1.bf16.msra.mxu0 %v9988
    %10017 = vmatprep.subr.bf16.mxu0 0
    %10018 = vmatpush1.bf16.msra.mxu0 0
    %10019 = vmatprep.subr.bf16.mxu0 0
    %10020 = vmatpush1.bf16.msra.mxu0 0
    %10021 = vmatprep.subr.bf16.mxu0 0
    %10022 = vmatpush1.bf16.msra.mxu0 0
    %10023 = vmatprep.subr.bf16.mxu0 0
    %10024 = vmatpush1.bf16.msra.mxu0 0
    %10025 = vmatprep.subr.bf16.mxu0 0
    %10026 = vmatpush1.bf16.msra.mxu0 0
    %10027 = vmatprep.subr.bf16.mxu0 0
    %10028 = vmatpush1.bf16.msra.mxu0 0
    %10029 = vmatprep.subr.bf16.mxu0 0
    %10030 = vmatpush1.bf16.msra.mxu0 0
    %10031 = vmatprep.subr.bf16.mxu0 0
    %10032 = vmatpush1.bf16.msra.mxu0 0
    %10033 = vmatprep.mubr.bf16.mxu0 0
    %10034 = vmatmul.mubr.bf16.gmra.mrb[0].mxu0 %v9997
    %v10035 = vpop.f32.mrb[0].mxu0
    %v10036 = vadd.f32 0.0, %v10035
    %v10037 = vpop.f32.mrb[0].mxu0
    %v10038 = vpop.f32.mrb[0].mxu0
    %v10039 = vadd.f32 0.0, %v10038
    %v10040 = vpop.f32.mrb[0].mxu0
    %10041 = vmatprep.mubr.bf16.mxu0 0
    %10042 = vmatmul.mubr.bf16.gmra.mrb[0].mxu0 %v9998
    %v10043 = vpop.f32.mrb[0].mxu0
    %v10044 = vadd.f32 0.0, %v10043
    %v10045 = vpop.f32.mrb[0].mxu0
    %v10046 = vpop.f32.mrb[0].mxu0
    %v10047 = vadd.f32 0.0, %v10046
    %v10048 = vpop.f32.mrb[0].mxu0
    %10049 = vdwg.mxu0
    %v10050 = vpack.c.bf16 %v10039, %v10036
    %v10051 = vpack.c.bf16 %v10047, %v10044
    %v10052 = vld [vmem:[%s14] sm:$0xf]
    %v10053 = vld [vmem:[%s14 + $0x4] sm:$0xf]
    %v10054 = vld [vmem:[%s14 + $0x8] sm:$0xf]
    %v10055 = vld [vmem:[%s14 + $0xc] sm:$0xf]
    %v10056 = vld [vmem:[%s14 + $0x10] sm:$0xf]
    %v10057 = vld [vmem:[%s14 + $0x14] sm:$0xf]
    %v10058 = vld [vmem:[%s14 + $0x18] sm:$0xf]
    %v10059 = vld [vmem:[%s14 + $0x1c] sm:$0xf]
    %v10068 = vunpack.c.l.b16 %v10052
    %v10069 = vunpack.c.l.b16 %v10053
    %v10070 = vunpack.c.l.b16 %v10054
    %v10071 = vunpack.c.l.b16 %v10055
    %v10072 = vunpack.c.l.b16 %v10056
    %v10073 = vunpack.c.l.b16 %v10057
    %v10074 = vunpack.c.l.b16 %v10058
    %v10075 = vunpack.c.l.b16 %v10059
    %v10076 = vpack.c.b16 %v10069, %v10068
    %v10077 = vpack.c.b16 %v10071, %v10070
    %v10078 = vpack.c.b16 %v10073, %v10072
    %v10079 = vpack.c.b16 %v10075, %v10074
    %v10085 = vsel %vm8833, %v10050, 0
    %v10088 = vsel %vm8833, %v10051, 0
    %10090 = vmatprep.subr.bf16.mxu0 0
    %10091 = vmatpush1.bf16.msra.mxu0 %v10076
    %10092 = vmatprep.subr.bf16.mxu0 0
    %10093 = vmatpush1.bf16.msra.mxu0 %v10077
    %10094 = vmatprep.subr.bf16.mxu0 0
    %10095 = vmatpush1.bf16.msra.mxu0 %v10078
    %10096 = vmatprep.subr.bf16.mxu0 0
    %10097 = vmatpush1.bf16.msra.mxu0 %v10079
    %10098 = vmatprep.subr.bf16.mxu0 0
    %10099 = vmatpush1.bf16.msra.mxu0 0
    %10100 = vmatprep.subr.bf16.mxu0 0
    %10101 = vmatpush1.bf16.msra.mxu0 0
    %10102 = vmatprep.subr.bf16.mxu0 0
    %10103 = vmatpush1.bf16.msra.mxu0 0
    %10104 = vmatprep.subr.bf16.mxu0 0
    %10105 = vmatpush1.bf16.msra.mxu0 0
    %10106 = vmatprep.subr.bf16.mxu0 0
    %10107 = vmatpush1.bf16.msra.mxu0 0
    %10108 = vmatprep.subr.bf16.mxu0 0
    %10109 = vmatpush1.bf16.msra.mxu0 0
    %10110 = vmatprep.subr.bf16.mxu0 0
    %10111 = vmatpush1.bf16.msra.mxu0 0
    %10112 = vmatprep.subr.bf16.mxu0 0
    %10113 = vmatpush1.bf16.msra.mxu0 0
    %10114 = vmatprep.subr.bf16.mxu0 0
    %10115 = vmatpush1.bf16.msra.mxu0 0
    %10116 = vmatprep.subr.bf16.mxu0 0
    %10117 = vmatpush1.bf16.msra.mxu0 0
    %10118 = vmatprep.subr.bf16.mxu0 0
    %10119 = vmatpush1.bf16.msra.mxu0 0
    %10120 = vmatprep.subr.bf16.mxu0 0
    %10121 = vmatpush1.bf16.msra.mxu0 0
    %10122 = vmatprep.mubr.bf16.mxu0 0
    %10123 = vmatmul.mubr.bf16.gmra.mrb[0].mxu0 %v10085
    %v10124 = vpop.f32.mrb[0].mxu0
    %v10125 = vadd.f32 0.0, %v10124
    %v10126 = vpop.f32.mrb[0].mxu0
    %v10127 = vpop.f32.mrb[0].mxu0
    %v10128 = vadd.f32 0.0, %v10127
    %v10129 = vpop.f32.mrb[0].mxu0
    %10130 = vmatprep.mubr.bf16.mxu0 0
    %10131 = vmatmul.mubr.bf16.gmra.mrb[0].mxu0 %v10088
    %v10132 = vpop.f32.mrb[0].mxu0
    %v10133 = vadd.f32 0.0, %v10132
    %v10134 = vpop.f32.mrb[0].mxu0
    %v10135 = vpop.f32.mrb[0].mxu0
    %v10136 = vadd.f32 0.0, %v10135
    %v10137 = vpop.f32.mrb[0].mxu0
    %10138 = vdwg.mxu0
    %v10139 = vld [vmem:[%s15] sm:$0x1]
    %v10140 = vld [vmem:[%s16] sm:$0x1]
    %v10141 = vadd.f32 %v10125, %v10128
    %v10142 = vadd.f32 %v10141, %v10133
    %v10143 = vadd.f32 %v10142, %v10136
    %v10144 = vrot.slane %v10143, 4
    %v10145 = vadd.f32 %v10143, %v10144
    %v10146 = vrot.slane %v10145, 2
    %v10147 = vadd.f32 %v10145, %v10146
    %v10148 = vrot.slane %v10147, 1
    %v10149 = vadd.f32 %v10147, %v10148
    %v10150 = vmul.f32 %v10149, 0.03125
    %v10151 = vsub.f32 %v10125, %v10150
    %v10152 = vsub.f32 %v10128, %v10150
    %v10153 = vsub.f32 %v10133, %v10150
    %v10154 = vsub.f32 %v10136, %v10150
    %v10155 = vmul.f32 %v10151, %v10151
    %v10156 = vmul.f32 %v10152, %v10152
    %v10157 = vmul.f32 %v10153, %v10153
    %v10158 = vmul.f32 %v10154, %v10154
    %v10159 = vadd.f32 %v10155, %v10156
    %v10160 = vadd.f32 %v10159, %v10157
    %v10161 = vadd.f32 %v10160, %v10158
    %v10162 = vrot.slane %v10161, 4
    %v10163 = vadd.f32 %v10161, %v10162
    %v10164 = vrot.slane %v10163, 2
    %v10165 = vadd.f32 %v10163, %v10164
    %v10166 = vrot.slane %v10165, 1
    %v10167 = vadd.f32 %v10165, %v10166
    %v10168 = vmul.f32 %v10167, 0.03125
    %v10169 = vadd.f32 %v10168, 1e-05
    %v10170 = vrsqrt.pop %v10169
    %v10171 = vmul.f32 %v10139, %v10170
    %v10173 = vlaneseq
    %v10174 = vshrl.u32 %v10173, 7
    %v10175 = vsub.s32 0, %v10174
    %v10176 = vrot.slane %v10171, %v10175
    %v10178 = vmul.f32 %v10151, %v10176
    %v10179 = vmul.f32 %v10152, %v10176
    %v10180 = vmul.f32 %v10153, %v10176
    %v10181 = vmul.f32 %v10154, %v10176
    %v10183 = vlaneseq
    %v10184 = vshrl.u32 %v10183, 7
    %v10185 = vsub.s32 0, %v10184
    %v10186 = vrot.slane %v10140, %v10185
    %v10188 = vadd.f32 %v10178, %v10186
    %v10189 = vadd.f32 %v10179, %v10186
    %v10190 = vadd.f32 %v10180, %v10186
    %v10191 = vadd.f32 %v10181, %v10186
    %v10192 = vmax.f32 %v10188, 0.0
    %v10193 = vmax.f32 %v10189, 0.0
    %v10194 = vmax.f32 %v10190, 0.0
    %v10195 = vmax.f32 %v10191, 0.0
    %v10196 = vshra.s32 %v1321, 2
    %v10197 = vshra.s32 %v1322, 2
    %v10198 = vshra.s32 %v1323, 2
    %v10199 = vshra.s32 %v1324, 2
    %v10200 = vand.u32 %v10196, 3
    %v10201 = vand.u32 %v10197, 3
    %v10202 = vand.u32 %v10198, 3
    %v10203 = vand.u32 %v10199, 3
    %v10204 = vand.u32 %v1321, 3
    %v10205 = vand.u32 %v1322, 3
    %v10206 = vand.u32 %v1323, 3
    %v10207 = vand.u32 %v1324, 3
    %v10208 = vld [vmem:[%s18] sm:$0xff]
    %v10209 = vld [vmem:[%s18 + $0x8] sm:$0x1]
    %v10214 = vrot.slane %v10192, 3
    %v10215 = vrot.slane %v10193, 3
    %v10216 = vsel %vm418, %v10214, %v10215
    %v10217 = vrot.slane %v10194, 3
    %v10218 = vsel %vm418, %v10215, %v10217
    %v10219 = vrot.slane %v10195, 3
    %v10220 = vsel %vm418, %v10217, %v10219
    %v10225 = vsel %vm418, 0.0, %v10214
    %vm10226 = vcmp.ge.s32.totalorder %v10200, 1
    %vm10227 = vcmp.ge.s32.totalorder %v10201, 1
    %vm10228 = vcmp.ge.s32.totalorder %v10202, 1
    %vm10229 = vcmp.ge.s32.totalorder %v10203, 1
    %vm10230 = vcmp.ge.s32.totalorder %v10204, 1
    %vm10231 = vcmp.ge.s32.totalorder %v10205, 1
    %vm10232 = vcmp.ge.s32.totalorder %v10206, 1
    %vm10233 = vcmp.ge.s32.totalorder %v10207, 1
    %vm10234 = vmand %vm10226, %vm10230
    %vm10235 = vmand %vm10227, %vm10231
    %vm10236 = vmand %vm10228, %vm10232
    %vm10237 = vmand %vm10229, %vm10233
    %v10238 = vsel %vm10234, 1, 0
    %v10239 = vsel %vm10235, 1, 0
    %v10240 = vsel %vm10236, 1, 0
    %v10241 = vsel %vm10237, 1, 0
    %vm10242 = vcmp.eq.s32.totalorder %v10238, 1
    %vm10243 = vcmp.eq.s32.totalorder %v10239, 1
    %vm10244 = vcmp.eq.s32.totalorder %v10240, 1
    %vm10245 = vcmp.eq.s32.totalorder %v10241, 1
    %v10246 = vsel %vm10242, %v10225, 0.0
    %v10247 = vsel %vm10243, %v10216, 0.0
    %v10248 = vsel %vm10244, %v10218, 0.0
    %v10249 = vsel %vm10245, %v10220, 0.0
    %v10250 = vlaneseq
    %v10251 = vshrl.u32 %v10250, 7
    %v10252 = vsub.s32 0, %v10251
    %v10253 = vrot.slane %v10208, %v10252
    %v10254 = vmul.f32 %v10246, %v10253
    %v10255 = vmul.f32 %v10247, %v10253
    %v10256 = vmul.f32 %v10248, %v10253
    %v10257 = vmul.f32 %v10249, %v10253
    %vm10258 = vcmask 1043456
    %v10259 = vrot.slane %v10192, 4
    %v10260 = vrot.slane %v10193, 4
    %v10261 = vsel %vm10258, %v10259, %v10260
    %v10262 = vrot.slane %v10194, 4
    %v10263 = vsel %vm10258, %v10260, %v10262
    %v10264 = vrot.slane %v10195, 4
    %v10265 = vsel %vm10258, %v10262, %v10264
    %v10270 = vsel %vm10258, 0.0, %v10259
    %v10271 = vsel %vm10226, 1, 0
    %v10272 = vsel %vm10227, 1, 0
    %v10273 = vsel %vm10228, 1, 0
    %v10274 = vsel %vm10229, 1, 0
    %vm10275 = vcmp.eq.s32.totalorder %v10271, 1
    %vm10276 = vcmp.eq.s32.totalorder %v10272, 1
    %vm10277 = vcmp.eq.s32.totalorder %v10273, 1
    %vm10278 = vcmp.eq.s32.totalorder %v10274, 1
    %v10279 = vsel %vm10275, %v10270, 0.0
    %v10280 = vsel %vm10276, %v10261, 0.0
    %v10281 = vsel %vm10277, %v10263, 0.0
    %v10282 = vsel %vm10278, %v10265, 0.0
    %v10283 = vlaneseq
    %v10284 = vshrl.u32 %v10283, 7
    %v10285 = vsub.s32 1, %v10284
    %v10286 = vrot.slane %v10208, %v10285
    %v10287 = vmul.f32 %v10279, %v10286
    %v10288 = vmul.f32 %v10280, %v10286
    %v10289 = vmul.f32 %v10281, %v10286
    %v10290 = vmul.f32 %v10282, %v10286
    %v10291 = vadd.f32 %v10254, %v10287
    %v10292 = vadd.f32 %v10255, %v10288
    %v10293 = vadd.f32 %v10256, %v10289
    %v10294 = vadd.f32 %v10257, %v10290
    %vm10295 = vcmask 1042432
    %v10296 = vrot.slane %v10192, 5
    %v10297 = vrot.slane %v10193, 5
    %v10298 = vsel %vm10295, %v10296, %v10297
    %v10299 = vrot.slane %v10194, 5
    %v10300 = vsel %vm10295, %v10297, %v10299
    %v10301 = vrot.slane %v10195, 5
    %v10302 = vsel %vm10295, %v10299, %v10301
    %v10307 = vsel %vm10295, 0.0, %v10296
    %vm10308 = vcmp.lt.s32.totalorder %v10204, 3
    %vm10309 = vcmp.lt.s32.totalorder %v10205, 3
    %vm10310 = vcmp.lt.s32.totalorder %v10206, 3
    %vm10311 = vcmp.lt.s32.totalorder %v10207, 3
    %vm10312 = vmand %vm10226, %vm10308
    %vm10313 = vmand %vm10227, %vm10309
    %vm10314 = vmand %vm10228, %vm10310
    %vm10315 = vmand %vm10229, %vm10311
    %v10316 = vsel %vm10312, 1, 0
    %v10317 = vsel %vm10313, 1, 0
    %v10318 = vsel %vm10314, 1, 0
    %v10319 = vsel %vm10315, 1, 0
    %vm10320 = vcmp.eq.s32.totalorder %v10316, 1
    %vm10321 = vcmp.eq.s32.totalorder %v10317, 1
    %vm10322 = vcmp.eq.s32.totalorder %v10318, 1
    %vm10323 = vcmp.eq.s32.totalorder %v10319, 1
    %v10324 = vsel %vm10320, %v10307, 0.0
    %v10325 = vsel %vm10321, %v10298, 0.0
    %v10326 = vsel %vm10322, %v10300, 0.0
    %v10327 = vsel %vm10323, %v10302, 0.0
    %v10328 = vlaneseq
    %v10329 = vshrl.u32 %v10328, 7
    %v10330 = vsub.s32 2, %v10329
    %v10331 = vrot.slane %v10208, %v10330
    %v10332 = vmul.f32 %v10324, %v10331
    %v10333 = vmul.f32 %v10325, %v10331
    %v10334 = vmul.f32 %v10326, %v10331
    %v10335 = vmul.f32 %v10327, %v10331
    %v10336 = vadd.f32 %v10291, %v10332
    %v10337 = vadd.f32 %v10292, %v10333
    %v10338 = vadd.f32 %v10293, %v10334
    %v10339 = vadd.f32 %v10294, %v10335
    %v10340 = vrot.slane %v10192, 7
    %v10341 = vrot.slane %v10193, 7
    %v10342 = vsel %vm1641, %v10340, %v10341
    %v10343 = vrot.slane %v10194, 7
    %v10344 = vsel %vm1641, %v10341, %v10343
    %v10345 = vrot.slane %v10195, 7
    %v10346 = vsel %vm1641, %v10343, %v10345
    %v10351 = vsel %vm1641, 0.0, %v10340
    %v10352 = vsel %vm10230, 1, 0
    %v10353 = vsel %vm10231, 1, 0
    %v10354 = vsel %vm10232, 1, 0
    %v10355 = vsel %vm10233, 1, 0
    %vm10356 = vcmp.eq.s32.totalorder %v10352, 1
    %vm10357 = vcmp.eq.s32.totalorder %v10353, 1
    %vm10358 = vcmp.eq.s32.totalorder %v10354, 1
    %vm10359 = vcmp.eq.s32.totalorder %v10355, 1
    %v10360 = vsel %vm10356, %v10351, 0.0
    %v10361 = vsel %vm10357, %v10342, 0.0
    %v10362 = vsel %vm10358, %v10344, 0.0
    %v10363 = vsel %vm10359, %v10346, 0.0
    %v10364 = vlaneseq
    %v10365 = vshrl.u32 %v10364, 7
    %v10366 = vsub.s32 3, %v10365
    %v10367 = vrot.slane %v10208, %v10366
    %v10368 = vmul.f32 %v10360, %v10367
    %v10369 = vmul.f32 %v10361, %v10367
    %v10370 = vmul.f32 %v10362, %v10367
    %v10371 = vmul.f32 %v10363, %v10367
    %v10372 = vadd.f32 %v10336, %v10368
    %v10373 = vadd.f32 %v10337, %v10369
    %v10374 = vadd.f32 %v10338, %v10370
    %v10375 = vadd.f32 %v10339, %v10371
    %v10376 = vlaneseq
    %v10377 = vshrl.u32 %v10376, 7
    %v10378 = vsub.s32 4, %v10377
    %v10379 = vrot.slane %v10208, %v10378
    %v10380 = vmul.f32 %v10192, %v10379
    %v10381 = vmul.f32 %v10193, %v10379
    %v10382 = vmul.f32 %v10194, %v10379
    %v10383 = vmul.f32 %v10195, %v10379
    %v10384 = vadd.f32 %v10372, %v10380
    %v10385 = vadd.f32 %v10373, %v10381
    %v10386 = vadd.f32 %v10374, %v10382
    %v10387 = vadd.f32 %v10375, %v10383
    %v10388 = vrot.slane %v10192, 1
    %v10389 = vrot.slane %v10193, 1
    %v10390 = vsel %vm2587, %v10388, %v10389
    %v10391 = vrot.slane %v10194, 1
    %v10392 = vsel %vm2587, %v10389, %v10391
    %v10393 = vrot.slane %v10195, 1
    %v10394 = vsel %vm2587, %v10391, %v10393
    %v10399 = vsel %vm2587, %v10393, 0.0
    %v10400 = vsel %vm10308, 1, 0
    %v10401 = vsel %vm10309, 1, 0
    %v10402 = vsel %vm10310, 1, 0
    %v10403 = vsel %vm10311, 1, 0
    %vm10404 = vcmp.eq.s32.totalorder %v10400, 1
    %vm10405 = vcmp.eq.s32.totalorder %v10401, 1
    %vm10406 = vcmp.eq.s32.totalorder %v10402, 1
    %vm10407 = vcmp.eq.s32.totalorder %v10403, 1
    %v10408 = vsel %vm10404, %v10390, 0.0
    %v10409 = vsel %vm10405, %v10392, 0.0
    %v10410 = vsel %vm10406, %v10394, 0.0
    %v10411 = vsel %vm10407, %v10399, 0.0
    %v10412 = vlaneseq
    %v10413 = vshrl.u32 %v10412, 7
    %v10414 = vsub.s32 5, %v10413
    %v10415 = vrot.slane %v10208, %v10414
    %v10416 = vmul.f32 %v10408, %v10415
    %v10417 = vmul.f32 %v10409, %v10415
    %v10418 = vmul.f32 %v10410, %v10415
    %v10419 = vmul.f32 %v10411, %v10415
    %v10420 = vadd.f32 %v10384, %v10416
    %v10421 = vadd.f32 %v10385, %v10417
    %v10422 = vadd.f32 %v10386, %v10418
    %v10423 = vadd.f32 %v10387, %v10419
    %v10425 = vsel %vm418, %v10219, 0.0
    %vm10426 = vcmp.lt.s32.totalorder %v10200, 3
    %vm10427 = vcmp.lt.s32.totalorder %v10201, 3
    %vm10428 = vcmp.lt.s32.totalorder %v10202, 3
    %vm10429 = vcmp.lt.s32.totalorder %v10203, 3
    %vm10430 = vmand %vm10426, %vm10230
    %vm10431 = vmand %vm10427, %vm10231
    %vm10432 = vmand %vm10428, %vm10232
    %vm10433 = vmand %vm10429, %vm10233
    %v10434 = vsel %vm10430, 1, 0
    %v10435 = vsel %vm10431, 1, 0
    %v10436 = vsel %vm10432, 1, 0
    %v10437 = vsel %vm10433, 1, 0
    %vm10438 = vcmp.eq.s32.totalorder %v10434, 1
    %vm10439 = vcmp.eq.s32.totalorder %v10435, 1
    %vm10440 = vcmp.eq.s32.totalorder %v10436, 1
    %vm10441 = vcmp.eq.s32.totalorder %v10437, 1
    %v10442 = vsel %vm10438, %v10216, 0.0
    %v10443 = vsel %vm10439, %v10218, 0.0
    %v10444 = vsel %vm10440, %v10220, 0.0
    %v10445 = vsel %vm10441, %v10425, 0.0
    %v10446 = vlaneseq
    %v10447 = vshrl.u32 %v10446, 7
    %v10448 = vsub.s32 6, %v10447
    %v10449 = vrot.slane %v10208, %v10448
    %v10450 = vmul.f32 %v10442, %v10449
    %v10451 = vmul.f32 %v10443, %v10449
    %v10452 = vmul.f32 %v10444, %v10449
    %v10453 = vmul.f32 %v10445, %v10449
    %v10454 = vadd.f32 %v10420, %v10450
    %v10455 = vadd.f32 %v10421, %v10451
    %v10456 = vadd.f32 %v10422, %v10452
    %v10457 = vadd.f32 %v10423, %v10453
    %v10459 = vsel %vm10258, %v10264, 0.0
    %v10460 = vsel %vm10426, 1, 0
    %v10461 = vsel %vm10427, 1, 0
    %v10462 = vsel %vm10428, 1, 0
    %v10463 = vsel %vm10429, 1, 0
    %vm10464 = vcmp.eq.s32.totalorder %v10460, 1
    %vm10465 = vcmp.eq.s32.totalorder %v10461, 1
    %vm10466 = vcmp.eq.s32.totalorder %v10462, 1
    %vm10467 = vcmp.eq.s32.totalorder %v10463, 1
    %v10468 = vsel %vm10464, %v10261, 0.0
    %v10469 = vsel %vm10465, %v10263, 0.0
    %v10470 = vsel %vm10466, %v10265, 0.0
    %v10471 = vsel %vm10467, %v10459, 0.0
    %v10472 = vlaneseq
    %v10473 = vshrl.u32 %v10472, 7
    %v10474 = vsub.s32 7, %v10473
    %v10475 = vrot.slane %v10208, %v10474
    %v10476 = vmul.f32 %v10468, %v10475
    %v10477 = vmul.f32 %v10469, %v10475
    %v10478 = vmul.f32 %v10470, %v10475
    %v10479 = vmul.f32 %v10471, %v10475
    %v10480 = vadd.f32 %v10454, %v10476
    %v10481 = vadd.f32 %v10455, %v10477
    %v10482 = vadd.f32 %v10456, %v10478
    %v10483 = vadd.f32 %v10457, %v10479
    %v10485 = vsel %vm10295, %v10301, 0.0
    %vm10486 = vmand %vm10426, %vm10308
    %vm10487 = vmand %vm10427, %vm10309
    %vm10488 = vmand %vm10428, %vm10310
    %vm10489 = vmand %vm10429, %vm10311
    %v10490 = vsel %vm10486, 1, 0
    %v10491 = vsel %vm10487, 1, 0
    %v10492 = vsel %vm10488, 1, 0
    %v10493 = vsel %vm10489, 1, 0
    %vm10494 = vcmp.eq.s32.totalorder %v10490, 1
    %vm10495 = vcmp.eq.s32.totalorder %v10491, 1
    %vm10496 = vcmp.eq.s32.totalorder %v10492, 1
    %vm10497 = vcmp.eq.s32.totalorder %v10493, 1
    %v10498 = vsel %vm10494, %v10298, 0.0
    %v10499 = vsel %vm10495, %v10300, 0.0
    %v10500 = vsel %vm10496, %v10302, 0.0
    %v10501 = vsel %vm10497, %v10485, 0.0
    %v10502 = vlaneseq
    %v10503 = vshrl.u32 %v10502, 7
    %v10504 = vsub.s32 0, %v10503
    %v10505 = vrot.slane %v10209, %v10504
    %v10506 = vmul.f32 %v10498, %v10505
    %v10507 = vmul.f32 %v10499, %v10505
    %v10508 = vmul.f32 %v10500, %v10505
    %v10509 = vmul.f32 %v10501, %v10505
    %v10510 = vadd.f32 %v10480, %v10506
    %v10511 = vadd.f32 %v10481, %v10507
    %v10512 = vadd.f32 %v10482, %v10508
    %v10513 = vadd.f32 %v10483, %v10509
    %v10514 = vld [vmem:[%s22] sm:$0xf]
    %v10515 = vpack.c.bf16 %v10511, %v10510
    %v10516 = vpack.c.bf16 %v10513, %v10512
    %v10518 = vsel %vm5589, %v10514, 0
    %10520 = vmatprep.subr.bf16.mxu0 0
    %10521 = vmatpush1.bf16.msra.mxu0 %v10515
    %10522 = vmatprep.subr.bf16.mxu0 0
    %10523 = vmatpush1.bf16.msra.mxu0 %v10516
    %10524 = vmatprep.subr.bf16.mxu0 0
    %10525 = vmatpush1.bf16.msra.mxu0 0
    %10526 = vmatprep.subr.bf16.mxu0 0
    %10527 = vmatpush1.bf16.msra.mxu0 0
    %10528 = vmatprep.subr.bf16.mxu0 0
    %10529 = vmatpush1.bf16.msra.mxu0 0
    %10530 = vmatprep.subr.bf16.mxu0 0
    %10531 = vmatpush1.bf16.msra.mxu0 0
    %10532 = vmatprep.subr.bf16.mxu0 0
    %10533 = vmatpush1.bf16.msra.mxu0 0
    %10534 = vmatprep.subr.bf16.mxu0 0
    %10535 = vmatpush1.bf16.msra.mxu0 0
    %10536 = vmatprep.subr.bf16.mxu0 0
    %10537 = vmatpush1.bf16.msra.mxu0 0
    %10538 = vmatprep.subr.bf16.mxu0 0
    %10539 = vmatpush1.bf16.msra.mxu0 0
    %10540 = vmatprep.subr.bf16.mxu0 0
    %10541 = vmatpush1.bf16.msra.mxu0 0
    %10542 = vmatprep.subr.bf16.mxu0 0
    %10543 = vmatpush1.bf16.msra.mxu0 0
    %10544 = vmatprep.subr.bf16.mxu0 0
    %10545 = vmatpush1.bf16.msra.mxu0 0
    %10546 = vmatprep.subr.bf16.mxu0 0
    %10547 = vmatpush1.bf16.msra.mxu0 0
    %10548 = vmatprep.subr.bf16.mxu0 0
    %10549 = vmatpush1.bf16.msra.mxu0 0
    %10550 = vmatprep.subr.bf16.mxu0 0
    %10551 = vmatpush1.bf16.msra.mxu0 0
    %10552 = vmatprep.mubr.bf16.mxu0 0
    %10553 = vmatmul.mubr.bf16.gmra.mrb[0].mxu0 %v10518
    %v10554 = vpop.f32.mrb[0].mxu0
    %v10555 = vadd.f32 0.0, %v10554
    %v10556 = vpop.f32.mrb[0].mxu0
    %v10557 = vpop.f32.mrb[0].mxu0
    %v10558 = vpop.f32.mrb[0].mxu0
    %10559 = vdwg.mxu0
    %v10560 = vpack.c.bf16 %v10555, %v10555
    %v10561 = vld [vmem:[%s19] sm:$0xff]
    %v10562 = vld [vmem:[%s19 + $0x8] sm:$0xff]
    %v10563 = vld [vmem:[%s19 + $0x10] sm:$0xff]
    %v10564 = vld [vmem:[%s19 + $0x18] sm:$0xff]
    %v10565 = vld [vmem:[%s19 + $0x20] sm:$0xff]
    %v10566 = vld [vmem:[%s19 + $0x28] sm:$0xff]
    %v10567 = vld [vmem:[%s19 + $0x30] sm:$0xff]
    %v10568 = vld [vmem:[%s19 + $0x38] sm:$0xff]
    %v10569 = vld [vmem:[%s19 + $0x40] sm:$0xff]
    %v10570 = vld [vmem:[%s19 + $0x48] sm:$0xff]
    %v10571 = vld [vmem:[%s19 + $0x50] sm:$0xff]
    %v10572 = vld [vmem:[%s19 + $0x58] sm:$0xff]
    %v10573 = vld [vmem:[%s19 + $0x60] sm:$0xff]
    %v10574 = vld [vmem:[%s19 + $0x68] sm:$0xff]
    %v10575 = vld [vmem:[%s19 + $0x70] sm:$0xff]
    %v10576 = vld [vmem:[%s19 + $0x78] sm:$0xff]
    %v10593 = vunpack.c.l.b16 %v10561
    %v10594 = vunpack.c.h.b16 %v10561
    %v10595 = vunpack.c.l.b16 %v10562
    %v10596 = vunpack.c.h.b16 %v10562
    %v10597 = vunpack.c.l.b16 %v10563
    %v10598 = vunpack.c.h.b16 %v10563
    %v10599 = vunpack.c.l.b16 %v10564
    %v10600 = vunpack.c.h.b16 %v10564
    %v10601 = vunpack.c.l.b16 %v10565
    %v10602 = vunpack.c.h.b16 %v10565
    %v10603 = vunpack.c.l.b16 %v10566
    %v10604 = vunpack.c.h.b16 %v10566
    %v10605 = vunpack.c.l.b16 %v10567
    %v10606 = vunpack.c.h.b16 %v10567
    %v10607 = vunpack.c.l.b16 %v10568
    %v10608 = vunpack.c.h.b16 %v10568
    %v10609 = vunpack.c.l.b16 %v10569
    %v10610 = vunpack.c.h.b16 %v10569
    %v10611 = vunpack.c.l.b16 %v10570
    %v10612 = vunpack.c.h.b16 %v10570
    %v10613 = vunpack.c.l.b16 %v10571
    %v10614 = vunpack.c.h.b16 %v10571
    %v10615 = vunpack.c.l.b16 %v10572
    %v10616 = vunpack.c.h.b16 %v10572
    %v10617 = vunpack.c.l.b16 %v10573
    %v10618 = vunpack.c.h.b16 %v10573
    %v10619 = vunpack.c.l.b16 %v10574
    %v10620 = vunpack.c.h.b16 %v10574
    %v10621 = vunpack.c.l.b16 %v10575
    %v10622 = vunpack.c.h.b16 %v10575
    %v10623 = vunpack.c.l.b16 %v10576
    %v10624 = vunpack.c.h.b16 %v10576
    %v10625 = vpack.c.b16 %v10595, %v10593
    %v10626 = vpack.c.b16 %v10596, %v10594
    %v10627 = vpack.c.b16 %v10599, %v10597
    %v10628 = vpack.c.b16 %v10600, %v10598
    %v10629 = vpack.c.b16 %v10603, %v10601
    %v10630 = vpack.c.b16 %v10604, %v10602
    %v10631 = vpack.c.b16 %v10607, %v10605
    %v10632 = vpack.c.b16 %v10608, %v10606
    %v10633 = vpack.c.b16 %v10611, %v10609
    %v10634 = vpack.c.b16 %v10612, %v10610
    %v10635 = vpack.c.b16 %v10615, %v10613
    %v10636 = vpack.c.b16 %v10616, %v10614
    %v10637 = vpack.c.b16 %v10619, %v10617
    %v10638 = vpack.c.b16 %v10620, %v10618
    %v10639 = vpack.c.b16 %v10623, %v10621
    %v10640 = vpack.c.b16 %v10624, %v10622
    %10657 = vmatprep.subr.bf16.mxu0 %v10626
    %10658 = vmatpush1.bf16.msra.mxu0 %v10625
    %10659 = vmatprep.subr.bf16.mxu0 %v10628
    %10660 = vmatpush1.bf16.msra.mxu0 %v10627
    %10661 = vmatprep.subr.bf16.mxu0 %v10630
    %10662 = vmatpush1.bf16.msra.mxu0 %v10629
    %10663 = vmatprep.subr.bf16.mxu0 %v10632
    %10664 = vmatpush1.bf16.msra.mxu0 %v10631
    %10665 = vmatprep.subr.bf16.mxu0 %v10634
    %10666 = vmatpush1.bf16.msra.mxu0 %v10633
    %10667 = vmatprep.subr.bf16.mxu0 %v10636
    %10668 = vmatpush1.bf16.msra.mxu0 %v10635
    %10669 = vmatprep.subr.bf16.mxu0 %v10638
    %10670 = vmatpush1.bf16.msra.mxu0 %v10637
    %10671 = vmatprep.subr.bf16.mxu0 %v10640
    %10672 = vmatpush1.bf16.msra.mxu0 %v10639
    %10673 = vmatprep.subr.bf16.mxu0 0
    %10674 = vmatpush1.bf16.msra.mxu0 0
    %10675 = vmatprep.subr.bf16.mxu0 0
    %10676 = vmatpush1.bf16.msra.mxu0 0
    %10677 = vmatprep.subr.bf16.mxu0 0
    %10678 = vmatpush1.bf16.msra.mxu0 0
    %10679 = vmatprep.subr.bf16.mxu0 0
    %10680 = vmatpush1.bf16.msra.mxu0 0
    %10681 = vmatprep.subr.bf16.mxu0 0
    %10682 = vmatpush1.bf16.msra.mxu0 0
    %10683 = vmatprep.subr.bf16.mxu0 0
    %10684 = vmatpush1.bf16.msra.mxu0 0
    %10685 = vmatprep.subr.bf16.mxu0 0
    %10686 = vmatpush1.bf16.msra.mxu0 0
    %10687 = vmatprep.subr.bf16.mxu0 0
    %10688 = vmatpush1.bf16.msra.mxu0 0
    %10689 = vmatprep.mubr.bf16.mxu0 0
    %10690 = vmatmul.mubr.bf16.gmra.mrb[0].mxu0 %v10560
    %v10691 = vpop.f32.mrb[0].mxu0
    %v10692 = vadd.f32 0.0, %v10691
    %v10693 = vpop.f32.mrb[0].mxu0
    %v10694 = vadd.f32 0.0, %v10693
    %v10695 = vpop.f32.mrb[0].mxu0
    %v10696 = vpop.f32.mrb[0].mxu0
    %10697 = vdwg.mxu0
    %v10698 = vld [vmem:[%s20] sm:$0x3]
    %v10699 = vld [vmem:[%s21] sm:$0x3]
    %v10700 = vrot.slane %v10692, 4
    %v10701 = vadd.f32 %v10692, %v10700
    %v10702 = vrot.slane %v10701, 2
    %v10703 = vadd.f32 %v10701, %v10702
    %v10704 = vrot.slane %v10703, 1
    %v10705 = vadd.f32 %v10703, %v10704
    %v10706 = vrot.slane %v10694, 4
    %v10707 = vadd.f32 %v10694, %v10706
    %v10708 = vrot.slane %v10707, 2
    %v10709 = vadd.f32 %v10707, %v10708
    %v10710 = vrot.slane %v10709, 1
    %v10711 = vadd.f32 %v10709, %v10710
    %v10712 = vmul.f32 %v10705, 0.125
    %v10713 = vmul.f32 %v10711, 0.125
    %v10714 = vsub.f32 %v10692, %v10712
    %v10715 = vsub.f32 %v10694, %v10713
    %v10716 = vmul.f32 %v10714, %v10714
    %v10717 = vmul.f32 %v10715, %v10715
    %v10718 = vrot.slane %v10716, 4
    %v10719 = vadd.f32 %v10716, %v10718
    %v10720 = vrot.slane %v10719, 2
    %v10721 = vadd.f32 %v10719, %v10720
    %v10722 = vrot.slane %v10721, 1
    %v10723 = vadd.f32 %v10721, %v10722
    %v10724 = vrot.slane %v10717, 4
    %v10725 = vadd.f32 %v10717, %v10724
    %v10726 = vrot.slane %v10725, 2
    %v10727 = vadd.f32 %v10725, %v10726
    %v10728 = vrot.slane %v10727, 1
    %v10729 = vadd.f32 %v10727, %v10728
    %v10730 = vmul.f32 %v10723, 0.125
    %v10731 = vmul.f32 %v10729, 0.125
    %v10732 = vadd.f32 %v10730, 1e-05
    %v10733 = vadd.f32 %v10731, 1e-05
    %v10734 = vrsqrt.pop %v10732
    %v10735 = vrsqrt.pop %v10733
    %v10738 = vcombine.low %v10734, %v10735
    %v10740 = vunpack.c.l.s4 1966171168
    %v10741 = vunpack.c.0.s8 %v10740
    %v10742 = vlaneseq
    %v10743 = vshrl.u32 %v10742, 7
    %v10744 = vsub.s32 %v10741, %v10743
    %v10745 = vrot.slane %v10738, %v10744
    %v10747 = vunpack.c.l.s4 1966171168
    %v10748 = vunpack.c.0.s8 %v10747
    %v10749 = vlaneseq
    %v10750 = vshrl.u32 %v10749, 7
    %v10751 = vsub.s32 %v10748, %v10750
    %v10752 = vrot.slane %v10745, %v10751
    %v10754 = vmul.f32 %v10698, %v10752
    %v10756 = vlaneseq
    %v10757 = vshrl.u32 %v10756, 7
    %v10758 = vsub.s32 0, %v10757
    %v10759 = vrot.slane %v10754, %v10758
    %v10760 = vlaneseq
    %v10761 = vshrl.u32 %v10760, 7
    %v10762 = vsub.s32 1, %v10761
    %v10763 = vrot.slane %v10754, %v10762
    %v10766 = vmul.f32 %v10714, %v10759
    %v10767 = vmul.f32 %v10715, %v10763
    %v10769 = vlaneseq
    %v10770 = vshrl.u32 %v10769, 7
    %v10771 = vsub.s32 0, %v10770
    %v10772 = vrot.slane %v10699, %v10771
    %v10773 = vlaneseq
    %v10774 = vshrl.u32 %v10773, 7
    %v10775 = vsub.s32 1, %v10774
    %v10776 = vrot.slane %v10699, %v10775
    %v10779 = vadd.f32 %v10766, %v10772
    %v10780 = vadd.f32 %v10767, %v10776
    %v10781 = vmax.f32 %v10779, 0.0
    %v10782 = vmax.f32 %v10780, 0.0
    %v10783 = vsel %vm10258, %v10781, 0.0
    %v10784 = vrot.slane %v10783, 4
    %v10785 = vadd.f32 %v10783, %v10784
    %v10786 = vrot.slane %v10785, 2
    %v10787 = vadd.f32 %v10785, %v10786
    %v10788 = vrot.slane %v10787, 1
    %v10789 = vadd.f32 %v10787, %v10788
    %v10790 = vsel %vm10258, %v10782, 0.0
    %v10791 = vrot.slane %v10790, 4
    %v10792 = vadd.f32 %v10790, %v10791
    %v10793 = vrot.slane %v10792, 2
    %v10794 = vadd.f32 %v10792, %v10793
    %v10795 = vrot.slane %v10794, 1
    %v10796 = vadd.f32 %v10794, %v10795
    %v10797 = vrcp.pop 4.0
    %v10798 = vmul.f32 %v10789, %v10797
    %v10799 = vmul.f32 %v10796, %v10797
    %v10802 = vrot.slane %v10781, 4
    %v10803 = vrot.slane %v10782, 4
    %v10806 = vsel %vm10258, %v10802, 0.0
    %v10807 = vrot.slane %v10806, 4
    %v10808 = vadd.f32 %v10806, %v10807
    %v10809 = vrot.slane %v10808, 2
    %v10810 = vadd.f32 %v10808, %v10809
    %v10811 = vrot.slane %v10810, 1
    %v10812 = vadd.f32 %v10810, %v10811
    %v10813 = vsel %vm10258, %v10803, 0.0
    %v10814 = vrot.slane %v10813, 4
    %v10815 = vadd.f32 %v10813, %v10814
    %v10816 = vrot.slane %v10815, 2
    %v10817 = vadd.f32 %v10815, %v10816
    %v10818 = vrot.slane %v10817, 1
    %v10819 = vadd.f32 %v10817, %v10818
    %v10820 = vmul.f32 %v10812, %v10797
    %v10821 = vmul.f32 %v10819, %v10797
    %v10822 = vsel %vm1641, %v10798, %v10820
    %v10823 = vsel %vm1641, %v10799, %v10821
    %v10824 = vpack.c.bf16 %v10822, %v10822
    %v10825 = vpack.c.bf16 %v10823, %v10823
    %v10826 = vld [vmem:[%s23] sm:$0xf]
    %v10827 = vld [vmem:[%s23 + $0x4] sm:$0xf]
    %v10828 = vld [vmem:[%s23 + $0x8] sm:$0xf]
    %v10829 = vld [vmem:[%s23 + $0xc] sm:$0xf]
    %v10830 = vld [vmem:[%s23 + $0x10] sm:$0xf]
    %v10831 = vld [vmem:[%s23 + $0x14] sm:$0xf]
    %v10832 = vld [vmem:[%s23 + $0x18] sm:$0xf]
    %v10833 = vld [vmem:[%s23 + $0x1c] sm:$0xf]
    %v10834 = vld [vmem:[%s23 + $0x20] sm:$0xf]
    %v10835 = vld [vmem:[%s23 + $0x24] sm:$0xf]
    %v10836 = vld [vmem:[%s23 + $0x28] sm:$0xf]
    %v10837 = vld [vmem:[%s23 + $0x2c] sm:$0xf]
    %v10838 = vld [vmem:[%s23 + $0x30] sm:$0xf]
    %v10839 = vld [vmem:[%s23 + $0x34] sm:$0xf]
    %v10840 = vld [vmem:[%s23 + $0x38] sm:$0xf]
    %v10841 = vld [vmem:[%s23 + $0x3c] sm:$0xf]
    %v10842 = vld [vmem:[%s23 + $0x40] sm:$0xf]
    %v10843 = vld [vmem:[%s23 + $0x44] sm:$0xf]
    %v10844 = vld [vmem:[%s23 + $0x48] sm:$0xf]
    %v10845 = vld [vmem:[%s23 + $0x4c] sm:$0xf]
    %v10846 = vld [vmem:[%s23 + $0x50] sm:$0xf]
    %v10847 = vld [vmem:[%s23 + $0x54] sm:$0xf]
    %v10848 = vld [vmem:[%s23 + $0x58] sm:$0xf]
    %v10849 = vld [vmem:[%s23 + $0x5c] sm:$0xf]
    %v10850 = vld [vmem:[%s23 + $0x60] sm:$0xf]
    %v10851 = vld [vmem:[%s23 + $0x64] sm:$0xf]
    %v10852 = vld [vmem:[%s23 + $0x68] sm:$0xf]
    %v10853 = vld [vmem:[%s23 + $0x6c] sm:$0xf]
    %v10854 = vld [vmem:[%s23 + $0x70] sm:$0xf]
    %v10855 = vld [vmem:[%s23 + $0x74] sm:$0xf]
    %v10856 = vld [vmem:[%s23 + $0x78] sm:$0xf]
    %v10857 = vld [vmem:[%s23 + $0x7c] sm:$0xf]
    %v10858 = vld [vmem:[%s24] sm:$0x1]
    %v10860 = vlaneseq
    %v10861 = vshrl.u32 %v10860, 7
    %v10862 = vsub.s32 0, %v10861
    %v10863 = vrot.slane %v10858, %v10862
    %v10897 = vunpack.c.l.b16 %v10826
    %v10898 = vunpack.c.l.b16 %v10827
    %v10899 = vunpack.c.l.b16 %v10828
    %v10900 = vunpack.c.l.b16 %v10829
    %v10901 = vunpack.c.l.b16 %v10830
    %v10902 = vunpack.c.l.b16 %v10831
    %v10903 = vunpack.c.l.b16 %v10832
    %v10904 = vunpack.c.l.b16 %v10833
    %v10905 = vunpack.c.l.b16 %v10834
    %v10906 = vunpack.c.l.b16 %v10835
    %v10907 = vunpack.c.l.b16 %v10836
    %v10908 = vunpack.c.l.b16 %v10837
    %v10909 = vunpack.c.l.b16 %v10838
    %v10910 = vunpack.c.l.b16 %v10839
    %v10911 = vunpack.c.l.b16 %v10840
    %v10912 = vunpack.c.l.b16 %v10841
    %v10913 = vunpack.c.l.b16 %v10842
    %v10914 = vunpack.c.l.b16 %v10843
    %v10915 = vunpack.c.l.b16 %v10844
    %v10916 = vunpack.c.l.b16 %v10845
    %v10917 = vunpack.c.l.b16 %v10846
    %v10918 = vunpack.c.l.b16 %v10847
    %v10919 = vunpack.c.l.b16 %v10848
    %v10920 = vunpack.c.l.b16 %v10849
    %v10921 = vunpack.c.l.b16 %v10850
    %v10922 = vunpack.c.l.b16 %v10851
    %v10923 = vunpack.c.l.b16 %v10852
    %v10924 = vunpack.c.l.b16 %v10853
    %v10925 = vunpack.c.l.b16 %v10854
    %v10926 = vunpack.c.l.b16 %v10855
    %v10927 = vunpack.c.l.b16 %v10856
    %v10928 = vunpack.c.l.b16 %v10857
    %v10929 = vpack.c.b16 %v10898, %v10897
    %v10930 = vpack.c.b16 %v10900, %v10899
    %v10931 = vpack.c.b16 %v10902, %v10901
    %v10932 = vpack.c.b16 %v10904, %v10903
    %v10933 = vpack.c.b16 %v10906, %v10905
    %v10934 = vpack.c.b16 %v10908, %v10907
    %v10935 = vpack.c.b16 %v10910, %v10909
    %v10936 = vpack.c.b16 %v10912, %v10911
    %v10937 = vpack.c.b16 %v10914, %v10913
    %v10938 = vpack.c.b16 %v10916, %v10915
    %v10939 = vpack.c.b16 %v10918, %v10917
    %v10940 = vpack.c.b16 %v10920, %v10919
    %v10941 = vpack.c.b16 %v10922, %v10921
    %v10942 = vpack.c.b16 %v10924, %v10923
    %v10943 = vpack.c.b16 %v10926, %v10925
    %v10944 = vpack.c.b16 %v10928, %v10927
    %10961 = vmatprep.subr.bf16.mxu0 0
    %10962 = vmatpush1.bf16.msra.mxu0 %v10929
    %10963 = vmatprep.subr.bf16.mxu0 0
    %10964 = vmatpush1.bf16.msra.mxu0 %v10930
    %10965 = vmatprep.subr.bf16.mxu0 0
    %10966 = vmatpush1.bf16.msra.mxu0 %v10931
    %10967 = vmatprep.subr.bf16.mxu0 0
    %10968 = vmatpush1.bf16.msra.mxu0 %v10932
    %10969 = vmatprep.subr.bf16.mxu0 0
    %10970 = vmatpush1.bf16.msra.mxu0 %v10933
    %10971 = vmatprep.subr.bf16.mxu0 0
    %10972 = vmatpush1.bf16.msra.mxu0 %v10934
    %10973 = vmatprep.subr.bf16.mxu0 0
    %10974 = vmatpush1.bf16.msra.mxu0 %v10935
    %10975 = vmatprep.subr.bf16.mxu0 0
    %10976 = vmatpush1.bf16.msra.mxu0 %v10936
    %10977 = vmatprep.subr.bf16.mxu0 0
    %10978 = vmatpush1.bf16.msra.mxu0 %v10937
    %10979 = vmatprep.subr.bf16.mxu0 0
    %10980 = vmatpush1.bf16.msra.mxu0 %v10938
    %10981 = vmatprep.subr.bf16.mxu0 0
    %10982 = vmatpush1.bf16.msra.mxu0 %v10939
    %10983 = vmatprep.subr.bf16.mxu0 0
    %10984 = vmatpush1.bf16.msra.mxu0 %v10940
    %10985 = vmatprep.subr.bf16.mxu0 0
    %10986 = vmatpush1.bf16.msra.mxu0 %v10941
    %10987 = vmatprep.subr.bf16.mxu0 0
    %10988 = vmatpush1.bf16.msra.mxu0 %v10942
    %10989 = vmatprep.subr.bf16.mxu0 0
    %10990 = vmatpush1.bf16.msra.mxu0 %v10943
    %10991 = vmatprep.subr.bf16.mxu0 0
    %10992 = vmatpush1.bf16.msra.mxu0 %v10944
    %10993 = vmatprep.mubr.bf16.mxu0 %v10825
    %10994 = vmatmul.mubr.bf16.gmra.mrb[0].mxu0 %v10824
    %v10995 = vpop.f32.mrb[0].mxu0
    %v10996 = vadd.f32 %v10863, %v10995
    %v10997 = vpop.f32.mrb[0].mxu0
    %v10998 = vpop.f32.mrb[0].mxu0
    %v10999 = vpop.f32.mrb[0].mxu0
    %11000 = vdwg.mxu0
    %11001 = vst [vmem:[#allocation2] sm:$0x3] %v10996
    // Predicated region
    $region102: #{_lambda_.1} parent=1 // pred_check
      _
    $region103: #{_lambda_.1} parent=1 // pred_check_branch
      %11003 = sbr.rel (0) target = $region105
    $region104: #{_lambda_.1} parent=1 // pred_region
      %s11005 = ssub.s32 32, 32
      %11006 = vsyncadd [#allocation3], %s11005
      %s11008 = sshll.u32 [#allocation2], 4
      %s11009 = int_to_ptr.vmem [resolvable:$true] %s11008
      %11011 = dma.vmem_to_hbm [thread:$0]  %s11009, 32, %s25, [#allocation3]
    $region105: #{_lambda_.1} parent=1 // pred_fallthru
      _
    // Predicated region
    $region106: #{_lambda_.1} parent=1 // pred_check
      _
    $region107: #{_lambda_.1} parent=1 // pred_check_branch
      %11013 = sbr.rel (0) target = $region109
    $region108: #{_lambda_.1} parent=1 // pred_region
      %11014 = dma.done [#allocation3], 32
    $region109: #{_lambda_.1} parent=1 // pred_fallthru
      _
    %11015 = vsyncpa [#allocation3], 1

</llo_original>
